<compile_context>
chip_gen: v6e
topology: v6e:2x2x1
jax: 0.10.0
libtpu: 0.0.40
codegen_flags: <defaults>
</compile_context>

<pallas_src>
import numpy as np
import jax
import jax.numpy as jnp
from jax.experimental import pallas as pl
from jax.experimental.pallas import tpu as pltpu

# ---- static geometry (28x28 input is implied by the hidden*7*7 classifier) ----
H1 = W1 = 28                 # layer-1 spatial size
H2 = W2 = 14                 # after pool 1
H3 = W3 = 7                  # after pool 2
Q = 32                       # lane pitch per (layer-1) image row
RFLAT = H1 * Q               # 896 logical lanes per image (flat h*Q + w)
PAD = 128                    # per-image zero pad on each side (>= 66 = max tap shift)
SEG = PAD + RFLAT + PAD      # 1152 lanes per image inside a batch block


# ----------------------------------------------------------------------------
# In-kernel helpers (values only; spatial on lanes, channels on sublanes)
# ----------------------------------------------------------------------------
def _shift_lanes(x, o):
    """y[:, g] = x[:, g + o] with zero fill at the global ends (static o)."""
    if o == 0:
        return x
    rows, ln = x.shape
    z = jnp.zeros((rows, abs(o)), x.dtype)
    if o > 0:
        return jnp.concatenate([x[:, o:], z], axis=1)
    return jnp.concatenate([z, x[:, :ln + o]], axis=1)


def _conv3x3(field, w_ref, b_ref, step, mask):
    """3x3 stride-1 conv on a flat (Cin, L) field whose valid samples live on a
    lattice of spatial step `step` (lane stride step, row stride step*Q).
    One lane-dense MXU matmul with K = 9*Cin, N = L; bf16 operands, f32 acc."""
    taps = [_shift_lanes(field, step * (Q * (dy - 1) + (dx - 1)))
            for dy in range(3) for dx in range(3)]
    patches = jnp.concatenate(taps, axis=0).astype(jnp.bfloat16)      # (9*Cin, L)
    y = jnp.dot(w_ref[...], patches, preferred_element_type=jnp.float32)
    y = jnp.maximum(y + b_ref[...], 0.0)                              # bias + ReLU (f32)
    return y * mask if mask is not None else y


def _pool2x2(field, step, mask):
    """2x2/2 max pool via shifted maxima; output valid on the 2*step lattice."""
    m = jnp.maximum(field, _shift_lanes(field, step))
    m = jnp.maximum(m, _shift_lanes(m, step * Q))
    return m * mask if mask is not None else m


# ----------------------------------------------------------------------------
# Fused forward kernel: B images per grid step, everything stays in VMEM
# ----------------------------------------------------------------------------
def _mnist_kernel(xp_ref, m1_ref, m2_ref,
                  w1_ref, b1_ref, w2_ref, b2_ref, w3_ref, b3_ref, w4_ref, b4_ref,
                  wfc_ref, bfc_ref, out_ref):
    m1 = m1_ref[...]                       # (1, L) 0/1 lattice mask, step 1
    m2 = m2_ref[...]                       # (1, L) 0/1 lattice mask, step 2

    # ---- layer 1 (lattice step 1): conv1 patches were im2col'ed wrapper-side.
    y = jnp.dot(w1_ref[...], xp_ref[...], preferred_element_type=jnp.float32)
    y = jnp.maximum(y + b1_ref[...], 0.0) * m1
    y = _conv3x3(y, w2_ref, b2_ref, 1, None)      # pool only reads valid lanes
    y = _pool2x2(y, 1, m2)

    # ---- layer 2 (lattice step 2, no compaction: doubled tap strides) ----
    y = _conv3x3(y, w3_ref, b3_ref, 2, m2)
    y = _conv3x3(y, w4_ref, b4_ref, 2, None)
    y = _pool2x2(y, 2, None)   # valid on step-4 lattice; off-lattice lanes hit zero FC weights

    # ---- classifier: one lane-dense (B, C*RFLAT) x (C*RFLAT, ncls) matmul ----
    nb, _ = out_ref.shape
    cch = y.shape[0]
    rows = []
    for b in range(nb):
        base = b * SEG + PAD               # 128-aligned slice start per image
        rows.append(jnp.concatenate(
            [y[c:c + 1, base:base + RFLAT] for c in range(cch)], axis=1))
    feats = jnp.concatenate(rows, axis=0).astype(jnp.bfloat16)        # (B, C*RFLAT)
    out_ref[...] = (jnp.dot(feats, wfc_ref[...], preferred_element_type=jnp.float32)
                    + bfc_ref[...])


# ----------------------------------------------------------------------------
# Wrapper-side glue: batch blocking, hoisted layer-1 im2col, lattice masks
# ----------------------------------------------------------------------------
def _pick_batch_block(n):
    # Largest B in {8,4,2,1} dividing n while keeping grid >= 2 (feeds both v7x TCs).
    for b in (8, 4, 2, 1):
        if n % b == 0 and n // b >= 2:
            return b
    return 1


def _build_masks(bblk):
    lam = np.arange(SEG, dtype=np.int64) - PAD

    def lattice(step, width):
        ok = ((lam >= 0) & (lam < RFLAT) & (lam % step == 0)
              & (((lam // step) % Q) < width))
        return ok.astype(np.float32)

    m1 = np.tile(lattice(1, W1), bblk)[None, :]
    m2 = np.tile(lattice(2, W2), bblk)[None, :]
    return jnp.asarray(m1), jnp.asarray(m2)


def _build_conv1_patches(x_nchw, bblk):
    """Hoisted layer-1 im2col: (G, 9*cin, B*SEG) bf16, spatial on lanes."""
    n, cin = x_nchw.shape[0], x_nchw.shape[1]
    g = n // bblk
    xp = jnp.pad(x_nchw, ((0, 0), (0, 0), (1, 1), (1, 1)))
    taps = jnp.stack([xp[:, :, dy:dy + H1, dx:dx + W1]
                      for dy in range(3) for dx in range(3)], axis=1)   # (N,9,cin,28,28)
    taps = jnp.pad(taps, ((0, 0), (0, 0), (0, 0), (0, 0), (0, Q - W1)))  # pitch-32 rows
    taps = taps.reshape(n, 9 * cin, RFLAT)
    taps = jnp.pad(taps, ((0, 0), (0, 0), (PAD, PAD)))                   # per-image pads
    taps = taps.reshape(g, bblk, 9 * cin, SEG)
    taps = jnp.transpose(taps, (0, 2, 1, 3)).reshape(g, 9 * cin, bblk * SEG)
    return taps.astype(jnp.bfloat16)


@jax.jit
def mnist_forward_pallas(x_nchw, kp):
    n, cin, h, w = x_nchw.shape
    assert (h, w) == (H1, W1), "MNISTModel geometry implies 28x28 inputs"
    ncls = kp["bfc"].shape[-1]
    bblk = _pick_batch_block(n)
    g = n // bblk

    xp = _build_conv1_patches(x_nchw, bblk)
    m1, m2 = _build_masks(bblk)

    def resident(a):  # whole-array block, constant index -> stays VMEM-resident
        return pl.BlockSpec(a.shape, lambda i, nd=a.ndim: (0,) * nd)

    out = pl.pallas_call(
        _mnist_kernel,
        out_shape=jax.ShapeDtypeStruct((g, bblk, ncls), jnp.float32),
        grid=(g,),
        in_specs=[
            pl.BlockSpec((None, 9 * cin, bblk * SEG), lambda i: (i, 0, 0)),
            resident(m1), resident(m2),
            resident(kp["w1"]), resident(kp["b1"]),
            resident(kp["w2"]), resident(kp["b2"]),
            resident(kp["w3"]), resident(kp["b3"]),
            resident(kp["w4"]), resident(kp["b4"]),
            resident(kp["wfc"]), resident(kp["bfc"]),
        ],
        out_specs=pl.BlockSpec((None, bblk, ncls), lambda i: (i, 0, 0)),
        compiler_params=pltpu.CompilerParams(
            dimension_semantics=("parallel",),     # batch-block axis -> both TCs
        ),
    )(xp, m1, m2, kp["w1"], kp["b1"], kp["w2"], kp["b2"], kp["w3"], kp["b3"],
      kp["w4"], kp["b4"], kp["wfc"], kp["bfc"])
    return out.reshape(n, ncls)


# ----------------------------------------------------------------------------
# Parameters (torch layouts) + wrapper-side re-layout for the kernel
# ----------------------------------------------------------------------------
def init_params(key, in_ch, hidden, out_dim):
    ks = jax.random.split(key, 10)
    p = {}
    shapes = [(hidden, in_ch, 3, 3), (hidden, hidden, 3, 3),
              (hidden, hidden, 3, 3), (hidden, hidden, 3, 3)]
    for i, s in enumerate(shapes, start=1):
        p[f"w{i}"] = 0.1 * jax.random.normal(ks[2 * i - 2], s, jnp.float32)
        p[f"b{i}"] = 0.01 * jax.random.normal(ks[2 * i - 1], (s[0],), jnp.float32)
    p["wfc"] = 0.1 * jax.random.normal(ks[8], (out_dim, hidden * H3 * W3), jnp.float32)
    p["bfc"] = 0.01 * jax.random.normal(ks[9], (out_dim,), jnp.float32)
    return p


def to_kernel_layout(p):
    kp = {}
    for i in range(1, 5):
        w = p[f"w{i}"]                                    # (Cout, Cin, 3, 3) torch
        cout, cin = w.shape[0], w.shape[1]
        # W^T with tap-major, cin-minor columns; bf16 MXU operand.
        kp[f"w{i}"] = (jnp.transpose(w, (0, 2, 3, 1))
                       .reshape(cout, 9 * cin).astype(jnp.bfloat16))
        kp[f"b{i}"] = p[f"b{i}"].reshape(-1, 1).astype(jnp.float32)
    hid = p["w1"].shape[0]
    ncls = p["wfc"].shape[0]
    # Classifier weights zero-expanded to the flat lane grid: the pooled pixel
    # (c, h, w) lives at lane 128*h + 4*w of channel c (step-4 lattice).
    wt = jnp.transpose(p["wfc"].reshape(ncls, hid, H3, W3), (1, 2, 3, 0))  # (C,7,7,ncls)
    wexp = jnp.zeros((hid, H1, Q, ncls), jnp.float32)
    wexp = wexp.at[:, 0:4 * H3:4, 0:4 * W3:4, :].set(wt)
    kp["wfc"] = wexp.reshape(hid * RFLAT, ncls).astype(jnp.bfloat16)
    kp["bfc"] = p["bfc"].reshape(1, -1).astype(jnp.float32)
    return kp


def mnist_forward_reference(x, p):
    def conv(x, w, b):
        y = jax.lax.conv_general_dilated(
            x, w, (1, 1), ((1, 1), (1, 1)),
            dimension_numbers=("NCHW", "OIHW", "NCHW"),
            precision=jax.lax.Precision.HIGHEST)
        return jax.nn.relu(y + b.reshape(1, -1, 1, 1))

    def pool(x):
        return jax.lax.reduce_window(x, -jnp.inf, jax.lax.max,
                                     (1, 1, 2, 2), (1, 1, 2, 2), "VALID")

    x = pool(conv(conv(x, p["w1"], p["b1"]), p["w2"], p["b2"]))
    x = pool(conv(conv(x, p["w3"], p["b3"]), p["w4"], p["b4"]))
    x = x.reshape(x.shape[0], -1)
    return jnp.dot(x, p["wfc"].T, precision=jax.lax.Precision.HIGHEST) + p["bfc"]


if __name__ == "__main__":
    key = jax.random.PRNGKey(0)
    k_x, k_p = jax.random.split(key)

    batch, in_ch, hidden, out_dim = 2, 1, 8, 10
    x = jax.random.normal(k_x, (batch, in_ch, H1, W1), jnp.float32)

    params = init_params(k_p, in_ch, hidden, out_dim)
    kparams = to_kernel_layout(params)

    out = jax.block_until_ready(mnist_forward_pallas(x, kparams))
    ref = jax.block_until_ready(mnist_forward_reference(x, params))

    assert out.shape == (batch, out_dim), out.shape
    # Kernel matmuls use bf16 operands with f32 accumulation; tolerance covers
    # bf16 rounding vs. the f32 HIGHEST-precision reference over 5 stacked layers.
    assert jnp.allclose(out, ref, atol=5e-2, rtol=5e-2), (
        "mismatch vs reference: max abs err = "
        f"{float(jnp.max(jnp.abs(out - ref)))}")

    print("KERNEL_OK")
</pallas_src>

<mosaic_0001>
module attributes {stable_mosaic.version = 11 : i64} {
  func.func @_mnist_kernel(%arg0: i32, %arg1: memref<1x9x1152xbf16, #tpu.memory_space<vmem>>, %arg2: memref<1x1152xf32, #tpu.memory_space<vmem>>, %arg3: memref<1x1152xf32, #tpu.memory_space<vmem>>, %arg4: memref<8x9xbf16, #tpu.memory_space<vmem>>, %arg5: memref<8x1xf32, #tpu.memory_space<vmem>>, %arg6: memref<8x72xbf16, #tpu.memory_space<vmem>>, %arg7: memref<8x1xf32, #tpu.memory_space<vmem>>, %arg8: memref<8x72xbf16, #tpu.memory_space<vmem>>, %arg9: memref<8x1xf32, #tpu.memory_space<vmem>>, %arg10: memref<8x72xbf16, #tpu.memory_space<vmem>>, %arg11: memref<8x1xf32, #tpu.memory_space<vmem>>, %arg12: memref<7168x10xbf16, #tpu.memory_space<vmem>>, %arg13: memref<1x10xf32, #tpu.memory_space<vmem>>, %arg14: memref<1x1x10xf32, #tpu.memory_space<vmem>>) attributes {dimension_semantics = [#tpu.dimension_semantics<parallel>], iteration_bounds = array<i64: 2>, scalar_prefetch = 0 : i64, scratch_operands = 0 : i64, tpu.core_type = #tpu.core_type<tc>, window_params = [{transform_indices = @transform_0, window_bounds = array<i64: 1, 9, 1152>}, {pipeline_mode = #tpu.pipeline_mode<synchronous>, transform_indices = @transform_1, window_bounds = array<i64: 1, 1152>}, {pipeline_mode = #tpu.pipeline_mode<synchronous>, transform_indices = @transform_2, window_bounds = array<i64: 1, 1152>}, {pipeline_mode = #tpu.pipeline_mode<synchronous>, transform_indices = @transform_3, window_bounds = array<i64: 8, 9>}, {pipeline_mode = #tpu.pipeline_mode<synchronous>, transform_indices = @transform_4, window_bounds = array<i64: 8, 1>}, {pipeline_mode = #tpu.pipeline_mode<synchronous>, transform_indices = @transform_5, window_bounds = array<i64: 8, 72>}, {pipeline_mode = #tpu.pipeline_mode<synchronous>, transform_indices = @transform_6, window_bounds = array<i64: 8, 1>}, {pipeline_mode = #tpu.pipeline_mode<synchronous>, transform_indices = @transform_7, window_bounds = array<i64: 8, 72>}, {pipeline_mode = #tpu.pipeline_mode<synchronous>, transform_indices = @transform_8, window_bounds = array<i64: 8, 1>}, {pipeline_mode = #tpu.pipeline_mode<synchronous>, transform_indices = @transform_9, window_bounds = array<i64: 8, 72>}, {pipeline_mode = #tpu.pipeline_mode<synchronous>, transform_indices = @transform_10, window_bounds = array<i64: 8, 1>}, {pipeline_mode = #tpu.pipeline_mode<synchronous>, transform_indices = @transform_11, window_bounds = array<i64: 7168, 10>}, {pipeline_mode = #tpu.pipeline_mode<synchronous>, transform_indices = @transform_12, window_bounds = array<i64: 1, 10>}, {transform_indices = @transform_13, window_bounds = array<i64: 1, 1, 10>}]} {
    %c0 = arith.constant 0 : index
    %c0_0 = arith.constant 0 : index
    %0 = vector.load %arg2[%c0, %c0_0] : memref<1x1152xf32, #tpu.memory_space<vmem>>, vector<1x1152xf32>
    %c0_1 = arith.constant 0 : index
    %c0_2 = arith.constant 0 : index
    %1 = vector.load %arg3[%c0_1, %c0_2] : memref<1x1152xf32, #tpu.memory_space<vmem>>, vector<1x1152xf32>
    %c0_3 = arith.constant 0 : index
    %c0_4 = arith.constant 0 : index
    %2 = vector.load %arg4[%c0_3, %c0_4] : memref<8x9xbf16, #tpu.memory_space<vmem>>, vector<8x9xbf16>
    %c0_5 = arith.constant 0 : index
    %c0_6 = arith.constant 0 : index
    %c0_7 = arith.constant 0 : index
    %3 = vector.load %arg1[%c0_5, %c0_6, %c0_7] : memref<1x9x1152xbf16, #tpu.memory_space<vmem>>, vector<1x9x1152xbf16>
    %4 = vector.shape_cast %3 : vector<1x9x1152xbf16> to vector<9x1152xbf16>
    %cst = arith.constant dense<0.000000e+00> : vector<8x1152xf32>
    %5 = tpu.matmul %2, %4, %cst {dimension_numbers = #tpu.dot_dimension_numbers<[1], [0], [0], [1], [0, 0, 1, 1], [], []>} : vector<8x9xbf16>, vector<9x1152xbf16>, vector<8x1152xf32> -> vector<8x1152xf32>
    %c0_8 = arith.constant 0 : index
    %c0_9 = arith.constant 0 : index
    %6 = vector.load %arg5[%c0_8, %c0_9] : memref<8x1xf32, #tpu.memory_space<vmem>>, vector<8x1xf32>
    %7 = vector.broadcast %6 : vector<8x1xf32> to vector<8x1152xf32>
    %8 = arith.addf %5, %7 : vector<8x1152xf32>
    %cst_10 = arith.constant 0.000000e+00 : f32
    %9 = vector.broadcast %cst_10 : f32 to vector<8x1152xf32>
    %10 = arith.maximumf %8, %9 : vector<8x1152xf32>
    %11 = vector.broadcast %0 : vector<1x1152xf32> to vector<8x1152xf32>
    %12 = arith.mulf %10, %11 : vector<8x1152xf32>
    %cst_11 = arith.constant 0.000000e+00 : f32
    %13 = vector.broadcast %cst_11 : f32 to vector<8x33xf32>
    %14 = vector.extract_strided_slice %12 {offsets = [0, 0], sizes = [8, 1119], strides = [1, 1]} : vector<8x1152xf32> to vector<8x1119xf32>
    %15 = tpu.concatenate %13, %14 in 1 : vector<8x33xf32>, vector<8x1119xf32> -> vector<8x1152xf32>
    %cst_12 = arith.constant 0.000000e+00 : f32
    %16 = vector.broadcast %cst_12 : f32 to vector<8x32xf32>
    %17 = vector.extract_strided_slice %12 {offsets = [0, 0], sizes = [8, 1120], strides = [1, 1]} : vector<8x1152xf32> to vector<8x1120xf32>
    %18 = tpu.concatenate %16, %17 in 1 : vector<8x32xf32>, vector<8x1120xf32> -> vector<8x1152xf32>
    %cst_13 = arith.constant 0.000000e+00 : f32
    %19 = vector.broadcast %cst_13 : f32 to vector<8x31xf32>
    %20 = vector.extract_strided_slice %12 {offsets = [0, 0], sizes = [8, 1121], strides = [1, 1]} : vector<8x1152xf32> to vector<8x1121xf32>
    %21 = tpu.concatenate %19, %20 in 1 : vector<8x31xf32>, vector<8x1121xf32> -> vector<8x1152xf32>
    %cst_14 = arith.constant 0.000000e+00 : f32
    %22 = vector.broadcast %cst_14 : f32 to vector<8x1xf32>
    %23 = vector.extract_strided_slice %12 {offsets = [0, 0], sizes = [8, 1151], strides = [1, 1]} : vector<8x1152xf32> to vector<8x1151xf32>
    %24 = tpu.concatenate %22, %23 in 1 : vector<8x1xf32>, vector<8x1151xf32> -> vector<8x1152xf32>
    %cst_15 = arith.constant 0.000000e+00 : f32
    %25 = vector.broadcast %cst_15 : f32 to vector<8x1xf32>
    %26 = vector.extract_strided_slice %12 {offsets = [0, 1], sizes = [8, 1151], strides = [1, 1]} : vector<8x1152xf32> to vector<8x1151xf32>
    %27 = tpu.concatenate %26, %25 in 1 : vector<8x1151xf32>, vector<8x1xf32> -> vector<8x1152xf32>
    %cst_16 = arith.constant 0.000000e+00 : f32
    %28 = vector.broadcast %cst_16 : f32 to vector<8x31xf32>
    %29 = vector.extract_strided_slice %12 {offsets = [0, 31], sizes = [8, 1121], strides = [1, 1]} : vector<8x1152xf32> to vector<8x1121xf32>
    %30 = tpu.concatenate %29, %28 in 1 : vector<8x1121xf32>, vector<8x31xf32> -> vector<8x1152xf32>
    %cst_17 = arith.constant 0.000000e+00 : f32
    %31 = vector.broadcast %cst_17 : f32 to vector<8x32xf32>
    %32 = vector.extract_strided_slice %12 {offsets = [0, 32], sizes = [8, 1120], strides = [1, 1]} : vector<8x1152xf32> to vector<8x1120xf32>
    %33 = tpu.concatenate %32, %31 in 1 : vector<8x1120xf32>, vector<8x32xf32> -> vector<8x1152xf32>
    %cst_18 = arith.constant 0.000000e+00 : f32
    %34 = vector.broadcast %cst_18 : f32 to vector<8x33xf32>
    %35 = vector.extract_strided_slice %12 {offsets = [0, 33], sizes = [8, 1119], strides = [1, 1]} : vector<8x1152xf32> to vector<8x1119xf32>
    %36 = tpu.concatenate %35, %34 in 1 : vector<8x1119xf32>, vector<8x33xf32> -> vector<8x1152xf32>
    %37 = tpu.concatenate %15, %18, %21, %24, %12, %27, %30, %33, %36 in 0 : vector<8x1152xf32>, vector<8x1152xf32>, vector<8x1152xf32>, vector<8x1152xf32>, vector<8x1152xf32>, vector<8x1152xf32>, vector<8x1152xf32>, vector<8x1152xf32>, vector<8x1152xf32> -> vector<72x1152xf32>
    %38 = arith.truncf %37 : vector<72x1152xf32> to vector<72x1152xbf16>
    %c0_19 = arith.constant 0 : index
    %c0_20 = arith.constant 0 : index
    %39 = vector.load %arg6[%c0_19, %c0_20] : memref<8x72xbf16, #tpu.memory_space<vmem>>, vector<8x72xbf16>
    %cst_21 = arith.constant dense<0.000000e+00> : vector<8x1152xf32>
    %40 = tpu.matmul %39, %38, %cst_21 {dimension_numbers = #tpu.dot_dimension_numbers<[1], [0], [0], [1], [0, 0, 1, 1], [], []>} : vector<8x72xbf16>, vector<72x1152xbf16>, vector<8x1152xf32> -> vector<8x1152xf32>
    %c0_22 = arith.constant 0 : index
    %c0_23 = arith.constant 0 : index
    %41 = vector.load %arg7[%c0_22, %c0_23] : memref<8x1xf32, #tpu.memory_space<vmem>>, vector<8x1xf32>
    %42 = vector.broadcast %41 : vector<8x1xf32> to vector<8x1152xf32>
    %43 = arith.addf %40, %42 : vector<8x1152xf32>
    %cst_24 = arith.constant 0.000000e+00 : f32
    %44 = vector.broadcast %cst_24 : f32 to vector<8x1152xf32>
    %45 = arith.maximumf %43, %44 : vector<8x1152xf32>
    %cst_25 = arith.constant 0.000000e+00 : f32
    %46 = vector.broadcast %cst_25 : f32 to vector<8x1xf32>
    %47 = vector.extract_strided_slice %45 {offsets = [0, 1], sizes = [8, 1151], strides = [1, 1]} : vector<8x1152xf32> to vector<8x1151xf32>
    %48 = tpu.concatenate %47, %46 in 1 : vector<8x1151xf32>, vector<8x1xf32> -> vector<8x1152xf32>
    %49 = arith.maximumf %45, %48 : vector<8x1152xf32>
    %cst_26 = arith.constant 0.000000e+00 : f32
    %50 = vector.broadcast %cst_26 : f32 to vector<8x32xf32>
    %51 = vector.extract_strided_slice %49 {offsets = [0, 32], sizes = [8, 1120], strides = [1, 1]} : vector<8x1152xf32> to vector<8x1120xf32>
    %52 = tpu.concatenate %51, %50 in 1 : vector<8x1120xf32>, vector<8x32xf32> -> vector<8x1152xf32>
    %53 = arith.maximumf %49, %52 : vector<8x1152xf32>
    %54 = vector.broadcast %1 : vector<1x1152xf32> to vector<8x1152xf32>
    %55 = arith.mulf %53, %54 : vector<8x1152xf32>
    %cst_27 = arith.constant 0.000000e+00 : f32
    %56 = vector.broadcast %cst_27 : f32 to vector<8x66xf32>
    %57 = vector.extract_strided_slice %55 {offsets = [0, 0], sizes = [8, 1086], strides = [1, 1]} : vector<8x1152xf32> to vector<8x1086xf32>
    %58 = tpu.concatenate %56, %57 in 1 : vector<8x66xf32>, vector<8x1086xf32> -> vector<8x1152xf32>
    %cst_28 = arith.constant 0.000000e+00 : f32
    %59 = vector.broadcast %cst_28 : f32 to vector<8x64xf32>
    %60 = vector.extract_strided_slice %55 {offsets = [0, 0], sizes = [8, 1088], strides = [1, 1]} : vector<8x1152xf32> to vector<8x1088xf32>
    %61 = tpu.concatenate %59, %60 in 1 : vector<8x64xf32>, vector<8x1088xf32> -> vector<8x1152xf32>
    %cst_29 = arith.constant 0.000000e+00 : f32
    %62 = vector.broadcast %cst_29 : f32 to vector<8x62xf32>
    %63 = vector.extract_strided_slice %55 {offsets = [0, 0], sizes = [8, 1090], strides = [1, 1]} : vector<8x1152xf32> to vector<8x1090xf32>
    %64 = tpu.concatenate %62, %63 in 1 : vector<8x62xf32>, vector<8x1090xf32> -> vector<8x1152xf32>
    %cst_30 = arith.constant 0.000000e+00 : f32
    %65 = vector.broadcast %cst_30 : f32 to vector<8x2xf32>
    %66 = vector.extract_strided_slice %55 {offsets = [0, 0], sizes = [8, 1150], strides = [1, 1]} : vector<8x1152xf32> to vector<8x1150xf32>
    %67 = tpu.concatenate %65, %66 in 1 : vector<8x2xf32>, vector<8x1150xf32> -> vector<8x1152xf32>
    %cst_31 = arith.constant 0.000000e+00 : f32
    %68 = vector.broadcast %cst_31 : f32 to vector<8x2xf32>
    %69 = vector.extract_strided_slice %55 {offsets = [0, 2], sizes = [8, 1150], strides = [1, 1]} : vector<8x1152xf32> to vector<8x1150xf32>
    %70 = tpu.concatenate %69, %68 in 1 : vector<8x1150xf32>, vector<8x2xf32> -> vector<8x1152xf32>
    %cst_32 = arith.constant 0.000000e+00 : f32
    %71 = vector.broadcast %cst_32 : f32 to vector<8x62xf32>
    %72 = vector.extract_strided_slice %55 {offsets = [0, 62], sizes = [8, 1090], strides = [1, 1]} : vector<8x1152xf32> to vector<8x1090xf32>
    %73 = tpu.concatenate %72, %71 in 1 : vector<8x1090xf32>, vector<8x62xf32> -> vector<8x1152xf32>
    %cst_33 = arith.constant 0.000000e+00 : f32
    %74 = vector.broadcast %cst_33 : f32 to vector<8x64xf32>
    %75 = vector.extract_strided_slice %55 {offsets = [0, 64], sizes = [8, 1088], strides = [1, 1]} : vector<8x1152xf32> to vector<8x1088xf32>
    %76 = tpu.concatenate %75, %74 in 1 : vector<8x1088xf32>, vector<8x64xf32> -> vector<8x1152xf32>
    %cst_34 = arith.constant 0.000000e+00 : f32
    %77 = vector.broadcast %cst_34 : f32 to vector<8x66xf32>
    %78 = vector.extract_strided_slice %55 {offsets = [0, 66], sizes = [8, 1086], strides = [1, 1]} : vector<8x1152xf32> to vector<8x1086xf32>
    %79 = tpu.concatenate %78, %77 in 1 : vector<8x1086xf32>, vector<8x66xf32> -> vector<8x1152xf32>
    %80 = tpu.concatenate %58, %61, %64, %67, %55, %70, %73, %76, %79 in 0 : vector<8x1152xf32>, vector<8x1152xf32>, vector<8x1152xf32>, vector<8x1152xf32>, vector<8x1152xf32>, vector<8x1152xf32>, vector<8x1152xf32>, vector<8x1152xf32>, vector<8x1152xf32> -> vector<72x1152xf32>
    %81 = arith.truncf %80 : vector<72x1152xf32> to vector<72x1152xbf16>
    %c0_35 = arith.constant 0 : index
    %c0_36 = arith.constant 0 : index
    %82 = vector.load %arg8[%c0_35, %c0_36] : memref<8x72xbf16, #tpu.memory_space<vmem>>, vector<8x72xbf16>
    %cst_37 = arith.constant dense<0.000000e+00> : vector<8x1152xf32>
    %83 = tpu.matmul %82, %81, %cst_37 {dimension_numbers = #tpu.dot_dimension_numbers<[1], [0], [0], [1], [0, 0, 1, 1], [], []>} : vector<8x72xbf16>, vector<72x1152xbf16>, vector<8x1152xf32> -> vector<8x1152xf32>
    %c0_38 = arith.constant 0 : index
    %c0_39 = arith.constant 0 : index
    %84 = vector.load %arg9[%c0_38, %c0_39] : memref<8x1xf32, #tpu.memory_space<vmem>>, vector<8x1xf32>
    %85 = vector.broadcast %84 : vector<8x1xf32> to vector<8x1152xf32>
    %86 = arith.addf %83, %85 : vector<8x1152xf32>
    %cst_40 = arith.constant 0.000000e+00 : f32
    %87 = vector.broadcast %cst_40 : f32 to vector<8x1152xf32>
    %88 = arith.maximumf %86, %87 : vector<8x1152xf32>
    %89 = vector.broadcast %1 : vector<1x1152xf32> to vector<8x1152xf32>
    %90 = arith.mulf %88, %89 : vector<8x1152xf32>
    %cst_41 = arith.constant 0.000000e+00 : f32
    %91 = vector.broadcast %cst_41 : f32 to vector<8x66xf32>
    %92 = vector.extract_strided_slice %90 {offsets = [0, 0], sizes = [8, 1086], strides = [1, 1]} : vector<8x1152xf32> to vector<8x1086xf32>
    %93 = tpu.concatenate %91, %92 in 1 : vector<8x66xf32>, vector<8x1086xf32> -> vector<8x1152xf32>
    %cst_42 = arith.constant 0.000000e+00 : f32
    %94 = vector.broadcast %cst_42 : f32 to vector<8x64xf32>
    %95 = vector.extract_strided_slice %90 {offsets = [0, 0], sizes = [8, 1088], strides = [1, 1]} : vector<8x1152xf32> to vector<8x1088xf32>
    %96 = tpu.concatenate %94, %95 in 1 : vector<8x64xf32>, vector<8x1088xf32> -> vector<8x1152xf32>
    %cst_43 = arith.constant 0.000000e+00 : f32
    %97 = vector.broadcast %cst_43 : f32 to vector<8x62xf32>
    %98 = vector.extract_strided_slice %90 {offsets = [0, 0], sizes = [8, 1090], strides = [1, 1]} : vector<8x1152xf32> to vector<8x1090xf32>
    %99 = tpu.concatenate %97, %98 in 1 : vector<8x62xf32>, vector<8x1090xf32> -> vector<8x1152xf32>
    %cst_44 = arith.constant 0.000000e+00 : f32
    %100 = vector.broadcast %cst_44 : f32 to vector<8x2xf32>
    %101 = vector.extract_strided_slice %90 {offsets = [0, 0], sizes = [8, 1150], strides = [1, 1]} : vector<8x1152xf32> to vector<8x1150xf32>
    %102 = tpu.concatenate %100, %101 in 1 : vector<8x2xf32>, vector<8x1150xf32> -> vector<8x1152xf32>
    %cst_45 = arith.constant 0.000000e+00 : f32
    %103 = vector.broadcast %cst_45 : f32 to vector<8x2xf32>
    %104 = vector.extract_strided_slice %90 {offsets = [0, 2], sizes = [8, 1150], strides = [1, 1]} : vector<8x1152xf32> to vector<8x1150xf32>
    %105 = tpu.concatenate %104, %103 in 1 : vector<8x1150xf32>, vector<8x2xf32> -> vector<8x1152xf32>
    %cst_46 = arith.constant 0.000000e+00 : f32
    %106 = vector.broadcast %cst_46 : f32 to vector<8x62xf32>
    %107 = vector.extract_strided_slice %90 {offsets = [0, 62], sizes = [8, 1090], strides = [1, 1]} : vector<8x1152xf32> to vector<8x1090xf32>
    %108 = tpu.concatenate %107, %106 in 1 : vector<8x1090xf32>, vector<8x62xf32> -> vector<8x1152xf32>
    %cst_47 = arith.constant 0.000000e+00 : f32
    %109 = vector.broadcast %cst_47 : f32 to vector<8x64xf32>
    %110 = vector.extract_strided_slice %90 {offsets = [0, 64], sizes = [8, 1088], strides = [1, 1]} : vector<8x1152xf32> to vector<8x1088xf32>
    %111 = tpu.concatenate %110, %109 in 1 : vector<8x1088xf32>, vector<8x64xf32> -> vector<8x1152xf32>
    %cst_48 = arith.constant 0.000000e+00 : f32
    %112 = vector.broadcast %cst_48 : f32 to vector<8x66xf32>
    %113 = vector.extract_strided_slice %90 {offsets = [0, 66], sizes = [8, 1086], strides = [1, 1]} : vector<8x1152xf32> to vector<8x1086xf32>
    %114 = tpu.concatenate %113, %112 in 1 : vector<8x1086xf32>, vector<8x66xf32> -> vector<8x1152xf32>
    %115 = tpu.concatenate %93, %96, %99, %102, %90, %105, %108, %111, %114 in 0 : vector<8x1152xf32>, vector<8x1152xf32>, vector<8x1152xf32>, vector<8x1152xf32>, vector<8x1152xf32>, vector<8x1152xf32>, vector<8x1152xf32>, vector<8x1152xf32>, vector<8x1152xf32> -> vector<72x1152xf32>
    %116 = arith.truncf %115 : vector<72x1152xf32> to vector<72x1152xbf16>
    %c0_49 = arith.constant 0 : index
    %c0_50 = arith.constant 0 : index
    %117 = vector.load %arg10[%c0_49, %c0_50] : memref<8x72xbf16, #tpu.memory_space<vmem>>, vector<8x72xbf16>
    %cst_51 = arith.constant dense<0.000000e+00> : vector<8x1152xf32>
    %118 = tpu.matmul %117, %116, %cst_51 {dimension_numbers = #tpu.dot_dimension_numbers<[1], [0], [0], [1], [0, 0, 1, 1], [], []>} : vector<8x72xbf16>, vector<72x1152xbf16>, vector<8x1152xf32> -> vector<8x1152xf32>
    %c0_52 = arith.constant 0 : index
    %c0_53 = arith.constant 0 : index
    %119 = vector.load %arg11[%c0_52, %c0_53] : memref<8x1xf32, #tpu.memory_space<vmem>>, vector<8x1xf32>
    %120 = vector.broadcast %119 : vector<8x1xf32> to vector<8x1152xf32>
    %121 = arith.addf %118, %120 : vector<8x1152xf32>
    %cst_54 = arith.constant 0.000000e+00 : f32
    %122 = vector.broadcast %cst_54 : f32 to vector<8x1152xf32>
    %123 = arith.maximumf %121, %122 : vector<8x1152xf32>
    %cst_55 = arith.constant 0.000000e+00 : f32
    %124 = vector.broadcast %cst_55 : f32 to vector<8x2xf32>
    %125 = vector.extract_strided_slice %123 {offsets = [0, 2], sizes = [8, 1150], strides = [1, 1]} : vector<8x1152xf32> to vector<8x1150xf32>
    %126 = tpu.concatenate %125, %124 in 1 : vector<8x1150xf32>, vector<8x2xf32> -> vector<8x1152xf32>
    %127 = arith.maximumf %123, %126 : vector<8x1152xf32>
    %cst_56 = arith.constant 0.000000e+00 : f32
    %128 = vector.broadcast %cst_56 : f32 to vector<8x64xf32>
    %129 = vector.extract_strided_slice %127 {offsets = [0, 64], sizes = [8, 1088], strides = [1, 1]} : vector<8x1152xf32> to vector<8x1088xf32>
    %130 = tpu.concatenate %129, %128 in 1 : vector<8x1088xf32>, vector<8x64xf32> -> vector<8x1152xf32>
    %131 = arith.maximumf %127, %130 : vector<8x1152xf32>
    %132 = vector.extract_strided_slice %131 {offsets = [0, 128], sizes = [1, 896], strides = [1, 1]} : vector<8x1152xf32> to vector<1x896xf32>
    %133 = vector.extract_strided_slice %131 {offsets = [1, 128], sizes = [1, 896], strides = [1, 1]} : vector<8x1152xf32> to vector<1x896xf32>
    %134 = vector.extract_strided_slice %131 {offsets = [2, 128], sizes = [1, 896], strides = [1, 1]} : vector<8x1152xf32> to vector<1x896xf32>
    %135 = vector.extract_strided_slice %131 {offsets = [3, 128], sizes = [1, 896], strides = [1, 1]} : vector<8x1152xf32> to vector<1x896xf32>
    %136 = vector.extract_strided_slice %131 {offsets = [4, 128], sizes = [1, 896], strides = [1, 1]} : vector<8x1152xf32> to vector<1x896xf32>
    %137 = vector.extract_strided_slice %131 {offsets = [5, 128], sizes = [1, 896], strides = [1, 1]} : vector<8x1152xf32> to vector<1x896xf32>
    %138 = vector.extract_strided_slice %131 {offsets = [6, 128], sizes = [1, 896], strides = [1, 1]} : vector<8x1152xf32> to vector<1x896xf32>
    %139 = vector.extract_strided_slice %131 {offsets = [7, 128], sizes = [1, 896], strides = [1, 1]} : vector<8x1152xf32> to vector<1x896xf32>
    %140 = tpu.concatenate %132, %133, %134, %135, %136, %137, %138, %139 in 1 : vector<1x896xf32>, vector<1x896xf32>, vector<1x896xf32>, vector<1x896xf32>, vector<1x896xf32>, vector<1x896xf32>, vector<1x896xf32>, vector<1x896xf32> -> vector<1x7168xf32>
    %141 = arith.truncf %140 : vector<1x7168xf32> to vector<1x7168xbf16>
    %c0_57 = arith.constant 0 : index
    %c0_58 = arith.constant 0 : index
    %142 = vector.load %arg12[%c0_57, %c0_58] : memref<7168x10xbf16, #tpu.memory_space<vmem>>, vector<7168x10xbf16>
    %cst_59 = arith.constant dense<0.000000e+00> : vector<1x10xf32>
    %143 = tpu.matmul %141, %142, %cst_59 {dimension_numbers = #tpu.dot_dimension_numbers<[1], [0], [0], [1], [0, 0, 1, 1], [], []>} : vector<1x7168xbf16>, vector<7168x10xbf16>, vector<1x10xf32> -> vector<1x10xf32>
    %c0_60 = arith.constant 0 : index
    %c0_61 = arith.constant 0 : index
    %144 = vector.load %arg13[%c0_60, %c0_61] : memref<1x10xf32, #tpu.memory_space<vmem>>, vector<1x10xf32>
    %145 = arith.addf %143, %144 : vector<1x10xf32>
    %c0_62 = arith.constant 0 : index
    %c0_63 = arith.constant 0 : index
    %c0_64 = arith.constant 0 : index
    %146 = vector.load %arg14[%c0_62, %c0_63, %c0_64] : memref<1x1x10xf32, #tpu.memory_space<vmem>>, vector<1x1x10xf32>
    %147 = vector.shape_cast %146 : vector<1x1x10xf32> to vector<1x10xf32>
    %148 = vector.shape_cast %145 : vector<1x10xf32> to vector<1x1x10xf32>
    tpu.vector_store %arg14[%c0_62, %c0_63, %c0_64], %148 {strides = array<i32>} : memref<1x1x10xf32, #tpu.memory_space<vmem>>, vector<1x1x10xf32>,
    return
  }
  func.func @transform_0(%arg0: i32) -> (i32, i32, i32) {
    %c0_i32 = arith.constant 0 : i32
    %c0_i32_0 = arith.constant 0 : i32
    %c0_i32_1 = arith.constant 0 : i32
    return %arg0, %c0_i32, %c0_i32_0 : i32, i32, i32
  }
  func.func @transform_1(%arg0: i32) -> (i32, i32) {
    %c0_i32 = arith.constant 0 : i32
    %c0_i32_0 = arith.constant 0 : i32
    %c0_i32_1 = arith.constant 0 : i32
    return %c0_i32, %c0_i32_0 : i32, i32
  }
  func.func @transform_2(%arg0: i32) -> (i32, i32) {
    %c0_i32 = arith.constant 0 : i32
    %c0_i32_0 = arith.constant 0 : i32
    %c0_i32_1 = arith.constant 0 : i32
    return %c0_i32, %c0_i32_0 : i32, i32
  }
  func.func @transform_3(%arg0: i32) -> (i32, i32) {
    %c0_i32 = arith.constant 0 : i32
    %c0_i32_0 = arith.constant 0 : i32
    %c0_i32_1 = arith.constant 0 : i32
    return %c0_i32, %c0_i32_0 : i32, i32
  }
  func.func @transform_4(%arg0: i32) -> (i32, i32) {
    %c0_i32 = arith.constant 0 : i32
    %c0_i32_0 = arith.constant 0 : i32
    %c0_i32_1 = arith.constant 0 : i32
    return %c0_i32, %c0_i32_0 : i32, i32
  }
  func.func @transform_5(%arg0: i32) -> (i32, i32) {
    %c0_i32 = arith.constant 0 : i32
    %c0_i32_0 = arith.constant 0 : i32
    %c0_i32_1 = arith.constant 0 : i32
    return %c0_i32, %c0_i32_0 : i32, i32
  }
  func.func @transform_6(%arg0: i32) -> (i32, i32) {
    %c0_i32 = arith.constant 0 : i32
    %c0_i32_0 = arith.constant 0 : i32
    %c0_i32_1 = arith.constant 0 : i32
    return %c0_i32, %c0_i32_0 : i32, i32
  }
  func.func @transform_7(%arg0: i32) -> (i32, i32) {
    %c0_i32 = arith.constant 0 : i32
    %c0_i32_0 = arith.constant 0 : i32
    %c0_i32_1 = arith.constant 0 : i32
    return %c0_i32, %c0_i32_0 : i32, i32
  }
  func.func @transform_8(%arg0: i32) -> (i32, i32) {
    %c0_i32 = arith.constant 0 : i32
    %c0_i32_0 = arith.constant 0 : i32
    %c0_i32_1 = arith.constant 0 : i32
    return %c0_i32, %c0_i32_0 : i32, i32
  }
  func.func @transform_9(%arg0: i32) -> (i32, i32) {
    %c0_i32 = arith.constant 0 : i32
    %c0_i32_0 = arith.constant 0 : i32
    %c0_i32_1 = arith.constant 0 : i32
    return %c0_i32, %c0_i32_0 : i32, i32
  }
  func.func @transform_10(%arg0: i32) -> (i32, i32) {
    %c0_i32 = arith.constant 0 : i32
    %c0_i32_0 = arith.constant 0 : i32
    %c0_i32_1 = arith.constant 0 : i32
    return %c0_i32, %c0_i32_0 : i32, i32
  }
  func.func @transform_11(%arg0: i32) -> (i32, i32) {
    %c0_i32 = arith.constant 0 : i32
    %c0_i32_0 = arith.constant 0 : i32
    %c0_i32_1 = arith.constant 0 : i32
    return %c0_i32, %c0_i32_0 : i32, i32
  }
  func.func @transform_12(%arg0: i32) -> (i32, i32) {
    %c0_i32 = arith.constant 0 : i32
    %c0_i32_0 = arith.constant 0 : i32
    %c0_i32_1 = arith.constant 0 : i32
    return %c0_i32, %c0_i32_0 : i32, i32
  }
  func.func @transform_13(%arg0: i32) -> (i32, i32, i32) {
    %c0_i32 = arith.constant 0 : i32
    %c0_i32_0 = arith.constant 0 : i32
    %c0_i32_1 = arith.constant 0 : i32
    return %arg0, %c0_i32, %c0_i32_0 : i32, i32, i32
  }
}

</mosaic_0001>

<llo_original>
// kernel: mnist_forward_pallas.1
$region0: #{mnist_forward_pallas.1}
  #allocation0 [shape = 'u32[]', space=smem, size = 0x4, offset = 0x4, fixed_abs, tag = 'smem constant byte address 0x4 - core index']
  #allocation1 [shape = 'u32[144,128]{1,0:T(1,128)}', space=vmem, size = 0x12000, scoped, tag = 'internal scratch']
  %s0 = inlined_call_operand.vmem [shape: bf16[2,9,1152], index: 0, kind: input, shape index: {}]
  %s1 = inlined_call_operand.vmem [shape: f32[1,1152], index: 1, kind: input, shape index: {}]
  %s2 = inlined_call_operand.vmem [shape: f32[1,1152], index: 2, kind: input, shape index: {}]
  %s3 = inlined_call_operand.vmem [shape: bf16[8,9], index: 3, kind: input, shape index: {}]
  %s4 = inlined_call_operand.vmem [shape: f32[8,1], index: 4, kind: input, shape index: {}]
  %s5 = inlined_call_operand.vmem [shape: bf16[8,72], index: 5, kind: input, shape index: {}]
  %s6 = inlined_call_operand.vmem [shape: f32[8,1], index: 6, kind: input, shape index: {}]
  %s7 = inlined_call_operand.vmem [shape: bf16[8,72], index: 7, kind: input, shape index: {}]
  %s8 = inlined_call_operand.vmem [shape: f32[8,1], index: 8, kind: input, shape index: {}]
  %s9 = inlined_call_operand.vmem [shape: bf16[8,72], index: 9, kind: input, shape index: {}]
  %s10 = inlined_call_operand.vmem [shape: f32[8,1], index: 10, kind: input, shape index: {}]
  %s11 = inlined_call_operand.vmem [shape: bf16[7168,10], index: 11, kind: input, shape index: {}]
  %s12 = inlined_call_operand.vmem [shape: f32[1,10], index: 12, kind: input, shape index: {}]
  %s13 = inlined_call_operand.hbm [shape: f32[2,1,10], index: 13, kind: output, shape index: {}]
  %s14 = sld [smem:[#allocation0]]
  $region85: #{mnist_forward_pallas.1} parent=0
    _
  %s16 = ssub.s32 1, %s14
  %s17 = scalar_select 0, %s16, %s14
  $region1: #{mnist_forward_pallas.1} parent=0
    #allocation2 [shape = 'u8[1024]{0}', space=vmem, size = 0x400, scoped, tag = 'output window, operand 0']
    #allocation3 [shape = 's32[2]{0}', space=sflag, size = 0x8, scoped, tag = 'scoped memory for mnist_forward_pallas.1']
    %18 = vsyncpa [#allocation3], 0
    %s19 = scalar_lea.sflag [#allocation3], 1
    %20 = vsyncpa %s19, 0
    loop: start=0, step=1, limit=4
    $region2: #{mnist_forward_pallas.1} parent=1 // loop_pre_header
      _
    $region3: #{mnist_forward_pallas.1} parent=1 // loop_header
      %s22 = sphi 0, %s26
      %p23 = scmp.ge.s32.totalorder %s22, 4
      %s32 = sphi 0, %s34
      %s35 = sphi 0, %s32
      %s36 = sphi 0, %s35
      %s52 = sphi 0, %s36
      %s56 = sphi 0, %s56
      %s58 = sphi 0, %s56
      %s59 = sphi 0, %s58
      %s73 = sphi 0, %s59
      %s77 = sphi 0, %s77
      %s79 = sphi 0, %s77
      %s80 = sphi 0, %s79
      %s94 = sphi 0, %s80
      %s98 = sphi 0, %s98
      %s100 = sphi 0, %s98
      %s101 = sphi 0, %s100
      %s115 = sphi 0, %s101
      %s119 = sphi 0, %s119
      %s121 = sphi 0, %s119
      %s122 = sphi 0, %s121
      %s136 = sphi 0, %s122
      %s140 = sphi 0, %s140
      %s142 = sphi 0, %s140
      %s143 = sphi 0, %s142
      %s157 = sphi 0, %s143
      %s161 = sphi 0, %s161
      %s163 = sphi 0, %s161
      %s164 = sphi 0, %s163
      %s178 = sphi 0, %s164
      %s182 = sphi 0, %s182
      %s184 = sphi 0, %s182
      %s185 = sphi 0, %s184
      %s199 = sphi 0, %s185
      %s203 = sphi 0, %s203
      %s205 = sphi 0, %s203
      %s206 = sphi 0, %s205
      %s220 = sphi 0, %s206
      %s224 = sphi 0, %s224
      %s226 = sphi 0, %s224
      %s227 = sphi 0, %s226
      %s241 = sphi 0, %s227
      %s245 = sphi 0, %s245
      %s247 = sphi 0, %s245
      %s248 = sphi 0, %s247
      %s262 = sphi 0, %s248
      %s266 = sphi 0, %s266
      %s268 = sphi 0, %s266
      %s269 = sphi 0, %s268
      %s283 = sphi 0, %s269
      %s287 = sphi 0, %s287
      %s289 = sphi 0, %s287
      %s290 = sphi 0, %s289
      %s304 = sphi 0, %s290
      %s310 = sphi 0, %s312
      %s313 = sphi 0, %s310
      %s314 = sphi 0, %s313
      %s330 = sphi 0, %s314
    $region4: #{mnist_forward_pallas.1} parent=1 // loop_header_branch
      %25 = sbr.rel (%p23) target = $region8
    $region5: #{mnist_forward_pallas.1} parent=1 // loop_body
      %s27 = ssub.s32 %s22, 1
      %s28 = ssub.s32 %s22, 2
      %s29 = sadd.s32 %s22, 1
      %s30 = ssub.s32 %s22, %s29
      %p31 = scmp.eq.s32.totalorder %s30, 0
      %s33 = sadd.s32 %s32, 1
      %s34 = scalar_select %p31, %s32, %s33
      %p37 = pneg %p31
      %p38 = scmp.eq.s32.totalorder %s22, 1
      %p39 = por %p37, %p38
      %p40 = scmp.ne.s32.totalorder %s32, %s35
      %p41 = scmp.eq.s32.totalorder %s22, 0
      %p42 = por %p40, %p41
      %p43 = scmp.ne.s32.totalorder %s32, %s35
      %p44 = scmp.eq.s32.totalorder %s27, 1
      %p45 = por %p43, %p44
      %p46 = scmp.ne.s32.totalorder %s35, %s36
      %p47 = scmp.eq.s32.totalorder %s27, 0
      %p48 = por %p46, %p47
      %p49 = scmp.ne.s32.totalorder %s35, %s36
      %p50 = scmp.eq.s32.totalorder %s28, 1
      %p51 = por %p49, %p50
      %p53 = scmp.ne.s32.totalorder %s36, %s52
      %p54 = scmp.eq.s32.totalorder %s28, 0
      %p55 = por %p53, %p54
      %s57 = sadd.s32 %s56, 1
      %p60 = scmp.eq.s32.totalorder %s22, 1
      %p61 = scmp.ne.s32.totalorder %s56, %s58
      %p62 = scmp.eq.s32.totalorder %s22, 0
      %p63 = por %p61, %p62
      %p64 = scmp.ne.s32.totalorder %s56, %s58
      %p65 = scmp.eq.s32.totalorder %s27, 1
      %p66 = por %p64, %p65
      %p67 = scmp.ne.s32.totalorder %s58, %s59
      %p68 = scmp.eq.s32.totalorder %s27, 0
      %p69 = por %p67, %p68
      %p70 = scmp.ne.s32.totalorder %s58, %s59
      %p71 = scmp.eq.s32.totalorder %s28, 1
      %p72 = por %p70, %p71
      %p74 = scmp.ne.s32.totalorder %s59, %s73
      %p75 = scmp.eq.s32.totalorder %s28, 0
      %p76 = por %p74, %p75
      %s78 = sadd.s32 %s77, 1
      %p81 = scmp.eq.s32.totalorder %s22, 1
      %p82 = scmp.ne.s32.totalorder %s77, %s79
      %p83 = scmp.eq.s32.totalorder %s22, 0
      %p84 = por %p82, %p83
      %p85 = scmp.ne.s32.totalorder %s77, %s79
      %p86 = scmp.eq.s32.totalorder %s27, 1
      %p87 = por %p85, %p86
      %p88 = scmp.ne.s32.totalorder %s79, %s80
      %p89 = scmp.eq.s32.totalorder %s27, 0
      %p90 = por %p88, %p89
      %p91 = scmp.ne.s32.totalorder %s79, %s80
      %p92 = scmp.eq.s32.totalorder %s28, 1
      %p93 = por %p91, %p92
      %p95 = scmp.ne.s32.totalorder %s80, %s94
      %p96 = scmp.eq.s32.totalorder %s28, 0
      %p97 = por %p95, %p96
      %s99 = sadd.s32 %s98, 1
      %p102 = scmp.eq.s32.totalorder %s22, 1
      %p103 = scmp.ne.s32.totalorder %s98, %s100
      %p104 = scmp.eq.s32.totalorder %s22, 0
      %p105 = por %p103, %p104
      %p106 = scmp.ne.s32.totalorder %s98, %s100
      %p107 = scmp.eq.s32.totalorder %s27, 1
      %p108 = por %p106, %p107
      %p109 = scmp.ne.s32.totalorder %s100, %s101
      %p110 = scmp.eq.s32.totalorder %s27, 0
      %p111 = por %p109, %p110
      %p112 = scmp.ne.s32.totalorder %s100, %s101
      %p113 = scmp.eq.s32.totalorder %s28, 1
      %p114 = por %p112, %p113
      %p116 = scmp.ne.s32.totalorder %s101, %s115
      %p117 = scmp.eq.s32.totalorder %s28, 0
      %p118 = por %p116, %p117
      %s120 = sadd.s32 %s119, 1
      %p123 = scmp.eq.s32.totalorder %s22, 1
      %p124 = scmp.ne.s32.totalorder %s119, %s121
      %p125 = scmp.eq.s32.totalorder %s22, 0
      %p126 = por %p124, %p125
      %p127 = scmp.ne.s32.totalorder %s119, %s121
      %p128 = scmp.eq.s32.totalorder %s27, 1
      %p129 = por %p127, %p128
      %p130 = scmp.ne.s32.totalorder %s121, %s122
      %p131 = scmp.eq.s32.totalorder %s27, 0
      %p132 = por %p130, %p131
      %p133 = scmp.ne.s32.totalorder %s121, %s122
      %p134 = scmp.eq.s32.totalorder %s28, 1
      %p135 = por %p133, %p134
      %p137 = scmp.ne.s32.totalorder %s122, %s136
      %p138 = scmp.eq.s32.totalorder %s28, 0
      %p139 = por %p137, %p138
      %s141 = sadd.s32 %s140, 1
      %p144 = scmp.eq.s32.totalorder %s22, 1
      %p145 = scmp.ne.s32.totalorder %s140, %s142
      %p146 = scmp.eq.s32.totalorder %s22, 0
      %p147 = por %p145, %p146
      %p148 = scmp.ne.s32.totalorder %s140, %s142
      %p149 = scmp.eq.s32.totalorder %s27, 1
      %p150 = por %p148, %p149
      %p151 = scmp.ne.s32.totalorder %s142, %s143
      %p152 = scmp.eq.s32.totalorder %s27, 0
      %p153 = por %p151, %p152
      %p154 = scmp.ne.s32.totalorder %s142, %s143
      %p155 = scmp.eq.s32.totalorder %s28, 1
      %p156 = por %p154, %p155
      %p158 = scmp.ne.s32.totalorder %s143, %s157
      %p159 = scmp.eq.s32.totalorder %s28, 0
      %p160 = por %p158, %p159
      %s162 = sadd.s32 %s161, 1
      %p165 = scmp.eq.s32.totalorder %s22, 1
      %p166 = scmp.ne.s32.totalorder %s161, %s163
      %p167 = scmp.eq.s32.totalorder %s22, 0
      %p168 = por %p166, %p167
      %p169 = scmp.ne.s32.totalorder %s161, %s163
      %p170 = scmp.eq.s32.totalorder %s27, 1
      %p171 = por %p169, %p170
      %p172 = scmp.ne.s32.totalorder %s163, %s164
      %p173 = scmp.eq.s32.totalorder %s27, 0
      %p174 = por %p172, %p173
      %p175 = scmp.ne.s32.totalorder %s163, %s164
      %p176 = scmp.eq.s32.totalorder %s28, 1
      %p177 = por %p175, %p176
      %p179 = scmp.ne.s32.totalorder %s164, %s178
      %p180 = scmp.eq.s32.totalorder %s28, 0
      %p181 = por %p179, %p180
      %s183 = sadd.s32 %s182, 1
      %p186 = scmp.eq.s32.totalorder %s22, 1
      %p187 = scmp.ne.s32.totalorder %s182, %s184
      %p188 = scmp.eq.s32.totalorder %s22, 0
      %p189 = por %p187, %p188
      %p190 = scmp.ne.s32.totalorder %s182, %s184
      %p191 = scmp.eq.s32.totalorder %s27, 1
      %p192 = por %p190, %p191
      %p193 = scmp.ne.s32.totalorder %s184, %s185
      %p194 = scmp.eq.s32.totalorder %s27, 0
      %p195 = por %p193, %p194
      %p196 = scmp.ne.s32.totalorder %s184, %s185
      %p197 = scmp.eq.s32.totalorder %s28, 1
      %p198 = por %p196, %p197
      %p200 = scmp.ne.s32.totalorder %s185, %s199
      %p201 = scmp.eq.s32.totalorder %s28, 0
      %p202 = por %p200, %p201
      %s204 = sadd.s32 %s203, 1
      %p207 = scmp.eq.s32.totalorder %s22, 1
      %p208 = scmp.ne.s32.totalorder %s203, %s205
      %p209 = scmp.eq.s32.totalorder %s22, 0
      %p210 = por %p208, %p209
      %p211 = scmp.ne.s32.totalorder %s203, %s205
      %p212 = scmp.eq.s32.totalorder %s27, 1
      %p213 = por %p211, %p212
      %p214 = scmp.ne.s32.totalorder %s205, %s206
      %p215 = scmp.eq.s32.totalorder %s27, 0
      %p216 = por %p214, %p215
      %p217 = scmp.ne.s32.totalorder %s205, %s206
      %p218 = scmp.eq.s32.totalorder %s28, 1
      %p219 = por %p217, %p218
      %p221 = scmp.ne.s32.totalorder %s206, %s220
      %p222 = scmp.eq.s32.totalorder %s28, 0
      %p223 = por %p221, %p222
      %s225 = sadd.s32 %s224, 1
      %p228 = scmp.eq.s32.totalorder %s22, 1
      %p229 = scmp.ne.s32.totalorder %s224, %s226
      %p230 = scmp.eq.s32.totalorder %s22, 0
      %p231 = por %p229, %p230
      %p232 = scmp.ne.s32.totalorder %s224, %s226
      %p233 = scmp.eq.s32.totalorder %s27, 1
      %p234 = por %p232, %p233
      %p235 = scmp.ne.s32.totalorder %s226, %s227
      %p236 = scmp.eq.s32.totalorder %s27, 0
      %p237 = por %p235, %p236
      %p238 = scmp.ne.s32.totalorder %s226, %s227
      %p239 = scmp.eq.s32.totalorder %s28, 1
      %p240 = por %p238, %p239
      %p242 = scmp.ne.s32.totalorder %s227, %s241
      %p243 = scmp.eq.s32.totalorder %s28, 0
      %p244 = por %p242, %p243
      %s246 = sadd.s32 %s245, 1
      %p249 = scmp.eq.s32.totalorder %s22, 1
      %p250 = scmp.ne.s32.totalorder %s245, %s247
      %p251 = scmp.eq.s32.totalorder %s22, 0
      %p252 = por %p250, %p251
      %p253 = scmp.ne.s32.totalorder %s245, %s247
      %p254 = scmp.eq.s32.totalorder %s27, 1
      %p255 = por %p253, %p254
      %p256 = scmp.ne.s32.totalorder %s247, %s248
      %p257 = scmp.eq.s32.totalorder %s27, 0
      %p258 = por %p256, %p257
      %p259 = scmp.ne.s32.totalorder %s247, %s248
      %p260 = scmp.eq.s32.totalorder %s28, 1
      %p261 = por %p259, %p260
      %p263 = scmp.ne.s32.totalorder %s248, %s262
      %p264 = scmp.eq.s32.totalorder %s28, 0
      %p265 = por %p263, %p264
      %s267 = sadd.s32 %s266, 1
      %p270 = scmp.eq.s32.totalorder %s22, 1
      %p271 = scmp.ne.s32.totalorder %s266, %s268
      %p272 = scmp.eq.s32.totalorder %s22, 0
      %p273 = por %p271, %p272
      %p274 = scmp.ne.s32.totalorder %s266, %s268
      %p275 = scmp.eq.s32.totalorder %s27, 1
      %p276 = por %p274, %p275
      %p277 = scmp.ne.s32.totalorder %s268, %s269
      %p278 = scmp.eq.s32.totalorder %s27, 0
      %p279 = por %p277, %p278
      %p280 = scmp.ne.s32.totalorder %s268, %s269
      %p281 = scmp.eq.s32.totalorder %s28, 1
      %p282 = por %p280, %p281
      %p284 = scmp.ne.s32.totalorder %s269, %s283
      %p285 = scmp.eq.s32.totalorder %s28, 0
      %p286 = por %p284, %p285
      %s288 = sadd.s32 %s287, 1
      %p291 = scmp.eq.s32.totalorder %s22, 1
      %p292 = scmp.ne.s32.totalorder %s287, %s289
      %p293 = scmp.eq.s32.totalorder %s22, 0
      %p294 = por %p292, %p293
      %p295 = scmp.ne.s32.totalorder %s287, %s289
      %p296 = scmp.eq.s32.totalorder %s27, 1
      %p297 = por %p295, %p296
      %p298 = scmp.ne.s32.totalorder %s289, %s290
      %p299 = scmp.eq.s32.totalorder %s27, 0
      %p300 = por %p298, %p299
      %p301 = scmp.ne.s32.totalorder %s289, %s290
      %p302 = scmp.eq.s32.totalorder %s28, 1
      %p303 = por %p301, %p302
      %p305 = scmp.ne.s32.totalorder %s290, %s304
      %p306 = scmp.eq.s32.totalorder %s28, 0
      %p307 = por %p305, %p306
      %s308 = ssub.s32 %s22, %s29
      %p309 = scmp.eq.s32.totalorder %s308, 0
      %s311 = sadd.s32 %s310, 1
      %s312 = scalar_select %p309, %s310, %s311
      %p315 = pneg %p309
      %p316 = scmp.eq.s32.totalorder %s22, 1
      %p317 = por %p315, %p316
      %p318 = scmp.ne.s32.totalorder %s310, %s313
      %p319 = scmp.eq.s32.totalorder %s22, 0
      %p320 = por %p318, %p319
      %p321 = scmp.ne.s32.totalorder %s310, %s313
      %p322 = scmp.eq.s32.totalorder %s27, 1
      %p323 = por %p321, %p322
      %p324 = scmp.ne.s32.totalorder %s313, %s314
      %p325 = scmp.eq.s32.totalorder %s27, 0
      %p326 = por %p324, %p325
      %p327 = scmp.ne.s32.totalorder %s313, %s314
      %p328 = scmp.eq.s32.totalorder %s28, 1
      %p329 = por %p327, %p328
      %p331 = scmp.ne.s32.totalorder %s314, %s330
      %p332 = scmp.eq.s32.totalorder %s28, 0
      %p333 = por %p331, %p332
      %p334 = scmp.le.s32.totalorder 1, %s22
      %p335 = scmp.lt.s32.totalorder %s22, 3
      %p336 = pnand %p334, %p335
      %p337 = pneg %p336
      // Predicated region
      $region9: #{mnist_forward_pallas.1} parent=5 // pred_check
        _
      $region10: #{mnist_forward_pallas.1} parent=5 // pred_check_branch
        %339 = sbr.rel (%p336) target = $region12
      $region11: #{mnist_forward_pallas.1} parent=5 // pred_region
        %s340 = ssub.s32 %s22, 1
        // Predicated region
        $region13: #{mnist_forward_pallas.1} parent=11 // pred_check
          %p341 = pneg %p69
        $region14: #{mnist_forward_pallas.1} parent=11 // pred_check_branch
          %343 = sbr.rel (%p341) target = $region16
        $region15: #{mnist_forward_pallas.1} parent=11 // pred_region
          _
        $region16: #{mnist_forward_pallas.1} parent=11 // pred_fallthru
          _
        // Predicated region
        $region17: #{mnist_forward_pallas.1} parent=11 // pred_check
          %p344 = pneg %p90
        $region18: #{mnist_forward_pallas.1} parent=11 // pred_check_branch
          %346 = sbr.rel (%p344) target = $region20
        $region19: #{mnist_forward_pallas.1} parent=11 // pred_region
          _
        $region20: #{mnist_forward_pallas.1} parent=11 // pred_fallthru
          _
        // Predicated region
        $region21: #{mnist_forward_pallas.1} parent=11 // pred_check
          %p347 = pneg %p111
        $region22: #{mnist_forward_pallas.1} parent=11 // pred_check_branch
          %349 = sbr.rel (%p347) target = $region24
        $region23: #{mnist_forward_pallas.1} parent=11 // pred_region
          _
        $region24: #{mnist_forward_pallas.1} parent=11 // pred_fallthru
          _
        // Predicated region
        $region25: #{mnist_forward_pallas.1} parent=11 // pred_check
          %p350 = pneg %p132
        $region26: #{mnist_forward_pallas.1} parent=11 // pred_check_branch
          %352 = sbr.rel (%p350) target = $region28
        $region27: #{mnist_forward_pallas.1} parent=11 // pred_region
          _
        $region28: #{mnist_forward_pallas.1} parent=11 // pred_fallthru
          _
        // Predicated region
        $region29: #{mnist_forward_pallas.1} parent=11 // pred_check
          %p353 = pneg %p153
        $region30: #{mnist_forward_pallas.1} parent=11 // pred_check_branch
          %355 = sbr.rel (%p353) target = $region32
        $region31: #{mnist_forward_pallas.1} parent=11 // pred_region
          _
        $region32: #{mnist_forward_pallas.1} parent=11 // pred_fallthru
          _
        // Predicated region
        $region33: #{mnist_forward_pallas.1} parent=11 // pred_check
          %p356 = pneg %p174
        $region34: #{mnist_forward_pallas.1} parent=11 // pred_check_branch
          %358 = sbr.rel (%p356) target = $region36
        $region35: #{mnist_forward_pallas.1} parent=11 // pred_region
          _
        $region36: #{mnist_forward_pallas.1} parent=11 // pred_fallthru
          _
        // Predicated region
        $region37: #{mnist_forward_pallas.1} parent=11 // pred_check
          %p359 = pneg %p195
        $region38: #{mnist_forward_pallas.1} parent=11 // pred_check_branch
          %361 = sbr.rel (%p359) target = $region40
        $region39: #{mnist_forward_pallas.1} parent=11 // pred_region
          _
        $region40: #{mnist_forward_pallas.1} parent=11 // pred_fallthru
          _
        // Predicated region
        $region41: #{mnist_forward_pallas.1} parent=11 // pred_check
          %p362 = pneg %p216
        $region42: #{mnist_forward_pallas.1} parent=11 // pred_check_branch
          %364 = sbr.rel (%p362) target = $region44
        $region43: #{mnist_forward_pallas.1} parent=11 // pred_region
          _
        $region44: #{mnist_forward_pallas.1} parent=11 // pred_fallthru
          _
        // Predicated region
        $region45: #{mnist_forward_pallas.1} parent=11 // pred_check
          %p365 = pneg %p237
        $region46: #{mnist_forward_pallas.1} parent=11 // pred_check_branch
          %367 = sbr.rel (%p365) target = $region48
        $region47: #{mnist_forward_pallas.1} parent=11 // pred_region
          _
        $region48: #{mnist_forward_pallas.1} parent=11 // pred_fallthru
          _
        // Predicated region
        $region49: #{mnist_forward_pallas.1} parent=11 // pred_check
          %p368 = pneg %p258
        $region50: #{mnist_forward_pallas.1} parent=11 // pred_check_branch
          %370 = sbr.rel (%p368) target = $region52
        $region51: #{mnist_forward_pallas.1} parent=11 // pred_region
          _
        $region52: #{mnist_forward_pallas.1} parent=11 // pred_fallthru
          _
        // Predicated region
        $region53: #{mnist_forward_pallas.1} parent=11 // pred_check
          %p371 = pneg %p279
        $region54: #{mnist_forward_pallas.1} parent=11 // pred_check_branch
          %373 = sbr.rel (%p371) target = $region56
        $region55: #{mnist_forward_pallas.1} parent=11 // pred_region
          _
        $region56: #{mnist_forward_pallas.1} parent=11 // pred_fallthru
          _
        // Predicated region
        $region57: #{mnist_forward_pallas.1} parent=11 // pred_check
          %p374 = pneg %p300
        $region58: #{mnist_forward_pallas.1} parent=11 // pred_check_branch
          %376 = sbr.rel (%p374) target = $region60
        $region59: #{mnist_forward_pallas.1} parent=11 // pred_region
          _
        $region60: #{mnist_forward_pallas.1} parent=11 // pred_fallthru
          _
      $region12: #{mnist_forward_pallas.1} parent=5 // pred_fallthru
        _
      %p377 = scmp.lt.s32.totalorder %s22, 2
      // Predicated region
      $region61: #{mnist_forward_pallas.1} parent=5 // pred_check
        %p378 = pneg %p377
      $region62: #{mnist_forward_pallas.1} parent=5 // pred_check_branch
        %380 = sbr.rel (%p378) target = $region64
      $region63: #{mnist_forward_pallas.1} parent=5 // pred_region
        // Predicated region
        $region65: #{mnist_forward_pallas.1} parent=63 // pred_check
          %p381 = pneg %p42
        $region66: #{mnist_forward_pallas.1} parent=63 // pred_check_branch
          %383 = sbr.rel (%p381) target = $region68
        $region67: #{mnist_forward_pallas.1} parent=63 // pred_region
          %p384 = scmp.lt.s32.totalorder %s22, 1
          %s385 = scalar_select %p384, %s22, 1
          %s386 = smul.addr %s385, 18
          %s387 = smul.addr %s386, 4
          %s388 = scalar_lea.vmem %s0, %s387
        $region68: #{mnist_forward_pallas.1} parent=63 // pred_fallthru
          _
      $region64: #{mnist_forward_pallas.1} parent=5 // pred_fallthru
        _
      %p389 = scmp.le.s32.totalorder 1, %s22
      %p390 = scmp.lt.s32.totalorder %s22, 3
      %p391 = pnand %p389, %p390
      %p392 = pneg %p391
      // Predicated region
      $region69: #{mnist_forward_pallas.1} parent=5 // pred_check
        _
      $region70: #{mnist_forward_pallas.1} parent=5 // pred_check_branch
        %394 = sbr.rel (%p391) target = $region72
      $region71: #{mnist_forward_pallas.1} parent=5 // pred_region
        %s395 = ssub.s32 %s22, 1
        %p396 = scmp.lt.s32.totalorder %s27, 1
        %s397 = scalar_select %p396, %s27, 1
        %s398 = smul.addr %s397, 18
        %s399 = smul.addr %s398, 4
        %s400 = scalar_lea.vmem %s0, %s399
        %p401 = pneg %p48
        %p402 = pneg %p45
        %p403 = pneg %p69
        %p404 = pneg %p66
        %p405 = pneg %p90
        %p406 = pneg %p87
        %p407 = pneg %p111
        %p408 = pneg %p108
        %p409 = pneg %p132
        %p410 = pneg %p129
        %p411 = pneg %p153
        %p412 = pneg %p150
        %p413 = pneg %p174
        %p414 = pneg %p171
        %p415 = pneg %p195
        %p416 = pneg %p192
        %p417 = pneg %p216
        %p418 = pneg %p213
        %p419 = pneg %p237
        %p420 = pneg %p234
        %p421 = pneg %p258
        %p422 = pneg %p255
        %p423 = pneg %p279
        %p424 = pneg %p276
        %p425 = pneg %p300
        %p426 = pneg %p297
        %p427 = pneg %p326
        %p428 = pneg %p323
        %s429 = sand.u32 %s313, 1
        %s430 = scalar_lea.sflag [#allocation3], %s429
        %s431 = sand.u32 %s313, 1
        %s432 = scalar_lea.vmem [#allocation2], %s431
        %p433 = scmp.lt.s32.totalorder %s27, 1
        %s434 = scalar_select %p433, %s27, 1
        %s435 = smul.addr %s434, 18
        %s436 = smul.addr %s435, 4
        %s437 = scalar_lea.vmem %s0, %s436
        %v439 = vld [vmem:[%s1] sm:$0xff]
        %v440 = vld [vmem:[%s1 + $0x8] sm:$0x1]
        %v441 = vld [vmem:[%s2] sm:$0xff]
        %v442 = vld [vmem:[%s2 + $0x8] sm:$0x1]
        %v443 = vld [vmem:[%s3] sm:$0xf]
        %v444 = vld [vmem:[%s437] sm:$0xff]
        %v445 = vld [vmem:[%s437 + $0x8] sm:$0xff]
        %v446 = vld [vmem:[%s437 + $0x10] sm:$0xff]
        %v447 = vld [vmem:[%s437 + $0x18] sm:$0xff]
        %v448 = vld [vmem:[%s437 + $0x20] sm:$0xf]
        %v449 = vld [vmem:[%s437 + $0x24] sm:$0x11]
        %v450 = vld [vmem:[%s437 + $0x2c] sm:$0x11]
        %v451 = vld [vmem:[%s437 + $0x34] sm:$0x11]
        %v452 = vld [vmem:[%s437 + $0x3c] sm:$0x11]
        %v453 = vld [vmem:[%s437 + $0x44] sm:$0x1]
        %v454 = vld [vmem:[%s4] sm:$0xff]
        %456 = vset.pattern.permute.xlu0 0
        %457 = vperm.xlu0 %456, %v454
        %v458 = vpop.permute.xlu0 %457
        %v470 = vunpack.c.l.b16 %v444
        %v471 = vunpack.c.h.b16 %v444
        %v472 = vunpack.c.l.b16 %v445
        %v473 = vunpack.c.h.b16 %v445
        %v474 = vunpack.c.l.b16 %v446
        %v475 = vunpack.c.h.b16 %v446
        %v476 = vunpack.c.l.b16 %v447
        %v477 = vunpack.c.h.b16 %v447
        %v478 = vunpack.c.l.b16 %v448
        %v479 = vunpack.c.l.b16 %v449
        %v480 = vunpack.c.h.b16 %v449
        %v481 = vunpack.c.l.b16 %v450
        %v482 = vunpack.c.h.b16 %v450
        %v483 = vunpack.c.l.b16 %v451
        %v484 = vunpack.c.h.b16 %v451
        %v485 = vunpack.c.l.b16 %v452
        %v486 = vunpack.c.h.b16 %v452
        %v487 = vunpack.c.l.b16 %v453
        %v488 = vpack.c.b16 %v479, %v470
        %v489 = vpack.c.b16 %v480, %v471
        %v490 = vpack.c.b16 %v481, %v472
        %v491 = vpack.c.b16 %v482, %v473
        %v492 = vpack.c.b16 %v483, %v474
        %v493 = vpack.c.b16 %v484, %v475
        %v494 = vpack.c.b16 %v485, %v476
        %v495 = vpack.c.b16 %v486, %v477
        %v496 = vpack.c.b16 %v487, %v478
        %vm497 = vcmask 72704
        %v499 = vsel %vm497, %v443, 0
        %vm501 = vcmask 1043456
        %vm502 = vcmask 1044480
        %v503 = vsel %vm501, 4294967295, 65535
        %v504 = vsel %vm502, %v503, 0
        %v506 = vand.u32 %v488, %v504
        %v509 = vand.u32 %v489, %v504
        %v512 = vand.u32 %v490, %v504
        %v515 = vand.u32 %v491, %v504
        %v518 = vand.u32 %v492, %v504
        %v521 = vand.u32 %v493, %v504
        %v524 = vand.u32 %v494, %v504
        %v527 = vand.u32 %v495, %v504
        %v530 = vand.u32 %v496, %v504
        %532 = vmatprep.subr.bf16.mxu0 0
        %533 = vmatpush1.bf16.msra.mxu0 0
        %534 = vmatprep.subr.bf16.mxu0 0
        %535 = vmatpush1.bf16.msra.mxu0 0
        %536 = vmatprep.subr.bf16.mxu0 0
        %537 = vmatpush1.bf16.msra.mxu0 0
        %538 = vmatprep.subr.bf16.mxu0 0
        %539 = vmatpush1.bf16.msra.mxu0 0
        %540 = vmatprep.subr.bf16.mxu0 0
        %541 = vmatpush1.bf16.msra.mxu0 0
        %542 = vmatprep.subr.bf16.mxu0 0
        %543 = vmatpush1.bf16.msra.mxu0 0
        %544 = vmatprep.subr.bf16.mxu0 0
        %545 = vmatpush1.bf16.msra.mxu0 0
        %546 = vmatprep.subr.bf16.mxu0 %v509
        %547 = vmatpush1.bf16.msra.mxu0 %v506
        %548 = vmatprep.subr.bf16.mxu0 0
        %549 = vmatpush2.bf16.msra.mxu0 0
        %550 = vmatprep.subr.bf16.mxu0 0
        %551 = vmatpush2.bf16.msra.mxu0 0
        %552 = vmatprep.subr.bf16.mxu0 0
        %553 = vmatpush2.bf16.msra.mxu0 0
        %554 = vmatprep.subr.bf16.mxu0 0
        %555 = vmatpush2.bf16.msra.mxu0 0
        %556 = vmatprep.subr.bf16.mxu0 0
        %557 = vmatpush2.bf16.msra.mxu0 0
        %558 = vmatprep.subr.bf16.mxu0 0
        %559 = vmatpush2.bf16.msra.mxu0 0
        %560 = vmatprep.subr.bf16.mxu0 0
        %561 = vmatpush2.bf16.msra.mxu0 0
        %562 = vmatprep.subr.bf16.mxu0 0
        %563 = vmatpush2.bf16.msra.mxu0 0
        %564 = vmatprep.mubr.bf16.mxu0 0
        %565 = vmatmul.mubr.bf16.gmra.mxu0 %v499
        %v566 = vpop.f32.mrf.mxu0
        %v567 = vadd.f32 %v458, %v566
        %v568 = vpop.f32.mrf.mxu0
        %v569 = vadd.f32 %v458, %v568
        %v570 = vpop.f32.mrf.mxu0
        %v571 = vpop.f32.mrf.mxu0
        %572 = vdwg.mxu0
        %573 = vmatprep.subr.bf16.mxu0 0
        %574 = vmatpush1.bf16.msra.mxu0 0
        %575 = vmatprep.subr.bf16.mxu0 0
        %576 = vmatpush1.bf16.msra.mxu0 0
        %577 = vmatprep.subr.bf16.mxu0 0
        %578 = vmatpush1.bf16.msra.mxu0 0
        %579 = vmatprep.subr.bf16.mxu0 0
        %580 = vmatpush1.bf16.msra.mxu0 0
        %581 = vmatprep.subr.bf16.mxu0 0
        %582 = vmatpush1.bf16.msra.mxu0 0
        %583 = vmatprep.subr.bf16.mxu0 0
        %584 = vmatpush1.bf16.msra.mxu0 0
        %585 = vmatprep.subr.bf16.mxu0 0
        %586 = vmatpush1.bf16.msra.mxu0 0
        %587 = vmatprep.subr.bf16.mxu0 %v515
        %588 = vmatpush1.bf16.msra.mxu0 %v512
        %589 = vmatprep.subr.bf16.mxu0 0
        %590 = vmatpush2.bf16.msra.mxu0 0
        %591 = vmatprep.subr.bf16.mxu0 0
        %592 = vmatpush2.bf16.msra.mxu0 0
        %593 = vmatprep.subr.bf16.mxu0 0
        %594 = vmatpush2.bf16.msra.mxu0 0
        %595 = vmatprep.subr.bf16.mxu0 0
        %596 = vmatpush2.bf16.msra.mxu0 0
        %597 = vmatprep.subr.bf16.mxu0 0
        %598 = vmatpush2.bf16.msra.mxu0 0
        %599 = vmatprep.subr.bf16.mxu0 0
        %600 = vmatpush2.bf16.msra.mxu0 0
        %601 = vmatprep.subr.bf16.mxu0 0
        %602 = vmatpush2.bf16.msra.mxu0 0
        %603 = vmatprep.subr.bf16.mxu0 0
        %604 = vmatpush2.bf16.msra.mxu0 0
        %605 = vmatprep.mubr.bf16.mxu0 0
        %606 = vmatmul.mubr.bf16.gmra.mxu0 %v499
        %v607 = vpop.f32.mrf.mxu0
        %v608 = vadd.f32 %v458, %v607
        %v609 = vpop.f32.mrf.mxu0
        %v610 = vadd.f32 %v458, %v609
        %v611 = vpop.f32.mrf.mxu0
        %v612 = vpop.f32.mrf.mxu0
        %613 = vdwg.mxu0
        %614 = vmatprep.subr.bf16.mxu0 0
        %615 = vmatpush1.bf16.msra.mxu0 0
        %616 = vmatprep.subr.bf16.mxu0 0
        %617 = vmatpush1.bf16.msra.mxu0 0
        %618 = vmatprep.subr.bf16.mxu0 0
        %619 = vmatpush1.bf16.msra.mxu0 0
        %620 = vmatprep.subr.bf16.mxu0 0
        %621 = vmatpush1.bf16.msra.mxu0 0
        %622 = vmatprep.subr.bf16.mxu0 0
        %623 = vmatpush1.bf16.msra.mxu0 0
        %624 = vmatprep.subr.bf16.mxu0 0
        %625 = vmatpush1.bf16.msra.mxu0 0
        %626 = vmatprep.subr.bf16.mxu0 0
        %627 = vmatpush1.bf16.msra.mxu0 0
        %628 = vmatprep.subr.bf16.mxu0 %v521
        %629 = vmatpush1.bf16.msra.mxu0 %v518
        %630 = vmatprep.subr.bf16.mxu0 0
        %631 = vmatpush2.bf16.msra.mxu0 0
        %632 = vmatprep.subr.bf16.mxu0 0
        %633 = vmatpush2.bf16.msra.mxu0 0
        %634 = vmatprep.subr.bf16.mxu0 0
        %635 = vmatpush2.bf16.msra.mxu0 0
        %636 = vmatprep.subr.bf16.mxu0 0
        %637 = vmatpush2.bf16.msra.mxu0 0
        %638 = vmatprep.subr.bf16.mxu0 0
        %639 = vmatpush2.bf16.msra.mxu0 0
        %640 = vmatprep.subr.bf16.mxu0 0
        %641 = vmatpush2.bf16.msra.mxu0 0
        %642 = vmatprep.subr.bf16.mxu0 0
        %643 = vmatpush2.bf16.msra.mxu0 0
        %644 = vmatprep.subr.bf16.mxu0 0
        %645 = vmatpush2.bf16.msra.mxu0 0
        %646 = vmatprep.mubr.bf16.mxu0 0
        %647 = vmatmul.mubr.bf16.gmra.mxu0 %v499
        %v648 = vpop.f32.mrf.mxu0
        %v649 = vadd.f32 %v458, %v648
        %v650 = vpop.f32.mrf.mxu0
        %v651 = vadd.f32 %v458, %v650
        %v652 = vpop.f32.mrf.mxu0
        %v653 = vpop.f32.mrf.mxu0
        %654 = vdwg.mxu0
        %655 = vmatprep.subr.bf16.mxu0 0
        %656 = vmatpush1.bf16.msra.mxu0 0
        %657 = vmatprep.subr.bf16.mxu0 0
        %658 = vmatpush1.bf16.msra.mxu0 0
        %659 = vmatprep.subr.bf16.mxu0 0
        %660 = vmatpush1.bf16.msra.mxu0 0
        %661 = vmatprep.subr.bf16.mxu0 0
        %662 = vmatpush1.bf16.msra.mxu0 0
        %663 = vmatprep.subr.bf16.mxu0 0
        %664 = vmatpush1.bf16.msra.mxu0 0
        %665 = vmatprep.subr.bf16.mxu0 0
        %666 = vmatpush1.bf16.msra.mxu0 0
        %667 = vmatprep.subr.bf16.mxu0 0
        %668 = vmatpush1.bf16.msra.mxu0 0
        %669 = vmatprep.subr.bf16.mxu0 %v527
        %670 = vmatpush1.bf16.msra.mxu0 %v524
        %671 = vmatprep.subr.bf16.mxu0 0
        %672 = vmatpush2.bf16.msra.mxu0 0
        %673 = vmatprep.subr.bf16.mxu0 0
        %674 = vmatpush2.bf16.msra.mxu0 0
        %675 = vmatprep.subr.bf16.mxu0 0
        %676 = vmatpush2.bf16.msra.mxu0 0
        %677 = vmatprep.subr.bf16.mxu0 0
        %678 = vmatpush2.bf16.msra.mxu0 0
        %679 = vmatprep.subr.bf16.mxu0 0
        %680 = vmatpush2.bf16.msra.mxu0 0
        %681 = vmatprep.subr.bf16.mxu0 0
        %682 = vmatpush2.bf16.msra.mxu0 0
        %683 = vmatprep.subr.bf16.mxu0 0
        %684 = vmatpush2.bf16.msra.mxu0 0
        %685 = vmatprep.subr.bf16.mxu0 0
        %686 = vmatpush2.bf16.msra.mxu0 0
        %687 = vmatprep.mubr.bf16.mxu0 0
        %688 = vmatmul.mubr.bf16.gmra.mxu0 %v499
        %v689 = vpop.f32.mrf.mxu0
        %v690 = vadd.f32 %v458, %v689
        %v691 = vpop.f32.mrf.mxu0
        %v692 = vadd.f32 %v458, %v691
        %v693 = vpop.f32.mrf.mxu0
        %v694 = vpop.f32.mrf.mxu0
        %695 = vdwg.mxu0
        %696 = vmatprep.subr.bf16.mxu0 0
        %697 = vmatpush1.bf16.msra.mxu0 0
        %698 = vmatprep.subr.bf16.mxu0 0
        %699 = vmatpush1.bf16.msra.mxu0 0
        %700 = vmatprep.subr.bf16.mxu0 0
        %701 = vmatpush1.bf16.msra.mxu0 0
        %702 = vmatprep.subr.bf16.mxu0 0
        %703 = vmatpush1.bf16.msra.mxu0 0
        %704 = vmatprep.subr.bf16.mxu0 0
        %705 = vmatpush1.bf16.msra.mxu0 0
        %706 = vmatprep.subr.bf16.mxu0 0
        %707 = vmatpush1.bf16.msra.mxu0 0
        %708 = vmatprep.subr.bf16.mxu0 0
        %709 = vmatpush1.bf16.msra.mxu0 0
        %710 = vmatprep.subr.bf16.mxu0 0
        %711 = vmatpush1.bf16.msra.mxu0 %v530
        %712 = vmatprep.subr.bf16.mxu0 0
        %713 = vmatpush2.bf16.msra.mxu0 0
        %714 = vmatprep.subr.bf16.mxu0 0
        %715 = vmatpush2.bf16.msra.mxu0 0
        %716 = vmatprep.subr.bf16.mxu0 0
        %717 = vmatpush2.bf16.msra.mxu0 0
        %718 = vmatprep.subr.bf16.mxu0 0
        %719 = vmatpush2.bf16.msra.mxu0 0
        %720 = vmatprep.subr.bf16.mxu0 0
        %721 = vmatpush2.bf16.msra.mxu0 0
        %722 = vmatprep.subr.bf16.mxu0 0
        %723 = vmatpush2.bf16.msra.mxu0 0
        %724 = vmatprep.subr.bf16.mxu0 0
        %725 = vmatpush2.bf16.msra.mxu0 0
        %726 = vmatprep.subr.bf16.mxu0 0
        %727 = vmatpush2.bf16.msra.mxu0 0
        %728 = vmatprep.mubr.bf16.mxu0 0
        %729 = vmatmul.mubr.bf16.gmra.mxu0 %v499
        %v730 = vpop.f32.mrf.mxu0
        %v731 = vadd.f32 %v458, %v730
        %v732 = vpop.f32.mrf.mxu0
        %v733 = vpop.f32.mrf.mxu0
        %v734 = vpop.f32.mrf.mxu0
        %735 = vdwg.mxu0
        %v736 = vmax.f32 %v567, 0.0
        %v737 = vmax.f32 %v569, 0.0
        %v738 = vmax.f32 %v608, 0.0
        %v739 = vmax.f32 %v610, 0.0
        %v740 = vmax.f32 %v649, 0.0
        %v741 = vmax.f32 %v651, 0.0
        %v742 = vmax.f32 %v690, 0.0
        %v743 = vmax.f32 %v692, 0.0
        %v744 = vmax.f32 %v731, 0.0
        %v747 = vlaneseq
        %v748 = vshrl.u32 %v747, 7
        %v749 = vsub.s32 0, %v748
        %v750 = vrot.slane %v439, %v749
        %v751 = vlaneseq
        %v752 = vshrl.u32 %v751, 7
        %v753 = vsub.s32 1, %v752
        %v754 = vrot.slane %v439, %v753
        %v755 = vlaneseq
        %v756 = vshrl.u32 %v755, 7
        %v757 = vsub.s32 2, %v756
        %v758 = vrot.slane %v439, %v757
        %v759 = vlaneseq
        %v760 = vshrl.u32 %v759, 7
        %v761 = vsub.s32 3, %v760
        %v762 = vrot.slane %v439, %v761
        %v763 = vlaneseq
        %v764 = vshrl.u32 %v763, 7
        %v765 = vsub.s32 4, %v764
        %v766 = vrot.slane %v439, %v765
        %v767 = vlaneseq
        %v768 = vshrl.u32 %v767, 7
        %v769 = vsub.s32 5, %v768
        %v770 = vrot.slane %v439, %v769
        %v771 = vlaneseq
        %v772 = vshrl.u32 %v771, 7
        %v773 = vsub.s32 6, %v772
        %v774 = vrot.slane %v439, %v773
        %v775 = vlaneseq
        %v776 = vshrl.u32 %v775, 7
        %v777 = vsub.s32 7, %v776
        %v778 = vrot.slane %v439, %v777
        %v779 = vlaneseq
        %v780 = vshrl.u32 %v779, 7
        %v781 = vsub.s32 0, %v780
        %v782 = vrot.slane %v440, %v781
        %v792 = vmul.f32 %v736, %v750
        %v793 = vmul.f32 %v737, %v754
        %v794 = vmul.f32 %v738, %v758
        %v795 = vmul.f32 %v739, %v762
        %v796 = vmul.f32 %v740, %v766
        %v797 = vmul.f32 %v741, %v770
        %v798 = vmul.f32 %v742, %v774
        %v799 = vmul.f32 %v743, %v778
        %v800 = vmul.f32 %v744, %v782
        %810 = vrot.lane.b32.xlu0 %v792, 33
        %v811 = vpop.permute.xlu0 %810
        %812 = vrot.lane.b32.xlu0 %v793, 33
        %v813 = vpop.permute.xlu0 %812
        %814 = vrot.lane.b32.xlu0 %v794, 33
        %v815 = vpop.permute.xlu0 %814
        %816 = vrot.lane.b32.xlu0 %v795, 33
        %v817 = vpop.permute.xlu0 %816
        %818 = vrot.lane.b32.xlu0 %v796, 33
        %v819 = vpop.permute.xlu0 %818
        %820 = vrot.lane.b32.xlu0 %v797, 33
        %v821 = vpop.permute.xlu0 %820
        %822 = vrot.lane.b32.xlu0 %v798, 33
        %v823 = vpop.permute.xlu0 %822
        %824 = vrot.lane.b32.xlu0 %v799, 33
        %v825 = vpop.permute.xlu0 %824
        %826 = vrot.lane.b32.xlu0 %v800, 33
        %v827 = vpop.permute.xlu0 %826
        %vm828 = vcmask 269312
        %v829 = vsel %vm828, %v811, %v813
        %v830 = vsel %vm828, %v813, %v815
        %v831 = vsel %vm828, %v815, %v817
        %v832 = vsel %vm828, %v817, %v819
        %v833 = vsel %vm828, %v819, %v821
        %v834 = vsel %vm828, %v821, %v823
        %v835 = vsel %vm828, %v823, %v825
        %v836 = vsel %vm828, %v825, %v827
        %v846 = vsel %vm828, 0.0, %v811
        %847 = vrot.lane.b32.xlu0 %v792, 32
        %v848 = vpop.permute.xlu0 %847
        %849 = vrot.lane.b32.xlu0 %v793, 32
        %v850 = vpop.permute.xlu0 %849
        %851 = vrot.lane.b32.xlu0 %v794, 32
        %v852 = vpop.permute.xlu0 %851
        %853 = vrot.lane.b32.xlu0 %v795, 32
        %v854 = vpop.permute.xlu0 %853
        %855 = vrot.lane.b32.xlu0 %v796, 32
        %v856 = vpop.permute.xlu0 %855
        %857 = vrot.lane.b32.xlu0 %v797, 32
        %v858 = vpop.permute.xlu0 %857
        %859 = vrot.lane.b32.xlu0 %v798, 32
        %v860 = vpop.permute.xlu0 %859
        %861 = vrot.lane.b32.xlu0 %v799, 32
        %v862 = vpop.permute.xlu0 %861
        %863 = vrot.lane.b32.xlu0 %v800, 32
        %v864 = vpop.permute.xlu0 %863
        %vm865 = vcmask 261120
        %v866 = vsel %vm865, %v848, %v850
        %v867 = vsel %vm865, %v850, %v852
        %v868 = vsel %vm865, %v852, %v854
        %v869 = vsel %vm865, %v854, %v856
        %v870 = vsel %vm865, %v856, %v858
        %v871 = vsel %vm865, %v858, %v860
        %v872 = vsel %vm865, %v860, %v862
        %v873 = vsel %vm865, %v862, %v864
        %v883 = vsel %vm865, 0.0, %v848
        %884 = vrot.lane.b32.xlu0 %v792, 31
        %v885 = vpop.permute.xlu0 %884
        %886 = vrot.lane.b32.xlu0 %v793, 31
        %v887 = vpop.permute.xlu0 %886
        %888 = vrot.lane.b32.xlu0 %v794, 31
        %v889 = vpop.permute.xlu0 %888
        %890 = vrot.lane.b32.xlu0 %v795, 31
        %v891 = vpop.permute.xlu0 %890
        %892 = vrot.lane.b32.xlu0 %v796, 31
        %v893 = vpop.permute.xlu0 %892
        %894 = vrot.lane.b32.xlu0 %v797, 31
        %v895 = vpop.permute.xlu0 %894
        %896 = vrot.lane.b32.xlu0 %v798, 31
        %v897 = vpop.permute.xlu0 %896
        %898 = vrot.lane.b32.xlu0 %v799, 31
        %v899 = vpop.permute.xlu0 %898
        %900 = vrot.lane.b32.xlu0 %v800, 31
        %v901 = vpop.permute.xlu0 %900
        %vm902 = vcmask 252928
        %v903 = vsel %vm902, %v885, %v887
        %v904 = vsel %vm902, %v887, %v889
        %v905 = vsel %vm902, %v889, %v891
        %v906 = vsel %vm902, %v891, %v893
        %v907 = vsel %vm902, %v893, %v895
        %v908 = vsel %vm902, %v895, %v897
        %v909 = vsel %vm902, %v897, %v899
        %v910 = vsel %vm902, %v899, %v901
        %v920 = vsel %vm902, 0.0, %v885
        %921 = vrot.lane.b32.xlu0 %v792, 1
        %v922 = vpop.permute.xlu0 %921
        %923 = vrot.lane.b32.xlu0 %v793, 1
        %v924 = vpop.permute.xlu0 %923
        %925 = vrot.lane.b32.xlu0 %v794, 1
        %v926 = vpop.permute.xlu0 %925
        %927 = vrot.lane.b32.xlu0 %v795, 1
        %v928 = vpop.permute.xlu0 %927
        %929 = vrot.lane.b32.xlu0 %v796, 1
        %v930 = vpop.permute.xlu0 %929
        %931 = vrot.lane.b32.xlu0 %v797, 1
        %v932 = vpop.permute.xlu0 %931
        %933 = vrot.lane.b32.xlu0 %v798, 1
        %v934 = vpop.permute.xlu0 %933
        %935 = vrot.lane.b32.xlu0 %v799, 1
        %v936 = vpop.permute.xlu0 %935
        %937 = vrot.lane.b32.xlu0 %v800, 1
        %v938 = vpop.permute.xlu0 %937
        %vm939 = vcmask 7168
        %v940 = vsel %vm939, %v922, %v924
        %v941 = vsel %vm939, %v924, %v926
        %v942 = vsel %vm939, %v926, %v928
        %v943 = vsel %vm939, %v928, %v930
        %v944 = vsel %vm939, %v930, %v932
        %v945 = vsel %vm939, %v932, %v934
        %v946 = vsel %vm939, %v934, %v936
        %v947 = vsel %vm939, %v936, %v938
        %v957 = vsel %vm939, 0.0, %v922
        %958 = vrot.lane.b32.xlu0 %v792, 127
        %v959 = vpop.permute.xlu0 %958
        %960 = vrot.lane.b32.xlu0 %v793, 127
        %v961 = vpop.permute.xlu0 %960
        %962 = vrot.lane.b32.xlu0 %v794, 127
        %v963 = vpop.permute.xlu0 %962
        %964 = vrot.lane.b32.xlu0 %v795, 127
        %v965 = vpop.permute.xlu0 %964
        %966 = vrot.lane.b32.xlu0 %v796, 127
        %v967 = vpop.permute.xlu0 %966
        %968 = vrot.lane.b32.xlu0 %v797, 127
        %v969 = vpop.permute.xlu0 %968
        %970 = vrot.lane.b32.xlu0 %v798, 127
        %v971 = vpop.permute.xlu0 %970
        %972 = vrot.lane.b32.xlu0 %v799, 127
        %v973 = vpop.permute.xlu0 %972
        %974 = vrot.lane.b32.xlu0 %v800, 127
        %v975 = vpop.permute.xlu0 %974
        %vm976 = vcmask 1039360
        %v977 = vsel %vm976, %v959, %v961
        %v978 = vsel %vm976, %v961, %v963
        %v979 = vsel %vm976, %v963, %v965
        %v980 = vsel %vm976, %v965, %v967
        %v981 = vsel %vm976, %v967, %v969
        %v982 = vsel %vm976, %v969, %v971
        %v983 = vsel %vm976, %v971, %v973
        %v984 = vsel %vm976, %v973, %v975
        %v994 = vsel %vm976, %v975, 0.0
        %995 = vrot.lane.b32.xlu0 %v792, 97
        %v996 = vpop.permute.xlu0 %995
        %997 = vrot.lane.b32.xlu0 %v793, 97
        %v998 = vpop.permute.xlu0 %997
        %999 = vrot.lane.b32.xlu0 %v794, 97
        %v1000 = vpop.permute.xlu0 %999
        %1001 = vrot.lane.b32.xlu0 %v795, 97
        %v1002 = vpop.permute.xlu0 %1001
        %1003 = vrot.lane.b32.xlu0 %v796, 97
        %v1004 = vpop.permute.xlu0 %1003
        %1005 = vrot.lane.b32.xlu0 %v797, 97
        %v1006 = vpop.permute.xlu0 %1005
        %1007 = vrot.lane.b32.xlu0 %v798, 97
        %v1008 = vpop.permute.xlu0 %1007
        %1009 = vrot.lane.b32.xlu0 %v799, 97
        %v1010 = vpop.permute.xlu0 %1009
        %1011 = vrot.lane.b32.xlu0 %v800, 97
        %v1012 = vpop.permute.xlu0 %1011
        %vm1013 = vcmask 793600
        %v1014 = vsel %vm1013, %v996, %v998
        %v1015 = vsel %vm1013, %v998, %v1000
        %v1016 = vsel %vm1013, %v1000, %v1002
        %v1017 = vsel %vm1013, %v1002, %v1004
        %v1018 = vsel %vm1013, %v1004, %v1006
        %v1019 = vsel %vm1013, %v1006, %v1008
        %v1020 = vsel %vm1013, %v1008, %v1010
        %v1021 = vsel %vm1013, %v1010, %v1012
        %v1031 = vsel %vm1013, %v1012, 0.0
        %1032 = vrot.lane.b32.xlu0 %v792, 96
        %v1033 = vpop.permute.xlu0 %1032
        %1034 = vrot.lane.b32.xlu0 %v793, 96
        %v1035 = vpop.permute.xlu0 %1034
        %1036 = vrot.lane.b32.xlu0 %v794, 96
        %v1037 = vpop.permute.xlu0 %1036
        %1038 = vrot.lane.b32.xlu0 %v795, 96
        %v1039 = vpop.permute.xlu0 %1038
        %1040 = vrot.lane.b32.xlu0 %v796, 96
        %v1041 = vpop.permute.xlu0 %1040
        %1042 = vrot.lane.b32.xlu0 %v797, 96
        %v1043 = vpop.permute.xlu0 %1042
        %1044 = vrot.lane.b32.xlu0 %v798, 96
        %v1045 = vpop.permute.xlu0 %1044
        %1046 = vrot.lane.b32.xlu0 %v799, 96
        %v1047 = vpop.permute.xlu0 %1046
        %1048 = vrot.lane.b32.xlu0 %v800, 96
        %v1049 = vpop.permute.xlu0 %1048
        %vm1050 = vcmask 785408
        %v1051 = vsel %vm1050, %v1033, %v1035
        %v1052 = vsel %vm1050, %v1035, %v1037
        %v1053 = vsel %vm1050, %v1037, %v1039
        %v1054 = vsel %vm1050, %v1039, %v1041
        %v1055 = vsel %vm1050, %v1041, %v1043
        %v1056 = vsel %vm1050, %v1043, %v1045
        %v1057 = vsel %vm1050, %v1045, %v1047
        %v1058 = vsel %vm1050, %v1047, %v1049
        %v1068 = vsel %vm1050, %v1049, 0.0
        %1069 = vrot.lane.b32.xlu0 %v792, 95
        %v1070 = vpop.permute.xlu0 %1069
        %1071 = vrot.lane.b32.xlu0 %v793, 95
        %v1072 = vpop.permute.xlu0 %1071
        %1073 = vrot.lane.b32.xlu0 %v794, 95
        %v1074 = vpop.permute.xlu0 %1073
        %1075 = vrot.lane.b32.xlu0 %v795, 95
        %v1076 = vpop.permute.xlu0 %1075
        %1077 = vrot.lane.b32.xlu0 %v796, 95
        %v1078 = vpop.permute.xlu0 %1077
        %1079 = vrot.lane.b32.xlu0 %v797, 95
        %v1080 = vpop.permute.xlu0 %1079
        %1081 = vrot.lane.b32.xlu0 %v798, 95
        %v1082 = vpop.permute.xlu0 %1081
        %1083 = vrot.lane.b32.xlu0 %v799, 95
        %v1084 = vpop.permute.xlu0 %1083
        %1085 = vrot.lane.b32.xlu0 %v800, 95
        %v1086 = vpop.permute.xlu0 %1085
        %vm1087 = vcmask 777216
        %v1088 = vsel %vm1087, %v1070, %v1072
        %v1089 = vsel %vm1087, %v1072, %v1074
        %v1090 = vsel %vm1087, %v1074, %v1076
        %v1091 = vsel %vm1087, %v1076, %v1078
        %v1092 = vsel %vm1087, %v1078, %v1080
        %v1093 = vsel %vm1087, %v1080, %v1082
        %v1094 = vsel %vm1087, %v1082, %v1084
        %v1095 = vsel %vm1087, %v1084, %v1086
        %v1105 = vsel %vm1087, %v1086, 0.0
        %v1106 = vpack.c.bf16 %v883, %v846
        %v1107 = vpack.c.bf16 %v866, %v829
        %v1108 = vpack.c.bf16 %v867, %v830
        %v1109 = vpack.c.bf16 %v868, %v831
        %v1110 = vpack.c.bf16 %v869, %v832
        %v1111 = vpack.c.bf16 %v870, %v833
        %v1112 = vpack.c.bf16 %v871, %v834
        %v1113 = vpack.c.bf16 %v872, %v835
        %v1114 = vpack.c.bf16 %v873, %v836
        %v1115 = vpack.c.bf16 %v957, %v920
        %v1116 = vpack.c.bf16 %v940, %v903
        %v1117 = vpack.c.bf16 %v941, %v904
        %v1118 = vpack.c.bf16 %v942, %v905
        %v1119 = vpack.c.bf16 %v943, %v906
        %v1120 = vpack.c.bf16 %v944, %v907
        %v1121 = vpack.c.bf16 %v945, %v908
        %v1122 = vpack.c.bf16 %v946, %v909
        %v1123 = vpack.c.bf16 %v947, %v910
        %v1124 = vpack.c.bf16 %v977, %v792
        %v1125 = vpack.c.bf16 %v978, %v793
        %v1126 = vpack.c.bf16 %v979, %v794
        %v1127 = vpack.c.bf16 %v980, %v795
        %v1128 = vpack.c.bf16 %v981, %v796
        %v1129 = vpack.c.bf16 %v982, %v797
        %v1130 = vpack.c.bf16 %v983, %v798
        %v1131 = vpack.c.bf16 %v984, %v799
        %v1132 = vpack.c.bf16 %v994, %v800
        %v1133 = vpack.c.bf16 %v1051, %v1014
        %v1134 = vpack.c.bf16 %v1052, %v1015
        %v1135 = vpack.c.bf16 %v1053, %v1016
        %v1136 = vpack.c.bf16 %v1054, %v1017
        %v1137 = vpack.c.bf16 %v1055, %v1018
        %v1138 = vpack.c.bf16 %v1056, %v1019
        %v1139 = vpack.c.bf16 %v1057, %v1020
        %v1140 = vpack.c.bf16 %v1058, %v1021
        %v1141 = vpack.c.bf16 %v1068, %v1031
        %v1142 = vpack.c.bf16 %v1088, %v1088
        %v1143 = vpack.c.bf16 %v1089, %v1089
        %v1144 = vpack.c.bf16 %v1090, %v1090
        %v1145 = vpack.c.bf16 %v1091, %v1091
        %v1146 = vpack.c.bf16 %v1092, %v1092
        %v1147 = vpack.c.bf16 %v1093, %v1093
        %v1148 = vpack.c.bf16 %v1094, %v1094
        %v1149 = vpack.c.bf16 %v1095, %v1095
        %v1150 = vpack.c.bf16 %v1105, %v1105
        %v1151 = vld [vmem:[%s5] sm:$0xf]
        %v1152 = vld [vmem:[%s6] sm:$0xff]
        %1154 = vset.pattern.permute.xlu0 0
        %1155 = vperm.xlu0 %1154, %v1152
        %v1156 = vpop.permute.xlu0 %1155
        %vm1158 = vcmask 588800
        %v1160 = vsel %vm1158, %v1151, 0
        %v1163 = vsel %vm501, %v1142, 0
        %v1166 = vsel %vm501, %v1143, 0
        %v1169 = vsel %vm501, %v1144, 0
        %v1172 = vsel %vm501, %v1145, 0
        %v1175 = vsel %vm501, %v1146, 0
        %v1178 = vsel %vm501, %v1147, 0
        %v1181 = vsel %vm501, %v1148, 0
        %v1184 = vsel %vm501, %v1149, 0
        %v1187 = vsel %vm501, %v1150, 0
        %1189 = vmatprep.subr.bf16.mxu0 0
        %1190 = vmatpush1.bf16.msra.mxu0 0
        %1191 = vmatprep.subr.bf16.mxu0 0
        %1192 = vmatpush1.bf16.msra.mxu0 0
        %1193 = vmatprep.subr.bf16.mxu0 0
        %1194 = vmatpush1.bf16.msra.mxu0 0
        %1195 = vmatprep.subr.bf16.mxu0 %v1166
        %1196 = vmatpush1.bf16.msra.mxu0 %v1163
        %1197 = vmatprep.subr.bf16.mxu0 %v1134
        %1198 = vmatpush1.bf16.msra.mxu0 %v1133
        %1199 = vmatprep.subr.bf16.mxu0 %v1125
        %1200 = vmatpush1.bf16.msra.mxu0 %v1124
        %1201 = vmatprep.subr.bf16.mxu0 %v1116
        %1202 = vmatpush1.bf16.msra.mxu0 %v1115
        %1203 = vmatprep.subr.bf16.mxu0 %v1107
        %1204 = vmatpush1.bf16.msra.mxu0 %v1106
        %1205 = vmatprep.subr.bf16.mxu0 0
        %1206 = vmatpush2.bf16.msra.mxu0 0
        %1207 = vmatprep.subr.bf16.mxu0 0
        %1208 = vmatpush2.bf16.msra.mxu0 0
        %1209 = vmatprep.subr.bf16.mxu0 0
        %1210 = vmatpush2.bf16.msra.mxu0 0
        %1211 = vmatprep.subr.bf16.mxu0 0
        %1212 = vmatpush2.bf16.msra.mxu0 0
        %1213 = vmatprep.subr.bf16.mxu0 0
        %1214 = vmatpush2.bf16.msra.mxu0 0
        %1215 = vmatprep.subr.bf16.mxu0 0
        %1216 = vmatpush2.bf16.msra.mxu0 0
        %1217 = vmatprep.subr.bf16.mxu0 0
        %1218 = vmatpush2.bf16.msra.mxu0 0
        %1219 = vmatprep.subr.bf16.mxu0 0
        %1220 = vmatpush2.bf16.msra.mxu0 0
        %1221 = vmatprep.mubr.bf16.mxu0 0
        %1222 = vmatmul.mubr.bf16.gmra.mxu0 %v1160
        %v1223 = vpop.f32.mrf.mxu0
        %v1224 = vadd.f32 %v1156, %v1223
        %v1225 = vpop.f32.mrf.mxu0
        %v1226 = vadd.f32 %v1156, %v1225
        %v1227 = vpop.f32.mrf.mxu0
        %v1228 = vpop.f32.mrf.mxu0
        %1229 = vdwg.mxu0
        %1230 = vmatprep.subr.bf16.mxu0 0
        %1231 = vmatpush1.bf16.msra.mxu0 0
        %1232 = vmatprep.subr.bf16.mxu0 0
        %1233 = vmatpush1.bf16.msra.mxu0 0
        %1234 = vmatprep.subr.bf16.mxu0 0
        %1235 = vmatpush1.bf16.msra.mxu0 0
        %1236 = vmatprep.subr.bf16.mxu0 %v1172
        %1237 = vmatpush1.bf16.msra.mxu0 %v1169
        %1238 = vmatprep.subr.bf16.mxu0 %v1136
        %1239 = vmatpush1.bf16.msra.mxu0 %v1135
        %1240 = vmatprep.subr.bf16.mxu0 %v1127
        %1241 = vmatpush1.bf16.msra.mxu0 %v1126
        %1242 = vmatprep.subr.bf16.mxu0 %v1118
        %1243 = vmatpush1.bf16.msra.mxu0 %v1117
        %1244 = vmatprep.subr.bf16.mxu0 %v1109
        %1245 = vmatpush1.bf16.msra.mxu0 %v1108
        %1246 = vmatprep.subr.bf16.mxu0 0
        %1247 = vmatpush2.bf16.msra.mxu0 0
        %1248 = vmatprep.subr.bf16.mxu0 0
        %1249 = vmatpush2.bf16.msra.mxu0 0
        %1250 = vmatprep.subr.bf16.mxu0 0
        %1251 = vmatpush2.bf16.msra.mxu0 0
        %1252 = vmatprep.subr.bf16.mxu0 0
        %1253 = vmatpush2.bf16.msra.mxu0 0
        %1254 = vmatprep.subr.bf16.mxu0 0
        %1255 = vmatpush2.bf16.msra.mxu0 0
        %1256 = vmatprep.subr.bf16.mxu0 0
        %1257 = vmatpush2.bf16.msra.mxu0 0
        %1258 = vmatprep.subr.bf16.mxu0 0
        %1259 = vmatpush2.bf16.msra.mxu0 0
        %1260 = vmatprep.subr.bf16.mxu0 0
        %1261 = vmatpush2.bf16.msra.mxu0 0
        %1262 = vmatprep.mubr.bf16.mxu0 0
        %1263 = vmatmul.mubr.bf16.gmra.mxu0 %v1160
        %v1264 = vpop.f32.mrf.mxu0
        %v1265 = vadd.f32 %v1156, %v1264
        %v1266 = vpop.f32.mrf.mxu0
        %v1267 = vadd.f32 %v1156, %v1266
        %v1268 = vpop.f32.mrf.mxu0
        %v1269 = vpop.f32.mrf.mxu0
        %1270 = vdwg.mxu0
        %1271 = vmatprep.subr.bf16.mxu0 0
        %1272 = vmatpush1.bf16.msra.mxu0 0
        %1273 = vmatprep.subr.bf16.mxu0 0
        %1274 = vmatpush1.bf16.msra.mxu0 0
        %1275 = vmatprep.subr.bf16.mxu0 0
        %1276 = vmatpush1.bf16.msra.mxu0 0
        %1277 = vmatprep.subr.bf16.mxu0 %v1178
        %1278 = vmatpush1.bf16.msra.mxu0 %v1175
        %1279 = vmatprep.subr.bf16.mxu0 %v1138
        %1280 = vmatpush1.bf16.msra.mxu0 %v1137
        %1281 = vmatprep.subr.bf16.mxu0 %v1129
        %1282 = vmatpush1.bf16.msra.mxu0 %v1128
        %1283 = vmatprep.subr.bf16.mxu0 %v1120
        %1284 = vmatpush1.bf16.msra.mxu0 %v1119
        %1285 = vmatprep.subr.bf16.mxu0 %v1111
        %1286 = vmatpush1.bf16.msra.mxu0 %v1110
        %1287 = vmatprep.subr.bf16.mxu0 0
        %1288 = vmatpush2.bf16.msra.mxu0 0
        %1289 = vmatprep.subr.bf16.mxu0 0
        %1290 = vmatpush2.bf16.msra.mxu0 0
        %1291 = vmatprep.subr.bf16.mxu0 0
        %1292 = vmatpush2.bf16.msra.mxu0 0
        %1293 = vmatprep.subr.bf16.mxu0 0
        %1294 = vmatpush2.bf16.msra.mxu0 0
        %1295 = vmatprep.subr.bf16.mxu0 0
        %1296 = vmatpush2.bf16.msra.mxu0 0
        %1297 = vmatprep.subr.bf16.mxu0 0
        %1298 = vmatpush2.bf16.msra.mxu0 0
        %1299 = vmatprep.subr.bf16.mxu0 0
        %1300 = vmatpush2.bf16.msra.mxu0 0
        %1301 = vmatprep.subr.bf16.mxu0 0
        %1302 = vmatpush2.bf16.msra.mxu0 0
        %1303 = vmatprep.mubr.bf16.mxu0 0
        %1304 = vmatmul.mubr.bf16.gmra.mxu0 %v1160
        %v1305 = vpop.f32.mrf.mxu0
        %v1306 = vadd.f32 %v1156, %v1305
        %v1307 = vpop.f32.mrf.mxu0
        %v1308 = vadd.f32 %v1156, %v1307
        %v1309 = vpop.f32.mrf.mxu0
        %v1310 = vpop.f32.mrf.mxu0
        %1311 = vdwg.mxu0
        %1312 = vmatprep.subr.bf16.mxu0 0
        %1313 = vmatpush1.bf16.msra.mxu0 0
        %1314 = vmatprep.subr.bf16.mxu0 0
        %1315 = vmatpush1.bf16.msra.mxu0 0
        %1316 = vmatprep.subr.bf16.mxu0 0
        %1317 = vmatpush1.bf16.msra.mxu0 0
        %1318 = vmatprep.subr.bf16.mxu0 %v1184
        %1319 = vmatpush1.bf16.msra.mxu0 %v1181
        %1320 = vmatprep.subr.bf16.mxu0 %v1140
        %1321 = vmatpush1.bf16.msra.mxu0 %v1139
        %1322 = vmatprep.subr.bf16.mxu0 %v1131
        %1323 = vmatpush1.bf16.msra.mxu0 %v1130
        %1324 = vmatprep.subr.bf16.mxu0 %v1122
        %1325 = vmatpush1.bf16.msra.mxu0 %v1121
        %1326 = vmatprep.subr.bf16.mxu0 %v1113
        %1327 = vmatpush1.bf16.msra.mxu0 %v1112
        %1328 = vmatprep.subr.bf16.mxu0 0
        %1329 = vmatpush2.bf16.msra.mxu0 0
        %1330 = vmatprep.subr.bf16.mxu0 0
        %1331 = vmatpush2.bf16.msra.mxu0 0
        %1332 = vmatprep.subr.bf16.mxu0 0
        %1333 = vmatpush2.bf16.msra.mxu0 0
        %1334 = vmatprep.subr.bf16.mxu0 0
        %1335 = vmatpush2.bf16.msra.mxu0 0
        %1336 = vmatprep.subr.bf16.mxu0 0
        %1337 = vmatpush2.bf16.msra.mxu0 0
        %1338 = vmatprep.subr.bf16.mxu0 0
        %1339 = vmatpush2.bf16.msra.mxu0 0
        %1340 = vmatprep.subr.bf16.mxu0 0
        %1341 = vmatpush2.bf16.msra.mxu0 0
        %1342 = vmatprep.subr.bf16.mxu0 0
        %1343 = vmatpush2.bf16.msra.mxu0 0
        %1344 = vmatprep.mubr.bf16.mxu0 0
        %1345 = vmatmul.mubr.bf16.gmra.mxu0 %v1160
        %v1346 = vpop.f32.mrf.mxu0
        %v1347 = vadd.f32 %v1156, %v1346
        %v1348 = vpop.f32.mrf.mxu0
        %v1349 = vadd.f32 %v1156, %v1348
        %v1350 = vpop.f32.mrf.mxu0
        %v1351 = vpop.f32.mrf.mxu0
        %1352 = vdwg.mxu0
        %1353 = vmatprep.subr.bf16.mxu0 0
        %1354 = vmatpush1.bf16.msra.mxu0 0
        %1355 = vmatprep.subr.bf16.mxu0 0
        %1356 = vmatpush1.bf16.msra.mxu0 0
        %1357 = vmatprep.subr.bf16.mxu0 0
        %1358 = vmatpush1.bf16.msra.mxu0 0
        %1359 = vmatprep.subr.bf16.mxu0 0
        %1360 = vmatpush1.bf16.msra.mxu0 %v1187
        %1361 = vmatprep.subr.bf16.mxu0 0
        %1362 = vmatpush1.bf16.msra.mxu0 %v1141
        %1363 = vmatprep.subr.bf16.mxu0 0
        %1364 = vmatpush1.bf16.msra.mxu0 %v1132
        %1365 = vmatprep.subr.bf16.mxu0 0
        %1366 = vmatpush1.bf16.msra.mxu0 %v1123
        %1367 = vmatprep.subr.bf16.mxu0 0
        %1368 = vmatpush1.bf16.msra.mxu0 %v1114
        %1369 = vmatprep.subr.bf16.mxu0 0
        %1370 = vmatpush2.bf16.msra.mxu0 0
        %1371 = vmatprep.subr.bf16.mxu0 0
        %1372 = vmatpush2.bf16.msra.mxu0 0
        %1373 = vmatprep.subr.bf16.mxu0 0
        %1374 = vmatpush2.bf16.msra.mxu0 0
        %1375 = vmatprep.subr.bf16.mxu0 0
        %1376 = vmatpush2.bf16.msra.mxu0 0
        %1377 = vmatprep.subr.bf16.mxu0 0
        %1378 = vmatpush2.bf16.msra.mxu0 0
        %1379 = vmatprep.subr.bf16.mxu0 0
        %1380 = vmatpush2.bf16.msra.mxu0 0
        %1381 = vmatprep.subr.bf16.mxu0 0
        %1382 = vmatpush2.bf16.msra.mxu0 0
        %1383 = vmatprep.subr.bf16.mxu0 0
        %1384 = vmatpush2.bf16.msra.mxu0 0
        %1385 = vmatprep.mubr.bf16.mxu0 0
        %1386 = vmatmul.mubr.bf16.gmra.mxu0 %v1160
        %v1387 = vpop.f32.mrf.mxu0
        %v1388 = vadd.f32 %v1156, %v1387
        %v1389 = vpop.f32.mrf.mxu0
        %v1390 = vpop.f32.mrf.mxu0
        %v1391 = vpop.f32.mrf.mxu0
        %1392 = vdwg.mxu0
        %v1393 = vmax.f32 %v1224, 0.0
        %v1394 = vmax.f32 %v1226, 0.0
        %v1395 = vmax.f32 %v1265, 0.0
        %v1396 = vmax.f32 %v1267, 0.0
        %v1397 = vmax.f32 %v1306, 0.0
        %v1398 = vmax.f32 %v1308, 0.0
        %v1399 = vmax.f32 %v1347, 0.0
        %v1400 = vmax.f32 %v1349, 0.0
        %v1401 = vmax.f32 %v1388, 0.0
        %1411 = vrot.lane.b32.xlu0 %v1393, 127
        %v1412 = vpop.permute.xlu0 %1411
        %1413 = vrot.lane.b32.xlu0 %v1394, 127
        %v1414 = vpop.permute.xlu0 %1413
        %1415 = vrot.lane.b32.xlu0 %v1395, 127
        %v1416 = vpop.permute.xlu0 %1415
        %1417 = vrot.lane.b32.xlu0 %v1396, 127
        %v1418 = vpop.permute.xlu0 %1417
        %1419 = vrot.lane.b32.xlu0 %v1397, 127
        %v1420 = vpop.permute.xlu0 %1419
        %1421 = vrot.lane.b32.xlu0 %v1398, 127
        %v1422 = vpop.permute.xlu0 %1421
        %1423 = vrot.lane.b32.xlu0 %v1399, 127
        %v1424 = vpop.permute.xlu0 %1423
        %1425 = vrot.lane.b32.xlu0 %v1400, 127
        %v1426 = vpop.permute.xlu0 %1425
        %1427 = vrot.lane.b32.xlu0 %v1401, 127
        %v1428 = vpop.permute.xlu0 %1427
        %v1429 = vsel %vm976, %v1412, %v1414
        %v1430 = vsel %vm976, %v1414, %v1416
        %v1431 = vsel %vm976, %v1416, %v1418
        %v1432 = vsel %vm976, %v1418, %v1420
        %v1433 = vsel %vm976, %v1420, %v1422
        %v1434 = vsel %vm976, %v1422, %v1424
        %v1435 = vsel %vm976, %v1424, %v1426
        %v1436 = vsel %vm976, %v1426, %v1428
        %v1446 = vsel %vm976, %v1428, 0.0
        %v1447 = vmax.f32 %v1393, %v1429
        %v1448 = vmax.f32 %v1394, %v1430
        %v1449 = vmax.f32 %v1395, %v1431
        %v1450 = vmax.f32 %v1396, %v1432
        %v1451 = vmax.f32 %v1397, %v1433
        %v1452 = vmax.f32 %v1398, %v1434
        %v1453 = vmax.f32 %v1399, %v1435
        %v1454 = vmax.f32 %v1400, %v1436
        %v1455 = vmax.f32 %v1401, %v1446
        %1465 = vrot.lane.b32.xlu0 %v1447, 96
        %v1466 = vpop.permute.xlu0 %1465
        %1467 = vrot.lane.b32.xlu0 %v1448, 96
        %v1468 = vpop.permute.xlu0 %1467
        %1469 = vrot.lane.b32.xlu0 %v1449, 96
        %v1470 = vpop.permute.xlu0 %1469
        %1471 = vrot.lane.b32.xlu0 %v1450, 96
        %v1472 = vpop.permute.xlu0 %1471
        %1473 = vrot.lane.b32.xlu0 %v1451, 96
        %v1474 = vpop.permute.xlu0 %1473
        %1475 = vrot.lane.b32.xlu0 %v1452, 96
        %v1476 = vpop.permute.xlu0 %1475
        %1477 = vrot.lane.b32.xlu0 %v1453, 96
        %v1478 = vpop.permute.xlu0 %1477
        %1479 = vrot.lane.b32.xlu0 %v1454, 96
        %v1480 = vpop.permute.xlu0 %1479
        %1481 = vrot.lane.b32.xlu0 %v1455, 96
        %v1482 = vpop.permute.xlu0 %1481
        %v1483 = vsel %vm1050, %v1466, %v1468
        %v1484 = vsel %vm1050, %v1468, %v1470
        %v1485 = vsel %vm1050, %v1470, %v1472
        %v1486 = vsel %vm1050, %v1472, %v1474
        %v1487 = vsel %vm1050, %v1474, %v1476
        %v1488 = vsel %vm1050, %v1476, %v1478
        %v1489 = vsel %vm1050, %v1478, %v1480
        %v1490 = vsel %vm1050, %v1480, %v1482
        %v1500 = vsel %vm1050, %v1482, 0.0
        %v1501 = vmax.f32 %v1447, %v1483
        %v1502 = vmax.f32 %v1448, %v1484
        %v1503 = vmax.f32 %v1449, %v1485
        %v1504 = vmax.f32 %v1450, %v1486
        %v1505 = vmax.f32 %v1451, %v1487
        %v1506 = vmax.f32 %v1452, %v1488
        %v1507 = vmax.f32 %v1453, %v1489
        %v1508 = vmax.f32 %v1454, %v1490
        %v1509 = vmax.f32 %v1455, %v1500
        %v1512 = vlaneseq
        %v1513 = vshrl.u32 %v1512, 7
        %v1514 = vsub.s32 0, %v1513
        %v1515 = vrot.slane %v441, %v1514
        %v1516 = vlaneseq
        %v1517 = vshrl.u32 %v1516, 7
        %v1518 = vsub.s32 1, %v1517
        %v1519 = vrot.slane %v441, %v1518
        %v1520 = vlaneseq
        %v1521 = vshrl.u32 %v1520, 7
        %v1522 = vsub.s32 2, %v1521
        %v1523 = vrot.slane %v441, %v1522
        %v1524 = vlaneseq
        %v1525 = vshrl.u32 %v1524, 7
        %v1526 = vsub.s32 3, %v1525
        %v1527 = vrot.slane %v441, %v1526
        %v1528 = vlaneseq
        %v1529 = vshrl.u32 %v1528, 7
        %v1530 = vsub.s32 4, %v1529
        %v1531 = vrot.slane %v441, %v1530
        %v1532 = vlaneseq
        %v1533 = vshrl.u32 %v1532, 7
        %v1534 = vsub.s32 5, %v1533
        %v1535 = vrot.slane %v441, %v1534
        %v1536 = vlaneseq
        %v1537 = vshrl.u32 %v1536, 7
        %v1538 = vsub.s32 6, %v1537
        %v1539 = vrot.slane %v441, %v1538
        %v1540 = vlaneseq
        %v1541 = vshrl.u32 %v1540, 7
        %v1542 = vsub.s32 7, %v1541
        %v1543 = vrot.slane %v441, %v1542
        %v1544 = vlaneseq
        %v1545 = vshrl.u32 %v1544, 7
        %v1546 = vsub.s32 0, %v1545
        %v1547 = vrot.slane %v442, %v1546
        %v1557 = vmul.f32 %v1501, %v1515
        %v1558 = vmul.f32 %v1502, %v1519
        %v1559 = vmul.f32 %v1503, %v1523
        %v1560 = vmul.f32 %v1504, %v1527
        %v1561 = vmul.f32 %v1505, %v1531
        %v1562 = vmul.f32 %v1506, %v1535
        %v1563 = vmul.f32 %v1507, %v1539
        %v1564 = vmul.f32 %v1508, %v1543
        %v1565 = vmul.f32 %v1509, %v1547
        %1575 = vrot.lane.b32.xlu0 %v1557, 66
        %v1576 = vpop.permute.xlu0 %1575
        %1577 = vrot.lane.b32.xlu0 %v1558, 66
        %v1578 = vpop.permute.xlu0 %1577
        %1579 = vrot.lane.b32.xlu0 %v1559, 66
        %v1580 = vpop.permute.xlu0 %1579
        %1581 = vrot.lane.b32.xlu0 %v1560, 66
        %v1582 = vpop.permute.xlu0 %1581
        %1583 = vrot.lane.b32.xlu0 %v1561, 66
        %v1584 = vpop.permute.xlu0 %1583
        %1585 = vrot.lane.b32.xlu0 %v1562, 66
        %v1586 = vpop.permute.xlu0 %1585
        %1587 = vrot.lane.b32.xlu0 %v1563, 66
        %v1588 = vpop.permute.xlu0 %1587
        %1589 = vrot.lane.b32.xlu0 %v1564, 66
        %v1590 = vpop.permute.xlu0 %1589
        %1591 = vrot.lane.b32.xlu0 %v1565, 66
        %v1592 = vpop.permute.xlu0 %1591
        %vm1593 = vcmask 539648
        %v1594 = vsel %vm1593, %v1576, %v1578
        %v1595 = vsel %vm1593, %v1578, %v1580
        %v1596 = vsel %vm1593, %v1580, %v1582
        %v1597 = vsel %vm1593, %v1582, %v1584
        %v1598 = vsel %vm1593, %v1584, %v1586
        %v1599 = vsel %vm1593, %v1586, %v1588
        %v1600 = vsel %vm1593, %v1588, %v1590
        %v1601 = vsel %vm1593, %v1590, %v1592
        %v1611 = vsel %vm1593, 0.0, %v1576
        %1612 = vrot.lane.b32.xlu0 %v1557, 64
        %v1613 = vpop.permute.xlu0 %1612
        %1614 = vrot.lane.b32.xlu0 %v1558, 64
        %v1615 = vpop.permute.xlu0 %1614
        %1616 = vrot.lane.b32.xlu0 %v1559, 64
        %v1617 = vpop.permute.xlu0 %1616
        %1618 = vrot.lane.b32.xlu0 %v1560, 64
        %v1619 = vpop.permute.xlu0 %1618
        %1620 = vrot.lane.b32.xlu0 %v1561, 64
        %v1621 = vpop.permute.xlu0 %1620
        %1622 = vrot.lane.b32.xlu0 %v1562, 64
        %v1623 = vpop.permute.xlu0 %1622
        %1624 = vrot.lane.b32.xlu0 %v1563, 64
        %v1625 = vpop.permute.xlu0 %1624
        %1626 = vrot.lane.b32.xlu0 %v1564, 64
        %v1627 = vpop.permute.xlu0 %1626
        %1628 = vrot.lane.b32.xlu0 %v1565, 64
        %v1629 = vpop.permute.xlu0 %1628
        %vm1630 = vcmask 523264
        %v1631 = vsel %vm1630, %v1613, %v1615
        %v1632 = vsel %vm1630, %v1615, %v1617
        %v1633 = vsel %vm1630, %v1617, %v1619
        %v1634 = vsel %vm1630, %v1619, %v1621
        %v1635 = vsel %vm1630, %v1621, %v1623
        %v1636 = vsel %vm1630, %v1623, %v1625
        %v1637 = vsel %vm1630, %v1625, %v1627
        %v1638 = vsel %vm1630, %v1627, %v1629
        %v1648 = vsel %vm1630, 0.0, %v1613
        %1649 = vrot.lane.b32.xlu0 %v1557, 62
        %v1650 = vpop.permute.xlu0 %1649
        %1651 = vrot.lane.b32.xlu0 %v1558, 62
        %v1652 = vpop.permute.xlu0 %1651
        %1653 = vrot.lane.b32.xlu0 %v1559, 62
        %v1654 = vpop.permute.xlu0 %1653
        %1655 = vrot.lane.b32.xlu0 %v1560, 62
        %v1656 = vpop.permute.xlu0 %1655
        %1657 = vrot.lane.b32.xlu0 %v1561, 62
        %v1658 = vpop.permute.xlu0 %1657
        %1659 = vrot.lane.b32.xlu0 %v1562, 62
        %v1660 = vpop.permute.xlu0 %1659
        %1661 = vrot.lane.b32.xlu0 %v1563, 62
        %v1662 = vpop.permute.xlu0 %1661
        %1663 = vrot.lane.b32.xlu0 %v1564, 62
        %v1664 = vpop.permute.xlu0 %1663
        %1665 = vrot.lane.b32.xlu0 %v1565, 62
        %v1666 = vpop.permute.xlu0 %1665
        %vm1667 = vcmask 506880
        %v1668 = vsel %vm1667, %v1650, %v1652
        %v1669 = vsel %vm1667, %v1652, %v1654
        %v1670 = vsel %vm1667, %v1654, %v1656
        %v1671 = vsel %vm1667, %v1656, %v1658
        %v1672 = vsel %vm1667, %v1658, %v1660
        %v1673 = vsel %vm1667, %v1660, %v1662
        %v1674 = vsel %vm1667, %v1662, %v1664
        %v1675 = vsel %vm1667, %v1664, %v1666
        %v1685 = vsel %vm1667, 0.0, %v1650
        %1686 = vrot.lane.b32.xlu0 %v1557, 2
        %v1687 = vpop.permute.xlu0 %1686
        %1688 = vrot.lane.b32.xlu0 %v1558, 2
        %v1689 = vpop.permute.xlu0 %1688
        %1690 = vrot.lane.b32.xlu0 %v1559, 2
        %v1691 = vpop.permute.xlu0 %1690
        %1692 = vrot.lane.b32.xlu0 %v1560, 2
        %v1693 = vpop.permute.xlu0 %1692
        %1694 = vrot.lane.b32.xlu0 %v1561, 2
        %v1695 = vpop.permute.xlu0 %1694
        %1696 = vrot.lane.b32.xlu0 %v1562, 2
        %v1697 = vpop.permute.xlu0 %1696
        %1698 = vrot.lane.b32.xlu0 %v1563, 2
        %v1699 = vpop.permute.xlu0 %1698
        %1700 = vrot.lane.b32.xlu0 %v1564, 2
        %v1701 = vpop.permute.xlu0 %1700
        %1702 = vrot.lane.b32.xlu0 %v1565, 2
        %v1703 = vpop.permute.xlu0 %1702
        %vm1704 = vcmask 15360
        %v1705 = vsel %vm1704, %v1687, %v1689
        %v1706 = vsel %vm1704, %v1689, %v1691
        %v1707 = vsel %vm1704, %v1691, %v1693
        %v1708 = vsel %vm1704, %v1693, %v1695
        %v1709 = vsel %vm1704, %v1695, %v1697
        %v1710 = vsel %vm1704, %v1697, %v1699
        %v1711 = vsel %vm1704, %v1699, %v1701
        %v1712 = vsel %vm1704, %v1701, %v1703
        %v1722 = vsel %vm1704, 0.0, %v1687
        %1723 = vrot.lane.b32.xlu0 %v1557, 126
        %v1724 = vpop.permute.xlu0 %1723
        %1725 = vrot.lane.b32.xlu0 %v1558, 126
        %v1726 = vpop.permute.xlu0 %1725
        %1727 = vrot.lane.b32.xlu0 %v1559, 126
        %v1728 = vpop.permute.xlu0 %1727
        %1729 = vrot.lane.b32.xlu0 %v1560, 126
        %v1730 = vpop.permute.xlu0 %1729
        %1731 = vrot.lane.b32.xlu0 %v1561, 126
        %v1732 = vpop.permute.xlu0 %1731
        %1733 = vrot.lane.b32.xlu0 %v1562, 126
        %v1734 = vpop.permute.xlu0 %1733
        %1735 = vrot.lane.b32.xlu0 %v1563, 126
        %v1736 = vpop.permute.xlu0 %1735
        %1737 = vrot.lane.b32.xlu0 %v1564, 126
        %v1738 = vpop.permute.xlu0 %1737
        %1739 = vrot.lane.b32.xlu0 %v1565, 126
        %v1740 = vpop.permute.xlu0 %1739
        %vm1741 = vcmask 1031168
        %v1742 = vsel %vm1741, %v1724, %v1726
        %v1743 = vsel %vm1741, %v1726, %v1728
        %v1744 = vsel %vm1741, %v1728, %v1730
        %v1745 = vsel %vm1741, %v1730, %v1732
        %v1746 = vsel %vm1741, %v1732, %v1734
        %v1747 = vsel %vm1741, %v1734, %v1736
        %v1748 = vsel %vm1741, %v1736, %v1738
        %v1749 = vsel %vm1741, %v1738, %v1740
        %v1759 = vsel %vm1741, %v1740, 0.0
        %v1761 = vsel %vm1593, %v1592, 0.0
        %v1763 = vsel %vm1630, %v1629, 0.0
        %v1765 = vsel %vm1667, %v1666, 0.0
        %v1766 = vpack.c.bf16 %v1648, %v1611
        %v1767 = vpack.c.bf16 %v1631, %v1594
        %v1768 = vpack.c.bf16 %v1632, %v1595
        %v1769 = vpack.c.bf16 %v1633, %v1596
        %v1770 = vpack.c.bf16 %v1634, %v1597
        %v1771 = vpack.c.bf16 %v1635, %v1598
        %v1772 = vpack.c.bf16 %v1636, %v1599
        %v1773 = vpack.c.bf16 %v1637, %v1600
        %v1774 = vpack.c.bf16 %v1638, %v1601
        %v1775 = vpack.c.bf16 %v1722, %v1685
        %v1776 = vpack.c.bf16 %v1705, %v1668
        %v1777 = vpack.c.bf16 %v1706, %v1669
        %v1778 = vpack.c.bf16 %v1707, %v1670
        %v1779 = vpack.c.bf16 %v1708, %v1671
        %v1780 = vpack.c.bf16 %v1709, %v1672
        %v1781 = vpack.c.bf16 %v1710, %v1673
        %v1782 = vpack.c.bf16 %v1711, %v1674
        %v1783 = vpack.c.bf16 %v1712, %v1675
        %v1784 = vpack.c.bf16 %v1742, %v1557
        %v1785 = vpack.c.bf16 %v1743, %v1558
        %v1786 = vpack.c.bf16 %v1744, %v1559
        %v1787 = vpack.c.bf16 %v1745, %v1560
        %v1788 = vpack.c.bf16 %v1746, %v1561
        %v1789 = vpack.c.bf16 %v1747, %v1562
        %v1790 = vpack.c.bf16 %v1748, %v1563
        %v1791 = vpack.c.bf16 %v1749, %v1564
        %v1792 = vpack.c.bf16 %v1759, %v1565
        %v1793 = vpack.c.bf16 %v1763, %v1761
        %v1794 = vpack.c.bf16 %v1668, %v1668
        %v1795 = vpack.c.bf16 %v1669, %v1669
        %v1796 = vpack.c.bf16 %v1670, %v1670
        %v1797 = vpack.c.bf16 %v1671, %v1671
        %v1798 = vpack.c.bf16 %v1672, %v1672
        %v1799 = vpack.c.bf16 %v1673, %v1673
        %v1800 = vpack.c.bf16 %v1674, %v1674
        %v1801 = vpack.c.bf16 %v1675, %v1675
        %v1802 = vpack.c.bf16 %v1765, %v1765
        %v1803 = vld [vmem:[%s7] sm:$0xf]
        %v1804 = vld [vmem:[%s8] sm:$0xff]
        %1806 = vset.pattern.permute.xlu0 0
        %1807 = vperm.xlu0 %1806, %v1804
        %v1808 = vpop.permute.xlu0 %1807
        %v1811 = vsel %vm1158, %v1803, 0
        %v1814 = vsel %vm501, %v1794, 0
        %v1817 = vsel %vm501, %v1795, 0
        %v1820 = vsel %vm501, %v1796, 0
        %v1823 = vsel %vm501, %v1797, 0
        %v1826 = vsel %vm501, %v1798, 0
        %v1829 = vsel %vm501, %v1799, 0
        %v1832 = vsel %vm501, %v1800, 0
        %v1835 = vsel %vm501, %v1801, 0
        %v1838 = vsel %vm501, %v1802, 0
        %1840 = vmatprep.subr.bf16.mxu0 0
        %1841 = vmatpush1.bf16.msra.mxu0 0
        %1842 = vmatprep.subr.bf16.mxu0 0
        %1843 = vmatpush1.bf16.msra.mxu0 0
        %1844 = vmatprep.subr.bf16.mxu0 0
        %1845 = vmatpush1.bf16.msra.mxu0 0
        %1846 = vmatprep.subr.bf16.mxu0 %v1817
        %1847 = vmatpush1.bf16.msra.mxu0 %v1814
        %1848 = vmatprep.subr.bf16.mxu0 %v1768
        %1849 = vmatpush1.bf16.msra.mxu0 %v1767
        %1850 = vmatprep.subr.bf16.mxu0 %v1785
        %1851 = vmatpush1.bf16.msra.mxu0 %v1784
        %1852 = vmatprep.subr.bf16.mxu0 %v1776
        %1853 = vmatpush1.bf16.msra.mxu0 %v1775
        %1854 = vmatprep.subr.bf16.mxu0 %v1767
        %1855 = vmatpush1.bf16.msra.mxu0 %v1766
        %1856 = vmatprep.subr.bf16.mxu0 0
        %1857 = vmatpush2.bf16.msra.mxu0 0
        %1858 = vmatprep.subr.bf16.mxu0 0
        %1859 = vmatpush2.bf16.msra.mxu0 0
        %1860 = vmatprep.subr.bf16.mxu0 0
        %1861 = vmatpush2.bf16.msra.mxu0 0
        %1862 = vmatprep.subr.bf16.mxu0 0
        %1863 = vmatpush2.bf16.msra.mxu0 0
        %1864 = vmatprep.subr.bf16.mxu0 0
        %1865 = vmatpush2.bf16.msra.mxu0 0
        %1866 = vmatprep.subr.bf16.mxu0 0
        %1867 = vmatpush2.bf16.msra.mxu0 0
        %1868 = vmatprep.subr.bf16.mxu0 0
        %1869 = vmatpush2.bf16.msra.mxu0 0
        %1870 = vmatprep.subr.bf16.mxu0 0
        %1871 = vmatpush2.bf16.msra.mxu0 0
        %1872 = vmatprep.mubr.bf16.mxu0 0
        %1873 = vmatmul.mubr.bf16.gmra.mxu0 %v1811
        %v1874 = vpop.f32.mrf.mxu0
        %v1875 = vadd.f32 %v1808, %v1874
        %v1876 = vpop.f32.mrf.mxu0
        %v1877 = vadd.f32 %v1808, %v1876
        %v1878 = vpop.f32.mrf.mxu0
        %v1879 = vpop.f32.mrf.mxu0
        %1880 = vdwg.mxu0
        %1881 = vmatprep.subr.bf16.mxu0 0
        %1882 = vmatpush1.bf16.msra.mxu0 0
        %1883 = vmatprep.subr.bf16.mxu0 0
        %1884 = vmatpush1.bf16.msra.mxu0 0
        %1885 = vmatprep.subr.bf16.mxu0 0
        %1886 = vmatpush1.bf16.msra.mxu0 0
        %1887 = vmatprep.subr.bf16.mxu0 %v1823
        %1888 = vmatpush1.bf16.msra.mxu0 %v1820
        %1889 = vmatprep.subr.bf16.mxu0 %v1770
        %1890 = vmatpush1.bf16.msra.mxu0 %v1769
        %1891 = vmatprep.subr.bf16.mxu0 %v1787
        %1892 = vmatpush1.bf16.msra.mxu0 %v1786
        %1893 = vmatprep.subr.bf16.mxu0 %v1778
        %1894 = vmatpush1.bf16.msra.mxu0 %v1777
        %1895 = vmatprep.subr.bf16.mxu0 %v1769
        %1896 = vmatpush1.bf16.msra.mxu0 %v1768
        %1897 = vmatprep.subr.bf16.mxu0 0
        %1898 = vmatpush2.bf16.msra.mxu0 0
        %1899 = vmatprep.subr.bf16.mxu0 0
        %1900 = vmatpush2.bf16.msra.mxu0 0
        %1901 = vmatprep.subr.bf16.mxu0 0
        %1902 = vmatpush2.bf16.msra.mxu0 0
        %1903 = vmatprep.subr.bf16.mxu0 0
        %1904 = vmatpush2.bf16.msra.mxu0 0
        %1905 = vmatprep.subr.bf16.mxu0 0
        %1906 = vmatpush2.bf16.msra.mxu0 0
        %1907 = vmatprep.subr.bf16.mxu0 0
        %1908 = vmatpush2.bf16.msra.mxu0 0
        %1909 = vmatprep.subr.bf16.mxu0 0
        %1910 = vmatpush2.bf16.msra.mxu0 0
        %1911 = vmatprep.subr.bf16.mxu0 0
        %1912 = vmatpush2.bf16.msra.mxu0 0
        %1913 = vmatprep.mubr.bf16.mxu0 0
        %1914 = vmatmul.mubr.bf16.gmra.mxu0 %v1811
        %v1915 = vpop.f32.mrf.mxu0
        %v1916 = vadd.f32 %v1808, %v1915
        %v1917 = vpop.f32.mrf.mxu0
        %v1918 = vadd.f32 %v1808, %v1917
        %v1919 = vpop.f32.mrf.mxu0
        %v1920 = vpop.f32.mrf.mxu0
        %1921 = vdwg.mxu0
        %1922 = vmatprep.subr.bf16.mxu0 0
        %1923 = vmatpush1.bf16.msra.mxu0 0
        %1924 = vmatprep.subr.bf16.mxu0 0
        %1925 = vmatpush1.bf16.msra.mxu0 0
        %1926 = vmatprep.subr.bf16.mxu0 0
        %1927 = vmatpush1.bf16.msra.mxu0 0
        %1928 = vmatprep.subr.bf16.mxu0 %v1829
        %1929 = vmatpush1.bf16.msra.mxu0 %v1826
        %1930 = vmatprep.subr.bf16.mxu0 %v1772
        %1931 = vmatpush1.bf16.msra.mxu0 %v1771
        %1932 = vmatprep.subr.bf16.mxu0 %v1789
        %1933 = vmatpush1.bf16.msra.mxu0 %v1788
        %1934 = vmatprep.subr.bf16.mxu0 %v1780
        %1935 = vmatpush1.bf16.msra.mxu0 %v1779
        %1936 = vmatprep.subr.bf16.mxu0 %v1771
        %1937 = vmatpush1.bf16.msra.mxu0 %v1770
        %1938 = vmatprep.subr.bf16.mxu0 0
        %1939 = vmatpush2.bf16.msra.mxu0 0
        %1940 = vmatprep.subr.bf16.mxu0 0
        %1941 = vmatpush2.bf16.msra.mxu0 0
        %1942 = vmatprep.subr.bf16.mxu0 0
        %1943 = vmatpush2.bf16.msra.mxu0 0
        %1944 = vmatprep.subr.bf16.mxu0 0
        %1945 = vmatpush2.bf16.msra.mxu0 0
        %1946 = vmatprep.subr.bf16.mxu0 0
        %1947 = vmatpush2.bf16.msra.mxu0 0
        %1948 = vmatprep.subr.bf16.mxu0 0
        %1949 = vmatpush2.bf16.msra.mxu0 0
        %1950 = vmatprep.subr.bf16.mxu0 0
        %1951 = vmatpush2.bf16.msra.mxu0 0
        %1952 = vmatprep.subr.bf16.mxu0 0
        %1953 = vmatpush2.bf16.msra.mxu0 0
        %1954 = vmatprep.mubr.bf16.mxu0 0
        %1955 = vmatmul.mubr.bf16.gmra.mxu0 %v1811
        %v1956 = vpop.f32.mrf.mxu0
        %v1957 = vadd.f32 %v1808, %v1956
        %v1958 = vpop.f32.mrf.mxu0
        %v1959 = vadd.f32 %v1808, %v1958
        %v1960 = vpop.f32.mrf.mxu0
        %v1961 = vpop.f32.mrf.mxu0
        %1962 = vdwg.mxu0
        %1963 = vmatprep.subr.bf16.mxu0 0
        %1964 = vmatpush1.bf16.msra.mxu0 0
        %1965 = vmatprep.subr.bf16.mxu0 0
        %1966 = vmatpush1.bf16.msra.mxu0 0
        %1967 = vmatprep.subr.bf16.mxu0 0
        %1968 = vmatpush1.bf16.msra.mxu0 0
        %1969 = vmatprep.subr.bf16.mxu0 %v1835
        %1970 = vmatpush1.bf16.msra.mxu0 %v1832
        %1971 = vmatprep.subr.bf16.mxu0 %v1774
        %1972 = vmatpush1.bf16.msra.mxu0 %v1773
        %1973 = vmatprep.subr.bf16.mxu0 %v1791
        %1974 = vmatpush1.bf16.msra.mxu0 %v1790
        %1975 = vmatprep.subr.bf16.mxu0 %v1782
        %1976 = vmatpush1.bf16.msra.mxu0 %v1781
        %1977 = vmatprep.subr.bf16.mxu0 %v1773
        %1978 = vmatpush1.bf16.msra.mxu0 %v1772
        %1979 = vmatprep.subr.bf16.mxu0 0
        %1980 = vmatpush2.bf16.msra.mxu0 0
        %1981 = vmatprep.subr.bf16.mxu0 0
        %1982 = vmatpush2.bf16.msra.mxu0 0
        %1983 = vmatprep.subr.bf16.mxu0 0
        %1984 = vmatpush2.bf16.msra.mxu0 0
        %1985 = vmatprep.subr.bf16.mxu0 0
        %1986 = vmatpush2.bf16.msra.mxu0 0
        %1987 = vmatprep.subr.bf16.mxu0 0
        %1988 = vmatpush2.bf16.msra.mxu0 0
        %1989 = vmatprep.subr.bf16.mxu0 0
        %1990 = vmatpush2.bf16.msra.mxu0 0
        %1991 = vmatprep.subr.bf16.mxu0 0
        %1992 = vmatpush2.bf16.msra.mxu0 0
        %1993 = vmatprep.subr.bf16.mxu0 0
        %1994 = vmatpush2.bf16.msra.mxu0 0
        %1995 = vmatprep.mubr.bf16.mxu0 0
        %1996 = vmatmul.mubr.bf16.gmra.mxu0 %v1811
        %v1997 = vpop.f32.mrf.mxu0
        %v1998 = vadd.f32 %v1808, %v1997
        %v1999 = vpop.f32.mrf.mxu0
        %v2000 = vadd.f32 %v1808, %v1999
        %v2001 = vpop.f32.mrf.mxu0
        %v2002 = vpop.f32.mrf.mxu0
        %2003 = vdwg.mxu0
        %2004 = vmatprep.subr.bf16.mxu0 0
        %2005 = vmatpush1.bf16.msra.mxu0 0
        %2006 = vmatprep.subr.bf16.mxu0 0
        %2007 = vmatpush1.bf16.msra.mxu0 0
        %2008 = vmatprep.subr.bf16.mxu0 0
        %2009 = vmatpush1.bf16.msra.mxu0 0
        %2010 = vmatprep.subr.bf16.mxu0 0
        %2011 = vmatpush1.bf16.msra.mxu0 %v1838
        %2012 = vmatprep.subr.bf16.mxu0 0
        %2013 = vmatpush1.bf16.msra.mxu0 %v1793
        %2014 = vmatprep.subr.bf16.mxu0 0
        %2015 = vmatpush1.bf16.msra.mxu0 %v1792
        %2016 = vmatprep.subr.bf16.mxu0 0
        %2017 = vmatpush1.bf16.msra.mxu0 %v1783
        %2018 = vmatprep.subr.bf16.mxu0 0
        %2019 = vmatpush1.bf16.msra.mxu0 %v1774
        %2020 = vmatprep.subr.bf16.mxu0 0
        %2021 = vmatpush2.bf16.msra.mxu0 0
        %2022 = vmatprep.subr.bf16.mxu0 0
        %2023 = vmatpush2.bf16.msra.mxu0 0
        %2024 = vmatprep.subr.bf16.mxu0 0
        %2025 = vmatpush2.bf16.msra.mxu0 0
        %2026 = vmatprep.subr.bf16.mxu0 0
        %2027 = vmatpush2.bf16.msra.mxu0 0
        %2028 = vmatprep.subr.bf16.mxu0 0
        %2029 = vmatpush2.bf16.msra.mxu0 0
        %2030 = vmatprep.subr.bf16.mxu0 0
        %2031 = vmatpush2.bf16.msra.mxu0 0
        %2032 = vmatprep.subr.bf16.mxu0 0
        %2033 = vmatpush2.bf16.msra.mxu0 0
        %2034 = vmatprep.subr.bf16.mxu0 0
        %2035 = vmatpush2.bf16.msra.mxu0 0
        %2036 = vmatprep.mubr.bf16.mxu0 0
        %2037 = vmatmul.mubr.bf16.gmra.mxu0 %v1811
        %v2038 = vpop.f32.mrf.mxu0
        %v2039 = vadd.f32 %v1808, %v2038
        %v2040 = vpop.f32.mrf.mxu0
        %v2041 = vpop.f32.mrf.mxu0
        %v2042 = vpop.f32.mrf.mxu0
        %2043 = vdwg.mxu0
        %v2044 = vmax.f32 %v1875, 0.0
        %v2045 = vmax.f32 %v1877, 0.0
        %v2046 = vmax.f32 %v1916, 0.0
        %v2047 = vmax.f32 %v1918, 0.0
        %v2048 = vmax.f32 %v1957, 0.0
        %v2049 = vmax.f32 %v1959, 0.0
        %v2050 = vmax.f32 %v1998, 0.0
        %v2051 = vmax.f32 %v2000, 0.0
        %v2052 = vmax.f32 %v2039, 0.0
        %v2053 = vmul.f32 %v2044, %v1515
        %v2054 = vmul.f32 %v2045, %v1519
        %v2055 = vmul.f32 %v2046, %v1523
        %v2056 = vmul.f32 %v2047, %v1527
        %v2057 = vmul.f32 %v2048, %v1531
        %v2058 = vmul.f32 %v2049, %v1535
        %v2059 = vmul.f32 %v2050, %v1539
        %v2060 = vmul.f32 %v2051, %v1543
        %v2061 = vmul.f32 %v2052, %v1547
        %2071 = vrot.lane.b32.xlu0 %v2053, 66
        %v2072 = vpop.permute.xlu0 %2071
        %2073 = vrot.lane.b32.xlu0 %v2054, 66
        %v2074 = vpop.permute.xlu0 %2073
        %2075 = vrot.lane.b32.xlu0 %v2055, 66
        %v2076 = vpop.permute.xlu0 %2075
        %2077 = vrot.lane.b32.xlu0 %v2056, 66
        %v2078 = vpop.permute.xlu0 %2077
        %2079 = vrot.lane.b32.xlu0 %v2057, 66
        %v2080 = vpop.permute.xlu0 %2079
        %2081 = vrot.lane.b32.xlu0 %v2058, 66
        %v2082 = vpop.permute.xlu0 %2081
        %2083 = vrot.lane.b32.xlu0 %v2059, 66
        %v2084 = vpop.permute.xlu0 %2083
        %2085 = vrot.lane.b32.xlu0 %v2060, 66
        %v2086 = vpop.permute.xlu0 %2085
        %2087 = vrot.lane.b32.xlu0 %v2061, 66
        %v2088 = vpop.permute.xlu0 %2087
        %v2089 = vsel %vm1593, %v2072, %v2074
        %v2090 = vsel %vm1593, %v2074, %v2076
        %v2091 = vsel %vm1593, %v2076, %v2078
        %v2092 = vsel %vm1593, %v2078, %v2080
        %v2093 = vsel %vm1593, %v2080, %v2082
        %v2094 = vsel %vm1593, %v2082, %v2084
        %v2095 = vsel %vm1593, %v2084, %v2086
        %v2096 = vsel %vm1593, %v2086, %v2088
        %v2106 = vsel %vm1593, 0.0, %v2072
        %2107 = vrot.lane.b32.xlu0 %v2053, 64
        %v2108 = vpop.permute.xlu0 %2107
        %2109 = vrot.lane.b32.xlu0 %v2054, 64
        %v2110 = vpop.permute.xlu0 %2109
        %2111 = vrot.lane.b32.xlu0 %v2055, 64
        %v2112 = vpop.permute.xlu0 %2111
        %2113 = vrot.lane.b32.xlu0 %v2056, 64
        %v2114 = vpop.permute.xlu0 %2113
        %2115 = vrot.lane.b32.xlu0 %v2057, 64
        %v2116 = vpop.permute.xlu0 %2115
        %2117 = vrot.lane.b32.xlu0 %v2058, 64
        %v2118 = vpop.permute.xlu0 %2117
        %2119 = vrot.lane.b32.xlu0 %v2059, 64
        %v2120 = vpop.permute.xlu0 %2119
        %2121 = vrot.lane.b32.xlu0 %v2060, 64
        %v2122 = vpop.permute.xlu0 %2121
        %2123 = vrot.lane.b32.xlu0 %v2061, 64
        %v2124 = vpop.permute.xlu0 %2123
        %v2125 = vsel %vm1630, %v2108, %v2110
        %v2126 = vsel %vm1630, %v2110, %v2112
        %v2127 = vsel %vm1630, %v2112, %v2114
        %v2128 = vsel %vm1630, %v2114, %v2116
        %v2129 = vsel %vm1630, %v2116, %v2118
        %v2130 = vsel %vm1630, %v2118, %v2120
        %v2131 = vsel %vm1630, %v2120, %v2122
        %v2132 = vsel %vm1630, %v2122, %v2124
        %v2142 = vsel %vm1630, 0.0, %v2108
        %2143 = vrot.lane.b32.xlu0 %v2053, 62
        %v2144 = vpop.permute.xlu0 %2143
        %2145 = vrot.lane.b32.xlu0 %v2054, 62
        %v2146 = vpop.permute.xlu0 %2145
        %2147 = vrot.lane.b32.xlu0 %v2055, 62
        %v2148 = vpop.permute.xlu0 %2147
        %2149 = vrot.lane.b32.xlu0 %v2056, 62
        %v2150 = vpop.permute.xlu0 %2149
        %2151 = vrot.lane.b32.xlu0 %v2057, 62
        %v2152 = vpop.permute.xlu0 %2151
        %2153 = vrot.lane.b32.xlu0 %v2058, 62
        %v2154 = vpop.permute.xlu0 %2153
        %2155 = vrot.lane.b32.xlu0 %v2059, 62
        %v2156 = vpop.permute.xlu0 %2155
        %2157 = vrot.lane.b32.xlu0 %v2060, 62
        %v2158 = vpop.permute.xlu0 %2157
        %2159 = vrot.lane.b32.xlu0 %v2061, 62
        %v2160 = vpop.permute.xlu0 %2159
        %v2161 = vsel %vm1667, %v2144, %v2146
        %v2162 = vsel %vm1667, %v2146, %v2148
        %v2163 = vsel %vm1667, %v2148, %v2150
        %v2164 = vsel %vm1667, %v2150, %v2152
        %v2165 = vsel %vm1667, %v2152, %v2154
        %v2166 = vsel %vm1667, %v2154, %v2156
        %v2167 = vsel %vm1667, %v2156, %v2158
        %v2168 = vsel %vm1667, %v2158, %v2160
        %v2178 = vsel %vm1667, 0.0, %v2144
        %2179 = vrot.lane.b32.xlu0 %v2053, 2
        %v2180 = vpop.permute.xlu0 %2179
        %2181 = vrot.lane.b32.xlu0 %v2054, 2
        %v2182 = vpop.permute.xlu0 %2181
        %2183 = vrot.lane.b32.xlu0 %v2055, 2
        %v2184 = vpop.permute.xlu0 %2183
        %2185 = vrot.lane.b32.xlu0 %v2056, 2
        %v2186 = vpop.permute.xlu0 %2185
        %2187 = vrot.lane.b32.xlu0 %v2057, 2
        %v2188 = vpop.permute.xlu0 %2187
        %2189 = vrot.lane.b32.xlu0 %v2058, 2
        %v2190 = vpop.permute.xlu0 %2189
        %2191 = vrot.lane.b32.xlu0 %v2059, 2
        %v2192 = vpop.permute.xlu0 %2191
        %2193 = vrot.lane.b32.xlu0 %v2060, 2
        %v2194 = vpop.permute.xlu0 %2193
        %2195 = vrot.lane.b32.xlu0 %v2061, 2
        %v2196 = vpop.permute.xlu0 %2195
        %v2197 = vsel %vm1704, %v2180, %v2182
        %v2198 = vsel %vm1704, %v2182, %v2184
        %v2199 = vsel %vm1704, %v2184, %v2186
        %v2200 = vsel %vm1704, %v2186, %v2188
        %v2201 = vsel %vm1704, %v2188, %v2190
        %v2202 = vsel %vm1704, %v2190, %v2192
        %v2203 = vsel %vm1704, %v2192, %v2194
        %v2204 = vsel %vm1704, %v2194, %v2196
        %v2214 = vsel %vm1704, 0.0, %v2180
        %2215 = vrot.lane.b32.xlu0 %v2053, 126
        %v2216 = vpop.permute.xlu0 %2215
        %2217 = vrot.lane.b32.xlu0 %v2054, 126
        %v2218 = vpop.permute.xlu0 %2217
        %2219 = vrot.lane.b32.xlu0 %v2055, 126
        %v2220 = vpop.permute.xlu0 %2219
        %2221 = vrot.lane.b32.xlu0 %v2056, 126
        %v2222 = vpop.permute.xlu0 %2221
        %2223 = vrot.lane.b32.xlu0 %v2057, 126
        %v2224 = vpop.permute.xlu0 %2223
        %2225 = vrot.lane.b32.xlu0 %v2058, 126
        %v2226 = vpop.permute.xlu0 %2225
        %2227 = vrot.lane.b32.xlu0 %v2059, 126
        %v2228 = vpop.permute.xlu0 %2227
        %2229 = vrot.lane.b32.xlu0 %v2060, 126
        %v2230 = vpop.permute.xlu0 %2229
        %2231 = vrot.lane.b32.xlu0 %v2061, 126
        %v2232 = vpop.permute.xlu0 %2231
        %v2233 = vsel %vm1741, %v2216, %v2218
        %v2234 = vsel %vm1741, %v2218, %v2220
        %v2235 = vsel %vm1741, %v2220, %v2222
        %v2236 = vsel %vm1741, %v2222, %v2224
        %v2237 = vsel %vm1741, %v2224, %v2226
        %v2238 = vsel %vm1741, %v2226, %v2228
        %v2239 = vsel %vm1741, %v2228, %v2230
        %v2240 = vsel %vm1741, %v2230, %v2232
        %v2250 = vsel %vm1741, %v2232, 0.0
        %v2252 = vsel %vm1593, %v2088, 0.0
        %v2254 = vsel %vm1630, %v2124, 0.0
        %v2256 = vsel %vm1667, %v2160, 0.0
        %v2257 = vpack.c.bf16 %v2142, %v2106
        %v2258 = vpack.c.bf16 %v2125, %v2089
        %v2259 = vpack.c.bf16 %v2126, %v2090
        %v2260 = vpack.c.bf16 %v2127, %v2091
        %v2261 = vpack.c.bf16 %v2128, %v2092
        %v2262 = vpack.c.bf16 %v2129, %v2093
        %v2263 = vpack.c.bf16 %v2130, %v2094
        %v2264 = vpack.c.bf16 %v2131, %v2095
        %v2265 = vpack.c.bf16 %v2132, %v2096
        %v2266 = vpack.c.bf16 %v2214, %v2178
        %v2267 = vpack.c.bf16 %v2197, %v2161
        %v2268 = vpack.c.bf16 %v2198, %v2162
        %v2269 = vpack.c.bf16 %v2199, %v2163
        %v2270 = vpack.c.bf16 %v2200, %v2164
        %v2271 = vpack.c.bf16 %v2201, %v2165
        %v2272 = vpack.c.bf16 %v2202, %v2166
        %v2273 = vpack.c.bf16 %v2203, %v2167
        %v2274 = vpack.c.bf16 %v2204, %v2168
        %v2275 = vpack.c.bf16 %v2233, %v2053
        %v2276 = vpack.c.bf16 %v2234, %v2054
        %v2277 = vpack.c.bf16 %v2235, %v2055
        %v2278 = vpack.c.bf16 %v2236, %v2056
        %v2279 = vpack.c.bf16 %v2237, %v2057
        %v2280 = vpack.c.bf16 %v2238, %v2058
        %v2281 = vpack.c.bf16 %v2239, %v2059
        %v2282 = vpack.c.bf16 %v2240, %v2060
        %v2283 = vpack.c.bf16 %v2250, %v2061
        %v2284 = vpack.c.bf16 %v2254, %v2252
        %v2285 = vpack.c.bf16 %v2161, %v2161
        %v2286 = vpack.c.bf16 %v2162, %v2162
        %v2287 = vpack.c.bf16 %v2163, %v2163
        %v2288 = vpack.c.bf16 %v2164, %v2164
        %v2289 = vpack.c.bf16 %v2165, %v2165
        %v2290 = vpack.c.bf16 %v2166, %v2166
        %v2291 = vpack.c.bf16 %v2167, %v2167
        %v2292 = vpack.c.bf16 %v2168, %v2168
        %v2293 = vpack.c.bf16 %v2256, %v2256
        %v2294 = vld [vmem:[%s9] sm:$0xf]
        %v2295 = vld [vmem:[%s10] sm:$0xff]
        %2297 = vset.pattern.permute.xlu0 0
        %2298 = vperm.xlu0 %2297, %v2295
        %v2299 = vpop.permute.xlu0 %2298
        %v2302 = vsel %vm1158, %v2294, 0
        %v2305 = vsel %vm501, %v2285, 0
        %v2308 = vsel %vm501, %v2286, 0
        %v2311 = vsel %vm501, %v2287, 0
        %v2314 = vsel %vm501, %v2288, 0
        %v2317 = vsel %vm501, %v2289, 0
        %v2320 = vsel %vm501, %v2290, 0
        %v2323 = vsel %vm501, %v2291, 0
        %v2326 = vsel %vm501, %v2292, 0
        %v2329 = vsel %vm501, %v2293, 0
        %2331 = vmatprep.subr.bf16.mxu0 0
        %2332 = vmatpush1.bf16.msra.mxu0 0
        %2333 = vmatprep.subr.bf16.mxu0 0
        %2334 = vmatpush1.bf16.msra.mxu0 0
        %2335 = vmatprep.subr.bf16.mxu0 0
        %2336 = vmatpush1.bf16.msra.mxu0 0
        %2337 = vmatprep.subr.bf16.mxu0 %v2308
        %2338 = vmatpush1.bf16.msra.mxu0 %v2305
        %2339 = vmatprep.subr.bf16.mxu0 %v2259
        %2340 = vmatpush1.bf16.msra.mxu0 %v2258
        %2341 = vmatprep.subr.bf16.mxu0 %v2276
        %2342 = vmatpush1.bf16.msra.mxu0 %v2275
        %2343 = vmatprep.subr.bf16.mxu0 %v2267
        %2344 = vmatpush1.bf16.msra.mxu0 %v2266
        %2345 = vmatprep.subr.bf16.mxu0 %v2258
        %2346 = vmatpush1.bf16.msra.mxu0 %v2257
        %2347 = vmatprep.subr.bf16.mxu0 0
        %2348 = vmatpush2.bf16.msra.mxu0 0
        %2349 = vmatprep.subr.bf16.mxu0 0
        %2350 = vmatpush2.bf16.msra.mxu0 0
        %2351 = vmatprep.subr.bf16.mxu0 0
        %2352 = vmatpush2.bf16.msra.mxu0 0
        %2353 = vmatprep.subr.bf16.mxu0 0
        %2354 = vmatpush2.bf16.msra.mxu0 0
        %2355 = vmatprep.subr.bf16.mxu0 0
        %2356 = vmatpush2.bf16.msra.mxu0 0
        %2357 = vmatprep.subr.bf16.mxu0 0
        %2358 = vmatpush2.bf16.msra.mxu0 0
        %2359 = vmatprep.subr.bf16.mxu0 0
        %2360 = vmatpush2.bf16.msra.mxu0 0
        %2361 = vmatprep.subr.bf16.mxu0 0
        %2362 = vmatpush2.bf16.msra.mxu0 0
        %2363 = vmatprep.mubr.bf16.mxu0 0
        %2364 = vmatmul.mubr.bf16.gmra.mxu0 %v2302
        %v2365 = vpop.f32.mrf.mxu0
        %v2366 = vpop.f32.mrf.mxu0
        %v2367 = vadd.f32 %v2299, %v2366
        %v2368 = vpop.f32.mrf.mxu0
        %v2369 = vpop.f32.mrf.mxu0
        %2370 = vdwg.mxu0
        %2371 = vmatprep.subr.bf16.mxu0 0
        %2372 = vmatpush1.bf16.msra.mxu0 0
        %2373 = vmatprep.subr.bf16.mxu0 0
        %2374 = vmatpush1.bf16.msra.mxu0 0
        %2375 = vmatprep.subr.bf16.mxu0 0
        %2376 = vmatpush1.bf16.msra.mxu0 0
        %2377 = vmatprep.subr.bf16.mxu0 %v2314
        %2378 = vmatpush1.bf16.msra.mxu0 %v2311
        %2379 = vmatprep.subr.bf16.mxu0 %v2261
        %2380 = vmatpush1.bf16.msra.mxu0 %v2260
        %2381 = vmatprep.subr.bf16.mxu0 %v2278
        %2382 = vmatpush1.bf16.msra.mxu0 %v2277
        %2383 = vmatprep.subr.bf16.mxu0 %v2269
        %2384 = vmatpush1.bf16.msra.mxu0 %v2268
        %2385 = vmatprep.subr.bf16.mxu0 %v2260
        %2386 = vmatpush1.bf16.msra.mxu0 %v2259
        %2387 = vmatprep.subr.bf16.mxu0 0
        %2388 = vmatpush2.bf16.msra.mxu0 0
        %2389 = vmatprep.subr.bf16.mxu0 0
        %2390 = vmatpush2.bf16.msra.mxu0 0
        %2391 = vmatprep.subr.bf16.mxu0 0
        %2392 = vmatpush2.bf16.msra.mxu0 0
        %2393 = vmatprep.subr.bf16.mxu0 0
        %2394 = vmatpush2.bf16.msra.mxu0 0
        %2395 = vmatprep.subr.bf16.mxu0 0
        %2396 = vmatpush2.bf16.msra.mxu0 0
        %2397 = vmatprep.subr.bf16.mxu0 0
        %2398 = vmatpush2.bf16.msra.mxu0 0
        %2399 = vmatprep.subr.bf16.mxu0 0
        %2400 = vmatpush2.bf16.msra.mxu0 0
        %2401 = vmatprep.subr.bf16.mxu0 0
        %2402 = vmatpush2.bf16.msra.mxu0 0
        %2403 = vmatprep.mubr.bf16.mxu0 0
        %2404 = vmatmul.mubr.bf16.gmra.mxu0 %v2302
        %v2405 = vpop.f32.mrf.mxu0
        %v2406 = vadd.f32 %v2299, %v2405
        %v2407 = vpop.f32.mrf.mxu0
        %v2408 = vadd.f32 %v2299, %v2407
        %v2409 = vpop.f32.mrf.mxu0
        %v2410 = vpop.f32.mrf.mxu0
        %2411 = vdwg.mxu0
        %2412 = vmatprep.subr.bf16.mxu0 0
        %2413 = vmatpush1.bf16.msra.mxu0 0
        %2414 = vmatprep.subr.bf16.mxu0 0
        %2415 = vmatpush1.bf16.msra.mxu0 0
        %2416 = vmatprep.subr.bf16.mxu0 0
        %2417 = vmatpush1.bf16.msra.mxu0 0
        %2418 = vmatprep.subr.bf16.mxu0 %v2320
        %2419 = vmatpush1.bf16.msra.mxu0 %v2317
        %2420 = vmatprep.subr.bf16.mxu0 %v2263
        %2421 = vmatpush1.bf16.msra.mxu0 %v2262
        %2422 = vmatprep.subr.bf16.mxu0 %v2280
        %2423 = vmatpush1.bf16.msra.mxu0 %v2279
        %2424 = vmatprep.subr.bf16.mxu0 %v2271
        %2425 = vmatpush1.bf16.msra.mxu0 %v2270
        %2426 = vmatprep.subr.bf16.mxu0 %v2262
        %2427 = vmatpush1.bf16.msra.mxu0 %v2261
        %2428 = vmatprep.subr.bf16.mxu0 0
        %2429 = vmatpush2.bf16.msra.mxu0 0
        %2430 = vmatprep.subr.bf16.mxu0 0
        %2431 = vmatpush2.bf16.msra.mxu0 0
        %2432 = vmatprep.subr.bf16.mxu0 0
        %2433 = vmatpush2.bf16.msra.mxu0 0
        %2434 = vmatprep.subr.bf16.mxu0 0
        %2435 = vmatpush2.bf16.msra.mxu0 0
        %2436 = vmatprep.subr.bf16.mxu0 0
        %2437 = vmatpush2.bf16.msra.mxu0 0
        %2438 = vmatprep.subr.bf16.mxu0 0
        %2439 = vmatpush2.bf16.msra.mxu0 0
        %2440 = vmatprep.subr.bf16.mxu0 0
        %2441 = vmatpush2.bf16.msra.mxu0 0
        %2442 = vmatprep.subr.bf16.mxu0 0
        %2443 = vmatpush2.bf16.msra.mxu0 0
        %2444 = vmatprep.mubr.bf16.mxu0 0
        %2445 = vmatmul.mubr.bf16.gmra.mxu0 %v2302
        %v2446 = vpop.f32.mrf.mxu0
        %v2447 = vadd.f32 %v2299, %v2446
        %v2448 = vpop.f32.mrf.mxu0
        %v2449 = vadd.f32 %v2299, %v2448
        %v2450 = vpop.f32.mrf.mxu0
        %v2451 = vpop.f32.mrf.mxu0
        %2452 = vdwg.mxu0
        %2453 = vmatprep.subr.bf16.mxu0 0
        %2454 = vmatpush1.bf16.msra.mxu0 0
        %2455 = vmatprep.subr.bf16.mxu0 0
        %2456 = vmatpush1.bf16.msra.mxu0 0
        %2457 = vmatprep.subr.bf16.mxu0 0
        %2458 = vmatpush1.bf16.msra.mxu0 0
        %2459 = vmatprep.subr.bf16.mxu0 %v2326
        %2460 = vmatpush1.bf16.msra.mxu0 %v2323
        %2461 = vmatprep.subr.bf16.mxu0 %v2265
        %2462 = vmatpush1.bf16.msra.mxu0 %v2264
        %2463 = vmatprep.subr.bf16.mxu0 %v2282
        %2464 = vmatpush1.bf16.msra.mxu0 %v2281
        %2465 = vmatprep.subr.bf16.mxu0 %v2273
        %2466 = vmatpush1.bf16.msra.mxu0 %v2272
        %2467 = vmatprep.subr.bf16.mxu0 %v2264
        %2468 = vmatpush1.bf16.msra.mxu0 %v2263
        %2469 = vmatprep.subr.bf16.mxu0 0
        %2470 = vmatpush2.bf16.msra.mxu0 0
        %2471 = vmatprep.subr.bf16.mxu0 0
        %2472 = vmatpush2.bf16.msra.mxu0 0
        %2473 = vmatprep.subr.bf16.mxu0 0
        %2474 = vmatpush2.bf16.msra.mxu0 0
        %2475 = vmatprep.subr.bf16.mxu0 0
        %2476 = vmatpush2.bf16.msra.mxu0 0
        %2477 = vmatprep.subr.bf16.mxu0 0
        %2478 = vmatpush2.bf16.msra.mxu0 0
        %2479 = vmatprep.subr.bf16.mxu0 0
        %2480 = vmatpush2.bf16.msra.mxu0 0
        %2481 = vmatprep.subr.bf16.mxu0 0
        %2482 = vmatpush2.bf16.msra.mxu0 0
        %2483 = vmatprep.subr.bf16.mxu0 0
        %2484 = vmatpush2.bf16.msra.mxu0 0
        %2485 = vmatprep.mubr.bf16.mxu0 0
        %2486 = vmatmul.mubr.bf16.gmra.mxu0 %v2302
        %v2487 = vpop.f32.mrf.mxu0
        %v2488 = vadd.f32 %v2299, %v2487
        %v2489 = vpop.f32.mrf.mxu0
        %v2490 = vadd.f32 %v2299, %v2489
        %v2491 = vpop.f32.mrf.mxu0
        %v2492 = vpop.f32.mrf.mxu0
        %2493 = vdwg.mxu0
        %2494 = vmatprep.subr.bf16.mxu0 0
        %2495 = vmatpush1.bf16.msra.mxu0 0
        %2496 = vmatprep.subr.bf16.mxu0 0
        %2497 = vmatpush1.bf16.msra.mxu0 0
        %2498 = vmatprep.subr.bf16.mxu0 0
        %2499 = vmatpush1.bf16.msra.mxu0 0
        %2500 = vmatprep.subr.bf16.mxu0 0
        %2501 = vmatpush1.bf16.msra.mxu0 %v2329
        %2502 = vmatprep.subr.bf16.mxu0 0
        %2503 = vmatpush1.bf16.msra.mxu0 %v2284
        %2504 = vmatprep.subr.bf16.mxu0 0
        %2505 = vmatpush1.bf16.msra.mxu0 %v2283
        %2506 = vmatprep.subr.bf16.mxu0 0
        %2507 = vmatpush1.bf16.msra.mxu0 %v2274
        %2508 = vmatprep.subr.bf16.mxu0 0
        %2509 = vmatpush1.bf16.msra.mxu0 %v2265
        %2510 = vmatprep.subr.bf16.mxu0 0
        %2511 = vmatpush2.bf16.msra.mxu0 0
        %2512 = vmatprep.subr.bf16.mxu0 0
        %2513 = vmatpush2.bf16.msra.mxu0 0
        %2514 = vmatprep.subr.bf16.mxu0 0
        %2515 = vmatpush2.bf16.msra.mxu0 0
        %2516 = vmatprep.subr.bf16.mxu0 0
        %2517 = vmatpush2.bf16.msra.mxu0 0
        %2518 = vmatprep.subr.bf16.mxu0 0
        %2519 = vmatpush2.bf16.msra.mxu0 0
        %2520 = vmatprep.subr.bf16.mxu0 0
        %2521 = vmatpush2.bf16.msra.mxu0 0
        %2522 = vmatprep.subr.bf16.mxu0 0
        %2523 = vmatpush2.bf16.msra.mxu0 0
        %2524 = vmatprep.subr.bf16.mxu0 0
        %2525 = vmatpush2.bf16.msra.mxu0 0
        %2526 = vmatprep.mubr.bf16.mxu0 0
        %2527 = vmatmul.mubr.bf16.gmra.mxu0 %v2302
        %v2528 = vpop.f32.mrf.mxu0
        %v2529 = vadd.f32 %v2299, %v2528
        %v2530 = vpop.f32.mrf.mxu0
        %v2531 = vpop.f32.mrf.mxu0
        %v2532 = vpop.f32.mrf.mxu0
        %2533 = vdwg.mxu0
        %v2534 = vmax.f32 %v2367, 0.0
        %v2535 = vmax.f32 %v2406, 0.0
        %v2536 = vmax.f32 %v2408, 0.0
        %v2537 = vmax.f32 %v2447, 0.0
        %v2538 = vmax.f32 %v2449, 0.0
        %v2539 = vmax.f32 %v2488, 0.0
        %v2540 = vmax.f32 %v2490, 0.0
        %v2541 = vmax.f32 %v2529, 0.0
        %2550 = vrot.lane.b32.xlu0 %v2534, 126
        %v2551 = vpop.permute.xlu0 %2550
        %2552 = vrot.lane.b32.xlu0 %v2535, 126
        %v2553 = vpop.permute.xlu0 %2552
        %2554 = vrot.lane.b32.xlu0 %v2536, 126
        %v2555 = vpop.permute.xlu0 %2554
        %2556 = vrot.lane.b32.xlu0 %v2537, 126
        %v2557 = vpop.permute.xlu0 %2556
        %2558 = vrot.lane.b32.xlu0 %v2538, 126
        %v2559 = vpop.permute.xlu0 %2558
        %2560 = vrot.lane.b32.xlu0 %v2539, 126
        %v2561 = vpop.permute.xlu0 %2560
        %2562 = vrot.lane.b32.xlu0 %v2540, 126
        %v2563 = vpop.permute.xlu0 %2562
        %2564 = vrot.lane.b32.xlu0 %v2541, 126
        %v2565 = vpop.permute.xlu0 %2564
        %v2566 = vsel %vm1741, %v2551, %v2553
        %v2567 = vsel %vm1741, %v2553, %v2555
        %v2568 = vsel %vm1741, %v2555, %v2557
        %v2569 = vsel %vm1741, %v2557, %v2559
        %v2570 = vsel %vm1741, %v2559, %v2561
        %v2571 = vsel %vm1741, %v2561, %v2563
        %v2572 = vsel %vm1741, %v2563, %v2565
        %v2581 = vsel %vm1741, %v2565, 0.0
        %v2582 = vmax.f32 %v2534, %v2566
        %v2583 = vmax.f32 %v2535, %v2567
        %v2584 = vmax.f32 %v2536, %v2568
        %v2585 = vmax.f32 %v2537, %v2569
        %v2586 = vmax.f32 %v2538, %v2570
        %v2587 = vmax.f32 %v2539, %v2571
        %v2588 = vmax.f32 %v2540, %v2572
        %v2589 = vmax.f32 %v2541, %v2581
        %2598 = vrot.lane.b32.xlu0 %v2582, 64
        %v2599 = vpop.permute.xlu0 %2598
        %2600 = vrot.lane.b32.xlu0 %v2583, 64
        %v2601 = vpop.permute.xlu0 %2600
        %2602 = vrot.lane.b32.xlu0 %v2584, 64
        %v2603 = vpop.permute.xlu0 %2602
        %2604 = vrot.lane.b32.xlu0 %v2585, 64
        %v2605 = vpop.permute.xlu0 %2604
        %2606 = vrot.lane.b32.xlu0 %v2586, 64
        %v2607 = vpop.permute.xlu0 %2606
        %2608 = vrot.lane.b32.xlu0 %v2587, 64
        %v2609 = vpop.permute.xlu0 %2608
        %2610 = vrot.lane.b32.xlu0 %v2588, 64
        %v2611 = vpop.permute.xlu0 %2610
        %2612 = vrot.lane.b32.xlu0 %v2589, 64
        %v2613 = vpop.permute.xlu0 %2612
        %v2614 = vsel %vm1630, %v2599, %v2601
        %v2615 = vsel %vm1630, %v2601, %v2603
        %v2616 = vsel %vm1630, %v2603, %v2605
        %v2617 = vsel %vm1630, %v2605, %v2607
        %v2618 = vsel %vm1630, %v2607, %v2609
        %v2619 = vsel %vm1630, %v2609, %v2611
        %v2620 = vsel %vm1630, %v2611, %v2613
        %v2628 = vmax.f32 %v2582, %v2614
        %v2629 = vmax.f32 %v2583, %v2615
        %v2630 = vmax.f32 %v2584, %v2616
        %v2631 = vmax.f32 %v2585, %v2617
        %v2632 = vmax.f32 %v2586, %v2618
        %v2633 = vmax.f32 %v2587, %v2619
        %v2634 = vmax.f32 %v2588, %v2620
        %v2642 = vrot.slane %v2628, 1
        %v2643 = vrot.slane %v2629, 1
        %v2644 = vrot.slane %v2630, 1
        %v2645 = vrot.slane %v2631, 1
        %v2646 = vrot.slane %v2632, 1
        %v2647 = vrot.slane %v2633, 1
        %v2648 = vrot.slane %v2634, 1
        %v2656 = vrot.slane %v2628, 2
        %v2657 = vrot.slane %v2629, 2
        %v2658 = vrot.slane %v2630, 2
        %v2659 = vrot.slane %v2631, 2
        %v2660 = vrot.slane %v2632, 2
        %v2661 = vrot.slane %v2633, 2
        %v2662 = vrot.slane %v2634, 2
        %v2670 = vrot.slane %v2628, 3
        %v2671 = vrot.slane %v2629, 3
        %v2672 = vrot.slane %v2630, 3
        %v2673 = vrot.slane %v2631, 3
        %v2674 = vrot.slane %v2632, 3
        %v2675 = vrot.slane %v2633, 3
        %v2676 = vrot.slane %v2634, 3
        %v2684 = vrot.slane %v2628, 4
        %v2685 = vrot.slane %v2629, 4
        %v2686 = vrot.slane %v2630, 4
        %v2687 = vrot.slane %v2631, 4
        %v2688 = vrot.slane %v2632, 4
        %v2689 = vrot.slane %v2633, 4
        %v2690 = vrot.slane %v2634, 4
        %v2698 = vrot.slane %v2628, 5
        %v2699 = vrot.slane %v2629, 5
        %v2700 = vrot.slane %v2630, 5
        %v2701 = vrot.slane %v2631, 5
        %v2702 = vrot.slane %v2632, 5
        %v2703 = vrot.slane %v2633, 5
        %v2704 = vrot.slane %v2634, 5
        %v2712 = vrot.slane %v2628, 6
        %v2713 = vrot.slane %v2629, 6
        %v2714 = vrot.slane %v2630, 6
        %v2715 = vrot.slane %v2631, 6
        %v2716 = vrot.slane %v2632, 6
        %v2717 = vrot.slane %v2633, 6
        %v2718 = vrot.slane %v2634, 6
        %v2726 = vrot.slane %v2628, 7
        %v2727 = vrot.slane %v2629, 7
        %v2728 = vrot.slane %v2630, 7
        %v2729 = vrot.slane %v2631, 7
        %v2730 = vrot.slane %v2632, 7
        %v2731 = vrot.slane %v2633, 7
        %v2732 = vrot.slane %v2634, 7
        %v2740 = vpack.c.bf16 %v2628, %v2628
        %v2741 = vpack.c.bf16 %v2629, %v2629
        %v2742 = vpack.c.bf16 %v2630, %v2630
        %v2743 = vpack.c.bf16 %v2631, %v2631
        %v2744 = vpack.c.bf16 %v2632, %v2632
        %v2745 = vpack.c.bf16 %v2633, %v2633
        %v2746 = vpack.c.bf16 %v2634, %v2634
        %v2747 = vpack.c.bf16 %v2642, %v2642
        %v2748 = vpack.c.bf16 %v2643, %v2643
        %v2749 = vpack.c.bf16 %v2644, %v2644
        %v2750 = vpack.c.bf16 %v2645, %v2645
        %v2751 = vpack.c.bf16 %v2646, %v2646
        %v2752 = vpack.c.bf16 %v2647, %v2647
        %v2753 = vpack.c.bf16 %v2648, %v2648
        %v2754 = vpack.c.bf16 %v2656, %v2656
        %v2755 = vpack.c.bf16 %v2657, %v2657
        %v2756 = vpack.c.bf16 %v2658, %v2658
        %v2757 = vpack.c.bf16 %v2659, %v2659
        %v2758 = vpack.c.bf16 %v2660, %v2660
        %v2759 = vpack.c.bf16 %v2661, %v2661
        %v2760 = vpack.c.bf16 %v2662, %v2662
        %v2761 = vpack.c.bf16 %v2670, %v2670
        %v2762 = vpack.c.bf16 %v2671, %v2671
        %v2763 = vpack.c.bf16 %v2672, %v2672
        %v2764 = vpack.c.bf16 %v2673, %v2673
        %v2765 = vpack.c.bf16 %v2674, %v2674
        %v2766 = vpack.c.bf16 %v2675, %v2675
        %v2767 = vpack.c.bf16 %v2676, %v2676
        %v2768 = vpack.c.bf16 %v2684, %v2684
        %v2769 = vpack.c.bf16 %v2685, %v2685
        %v2770 = vpack.c.bf16 %v2686, %v2686
        %v2771 = vpack.c.bf16 %v2687, %v2687
        %v2772 = vpack.c.bf16 %v2688, %v2688
        %v2773 = vpack.c.bf16 %v2689, %v2689
        %v2774 = vpack.c.bf16 %v2690, %v2690
        %v2775 = vpack.c.bf16 %v2698, %v2698
        %v2776 = vpack.c.bf16 %v2699, %v2699
        %v2777 = vpack.c.bf16 %v2700, %v2700
        %v2778 = vpack.c.bf16 %v2701, %v2701
        %v2779 = vpack.c.bf16 %v2702, %v2702
        %v2780 = vpack.c.bf16 %v2703, %v2703
        %v2781 = vpack.c.bf16 %v2704, %v2704
        %v2782 = vpack.c.bf16 %v2712, %v2712
        %v2783 = vpack.c.bf16 %v2713, %v2713
        %v2784 = vpack.c.bf16 %v2714, %v2714
        %v2785 = vpack.c.bf16 %v2715, %v2715
        %v2786 = vpack.c.bf16 %v2716, %v2716
        %v2787 = vpack.c.bf16 %v2717, %v2717
        %v2788 = vpack.c.bf16 %v2718, %v2718
        %v2789 = vpack.c.bf16 %v2726, %v2726
        %v2790 = vpack.c.bf16 %v2727, %v2727
        %v2791 = vpack.c.bf16 %v2728, %v2728
        %v2792 = vpack.c.bf16 %v2729, %v2729
        %v2793 = vpack.c.bf16 %v2730, %v2730
        %v2794 = vpack.c.bf16 %v2731, %v2731
        %v2795 = vpack.c.bf16 %v2732, %v2732
        %v2796 = vld [vmem:[%s11] sm:$0xf]
        %v2797 = vld [vmem:[%s11 + $0x4] sm:$0xf]
        %v2798 = vld [vmem:[%s11 + $0x8] sm:$0xf]
        %v2799 = vld [vmem:[%s11 + $0xc] sm:$0xf]
        %v2800 = vld [vmem:[%s11 + $0x10] sm:$0xf]
        %v2801 = vld [vmem:[%s11 + $0x14] sm:$0xf]
        %v2802 = vld [vmem:[%s11 + $0x18] sm:$0xf]
        %v2803 = vld [vmem:[%s11 + $0x1c] sm:$0xf]
        %v2804 = vld [vmem:[%s11 + $0x20] sm:$0xf]
        %v2805 = vld [vmem:[%s11 + $0x24] sm:$0xf]
        %v2806 = vld [vmem:[%s11 + $0x28] sm:$0xf]
        %v2807 = vld [vmem:[%s11 + $0x2c] sm:$0xf]
        %v2808 = vld [vmem:[%s11 + $0x30] sm:$0xf]
        %v2809 = vld [vmem:[%s11 + $0x34] sm:$0xf]
        %v2810 = vld [vmem:[%s11 + $0x38] sm:$0xf]
        %v2811 = vld [vmem:[%s11 + $0x3c] sm:$0xf]
        %v2812 = vld [vmem:[%s11 + $0x40] sm:$0xf]
        %v2813 = vld [vmem:[%s11 + $0x44] sm:$0xf]
        %v2814 = vld [vmem:[%s11 + $0x48] sm:$0xf]
        %v2815 = vld [vmem:[%s11 + $0x4c] sm:$0xf]
        %v2816 = vld [vmem:[%s11 + $0x50] sm:$0xf]
        %v2817 = vld [vmem:[%s11 + $0x54] sm:$0xf]
        %v2818 = vld [vmem:[%s11 + $0x58] sm:$0xf]
        %v2819 = vld [vmem:[%s11 + $0x5c] sm:$0xf]
        %v2820 = vld [vmem:[%s11 + $0x60] sm:$0xf]
        %v2821 = vld [vmem:[%s11 + $0x64] sm:$0xf]
        %v2822 = vld [vmem:[%s11 + $0x68] sm:$0xf]
        %v2823 = vld [vmem:[%s11 + $0x6c] sm:$0xf]
        %v2824 = vld [vmem:[%s11 + $0x70] sm:$0xf]
        %v2825 = vld [vmem:[%s11 + $0x74] sm:$0xf]
        %v2826 = vld [vmem:[%s11 + $0x78] sm:$0xf]
        %v2827 = vld [vmem:[%s11 + $0x7c] sm:$0xf]
        %v2828 = vld [vmem:[%s11 + $0x80] sm:$0xf]
        %v2829 = vld [vmem:[%s11 + $0x84] sm:$0xf]
        %v2830 = vld [vmem:[%s11 + $0x88] sm:$0xf]
        %v2831 = vld [vmem:[%s11 + $0x8c] sm:$0xf]
        %v2832 = vld [vmem:[%s11 + $0x90] sm:$0xf]
        %v2833 = vld [vmem:[%s11 + $0x94] sm:$0xf]
        %v2834 = vld [vmem:[%s11 + $0x98] sm:$0xf]
        %v2835 = vld [vmem:[%s11 + $0x9c] sm:$0xf]
        %v2836 = vld [vmem:[%s11 + $0xa0] sm:$0xf]
        %v2837 = vld [vmem:[%s11 + $0xa4] sm:$0xf]
        %v2838 = vld [vmem:[%s11 + $0xa8] sm:$0xf]
        %v2839 = vld [vmem:[%s11 + $0xac] sm:$0xf]
        %v2840 = vld [vmem:[%s11 + $0xb0] sm:$0xf]
        %v2841 = vld [vmem:[%s11 + $0xb4] sm:$0xf]
        %v2842 = vld [vmem:[%s11 + $0xb8] sm:$0xf]
        %v2843 = vld [vmem:[%s11 + $0xbc] sm:$0xf]
        %v2844 = vld [vmem:[%s11 + $0xc0] sm:$0xf]
        %v2845 = vld [vmem:[%s11 + $0xc4] sm:$0xf]
        %v2846 = vld [vmem:[%s11 + $0xc8] sm:$0xf]
        %v2847 = vld [vmem:[%s11 + $0xcc] sm:$0xf]
        %v2848 = vld [vmem:[%s11 + $0xd0] sm:$0xf]
        %v2849 = vld [vmem:[%s11 + $0xd4] sm:$0xf]
        %v2850 = vld [vmem:[%s11 + $0xd8] sm:$0xf]
        %v2851 = vld [vmem:[%s11 + $0xdc] sm:$0xf]
        %v2852 = vld [vmem:[%s11 + $0xe0] sm:$0xf]
        %v2853 = vld [vmem:[%s11 + $0xe4] sm:$0xf]
        %v2854 = vld [vmem:[%s11 + $0xe8] sm:$0xf]
        %v2855 = vld [vmem:[%s11 + $0xec] sm:$0xf]
        %v2856 = vld [vmem:[%s11 + $0xf0] sm:$0xf]
        %v2857 = vld [vmem:[%s11 + $0xf4] sm:$0xf]
        %v2858 = vld [vmem:[%s11 + $0xf8] sm:$0xf]
        %v2859 = vld [vmem:[%s11 + $0xfc] sm:$0xf]
        %v2860 = vld [vmem:[%s11 + $0x100] sm:$0xf]
        %v2861 = vld [vmem:[%s11 + $0x104] sm:$0xf]
        %v2862 = vld [vmem:[%s11 + $0x108] sm:$0xf]
        %v2863 = vld [vmem:[%s11 + $0x10c] sm:$0xf]
        %v2864 = vld [vmem:[%s11 + $0x110] sm:$0xf]
        %v2865 = vld [vmem:[%s11 + $0x114] sm:$0xf]
        %v2866 = vld [vmem:[%s11 + $0x118] sm:$0xf]
        %v2867 = vld [vmem:[%s11 + $0x11c] sm:$0xf]
        %v2868 = vld [vmem:[%s11 + $0x120] sm:$0xf]
        %v2869 = vld [vmem:[%s11 + $0x124] sm:$0xf]
        %v2870 = vld [vmem:[%s11 + $0x128] sm:$0xf]
        %v2871 = vld [vmem:[%s11 + $0x12c] sm:$0xf]
        %v2872 = vld [vmem:[%s11 + $0x130] sm:$0xf]
        %v2873 = vld [vmem:[%s11 + $0x134] sm:$0xf]
        %v2874 = vld [vmem:[%s11 + $0x138] sm:$0xf]
        %v2875 = vld [vmem:[%s11 + $0x13c] sm:$0xf]
        %v2876 = vld [vmem:[%s11 + $0x140] sm:$0xf]
        %v2877 = vld [vmem:[%s11 + $0x144] sm:$0xf]
        %v2878 = vld [vmem:[%s11 + $0x148] sm:$0xf]
        %v2879 = vld [vmem:[%s11 + $0x14c] sm:$0xf]
        %v2880 = vld [vmem:[%s11 + $0x150] sm:$0xf]
        %v2881 = vld [vmem:[%s11 + $0x154] sm:$0xf]
        %v2882 = vld [vmem:[%s11 + $0x158] sm:$0xf]
        %v2883 = vld [vmem:[%s11 + $0x15c] sm:$0xf]
        %v2884 = vld [vmem:[%s11 + $0x160] sm:$0xf]
        %v2885 = vld [vmem:[%s11 + $0x164] sm:$0xf]
        %v2886 = vld [vmem:[%s11 + $0x168] sm:$0xf]
        %v2887 = vld [vmem:[%s11 + $0x16c] sm:$0xf]
        %v2888 = vld [vmem:[%s11 + $0x170] sm:$0xf]
        %v2889 = vld [vmem:[%s11 + $0x174] sm:$0xf]
        %v2890 = vld [vmem:[%s11 + $0x178] sm:$0xf]
        %v2891 = vld [vmem:[%s11 + $0x17c] sm:$0xf]
        %v2892 = vld [vmem:[%s11 + $0x180] sm:$0xf]
        %v2893 = vld [vmem:[%s11 + $0x184] sm:$0xf]
        %v2894 = vld [vmem:[%s11 + $0x188] sm:$0xf]
        %v2895 = vld [vmem:[%s11 + $0x18c] sm:$0xf]
        %v2896 = vld [vmem:[%s11 + $0x190] sm:$0xf]
        %v2897 = vld [vmem:[%s11 + $0x194] sm:$0xf]
        %v2898 = vld [vmem:[%s11 + $0x198] sm:$0xf]
        %v2899 = vld [vmem:[%s11 + $0x19c] sm:$0xf]
        %v2900 = vld [vmem:[%s11 + $0x1a0] sm:$0xf]
        %v2901 = vld [vmem:[%s11 + $0x1a4] sm:$0xf]
        %v2902 = vld [vmem:[%s11 + $0x1a8] sm:$0xf]
        %v2903 = vld [vmem:[%s11 + $0x1ac] sm:$0xf]
        %v2904 = vld [vmem:[%s11 + $0x1b0] sm:$0xf]
        %v2905 = vld [vmem:[%s11 + $0x1b4] sm:$0xf]
        %v2906 = vld [vmem:[%s11 + $0x1b8] sm:$0xf]
        %v2907 = vld [vmem:[%s11 + $0x1bc] sm:$0xf]
        %v2908 = vld [vmem:[%s11 + $0x1c0] sm:$0xf]
        %v2909 = vld [vmem:[%s11 + $0x1c4] sm:$0xf]
        %v2910 = vld [vmem:[%s11 + $0x1c8] sm:$0xf]
        %v2911 = vld [vmem:[%s11 + $0x1cc] sm:$0xf]
        %v2912 = vld [vmem:[%s11 + $0x1d0] sm:$0xf]
        %v2913 = vld [vmem:[%s11 + $0x1d4] sm:$0xf]
        %v2914 = vld [vmem:[%s11 + $0x1d8] sm:$0xf]
        %v2915 = vld [vmem:[%s11 + $0x1dc] sm:$0xf]
        %v2916 = vld [vmem:[%s11 + $0x1e0] sm:$0xf]
        %v2917 = vld [vmem:[%s11 + $0x1e4] sm:$0xf]
        %v2918 = vld [vmem:[%s11 + $0x1e8] sm:$0xf]
        %v2919 = vld [vmem:[%s11 + $0x1ec] sm:$0xf]
        %v2920 = vld [vmem:[%s11 + $0x1f0] sm:$0xf]
        %v2921 = vld [vmem:[%s11 + $0x1f4] sm:$0xf]
        %v2922 = vld [vmem:[%s11 + $0x1f8] sm:$0xf]
        %v2923 = vld [vmem:[%s11 + $0x1fc] sm:$0xf]
        %v2924 = vld [vmem:[%s11 + $0x200] sm:$0xf]
        %v2925 = vld [vmem:[%s11 + $0x204] sm:$0xf]
        %v2926 = vld [vmem:[%s11 + $0x208] sm:$0xf]
        %v2927 = vld [vmem:[%s11 + $0x20c] sm:$0xf]
        %v2928 = vld [vmem:[%s11 + $0x210] sm:$0xf]
        %v2929 = vld [vmem:[%s11 + $0x214] sm:$0xf]
        %v2930 = vld [vmem:[%s11 + $0x218] sm:$0xf]
        %v2931 = vld [vmem:[%s11 + $0x21c] sm:$0xf]
        %v2932 = vld [vmem:[%s11 + $0x220] sm:$0xf]
        %v2933 = vld [vmem:[%s11 + $0x224] sm:$0xf]
        %v2934 = vld [vmem:[%s11 + $0x228] sm:$0xf]
        %v2935 = vld [vmem:[%s11 + $0x22c] sm:$0xf]
        %v2936 = vld [vmem:[%s11 + $0x230] sm:$0xf]
        %v2937 = vld [vmem:[%s11 + $0x234] sm:$0xf]
        %v2938 = vld [vmem:[%s11 + $0x238] sm:$0xf]
        %v2939 = vld [vmem:[%s11 + $0x23c] sm:$0xf]
        %v2940 = vld [vmem:[%s11 + $0x240] sm:$0xf]
        %v2941 = vld [vmem:[%s11 + $0x244] sm:$0xf]
        %v2942 = vld [vmem:[%s11 + $0x248] sm:$0xf]
        %v2943 = vld [vmem:[%s11 + $0x24c] sm:$0xf]
        %v2944 = vld [vmem:[%s11 + $0x250] sm:$0xf]
        %v2945 = vld [vmem:[%s11 + $0x254] sm:$0xf]
        %v2946 = vld [vmem:[%s11 + $0x258] sm:$0xf]
        %v2947 = vld [vmem:[%s11 + $0x25c] sm:$0xf]
        %v2948 = vld [vmem:[%s11 + $0x260] sm:$0xf]
        %v2949 = vld [vmem:[%s11 + $0x264] sm:$0xf]
        %v2950 = vld [vmem:[%s11 + $0x268] sm:$0xf]
        %v2951 = vld [vmem:[%s11 + $0x26c] sm:$0xf]
        %v2952 = vld [vmem:[%s11 + $0x270] sm:$0xf]
        %v2953 = vld [vmem:[%s11 + $0x274] sm:$0xf]
        %v2954 = vld [vmem:[%s11 + $0x278] sm:$0xf]
        %v2955 = vld [vmem:[%s11 + $0x27c] sm:$0xf]
        %v2956 = vld [vmem:[%s11 + $0x280] sm:$0xf]
        %v2957 = vld [vmem:[%s11 + $0x284] sm:$0xf]
        %v2958 = vld [vmem:[%s11 + $0x288] sm:$0xf]
        %v2959 = vld [vmem:[%s11 + $0x28c] sm:$0xf]
        %v2960 = vld [vmem:[%s11 + $0x290] sm:$0xf]
        %v2961 = vld [vmem:[%s11 + $0x294] sm:$0xf]
        %v2962 = vld [vmem:[%s11 + $0x298] sm:$0xf]
        %v2963 = vld [vmem:[%s11 + $0x29c] sm:$0xf]
        %v2964 = vld [vmem:[%s11 + $0x2a0] sm:$0xf]
        %v2965 = vld [vmem:[%s11 + $0x2a4] sm:$0xf]
        %v2966 = vld [vmem:[%s11 + $0x2a8] sm:$0xf]
        %v2967 = vld [vmem:[%s11 + $0x2ac] sm:$0xf]
        %v2968 = vld [vmem:[%s11 + $0x2b0] sm:$0xf]
        %v2969 = vld [vmem:[%s11 + $0x2b4] sm:$0xf]
        %v2970 = vld [vmem:[%s11 + $0x2b8] sm:$0xf]
        %v2971 = vld [vmem:[%s11 + $0x2bc] sm:$0xf]
        %v2972 = vld [vmem:[%s11 + $0x2c0] sm:$0xf]
        %v2973 = vld [vmem:[%s11 + $0x2c4] sm:$0xf]
        %v2974 = vld [vmem:[%s11 + $0x2c8] sm:$0xf]
        %v2975 = vld [vmem:[%s11 + $0x2cc] sm:$0xf]
        %v2976 = vld [vmem:[%s11 + $0x2d0] sm:$0xf]
        %v2977 = vld [vmem:[%s11 + $0x2d4] sm:$0xf]
        %v2978 = vld [vmem:[%s11 + $0x2d8] sm:$0xf]
        %v2979 = vld [vmem:[%s11 + $0x2dc] sm:$0xf]
        %v2980 = vld [vmem:[%s11 + $0x2e0] sm:$0xf]
        %v2981 = vld [vmem:[%s11 + $0x2e4] sm:$0xf]
        %v2982 = vld [vmem:[%s11 + $0x2e8] sm:$0xf]
        %v2983 = vld [vmem:[%s11 + $0x2ec] sm:$0xf]
        %v2984 = vld [vmem:[%s11 + $0x2f0] sm:$0xf]
        %v2985 = vld [vmem:[%s11 + $0x2f4] sm:$0xf]
        %v2986 = vld [vmem:[%s11 + $0x2f8] sm:$0xf]
        %v2987 = vld [vmem:[%s11 + $0x2fc] sm:$0xf]
        %v2988 = vld [vmem:[%s11 + $0x300] sm:$0xf]
        %v2989 = vld [vmem:[%s11 + $0x304] sm:$0xf]
        %v2990 = vld [vmem:[%s11 + $0x308] sm:$0xf]
        %v2991 = vld [vmem:[%s11 + $0x30c] sm:$0xf]
        %v2992 = vld [vmem:[%s11 + $0x310] sm:$0xf]
        %v2993 = vld [vmem:[%s11 + $0x314] sm:$0xf]
        %v2994 = vld [vmem:[%s11 + $0x318] sm:$0xf]
        %v2995 = vld [vmem:[%s11 + $0x31c] sm:$0xf]
        %v2996 = vld [vmem:[%s11 + $0x320] sm:$0xf]
        %v2997 = vld [vmem:[%s11 + $0x324] sm:$0xf]
        %v2998 = vld [vmem:[%s11 + $0x328] sm:$0xf]
        %v2999 = vld [vmem:[%s11 + $0x32c] sm:$0xf]
        %v3000 = vld [vmem:[%s11 + $0x330] sm:$0xf]
        %v3001 = vld [vmem:[%s11 + $0x334] sm:$0xf]
        %v3002 = vld [vmem:[%s11 + $0x338] sm:$0xf]
        %v3003 = vld [vmem:[%s11 + $0x33c] sm:$0xf]
        %v3004 = vld [vmem:[%s11 + $0x340] sm:$0xf]
        %v3005 = vld [vmem:[%s11 + $0x344] sm:$0xf]
        %v3006 = vld [vmem:[%s11 + $0x348] sm:$0xf]
        %v3007 = vld [vmem:[%s11 + $0x34c] sm:$0xf]
        %v3008 = vld [vmem:[%s11 + $0x350] sm:$0xf]
        %v3009 = vld [vmem:[%s11 + $0x354] sm:$0xf]
        %v3010 = vld [vmem:[%s11 + $0x358] sm:$0xf]
        %v3011 = vld [vmem:[%s11 + $0x35c] sm:$0xf]
        %v3012 = vld [vmem:[%s11 + $0x360] sm:$0xf]
        %v3013 = vld [vmem:[%s11 + $0x364] sm:$0xf]
        %v3014 = vld [vmem:[%s11 + $0x368] sm:$0xf]
        %v3015 = vld [vmem:[%s11 + $0x36c] sm:$0xf]
        %v3016 = vld [vmem:[%s11 + $0x370] sm:$0xf]
        %v3017 = vld [vmem:[%s11 + $0x374] sm:$0xf]
        %v3018 = vld [vmem:[%s11 + $0x378] sm:$0xf]
        %v3019 = vld [vmem:[%s11 + $0x37c] sm:$0xf]
        %v3020 = vld [vmem:[%s11 + $0x380] sm:$0xf]
        %v3021 = vld [vmem:[%s11 + $0x384] sm:$0xf]
        %v3022 = vld [vmem:[%s11 + $0x388] sm:$0xf]
        %v3023 = vld [vmem:[%s11 + $0x38c] sm:$0xf]
        %v3024 = vld [vmem:[%s11 + $0x390] sm:$0xf]
        %v3025 = vld [vmem:[%s11 + $0x394] sm:$0xf]
        %v3026 = vld [vmem:[%s11 + $0x398] sm:$0xf]
        %v3027 = vld [vmem:[%s11 + $0x39c] sm:$0xf]
        %v3028 = vld [vmem:[%s11 + $0x3a0] sm:$0xf]
        %v3029 = vld [vmem:[%s11 + $0x3a4] sm:$0xf]
        %v3030 = vld [vmem:[%s11 + $0x3a8] sm:$0xf]
        %v3031 = vld [vmem:[%s11 + $0x3ac] sm:$0xf]
        %v3032 = vld [vmem:[%s11 + $0x3b0] sm:$0xf]
        %v3033 = vld [vmem:[%s11 + $0x3b4] sm:$0xf]
        %v3034 = vld [vmem:[%s11 + $0x3b8] sm:$0xf]
        %v3035 = vld [vmem:[%s11 + $0x3bc] sm:$0xf]
        %v3036 = vld [vmem:[%s11 + $0x3c0] sm:$0xf]
        %v3037 = vld [vmem:[%s11 + $0x3c4] sm:$0xf]
        %v3038 = vld [vmem:[%s11 + $0x3c8] sm:$0xf]
        %v3039 = vld [vmem:[%s11 + $0x3cc] sm:$0xf]
        %v3040 = vld [vmem:[%s11 + $0x3d0] sm:$0xf]
        %v3041 = vld [vmem:[%s11 + $0x3d4] sm:$0xf]
        %v3042 = vld [vmem:[%s11 + $0x3d8] sm:$0xf]
        %v3043 = vld [vmem:[%s11 + $0x3dc] sm:$0xf]
        %v3044 = vld [vmem:[%s11 + $0x3e0] sm:$0xf]
        %v3045 = vld [vmem:[%s11 + $0x3e4] sm:$0xf]
        %v3046 = vld [vmem:[%s11 + $0x3e8] sm:$0xf]
        %v3047 = vld [vmem:[%s11 + $0x3ec] sm:$0xf]
        %v3048 = vld [vmem:[%s11 + $0x3f0] sm:$0xf]
        %v3049 = vld [vmem:[%s11 + $0x3f4] sm:$0xf]
        %v3050 = vld [vmem:[%s11 + $0x3f8] sm:$0xf]
        %v3051 = vld [vmem:[%s11 + $0x3fc] sm:$0xf]
        %v3052 = vld [vmem:[%s11 + $0x400] sm:$0xf]
        %v3053 = vld [vmem:[%s11 + $0x404] sm:$0xf]
        %v3054 = vld [vmem:[%s11 + $0x408] sm:$0xf]
        %v3055 = vld [vmem:[%s11 + $0x40c] sm:$0xf]
        %v3056 = vld [vmem:[%s11 + $0x410] sm:$0xf]
        %v3057 = vld [vmem:[%s11 + $0x414] sm:$0xf]
        %v3058 = vld [vmem:[%s11 + $0x418] sm:$0xf]
        %v3059 = vld [vmem:[%s11 + $0x41c] sm:$0xf]
        %v3060 = vld [vmem:[%s11 + $0x420] sm:$0xf]
        %v3061 = vld [vmem:[%s11 + $0x424] sm:$0xf]
        %v3062 = vld [vmem:[%s11 + $0x428] sm:$0xf]
        %v3063 = vld [vmem:[%s11 + $0x42c] sm:$0xf]
        %v3064 = vld [vmem:[%s11 + $0x430] sm:$0xf]
        %v3065 = vld [vmem:[%s11 + $0x434] sm:$0xf]
        %v3066 = vld [vmem:[%s11 + $0x438] sm:$0xf]
        %v3067 = vld [vmem:[%s11 + $0x43c] sm:$0xf]
        %v3068 = vld [vmem:[%s11 + $0x440] sm:$0xf]
        %v3069 = vld [vmem:[%s11 + $0x444] sm:$0xf]
        %v3070 = vld [vmem:[%s11 + $0x448] sm:$0xf]
        %v3071 = vld [vmem:[%s11 + $0x44c] sm:$0xf]
        %v3072 = vld [vmem:[%s11 + $0x450] sm:$0xf]
        %v3073 = vld [vmem:[%s11 + $0x454] sm:$0xf]
        %v3074 = vld [vmem:[%s11 + $0x458] sm:$0xf]
        %v3075 = vld [vmem:[%s11 + $0x45c] sm:$0xf]
        %v3076 = vld [vmem:[%s11 + $0x460] sm:$0xf]
        %v3077 = vld [vmem:[%s11 + $0x464] sm:$0xf]
        %v3078 = vld [vmem:[%s11 + $0x468] sm:$0xf]
        %v3079 = vld [vmem:[%s11 + $0x46c] sm:$0xf]
        %v3080 = vld [vmem:[%s11 + $0x470] sm:$0xf]
        %v3081 = vld [vmem:[%s11 + $0x474] sm:$0xf]
        %v3082 = vld [vmem:[%s11 + $0x478] sm:$0xf]
        %v3083 = vld [vmem:[%s11 + $0x47c] sm:$0xf]
        %v3084 = vld [vmem:[%s11 + $0x480] sm:$0xf]
        %v3085 = vld [vmem:[%s11 + $0x484] sm:$0xf]
        %v3086 = vld [vmem:[%s11 + $0x488] sm:$0xf]
        %v3087 = vld [vmem:[%s11 + $0x48c] sm:$0xf]
        %v3088 = vld [vmem:[%s11 + $0x490] sm:$0xf]
        %v3089 = vld [vmem:[%s11 + $0x494] sm:$0xf]
        %v3090 = vld [vmem:[%s11 + $0x498] sm:$0xf]
        %v3091 = vld [vmem:[%s11 + $0x49c] sm:$0xf]
        %v3092 = vld [vmem:[%s11 + $0x4a0] sm:$0xf]
        %v3093 = vld [vmem:[%s11 + $0x4a4] sm:$0xf]
        %v3094 = vld [vmem:[%s11 + $0x4a8] sm:$0xf]
        %v3095 = vld [vmem:[%s11 + $0x4ac] sm:$0xf]
        %v3096 = vld [vmem:[%s11 + $0x4b0] sm:$0xf]
        %v3097 = vld [vmem:[%s11 + $0x4b4] sm:$0xf]
        %v3098 = vld [vmem:[%s11 + $0x4b8] sm:$0xf]
        %v3099 = vld [vmem:[%s11 + $0x4bc] sm:$0xf]
        %v3100 = vld [vmem:[%s11 + $0x4c0] sm:$0xf]
        %v3101 = vld [vmem:[%s11 + $0x4c4] sm:$0xf]
        %v3102 = vld [vmem:[%s11 + $0x4c8] sm:$0xf]
        %v3103 = vld [vmem:[%s11 + $0x4cc] sm:$0xf]
        %v3104 = vld [vmem:[%s11 + $0x4d0] sm:$0xf]
        %v3105 = vld [vmem:[%s11 + $0x4d4] sm:$0xf]
        %v3106 = vld [vmem:[%s11 + $0x4d8] sm:$0xf]
        %v3107 = vld [vmem:[%s11 + $0x4dc] sm:$0xf]
        %v3108 = vld [vmem:[%s11 + $0x4e0] sm:$0xf]
        %v3109 = vld [vmem:[%s11 + $0x4e4] sm:$0xf]
        %v3110 = vld [vmem:[%s11 + $0x4e8] sm:$0xf]
        %v3111 = vld [vmem:[%s11 + $0x4ec] sm:$0xf]
        %v3112 = vld [vmem:[%s11 + $0x4f0] sm:$0xf]
        %v3113 = vld [vmem:[%s11 + $0x4f4] sm:$0xf]
        %v3114 = vld [vmem:[%s11 + $0x4f8] sm:$0xf]
        %v3115 = vld [vmem:[%s11 + $0x4fc] sm:$0xf]
        %v3116 = vld [vmem:[%s11 + $0x500] sm:$0xf]
        %v3117 = vld [vmem:[%s11 + $0x504] sm:$0xf]
        %v3118 = vld [vmem:[%s11 + $0x508] sm:$0xf]
        %v3119 = vld [vmem:[%s11 + $0x50c] sm:$0xf]
        %v3120 = vld [vmem:[%s11 + $0x510] sm:$0xf]
        %v3121 = vld [vmem:[%s11 + $0x514] sm:$0xf]
        %v3122 = vld [vmem:[%s11 + $0x518] sm:$0xf]
        %v3123 = vld [vmem:[%s11 + $0x51c] sm:$0xf]
        %v3124 = vld [vmem:[%s11 + $0x520] sm:$0xf]
        %v3125 = vld [vmem:[%s11 + $0x524] sm:$0xf]
        %v3126 = vld [vmem:[%s11 + $0x528] sm:$0xf]
        %v3127 = vld [vmem:[%s11 + $0x52c] sm:$0xf]
        %v3128 = vld [vmem:[%s11 + $0x530] sm:$0xf]
        %v3129 = vld [vmem:[%s11 + $0x534] sm:$0xf]
        %v3130 = vld [vmem:[%s11 + $0x538] sm:$0xf]
        %v3131 = vld [vmem:[%s11 + $0x53c] sm:$0xf]
        %v3132 = vld [vmem:[%s11 + $0x540] sm:$0xf]
        %v3133 = vld [vmem:[%s11 + $0x544] sm:$0xf]
        %v3134 = vld [vmem:[%s11 + $0x548] sm:$0xf]
        %v3135 = vld [vmem:[%s11 + $0x54c] sm:$0xf]
        %v3136 = vld [vmem:[%s11 + $0x550] sm:$0xf]
        %v3137 = vld [vmem:[%s11 + $0x554] sm:$0xf]
        %v3138 = vld [vmem:[%s11 + $0x558] sm:$0xf]
        %v3139 = vld [vmem:[%s11 + $0x55c] sm:$0xf]
        %v3140 = vld [vmem:[%s11 + $0x560] sm:$0xf]
        %v3141 = vld [vmem:[%s11 + $0x564] sm:$0xf]
        %v3142 = vld [vmem:[%s11 + $0x568] sm:$0xf]
        %v3143 = vld [vmem:[%s11 + $0x56c] sm:$0xf]
        %v3144 = vld [vmem:[%s11 + $0x570] sm:$0xf]
        %v3145 = vld [vmem:[%s11 + $0x574] sm:$0xf]
        %v3146 = vld [vmem:[%s11 + $0x578] sm:$0xf]
        %v3147 = vld [vmem:[%s11 + $0x57c] sm:$0xf]
        %v3148 = vld [vmem:[%s11 + $0x580] sm:$0xf]
        %v3149 = vld [vmem:[%s11 + $0x584] sm:$0xf]
        %v3150 = vld [vmem:[%s11 + $0x588] sm:$0xf]
        %v3151 = vld [vmem:[%s11 + $0x58c] sm:$0xf]
        %v3152 = vld [vmem:[%s11 + $0x590] sm:$0xf]
        %v3153 = vld [vmem:[%s11 + $0x594] sm:$0xf]
        %v3154 = vld [vmem:[%s11 + $0x598] sm:$0xf]
        %v3155 = vld [vmem:[%s11 + $0x59c] sm:$0xf]
        %v3156 = vld [vmem:[%s11 + $0x5a0] sm:$0xf]
        %v3157 = vld [vmem:[%s11 + $0x5a4] sm:$0xf]
        %v3158 = vld [vmem:[%s11 + $0x5a8] sm:$0xf]
        %v3159 = vld [vmem:[%s11 + $0x5ac] sm:$0xf]
        %v3160 = vld [vmem:[%s11 + $0x5b0] sm:$0xf]
        %v3161 = vld [vmem:[%s11 + $0x5b4] sm:$0xf]
        %v3162 = vld [vmem:[%s11 + $0x5b8] sm:$0xf]
        %v3163 = vld [vmem:[%s11 + $0x5bc] sm:$0xf]
        %v3164 = vld [vmem:[%s11 + $0x5c0] sm:$0xf]
        %v3165 = vld [vmem:[%s11 + $0x5c4] sm:$0xf]
        %v3166 = vld [vmem:[%s11 + $0x5c8] sm:$0xf]
        %v3167 = vld [vmem:[%s11 + $0x5cc] sm:$0xf]
        %v3168 = vld [vmem:[%s11 + $0x5d0] sm:$0xf]
        %v3169 = vld [vmem:[%s11 + $0x5d4] sm:$0xf]
        %v3170 = vld [vmem:[%s11 + $0x5d8] sm:$0xf]
        %v3171 = vld [vmem:[%s11 + $0x5dc] sm:$0xf]
        %v3172 = vld [vmem:[%s11 + $0x5e0] sm:$0xf]
        %v3173 = vld [vmem:[%s11 + $0x5e4] sm:$0xf]
        %v3174 = vld [vmem:[%s11 + $0x5e8] sm:$0xf]
        %v3175 = vld [vmem:[%s11 + $0x5ec] sm:$0xf]
        %v3176 = vld [vmem:[%s11 + $0x5f0] sm:$0xf]
        %v3177 = vld [vmem:[%s11 + $0x5f4] sm:$0xf]
        %v3178 = vld [vmem:[%s11 + $0x5f8] sm:$0xf]
        %v3179 = vld [vmem:[%s11 + $0x5fc] sm:$0xf]
        %v3180 = vld [vmem:[%s11 + $0x600] sm:$0xf]
        %v3181 = vld [vmem:[%s11 + $0x604] sm:$0xf]
        %v3182 = vld [vmem:[%s11 + $0x608] sm:$0xf]
        %v3183 = vld [vmem:[%s11 + $0x60c] sm:$0xf]
        %v3184 = vld [vmem:[%s11 + $0x610] sm:$0xf]
        %v3185 = vld [vmem:[%s11 + $0x614] sm:$0xf]
        %v3186 = vld [vmem:[%s11 + $0x618] sm:$0xf]
        %v3187 = vld [vmem:[%s11 + $0x61c] sm:$0xf]
        %v3188 = vld [vmem:[%s11 + $0x620] sm:$0xf]
        %v3189 = vld [vmem:[%s11 + $0x624] sm:$0xf]
        %v3190 = vld [vmem:[%s11 + $0x628] sm:$0xf]
        %v3191 = vld [vmem:[%s11 + $0x62c] sm:$0xf]
        %v3192 = vld [vmem:[%s11 + $0x630] sm:$0xf]
        %v3193 = vld [vmem:[%s11 + $0x634] sm:$0xf]
        %v3194 = vld [vmem:[%s11 + $0x638] sm:$0xf]
        %v3195 = vld [vmem:[%s11 + $0x63c] sm:$0xf]
        %v3196 = vld [vmem:[%s11 + $0x640] sm:$0xf]
        %v3197 = vld [vmem:[%s11 + $0x644] sm:$0xf]
        %v3198 = vld [vmem:[%s11 + $0x648] sm:$0xf]
        %v3199 = vld [vmem:[%s11 + $0x64c] sm:$0xf]
        %v3200 = vld [vmem:[%s11 + $0x650] sm:$0xf]
        %v3201 = vld [vmem:[%s11 + $0x654] sm:$0xf]
        %v3202 = vld [vmem:[%s11 + $0x658] sm:$0xf]
        %v3203 = vld [vmem:[%s11 + $0x65c] sm:$0xf]
        %v3204 = vld [vmem:[%s11 + $0x660] sm:$0xf]
        %v3205 = vld [vmem:[%s11 + $0x664] sm:$0xf]
        %v3206 = vld [vmem:[%s11 + $0x668] sm:$0xf]
        %v3207 = vld [vmem:[%s11 + $0x66c] sm:$0xf]
        %v3208 = vld [vmem:[%s11 + $0x670] sm:$0xf]
        %v3209 = vld [vmem:[%s11 + $0x674] sm:$0xf]
        %v3210 = vld [vmem:[%s11 + $0x678] sm:$0xf]
        %v3211 = vld [vmem:[%s11 + $0x67c] sm:$0xf]
        %v3212 = vld [vmem:[%s11 + $0x680] sm:$0xf]
        %v3213 = vld [vmem:[%s11 + $0x684] sm:$0xf]
        %v3214 = vld [vmem:[%s11 + $0x688] sm:$0xf]
        %v3215 = vld [vmem:[%s11 + $0x68c] sm:$0xf]
        %v3216 = vld [vmem:[%s11 + $0x690] sm:$0xf]
        %v3217 = vld [vmem:[%s11 + $0x694] sm:$0xf]
        %v3218 = vld [vmem:[%s11 + $0x698] sm:$0xf]
        %v3219 = vld [vmem:[%s11 + $0x69c] sm:$0xf]
        %v3220 = vld [vmem:[%s11 + $0x6a0] sm:$0xf]
        %v3221 = vld [vmem:[%s11 + $0x6a4] sm:$0xf]
        %v3222 = vld [vmem:[%s11 + $0x6a8] sm:$0xf]
        %v3223 = vld [vmem:[%s11 + $0x6ac] sm:$0xf]
        %v3224 = vld [vmem:[%s11 + $0x6b0] sm:$0xf]
        %v3225 = vld [vmem:[%s11 + $0x6b4] sm:$0xf]
        %v3226 = vld [vmem:[%s11 + $0x6b8] sm:$0xf]
        %v3227 = vld [vmem:[%s11 + $0x6bc] sm:$0xf]
        %v3228 = vld [vmem:[%s11 + $0x6c0] sm:$0xf]
        %v3229 = vld [vmem:[%s11 + $0x6c4] sm:$0xf]
        %v3230 = vld [vmem:[%s11 + $0x6c8] sm:$0xf]
        %v3231 = vld [vmem:[%s11 + $0x6cc] sm:$0xf]
        %v3232 = vld [vmem:[%s11 + $0x6d0] sm:$0xf]
        %v3233 = vld [vmem:[%s11 + $0x6d4] sm:$0xf]
        %v3234 = vld [vmem:[%s11 + $0x6d8] sm:$0xf]
        %v3235 = vld [vmem:[%s11 + $0x6dc] sm:$0xf]
        %v3236 = vld [vmem:[%s11 + $0x6e0] sm:$0xf]
        %v3237 = vld [vmem:[%s11 + $0x6e4] sm:$0xf]
        %v3238 = vld [vmem:[%s11 + $0x6e8] sm:$0xf]
        %v3239 = vld [vmem:[%s11 + $0x6ec] sm:$0xf]
        %v3240 = vld [vmem:[%s11 + $0x6f0] sm:$0xf]
        %v3241 = vld [vmem:[%s11 + $0x6f4] sm:$0xf]
        %v3242 = vld [vmem:[%s11 + $0x6f8] sm:$0xf]
        %v3243 = vld [vmem:[%s11 + $0x6fc] sm:$0xf]
        %v3244 = vld [vmem:[%s11 + $0x700] sm:$0xf]
        %v3245 = vld [vmem:[%s11 + $0x704] sm:$0xf]
        %v3246 = vld [vmem:[%s11 + $0x708] sm:$0xf]
        %v3247 = vld [vmem:[%s11 + $0x70c] sm:$0xf]
        %v3248 = vld [vmem:[%s11 + $0x710] sm:$0xf]
        %v3249 = vld [vmem:[%s11 + $0x714] sm:$0xf]
        %v3250 = vld [vmem:[%s11 + $0x718] sm:$0xf]
        %v3251 = vld [vmem:[%s11 + $0x71c] sm:$0xf]
        %v3252 = vld [vmem:[%s11 + $0x720] sm:$0xf]
        %v3253 = vld [vmem:[%s11 + $0x724] sm:$0xf]
        %v3254 = vld [vmem:[%s11 + $0x728] sm:$0xf]
        %v3255 = vld [vmem:[%s11 + $0x72c] sm:$0xf]
        %v3256 = vld [vmem:[%s11 + $0x730] sm:$0xf]
        %v3257 = vld [vmem:[%s11 + $0x734] sm:$0xf]
        %v3258 = vld [vmem:[%s11 + $0x738] sm:$0xf]
        %v3259 = vld [vmem:[%s11 + $0x73c] sm:$0xf]
        %v3260 = vld [vmem:[%s11 + $0x740] sm:$0xf]
        %v3261 = vld [vmem:[%s11 + $0x744] sm:$0xf]
        %v3262 = vld [vmem:[%s11 + $0x748] sm:$0xf]
        %v3263 = vld [vmem:[%s11 + $0x74c] sm:$0xf]
        %v3264 = vld [vmem:[%s11 + $0x750] sm:$0xf]
        %v3265 = vld [vmem:[%s11 + $0x754] sm:$0xf]
        %v3266 = vld [vmem:[%s11 + $0x758] sm:$0xf]
        %v3267 = vld [vmem:[%s11 + $0x75c] sm:$0xf]
        %v3268 = vld [vmem:[%s11 + $0x760] sm:$0xf]
        %v3269 = vld [vmem:[%s11 + $0x764] sm:$0xf]
        %v3270 = vld [vmem:[%s11 + $0x768] sm:$0xf]
        %v3271 = vld [vmem:[%s11 + $0x76c] sm:$0xf]
        %v3272 = vld [vmem:[%s11 + $0x770] sm:$0xf]
        %v3273 = vld [vmem:[%s11 + $0x774] sm:$0xf]
        %v3274 = vld [vmem:[%s11 + $0x778] sm:$0xf]
        %v3275 = vld [vmem:[%s11 + $0x77c] sm:$0xf]
        %v3276 = vld [vmem:[%s11 + $0x780] sm:$0xf]
        %v3277 = vld [vmem:[%s11 + $0x784] sm:$0xf]
        %v3278 = vld [vmem:[%s11 + $0x788] sm:$0xf]
        %v3279 = vld [vmem:[%s11 + $0x78c] sm:$0xf]
        %v3280 = vld [vmem:[%s11 + $0x790] sm:$0xf]
        %v3281 = vld [vmem:[%s11 + $0x794] sm:$0xf]
        %v3282 = vld [vmem:[%s11 + $0x798] sm:$0xf]
        %v3283 = vld [vmem:[%s11 + $0x79c] sm:$0xf]
        %v3284 = vld [vmem:[%s11 + $0x7a0] sm:$0xf]
        %v3285 = vld [vmem:[%s11 + $0x7a4] sm:$0xf]
        %v3286 = vld [vmem:[%s11 + $0x7a8] sm:$0xf]
        %v3287 = vld [vmem:[%s11 + $0x7ac] sm:$0xf]
        %v3288 = vld [vmem:[%s11 + $0x7b0] sm:$0xf]
        %v3289 = vld [vmem:[%s11 + $0x7b4] sm:$0xf]
        %v3290 = vld [vmem:[%s11 + $0x7b8] sm:$0xf]
        %v3291 = vld [vmem:[%s11 + $0x7bc] sm:$0xf]
        %v3292 = vld [vmem:[%s11 + $0x7c0] sm:$0xf]
        %v3293 = vld [vmem:[%s11 + $0x7c4] sm:$0xf]
        %v3294 = vld [vmem:[%s11 + $0x7c8] sm:$0xf]
        %v3295 = vld [vmem:[%s11 + $0x7cc] sm:$0xf]
        %v3296 = vld [vmem:[%s11 + $0x7d0] sm:$0xf]
        %v3297 = vld [vmem:[%s11 + $0x7d4] sm:$0xf]
        %v3298 = vld [vmem:[%s11 + $0x7d8] sm:$0xf]
        %v3299 = vld [vmem:[%s11 + $0x7dc] sm:$0xf]
        %v3300 = vld [vmem:[%s11 + $0x7e0] sm:$0xf]
        %v3301 = vld [vmem:[%s11 + $0x7e4] sm:$0xf]
        %v3302 = vld [vmem:[%s11 + $0x7e8] sm:$0xf]
        %v3303 = vld [vmem:[%s11 + $0x7ec] sm:$0xf]
        %v3304 = vld [vmem:[%s11 + $0x7f0] sm:$0xf]
        %v3305 = vld [vmem:[%s11 + $0x7f4] sm:$0xf]
        %v3306 = vld [vmem:[%s11 + $0x7f8] sm:$0xf]
        %v3307 = vld [vmem:[%s11 + $0x7fc] sm:$0xf]
        %v3308 = vld [vmem:[%s11 + $0x800] sm:$0xf]
        %v3309 = vld [vmem:[%s11 + $0x804] sm:$0xf]
        %v3310 = vld [vmem:[%s11 + $0x808] sm:$0xf]
        %v3311 = vld [vmem:[%s11 + $0x80c] sm:$0xf]
        %v3312 = vld [vmem:[%s11 + $0x810] sm:$0xf]
        %v3313 = vld [vmem:[%s11 + $0x814] sm:$0xf]
        %v3314 = vld [vmem:[%s11 + $0x818] sm:$0xf]
        %v3315 = vld [vmem:[%s11 + $0x81c] sm:$0xf]
        %v3316 = vld [vmem:[%s11 + $0x820] sm:$0xf]
        %v3317 = vld [vmem:[%s11 + $0x824] sm:$0xf]
        %v3318 = vld [vmem:[%s11 + $0x828] sm:$0xf]
        %v3319 = vld [vmem:[%s11 + $0x82c] sm:$0xf]
        %v3320 = vld [vmem:[%s11 + $0x830] sm:$0xf]
        %v3321 = vld [vmem:[%s11 + $0x834] sm:$0xf]
        %v3322 = vld [vmem:[%s11 + $0x838] sm:$0xf]
        %v3323 = vld [vmem:[%s11 + $0x83c] sm:$0xf]
        %v3324 = vld [vmem:[%s11 + $0x840] sm:$0xf]
        %v3325 = vld [vmem:[%s11 + $0x844] sm:$0xf]
        %v3326 = vld [vmem:[%s11 + $0x848] sm:$0xf]
        %v3327 = vld [vmem:[%s11 + $0x84c] sm:$0xf]
        %v3328 = vld [vmem:[%s11 + $0x850] sm:$0xf]
        %v3329 = vld [vmem:[%s11 + $0x854] sm:$0xf]
        %v3330 = vld [vmem:[%s11 + $0x858] sm:$0xf]
        %v3331 = vld [vmem:[%s11 + $0x85c] sm:$0xf]
        %v3332 = vld [vmem:[%s11 + $0x860] sm:$0xf]
        %v3333 = vld [vmem:[%s11 + $0x864] sm:$0xf]
        %v3334 = vld [vmem:[%s11 + $0x868] sm:$0xf]
        %v3335 = vld [vmem:[%s11 + $0x86c] sm:$0xf]
        %v3336 = vld [vmem:[%s11 + $0x870] sm:$0xf]
        %v3337 = vld [vmem:[%s11 + $0x874] sm:$0xf]
        %v3338 = vld [vmem:[%s11 + $0x878] sm:$0xf]
        %v3339 = vld [vmem:[%s11 + $0x87c] sm:$0xf]
        %v3340 = vld [vmem:[%s11 + $0x880] sm:$0xf]
        %v3341 = vld [vmem:[%s11 + $0x884] sm:$0xf]
        %v3342 = vld [vmem:[%s11 + $0x888] sm:$0xf]
        %v3343 = vld [vmem:[%s11 + $0x88c] sm:$0xf]
        %v3344 = vld [vmem:[%s11 + $0x890] sm:$0xf]
        %v3345 = vld [vmem:[%s11 + $0x894] sm:$0xf]
        %v3346 = vld [vmem:[%s11 + $0x898] sm:$0xf]
        %v3347 = vld [vmem:[%s11 + $0x89c] sm:$0xf]
        %v3348 = vld [vmem:[%s11 + $0x8a0] sm:$0xf]
        %v3349 = vld [vmem:[%s11 + $0x8a4] sm:$0xf]
        %v3350 = vld [vmem:[%s11 + $0x8a8] sm:$0xf]
        %v3351 = vld [vmem:[%s11 + $0x8ac] sm:$0xf]
        %v3352 = vld [vmem:[%s11 + $0x8b0] sm:$0xf]
        %v3353 = vld [vmem:[%s11 + $0x8b4] sm:$0xf]
        %v3354 = vld [vmem:[%s11 + $0x8b8] sm:$0xf]
        %v3355 = vld [vmem:[%s11 + $0x8bc] sm:$0xf]
        %v3356 = vld [vmem:[%s11 + $0x8c0] sm:$0xf]
        %v3357 = vld [vmem:[%s11 + $0x8c4] sm:$0xf]
        %v3358 = vld [vmem:[%s11 + $0x8c8] sm:$0xf]
        %v3359 = vld [vmem:[%s11 + $0x8cc] sm:$0xf]
        %v3360 = vld [vmem:[%s11 + $0x8d0] sm:$0xf]
        %v3361 = vld [vmem:[%s11 + $0x8d4] sm:$0xf]
        %v3362 = vld [vmem:[%s11 + $0x8d8] sm:$0xf]
        %v3363 = vld [vmem:[%s11 + $0x8dc] sm:$0xf]
        %v3364 = vld [vmem:[%s11 + $0x8e0] sm:$0xf]
        %v3365 = vld [vmem:[%s11 + $0x8e4] sm:$0xf]
        %v3366 = vld [vmem:[%s11 + $0x8e8] sm:$0xf]
        %v3367 = vld [vmem:[%s11 + $0x8ec] sm:$0xf]
        %v3368 = vld [vmem:[%s11 + $0x8f0] sm:$0xf]
        %v3369 = vld [vmem:[%s11 + $0x8f4] sm:$0xf]
        %v3370 = vld [vmem:[%s11 + $0x8f8] sm:$0xf]
        %v3371 = vld [vmem:[%s11 + $0x8fc] sm:$0xf]
        %v3372 = vld [vmem:[%s11 + $0x900] sm:$0xf]
        %v3373 = vld [vmem:[%s11 + $0x904] sm:$0xf]
        %v3374 = vld [vmem:[%s11 + $0x908] sm:$0xf]
        %v3375 = vld [vmem:[%s11 + $0x90c] sm:$0xf]
        %v3376 = vld [vmem:[%s11 + $0x910] sm:$0xf]
        %v3377 = vld [vmem:[%s11 + $0x914] sm:$0xf]
        %v3378 = vld [vmem:[%s11 + $0x918] sm:$0xf]
        %v3379 = vld [vmem:[%s11 + $0x91c] sm:$0xf]
        %v3380 = vld [vmem:[%s11 + $0x920] sm:$0xf]
        %v3381 = vld [vmem:[%s11 + $0x924] sm:$0xf]
        %v3382 = vld [vmem:[%s11 + $0x928] sm:$0xf]
        %v3383 = vld [vmem:[%s11 + $0x92c] sm:$0xf]
        %v3384 = vld [vmem:[%s11 + $0x930] sm:$0xf]
        %v3385 = vld [vmem:[%s11 + $0x934] sm:$0xf]
        %v3386 = vld [vmem:[%s11 + $0x938] sm:$0xf]
        %v3387 = vld [vmem:[%s11 + $0x93c] sm:$0xf]
        %v3388 = vld [vmem:[%s11 + $0x940] sm:$0xf]
        %v3389 = vld [vmem:[%s11 + $0x944] sm:$0xf]
        %v3390 = vld [vmem:[%s11 + $0x948] sm:$0xf]
        %v3391 = vld [vmem:[%s11 + $0x94c] sm:$0xf]
        %v3392 = vld [vmem:[%s11 + $0x950] sm:$0xf]
        %v3393 = vld [vmem:[%s11 + $0x954] sm:$0xf]
        %v3394 = vld [vmem:[%s11 + $0x958] sm:$0xf]
        %v3395 = vld [vmem:[%s11 + $0x95c] sm:$0xf]
        %v3396 = vld [vmem:[%s11 + $0x960] sm:$0xf]
        %v3397 = vld [vmem:[%s11 + $0x964] sm:$0xf]
        %v3398 = vld [vmem:[%s11 + $0x968] sm:$0xf]
        %v3399 = vld [vmem:[%s11 + $0x96c] sm:$0xf]
        %v3400 = vld [vmem:[%s11 + $0x970] sm:$0xf]
        %v3401 = vld [vmem:[%s11 + $0x974] sm:$0xf]
        %v3402 = vld [vmem:[%s11 + $0x978] sm:$0xf]
        %v3403 = vld [vmem:[%s11 + $0x97c] sm:$0xf]
        %v3404 = vld [vmem:[%s11 + $0x980] sm:$0xf]
        %v3405 = vld [vmem:[%s11 + $0x984] sm:$0xf]
        %v3406 = vld [vmem:[%s11 + $0x988] sm:$0xf]
        %v3407 = vld [vmem:[%s11 + $0x98c] sm:$0xf]
        %v3408 = vld [vmem:[%s11 + $0x990] sm:$0xf]
        %v3409 = vld [vmem:[%s11 + $0x994] sm:$0xf]
        %v3410 = vld [vmem:[%s11 + $0x998] sm:$0xf]
        %v3411 = vld [vmem:[%s11 + $0x99c] sm:$0xf]
        %v3412 = vld [vmem:[%s11 + $0x9a0] sm:$0xf]
        %v3413 = vld [vmem:[%s11 + $0x9a4] sm:$0xf]
        %v3414 = vld [vmem:[%s11 + $0x9a8] sm:$0xf]
        %v3415 = vld [vmem:[%s11 + $0x9ac] sm:$0xf]
        %v3416 = vld [vmem:[%s11 + $0x9b0] sm:$0xf]
        %v3417 = vld [vmem:[%s11 + $0x9b4] sm:$0xf]
        %v3418 = vld [vmem:[%s11 + $0x9b8] sm:$0xf]
        %v3419 = vld [vmem:[%s11 + $0x9bc] sm:$0xf]
        %v3420 = vld [vmem:[%s11 + $0x9c0] sm:$0xf]
        %v3421 = vld [vmem:[%s11 + $0x9c4] sm:$0xf]
        %v3422 = vld [vmem:[%s11 + $0x9c8] sm:$0xf]
        %v3423 = vld [vmem:[%s11 + $0x9cc] sm:$0xf]
        %v3424 = vld [vmem:[%s11 + $0x9d0] sm:$0xf]
        %v3425 = vld [vmem:[%s11 + $0x9d4] sm:$0xf]
        %v3426 = vld [vmem:[%s11 + $0x9d8] sm:$0xf]
        %v3427 = vld [vmem:[%s11 + $0x9dc] sm:$0xf]
        %v3428 = vld [vmem:[%s11 + $0x9e0] sm:$0xf]
        %v3429 = vld [vmem:[%s11 + $0x9e4] sm:$0xf]
        %v3430 = vld [vmem:[%s11 + $0x9e8] sm:$0xf]
        %v3431 = vld [vmem:[%s11 + $0x9ec] sm:$0xf]
        %v3432 = vld [vmem:[%s11 + $0x9f0] sm:$0xf]
        %v3433 = vld [vmem:[%s11 + $0x9f4] sm:$0xf]
        %v3434 = vld [vmem:[%s11 + $0x9f8] sm:$0xf]
        %v3435 = vld [vmem:[%s11 + $0x9fc] sm:$0xf]
        %v3436 = vld [vmem:[%s11 + $0xa00] sm:$0xf]
        %v3437 = vld [vmem:[%s11 + $0xa04] sm:$0xf]
        %v3438 = vld [vmem:[%s11 + $0xa08] sm:$0xf]
        %v3439 = vld [vmem:[%s11 + $0xa0c] sm:$0xf]
        %v3440 = vld [vmem:[%s11 + $0xa10] sm:$0xf]
        %v3441 = vld [vmem:[%s11 + $0xa14] sm:$0xf]
        %v3442 = vld [vmem:[%s11 + $0xa18] sm:$0xf]
        %v3443 = vld [vmem:[%s11 + $0xa1c] sm:$0xf]
        %v3444 = vld [vmem:[%s11 + $0xa20] sm:$0xf]
        %v3445 = vld [vmem:[%s11 + $0xa24] sm:$0xf]
        %v3446 = vld [vmem:[%s11 + $0xa28] sm:$0xf]
        %v3447 = vld [vmem:[%s11 + $0xa2c] sm:$0xf]
        %v3448 = vld [vmem:[%s11 + $0xa30] sm:$0xf]
        %v3449 = vld [vmem:[%s11 + $0xa34] sm:$0xf]
        %v3450 = vld [vmem:[%s11 + $0xa38] sm:$0xf]
        %v3451 = vld [vmem:[%s11 + $0xa3c] sm:$0xf]
        %v3452 = vld [vmem:[%s11 + $0xa40] sm:$0xf]
        %v3453 = vld [vmem:[%s11 + $0xa44] sm:$0xf]
        %v3454 = vld [vmem:[%s11 + $0xa48] sm:$0xf]
        %v3455 = vld [vmem:[%s11 + $0xa4c] sm:$0xf]
        %v3456 = vld [vmem:[%s11 + $0xa50] sm:$0xf]
        %v3457 = vld [vmem:[%s11 + $0xa54] sm:$0xf]
        %v3458 = vld [vmem:[%s11 + $0xa58] sm:$0xf]
        %v3459 = vld [vmem:[%s11 + $0xa5c] sm:$0xf]
        %v3460 = vld [vmem:[%s11 + $0xa60] sm:$0xf]
        %v3461 = vld [vmem:[%s11 + $0xa64] sm:$0xf]
        %v3462 = vld [vmem:[%s11 + $0xa68] sm:$0xf]
        %v3463 = vld [vmem:[%s11 + $0xa6c] sm:$0xf]
        %v3464 = vld [vmem:[%s11 + $0xa70] sm:$0xf]
        %v3465 = vld [vmem:[%s11 + $0xa74] sm:$0xf]
        %v3466 = vld [vmem:[%s11 + $0xa78] sm:$0xf]
        %v3467 = vld [vmem:[%s11 + $0xa7c] sm:$0xf]
        %v3468 = vld [vmem:[%s11 + $0xa80] sm:$0xf]
        %v3469 = vld [vmem:[%s11 + $0xa84] sm:$0xf]
        %v3470 = vld [vmem:[%s11 + $0xa88] sm:$0xf]
        %v3471 = vld [vmem:[%s11 + $0xa8c] sm:$0xf]
        %v3472 = vld [vmem:[%s11 + $0xa90] sm:$0xf]
        %v3473 = vld [vmem:[%s11 + $0xa94] sm:$0xf]
        %v3474 = vld [vmem:[%s11 + $0xa98] sm:$0xf]
        %v3475 = vld [vmem:[%s11 + $0xa9c] sm:$0xf]
        %v3476 = vld [vmem:[%s11 + $0xaa0] sm:$0xf]
        %v3477 = vld [vmem:[%s11 + $0xaa4] sm:$0xf]
        %v3478 = vld [vmem:[%s11 + $0xaa8] sm:$0xf]
        %v3479 = vld [vmem:[%s11 + $0xaac] sm:$0xf]
        %v3480 = vld [vmem:[%s11 + $0xab0] sm:$0xf]
        %v3481 = vld [vmem:[%s11 + $0xab4] sm:$0xf]
        %v3482 = vld [vmem:[%s11 + $0xab8] sm:$0xf]
        %v3483 = vld [vmem:[%s11 + $0xabc] sm:$0xf]
        %v3484 = vld [vmem:[%s11 + $0xac0] sm:$0xf]
        %v3485 = vld [vmem:[%s11 + $0xac4] sm:$0xf]
        %v3486 = vld [vmem:[%s11 + $0xac8] sm:$0xf]
        %v3487 = vld [vmem:[%s11 + $0xacc] sm:$0xf]
        %v3488 = vld [vmem:[%s11 + $0xad0] sm:$0xf]
        %v3489 = vld [vmem:[%s11 + $0xad4] sm:$0xf]
        %v3490 = vld [vmem:[%s11 + $0xad8] sm:$0xf]
        %v3491 = vld [vmem:[%s11 + $0xadc] sm:$0xf]
        %v3492 = vld [vmem:[%s11 + $0xae0] sm:$0xf]
        %v3493 = vld [vmem:[%s11 + $0xae4] sm:$0xf]
        %v3494 = vld [vmem:[%s11 + $0xae8] sm:$0xf]
        %v3495 = vld [vmem:[%s11 + $0xaec] sm:$0xf]
        %v3496 = vld [vmem:[%s11 + $0xaf0] sm:$0xf]
        %v3497 = vld [vmem:[%s11 + $0xaf4] sm:$0xf]
        %v3498 = vld [vmem:[%s11 + $0xaf8] sm:$0xf]
        %v3499 = vld [vmem:[%s11 + $0xafc] sm:$0xf]
        %v3500 = vld [vmem:[%s11 + $0xb00] sm:$0xf]
        %v3501 = vld [vmem:[%s11 + $0xb04] sm:$0xf]
        %v3502 = vld [vmem:[%s11 + $0xb08] sm:$0xf]
        %v3503 = vld [vmem:[%s11 + $0xb0c] sm:$0xf]
        %v3504 = vld [vmem:[%s11 + $0xb10] sm:$0xf]
        %v3505 = vld [vmem:[%s11 + $0xb14] sm:$0xf]
        %v3506 = vld [vmem:[%s11 + $0xb18] sm:$0xf]
        %v3507 = vld [vmem:[%s11 + $0xb1c] sm:$0xf]
        %v3508 = vld [vmem:[%s11 + $0xb20] sm:$0xf]
        %v3509 = vld [vmem:[%s11 + $0xb24] sm:$0xf]
        %v3510 = vld [vmem:[%s11 + $0xb28] sm:$0xf]
        %v3511 = vld [vmem:[%s11 + $0xb2c] sm:$0xf]
        %v3512 = vld [vmem:[%s11 + $0xb30] sm:$0xf]
        %v3513 = vld [vmem:[%s11 + $0xb34] sm:$0xf]
        %v3514 = vld [vmem:[%s11 + $0xb38] sm:$0xf]
        %v3515 = vld [vmem:[%s11 + $0xb3c] sm:$0xf]
        %v3516 = vld [vmem:[%s11 + $0xb40] sm:$0xf]
        %v3517 = vld [vmem:[%s11 + $0xb44] sm:$0xf]
        %v3518 = vld [vmem:[%s11 + $0xb48] sm:$0xf]
        %v3519 = vld [vmem:[%s11 + $0xb4c] sm:$0xf]
        %v3520 = vld [vmem:[%s11 + $0xb50] sm:$0xf]
        %v3521 = vld [vmem:[%s11 + $0xb54] sm:$0xf]
        %v3522 = vld [vmem:[%s11 + $0xb58] sm:$0xf]
        %v3523 = vld [vmem:[%s11 + $0xb5c] sm:$0xf]
        %v3524 = vld [vmem:[%s11 + $0xb60] sm:$0xf]
        %v3525 = vld [vmem:[%s11 + $0xb64] sm:$0xf]
        %v3526 = vld [vmem:[%s11 + $0xb68] sm:$0xf]
        %v3527 = vld [vmem:[%s11 + $0xb6c] sm:$0xf]
        %v3528 = vld [vmem:[%s11 + $0xb70] sm:$0xf]
        %v3529 = vld [vmem:[%s11 + $0xb74] sm:$0xf]
        %v3530 = vld [vmem:[%s11 + $0xb78] sm:$0xf]
        %v3531 = vld [vmem:[%s11 + $0xb7c] sm:$0xf]
        %v3532 = vld [vmem:[%s11 + $0xb80] sm:$0xf]
        %v3533 = vld [vmem:[%s11 + $0xb84] sm:$0xf]
        %v3534 = vld [vmem:[%s11 + $0xb88] sm:$0xf]
        %v3535 = vld [vmem:[%s11 + $0xb8c] sm:$0xf]
        %v3536 = vld [vmem:[%s11 + $0xb90] sm:$0xf]
        %v3537 = vld [vmem:[%s11 + $0xb94] sm:$0xf]
        %v3538 = vld [vmem:[%s11 + $0xb98] sm:$0xf]
        %v3539 = vld [vmem:[%s11 + $0xb9c] sm:$0xf]
        %v3540 = vld [vmem:[%s11 + $0xba0] sm:$0xf]
        %v3541 = vld [vmem:[%s11 + $0xba4] sm:$0xf]
        %v3542 = vld [vmem:[%s11 + $0xba8] sm:$0xf]
        %v3543 = vld [vmem:[%s11 + $0xbac] sm:$0xf]
        %v3544 = vld [vmem:[%s11 + $0xbb0] sm:$0xf]
        %v3545 = vld [vmem:[%s11 + $0xbb4] sm:$0xf]
        %v3546 = vld [vmem:[%s11 + $0xbb8] sm:$0xf]
        %v3547 = vld [vmem:[%s11 + $0xbbc] sm:$0xf]
        %v3548 = vld [vmem:[%s11 + $0xbc0] sm:$0xf]
        %v3549 = vld [vmem:[%s11 + $0xbc4] sm:$0xf]
        %v3550 = vld [vmem:[%s11 + $0xbc8] sm:$0xf]
        %v3551 = vld [vmem:[%s11 + $0xbcc] sm:$0xf]
        %v3552 = vld [vmem:[%s11 + $0xbd0] sm:$0xf]
        %v3553 = vld [vmem:[%s11 + $0xbd4] sm:$0xf]
        %v3554 = vld [vmem:[%s11 + $0xbd8] sm:$0xf]
        %v3555 = vld [vmem:[%s11 + $0xbdc] sm:$0xf]
        %v3556 = vld [vmem:[%s11 + $0xbe0] sm:$0xf]
        %v3557 = vld [vmem:[%s11 + $0xbe4] sm:$0xf]
        %v3558 = vld [vmem:[%s11 + $0xbe8] sm:$0xf]
        %v3559 = vld [vmem:[%s11 + $0xbec] sm:$0xf]
        %v3560 = vld [vmem:[%s11 + $0xbf0] sm:$0xf]
        %v3561 = vld [vmem:[%s11 + $0xbf4] sm:$0xf]
        %v3562 = vld [vmem:[%s11 + $0xbf8] sm:$0xf]
        %v3563 = vld [vmem:[%s11 + $0xbfc] sm:$0xf]
        %v3564 = vld [vmem:[%s11 + $0xc00] sm:$0xf]
        %v3565 = vld [vmem:[%s11 + $0xc04] sm:$0xf]
        %v3566 = vld [vmem:[%s11 + $0xc08] sm:$0xf]
        %v3567 = vld [vmem:[%s11 + $0xc0c] sm:$0xf]
        %v3568 = vld [vmem:[%s11 + $0xc10] sm:$0xf]
        %v3569 = vld [vmem:[%s11 + $0xc14] sm:$0xf]
        %v3570 = vld [vmem:[%s11 + $0xc18] sm:$0xf]
        %v3571 = vld [vmem:[%s11 + $0xc1c] sm:$0xf]
        %v3572 = vld [vmem:[%s11 + $0xc20] sm:$0xf]
        %v3573 = vld [vmem:[%s11 + $0xc24] sm:$0xf]
        %v3574 = vld [vmem:[%s11 + $0xc28] sm:$0xf]
        %v3575 = vld [vmem:[%s11 + $0xc2c] sm:$0xf]
        %v3576 = vld [vmem:[%s11 + $0xc30] sm:$0xf]
        %v3577 = vld [vmem:[%s11 + $0xc34] sm:$0xf]
        %v3578 = vld [vmem:[%s11 + $0xc38] sm:$0xf]
        %v3579 = vld [vmem:[%s11 + $0xc3c] sm:$0xf]
        %v3580 = vld [vmem:[%s11 + $0xc40] sm:$0xf]
        %v3581 = vld [vmem:[%s11 + $0xc44] sm:$0xf]
        %v3582 = vld [vmem:[%s11 + $0xc48] sm:$0xf]
        %v3583 = vld [vmem:[%s11 + $0xc4c] sm:$0xf]
        %v3584 = vld [vmem:[%s11 + $0xc50] sm:$0xf]
        %v3585 = vld [vmem:[%s11 + $0xc54] sm:$0xf]
        %v3586 = vld [vmem:[%s11 + $0xc58] sm:$0xf]
        %v3587 = vld [vmem:[%s11 + $0xc5c] sm:$0xf]
        %v3588 = vld [vmem:[%s11 + $0xc60] sm:$0xf]
        %v3589 = vld [vmem:[%s11 + $0xc64] sm:$0xf]
        %v3590 = vld [vmem:[%s11 + $0xc68] sm:$0xf]
        %v3591 = vld [vmem:[%s11 + $0xc6c] sm:$0xf]
        %v3592 = vld [vmem:[%s11 + $0xc70] sm:$0xf]
        %v3593 = vld [vmem:[%s11 + $0xc74] sm:$0xf]
        %v3594 = vld [vmem:[%s11 + $0xc78] sm:$0xf]
        %v3595 = vld [vmem:[%s11 + $0xc7c] sm:$0xf]
        %v3596 = vld [vmem:[%s11 + $0xc80] sm:$0xf]
        %v3597 = vld [vmem:[%s11 + $0xc84] sm:$0xf]
        %v3598 = vld [vmem:[%s11 + $0xc88] sm:$0xf]
        %v3599 = vld [vmem:[%s11 + $0xc8c] sm:$0xf]
        %v3600 = vld [vmem:[%s11 + $0xc90] sm:$0xf]
        %v3601 = vld [vmem:[%s11 + $0xc94] sm:$0xf]
        %v3602 = vld [vmem:[%s11 + $0xc98] sm:$0xf]
        %v3603 = vld [vmem:[%s11 + $0xc9c] sm:$0xf]
        %v3604 = vld [vmem:[%s11 + $0xca0] sm:$0xf]
        %v3605 = vld [vmem:[%s11 + $0xca4] sm:$0xf]
        %v3606 = vld [vmem:[%s11 + $0xca8] sm:$0xf]
        %v3607 = vld [vmem:[%s11 + $0xcac] sm:$0xf]
        %v3608 = vld [vmem:[%s11 + $0xcb0] sm:$0xf]
        %v3609 = vld [vmem:[%s11 + $0xcb4] sm:$0xf]
        %v3610 = vld [vmem:[%s11 + $0xcb8] sm:$0xf]
        %v3611 = vld [vmem:[%s11 + $0xcbc] sm:$0xf]
        %v3612 = vld [vmem:[%s11 + $0xcc0] sm:$0xf]
        %v3613 = vld [vmem:[%s11 + $0xcc4] sm:$0xf]
        %v3614 = vld [vmem:[%s11 + $0xcc8] sm:$0xf]
        %v3615 = vld [vmem:[%s11 + $0xccc] sm:$0xf]
        %v3616 = vld [vmem:[%s11 + $0xcd0] sm:$0xf]
        %v3617 = vld [vmem:[%s11 + $0xcd4] sm:$0xf]
        %v3618 = vld [vmem:[%s11 + $0xcd8] sm:$0xf]
        %v3619 = vld [vmem:[%s11 + $0xcdc] sm:$0xf]
        %v3620 = vld [vmem:[%s11 + $0xce0] sm:$0xf]
        %v3621 = vld [vmem:[%s11 + $0xce4] sm:$0xf]
        %v3622 = vld [vmem:[%s11 + $0xce8] sm:$0xf]
        %v3623 = vld [vmem:[%s11 + $0xcec] sm:$0xf]
        %v3624 = vld [vmem:[%s11 + $0xcf0] sm:$0xf]
        %v3625 = vld [vmem:[%s11 + $0xcf4] sm:$0xf]
        %v3626 = vld [vmem:[%s11 + $0xcf8] sm:$0xf]
        %v3627 = vld [vmem:[%s11 + $0xcfc] sm:$0xf]
        %v3628 = vld [vmem:[%s11 + $0xd00] sm:$0xf]
        %v3629 = vld [vmem:[%s11 + $0xd04] sm:$0xf]
        %v3630 = vld [vmem:[%s11 + $0xd08] sm:$0xf]
        %v3631 = vld [vmem:[%s11 + $0xd0c] sm:$0xf]
        %v3632 = vld [vmem:[%s11 + $0xd10] sm:$0xf]
        %v3633 = vld [vmem:[%s11 + $0xd14] sm:$0xf]
        %v3634 = vld [vmem:[%s11 + $0xd18] sm:$0xf]
        %v3635 = vld [vmem:[%s11 + $0xd1c] sm:$0xf]
        %v3636 = vld [vmem:[%s11 + $0xd20] sm:$0xf]
        %v3637 = vld [vmem:[%s11 + $0xd24] sm:$0xf]
        %v3638 = vld [vmem:[%s11 + $0xd28] sm:$0xf]
        %v3639 = vld [vmem:[%s11 + $0xd2c] sm:$0xf]
        %v3640 = vld [vmem:[%s11 + $0xd30] sm:$0xf]
        %v3641 = vld [vmem:[%s11 + $0xd34] sm:$0xf]
        %v3642 = vld [vmem:[%s11 + $0xd38] sm:$0xf]
        %v3643 = vld [vmem:[%s11 + $0xd3c] sm:$0xf]
        %v3644 = vld [vmem:[%s11 + $0xd40] sm:$0xf]
        %v3645 = vld [vmem:[%s11 + $0xd44] sm:$0xf]
        %v3646 = vld [vmem:[%s11 + $0xd48] sm:$0xf]
        %v3647 = vld [vmem:[%s11 + $0xd4c] sm:$0xf]
        %v3648 = vld [vmem:[%s11 + $0xd50] sm:$0xf]
        %v3649 = vld [vmem:[%s11 + $0xd54] sm:$0xf]
        %v3650 = vld [vmem:[%s11 + $0xd58] sm:$0xf]
        %v3651 = vld [vmem:[%s11 + $0xd5c] sm:$0xf]
        %v3652 = vld [vmem:[%s11 + $0xd60] sm:$0xf]
        %v3653 = vld [vmem:[%s11 + $0xd64] sm:$0xf]
        %v3654 = vld [vmem:[%s11 + $0xd68] sm:$0xf]
        %v3655 = vld [vmem:[%s11 + $0xd6c] sm:$0xf]
        %v3656 = vld [vmem:[%s11 + $0xd70] sm:$0xf]
        %v3657 = vld [vmem:[%s11 + $0xd74] sm:$0xf]
        %v3658 = vld [vmem:[%s11 + $0xd78] sm:$0xf]
        %v3659 = vld [vmem:[%s11 + $0xd7c] sm:$0xf]
        %v3660 = vld [vmem:[%s11 + $0xd80] sm:$0xf]
        %v3661 = vld [vmem:[%s11 + $0xd84] sm:$0xf]
        %v3662 = vld [vmem:[%s11 + $0xd88] sm:$0xf]
        %v3663 = vld [vmem:[%s11 + $0xd8c] sm:$0xf]
        %v3664 = vld [vmem:[%s11 + $0xd90] sm:$0xf]
        %v3665 = vld [vmem:[%s11 + $0xd94] sm:$0xf]
        %v3666 = vld [vmem:[%s11 + $0xd98] sm:$0xf]
        %v3667 = vld [vmem:[%s11 + $0xd9c] sm:$0xf]
        %v3668 = vld [vmem:[%s11 + $0xda0] sm:$0xf]
        %v3669 = vld [vmem:[%s11 + $0xda4] sm:$0xf]
        %v3670 = vld [vmem:[%s11 + $0xda8] sm:$0xf]
        %v3671 = vld [vmem:[%s11 + $0xdac] sm:$0xf]
        %v3672 = vld [vmem:[%s11 + $0xdb0] sm:$0xf]
        %v3673 = vld [vmem:[%s11 + $0xdb4] sm:$0xf]
        %v3674 = vld [vmem:[%s11 + $0xdb8] sm:$0xf]
        %v3675 = vld [vmem:[%s11 + $0xdbc] sm:$0xf]
        %v3676 = vld [vmem:[%s11 + $0xdc0] sm:$0xf]
        %v3677 = vld [vmem:[%s11 + $0xdc4] sm:$0xf]
        %v3678 = vld [vmem:[%s11 + $0xdc8] sm:$0xf]
        %v3679 = vld [vmem:[%s11 + $0xdcc] sm:$0xf]
        %v3680 = vld [vmem:[%s11 + $0xdd0] sm:$0xf]
        %v3681 = vld [vmem:[%s11 + $0xdd4] sm:$0xf]
        %v3682 = vld [vmem:[%s11 + $0xdd8] sm:$0xf]
        %v3683 = vld [vmem:[%s11 + $0xddc] sm:$0xf]
        %v3684 = vld [vmem:[%s11 + $0xde0] sm:$0xf]
        %v3685 = vld [vmem:[%s11 + $0xde4] sm:$0xf]
        %v3686 = vld [vmem:[%s11 + $0xde8] sm:$0xf]
        %v3687 = vld [vmem:[%s11 + $0xdec] sm:$0xf]
        %v3688 = vld [vmem:[%s11 + $0xdf0] sm:$0xf]
        %v3689 = vld [vmem:[%s11 + $0xdf4] sm:$0xf]
        %v3690 = vld [vmem:[%s11 + $0xdf8] sm:$0xf]
        %v3691 = vld [vmem:[%s11 + $0xdfc] sm:$0xf]
        %v3692 = vld [vmem:[%s12] sm:$0x1]
        %v4589 = vunpack.c.l.b16 %v2796
        %v4590 = vunpack.c.l.b16 %v2797
        %v4591 = vunpack.c.l.b16 %v2798
        %v4592 = vunpack.c.l.b16 %v2799
        %v4593 = vunpack.c.l.b16 %v2800
        %v4594 = vunpack.c.l.b16 %v2801
        %v4595 = vunpack.c.l.b16 %v2802
        %v4596 = vunpack.c.l.b16 %v2803
        %v4597 = vunpack.c.l.b16 %v2804
        %v4598 = vunpack.c.l.b16 %v2805
        %v4599 = vunpack.c.l.b16 %v2806
        %v4600 = vunpack.c.l.b16 %v2807
        %v4601 = vunpack.c.l.b16 %v2808
        %v4602 = vunpack.c.l.b16 %v2809
        %v4603 = vunpack.c.l.b16 %v2810
        %v4604 = vunpack.c.l.b16 %v2811
        %v4605 = vunpack.c.l.b16 %v2812
        %v4606 = vunpack.c.l.b16 %v2813
        %v4607 = vunpack.c.l.b16 %v2814
        %v4608 = vunpack.c.l.b16 %v2815
        %v4609 = vunpack.c.l.b16 %v2816
        %v4610 = vunpack.c.l.b16 %v2817
        %v4611 = vunpack.c.l.b16 %v2818
        %v4612 = vunpack.c.l.b16 %v2819
        %v4613 = vunpack.c.l.b16 %v2820
        %v4614 = vunpack.c.l.b16 %v2821
        %v4615 = vunpack.c.l.b16 %v2822
        %v4616 = vunpack.c.l.b16 %v2823
        %v4617 = vunpack.c.l.b16 %v2824
        %v4618 = vunpack.c.l.b16 %v2825
        %v4619 = vunpack.c.l.b16 %v2826
        %v4620 = vunpack.c.l.b16 %v2827
        %v4621 = vunpack.c.l.b16 %v2828
        %v4622 = vunpack.c.l.b16 %v2829
        %v4623 = vunpack.c.l.b16 %v2830
        %v4624 = vunpack.c.l.b16 %v2831
        %v4625 = vunpack.c.l.b16 %v2832
        %v4626 = vunpack.c.l.b16 %v2833
        %v4627 = vunpack.c.l.b16 %v2834
        %v4628 = vunpack.c.l.b16 %v2835
        %v4629 = vunpack.c.l.b16 %v2836
        %v4630 = vunpack.c.l.b16 %v2837
        %v4631 = vunpack.c.l.b16 %v2838
        %v4632 = vunpack.c.l.b16 %v2839
        %v4633 = vunpack.c.l.b16 %v2840
        %v4634 = vunpack.c.l.b16 %v2841
        %v4635 = vunpack.c.l.b16 %v2842
        %v4636 = vunpack.c.l.b16 %v2843
        %v4637 = vunpack.c.l.b16 %v2844
        %v4638 = vunpack.c.l.b16 %v2845
        %v4639 = vunpack.c.l.b16 %v2846
        %v4640 = vunpack.c.l.b16 %v2847
        %v4641 = vunpack.c.l.b16 %v2848
        %v4642 = vunpack.c.l.b16 %v2849
        %v4643 = vunpack.c.l.b16 %v2850
        %v4644 = vunpack.c.l.b16 %v2851
        %v4645 = vunpack.c.l.b16 %v2852
        %v4646 = vunpack.c.l.b16 %v2853
        %v4647 = vunpack.c.l.b16 %v2854
        %v4648 = vunpack.c.l.b16 %v2855
        %v4649 = vunpack.c.l.b16 %v2856
        %v4650 = vunpack.c.l.b16 %v2857
        %v4651 = vunpack.c.l.b16 %v2858
        %v4652 = vunpack.c.l.b16 %v2859
        %v4653 = vunpack.c.l.b16 %v2860
        %v4654 = vunpack.c.l.b16 %v2861
        %v4655 = vunpack.c.l.b16 %v2862
        %v4656 = vunpack.c.l.b16 %v2863
        %v4657 = vunpack.c.l.b16 %v2864
        %v4658 = vunpack.c.l.b16 %v2865
        %v4659 = vunpack.c.l.b16 %v2866
        %v4660 = vunpack.c.l.b16 %v2867
        %v4661 = vunpack.c.l.b16 %v2868
        %v4662 = vunpack.c.l.b16 %v2869
        %v4663 = vunpack.c.l.b16 %v2870
        %v4664 = vunpack.c.l.b16 %v2871
        %v4665 = vunpack.c.l.b16 %v2872
        %v4666 = vunpack.c.l.b16 %v2873
        %v4667 = vunpack.c.l.b16 %v2874
        %v4668 = vunpack.c.l.b16 %v2875
        %v4669 = vunpack.c.l.b16 %v2876
        %v4670 = vunpack.c.l.b16 %v2877
        %v4671 = vunpack.c.l.b16 %v2878
        %v4672 = vunpack.c.l.b16 %v2879
        %v4673 = vunpack.c.l.b16 %v2880
        %v4674 = vunpack.c.l.b16 %v2881
        %v4675 = vunpack.c.l.b16 %v2882
        %v4676 = vunpack.c.l.b16 %v2883
        %v4677 = vunpack.c.l.b16 %v2884
        %v4678 = vunpack.c.l.b16 %v2885
        %v4679 = vunpack.c.l.b16 %v2886
        %v4680 = vunpack.c.l.b16 %v2887
        %v4681 = vunpack.c.l.b16 %v2888
        %v4682 = vunpack.c.l.b16 %v2889
        %v4683 = vunpack.c.l.b16 %v2890
        %v4684 = vunpack.c.l.b16 %v2891
        %v4685 = vunpack.c.l.b16 %v2892
        %v4686 = vunpack.c.l.b16 %v2893
        %v4687 = vunpack.c.l.b16 %v2894
        %v4688 = vunpack.c.l.b16 %v2895
        %v4689 = vunpack.c.l.b16 %v2896
        %v4690 = vunpack.c.l.b16 %v2897
        %v4691 = vunpack.c.l.b16 %v2898
        %v4692 = vunpack.c.l.b16 %v2899
        %v4693 = vunpack.c.l.b16 %v2900
        %v4694 = vunpack.c.l.b16 %v2901
        %v4695 = vunpack.c.l.b16 %v2902
        %v4696 = vunpack.c.l.b16 %v2903
        %v4697 = vunpack.c.l.b16 %v2904
        %v4698 = vunpack.c.l.b16 %v2905
        %v4699 = vunpack.c.l.b16 %v2906
        %v4700 = vunpack.c.l.b16 %v2907
        %v4701 = vunpack.c.l.b16 %v2908
        %v4702 = vunpack.c.l.b16 %v2909
        %v4703 = vunpack.c.l.b16 %v2910
        %v4704 = vunpack.c.l.b16 %v2911
        %v4705 = vunpack.c.l.b16 %v2912
        %v4706 = vunpack.c.l.b16 %v2913
        %v4707 = vunpack.c.l.b16 %v2914
        %v4708 = vunpack.c.l.b16 %v2915
        %v4709 = vunpack.c.l.b16 %v2916
        %v4710 = vunpack.c.l.b16 %v2917
        %v4711 = vunpack.c.l.b16 %v2918
        %v4712 = vunpack.c.l.b16 %v2919
        %v4713 = vunpack.c.l.b16 %v2920
        %v4714 = vunpack.c.l.b16 %v2921
        %v4715 = vunpack.c.l.b16 %v2922
        %v4716 = vunpack.c.l.b16 %v2923
        %v4717 = vunpack.c.l.b16 %v2924
        %v4718 = vunpack.c.l.b16 %v2925
        %v4719 = vunpack.c.l.b16 %v2926
        %v4720 = vunpack.c.l.b16 %v2927
        %v4721 = vunpack.c.l.b16 %v2928
        %v4722 = vunpack.c.l.b16 %v2929
        %v4723 = vunpack.c.l.b16 %v2930
        %v4724 = vunpack.c.l.b16 %v2931
        %v4725 = vunpack.c.l.b16 %v2932
        %v4726 = vunpack.c.l.b16 %v2933
        %v4727 = vunpack.c.l.b16 %v2934
        %v4728 = vunpack.c.l.b16 %v2935
        %v4729 = vunpack.c.l.b16 %v2936
        %v4730 = vunpack.c.l.b16 %v2937
        %v4731 = vunpack.c.l.b16 %v2938
        %v4732 = vunpack.c.l.b16 %v2939
        %v4733 = vunpack.c.l.b16 %v2940
        %v4734 = vunpack.c.l.b16 %v2941
        %v4735 = vunpack.c.l.b16 %v2942
        %v4736 = vunpack.c.l.b16 %v2943
        %v4737 = vunpack.c.l.b16 %v2944
        %v4738 = vunpack.c.l.b16 %v2945
        %v4739 = vunpack.c.l.b16 %v2946
        %v4740 = vunpack.c.l.b16 %v2947
        %v4741 = vunpack.c.l.b16 %v2948
        %v4742 = vunpack.c.l.b16 %v2949
        %v4743 = vunpack.c.l.b16 %v2950
        %v4744 = vunpack.c.l.b16 %v2951
        %v4745 = vunpack.c.l.b16 %v2952
        %v4746 = vunpack.c.l.b16 %v2953
        %v4747 = vunpack.c.l.b16 %v2954
        %v4748 = vunpack.c.l.b16 %v2955
        %v4749 = vunpack.c.l.b16 %v2956
        %v4750 = vunpack.c.l.b16 %v2957
        %v4751 = vunpack.c.l.b16 %v2958
        %v4752 = vunpack.c.l.b16 %v2959
        %v4753 = vunpack.c.l.b16 %v2960
        %v4754 = vunpack.c.l.b16 %v2961
        %v4755 = vunpack.c.l.b16 %v2962
        %v4756 = vunpack.c.l.b16 %v2963
        %v4757 = vunpack.c.l.b16 %v2964
        %v4758 = vunpack.c.l.b16 %v2965
        %v4759 = vunpack.c.l.b16 %v2966
        %v4760 = vunpack.c.l.b16 %v2967
        %v4761 = vunpack.c.l.b16 %v2968
        %v4762 = vunpack.c.l.b16 %v2969
        %v4763 = vunpack.c.l.b16 %v2970
        %v4764 = vunpack.c.l.b16 %v2971
        %v4765 = vunpack.c.l.b16 %v2972
        %v4766 = vunpack.c.l.b16 %v2973
        %v4767 = vunpack.c.l.b16 %v2974
        %v4768 = vunpack.c.l.b16 %v2975
        %v4769 = vunpack.c.l.b16 %v2976
        %v4770 = vunpack.c.l.b16 %v2977
        %v4771 = vunpack.c.l.b16 %v2978
        %v4772 = vunpack.c.l.b16 %v2979
        %v4773 = vunpack.c.l.b16 %v2980
        %v4774 = vunpack.c.l.b16 %v2981
        %v4775 = vunpack.c.l.b16 %v2982
        %v4776 = vunpack.c.l.b16 %v2983
        %v4777 = vunpack.c.l.b16 %v2984
        %v4778 = vunpack.c.l.b16 %v2985
        %v4779 = vunpack.c.l.b16 %v2986
        %v4780 = vunpack.c.l.b16 %v2987
        %v4781 = vunpack.c.l.b16 %v2988
        %v4782 = vunpack.c.l.b16 %v2989
        %v4783 = vunpack.c.l.b16 %v2990
        %v4784 = vunpack.c.l.b16 %v2991
        %v4785 = vunpack.c.l.b16 %v2992
        %v4786 = vunpack.c.l.b16 %v2993
        %v4787 = vunpack.c.l.b16 %v2994
        %v4788 = vunpack.c.l.b16 %v2995
        %v4789 = vunpack.c.l.b16 %v2996
        %v4790 = vunpack.c.l.b16 %v2997
        %v4791 = vunpack.c.l.b16 %v2998
        %v4792 = vunpack.c.l.b16 %v2999
        %v4793 = vunpack.c.l.b16 %v3000
        %v4794 = vunpack.c.l.b16 %v3001
        %v4795 = vunpack.c.l.b16 %v3002
        %v4796 = vunpack.c.l.b16 %v3003
        %v4797 = vunpack.c.l.b16 %v3004
        %v4798 = vunpack.c.l.b16 %v3005
        %v4799 = vunpack.c.l.b16 %v3006
        %v4800 = vunpack.c.l.b16 %v3007
        %v4801 = vunpack.c.l.b16 %v3008
        %v4802 = vunpack.c.l.b16 %v3009
        %v4803 = vunpack.c.l.b16 %v3010
        %v4804 = vunpack.c.l.b16 %v3011
        %v4805 = vunpack.c.l.b16 %v3012
        %v4806 = vunpack.c.l.b16 %v3013
        %v4807 = vunpack.c.l.b16 %v3014
        %v4808 = vunpack.c.l.b16 %v3015
        %v4809 = vunpack.c.l.b16 %v3016
        %v4810 = vunpack.c.l.b16 %v3017
        %v4811 = vunpack.c.l.b16 %v3018
        %v4812 = vunpack.c.l.b16 %v3019
        %v4813 = vunpack.c.l.b16 %v3020
        %v4814 = vunpack.c.l.b16 %v3021
        %v4815 = vunpack.c.l.b16 %v3022
        %v4816 = vunpack.c.l.b16 %v3023
        %v4817 = vunpack.c.l.b16 %v3024
        %v4818 = vunpack.c.l.b16 %v3025
        %v4819 = vunpack.c.l.b16 %v3026
        %v4820 = vunpack.c.l.b16 %v3027
        %v4821 = vunpack.c.l.b16 %v3028
        %v4822 = vunpack.c.l.b16 %v3029
        %v4823 = vunpack.c.l.b16 %v3030
        %v4824 = vunpack.c.l.b16 %v3031
        %v4825 = vunpack.c.l.b16 %v3032
        %v4826 = vunpack.c.l.b16 %v3033
        %v4827 = vunpack.c.l.b16 %v3034
        %v4828 = vunpack.c.l.b16 %v3035
        %v4829 = vunpack.c.l.b16 %v3036
        %v4830 = vunpack.c.l.b16 %v3037
        %v4831 = vunpack.c.l.b16 %v3038
        %v4832 = vunpack.c.l.b16 %v3039
        %v4833 = vunpack.c.l.b16 %v3040
        %v4834 = vunpack.c.l.b16 %v3041
        %v4835 = vunpack.c.l.b16 %v3042
        %v4836 = vunpack.c.l.b16 %v3043
        %v4837 = vunpack.c.l.b16 %v3044
        %v4838 = vunpack.c.l.b16 %v3045
        %v4839 = vunpack.c.l.b16 %v3046
        %v4840 = vunpack.c.l.b16 %v3047
        %v4841 = vunpack.c.l.b16 %v3048
        %v4842 = vunpack.c.l.b16 %v3049
        %v4843 = vunpack.c.l.b16 %v3050
        %v4844 = vunpack.c.l.b16 %v3051
        %v4845 = vunpack.c.l.b16 %v3052
        %v4846 = vunpack.c.l.b16 %v3053
        %v4847 = vunpack.c.l.b16 %v3054
        %v4848 = vunpack.c.l.b16 %v3055
        %v4849 = vunpack.c.l.b16 %v3056
        %v4850 = vunpack.c.l.b16 %v3057
        %v4851 = vunpack.c.l.b16 %v3058
        %v4852 = vunpack.c.l.b16 %v3059
        %v4853 = vunpack.c.l.b16 %v3060
        %v4854 = vunpack.c.l.b16 %v3061
        %v4855 = vunpack.c.l.b16 %v3062
        %v4856 = vunpack.c.l.b16 %v3063
        %v4857 = vunpack.c.l.b16 %v3064
        %v4858 = vunpack.c.l.b16 %v3065
        %v4859 = vunpack.c.l.b16 %v3066
        %v4860 = vunpack.c.l.b16 %v3067
        %v4861 = vunpack.c.l.b16 %v3068
        %v4862 = vunpack.c.l.b16 %v3069
        %v4863 = vunpack.c.l.b16 %v3070
        %v4864 = vunpack.c.l.b16 %v3071
        %v4865 = vunpack.c.l.b16 %v3072
        %v4866 = vunpack.c.l.b16 %v3073
        %v4867 = vunpack.c.l.b16 %v3074
        %v4868 = vunpack.c.l.b16 %v3075
        %v4869 = vunpack.c.l.b16 %v3076
        %v4870 = vunpack.c.l.b16 %v3077
        %v4871 = vunpack.c.l.b16 %v3078
        %v4872 = vunpack.c.l.b16 %v3079
        %v4873 = vunpack.c.l.b16 %v3080
        %v4874 = vunpack.c.l.b16 %v3081
        %v4875 = vunpack.c.l.b16 %v3082
        %v4876 = vunpack.c.l.b16 %v3083
        %v4877 = vunpack.c.l.b16 %v3084
        %v4878 = vunpack.c.l.b16 %v3085
        %v4879 = vunpack.c.l.b16 %v3086
        %v4880 = vunpack.c.l.b16 %v3087
        %v4881 = vunpack.c.l.b16 %v3088
        %v4882 = vunpack.c.l.b16 %v3089
        %v4883 = vunpack.c.l.b16 %v3090
        %v4884 = vunpack.c.l.b16 %v3091
        %v4885 = vunpack.c.l.b16 %v3092
        %v4886 = vunpack.c.l.b16 %v3093
        %v4887 = vunpack.c.l.b16 %v3094
        %v4888 = vunpack.c.l.b16 %v3095
        %v4889 = vunpack.c.l.b16 %v3096
        %v4890 = vunpack.c.l.b16 %v3097
        %v4891 = vunpack.c.l.b16 %v3098
        %v4892 = vunpack.c.l.b16 %v3099
        %v4893 = vunpack.c.l.b16 %v3100
        %v4894 = vunpack.c.l.b16 %v3101
        %v4895 = vunpack.c.l.b16 %v3102
        %v4896 = vunpack.c.l.b16 %v3103
        %v4897 = vunpack.c.l.b16 %v3104
        %v4898 = vunpack.c.l.b16 %v3105
        %v4899 = vunpack.c.l.b16 %v3106
        %v4900 = vunpack.c.l.b16 %v3107
        %v4901 = vunpack.c.l.b16 %v3108
        %v4902 = vunpack.c.l.b16 %v3109
        %v4903 = vunpack.c.l.b16 %v3110
        %v4904 = vunpack.c.l.b16 %v3111
        %v4905 = vunpack.c.l.b16 %v3112
        %v4906 = vunpack.c.l.b16 %v3113
        %v4907 = vunpack.c.l.b16 %v3114
        %v4908 = vunpack.c.l.b16 %v3115
        %v4909 = vunpack.c.l.b16 %v3116
        %v4910 = vunpack.c.l.b16 %v3117
        %v4911 = vunpack.c.l.b16 %v3118
        %v4912 = vunpack.c.l.b16 %v3119
        %v4913 = vunpack.c.l.b16 %v3120
        %v4914 = vunpack.c.l.b16 %v3121
        %v4915 = vunpack.c.l.b16 %v3122
        %v4916 = vunpack.c.l.b16 %v3123
        %v4917 = vunpack.c.l.b16 %v3124
        %v4918 = vunpack.c.l.b16 %v3125
        %v4919 = vunpack.c.l.b16 %v3126
        %v4920 = vunpack.c.l.b16 %v3127
        %v4921 = vunpack.c.l.b16 %v3128
        %v4922 = vunpack.c.l.b16 %v3129
        %v4923 = vunpack.c.l.b16 %v3130
        %v4924 = vunpack.c.l.b16 %v3131
        %v4925 = vunpack.c.l.b16 %v3132
        %v4926 = vunpack.c.l.b16 %v3133
        %v4927 = vunpack.c.l.b16 %v3134
        %v4928 = vunpack.c.l.b16 %v3135
        %v4929 = vunpack.c.l.b16 %v3136
        %v4930 = vunpack.c.l.b16 %v3137
        %v4931 = vunpack.c.l.b16 %v3138
        %v4932 = vunpack.c.l.b16 %v3139
        %v4933 = vunpack.c.l.b16 %v3140
        %v4934 = vunpack.c.l.b16 %v3141
        %v4935 = vunpack.c.l.b16 %v3142
        %v4936 = vunpack.c.l.b16 %v3143
        %v4937 = vunpack.c.l.b16 %v3144
        %v4938 = vunpack.c.l.b16 %v3145
        %v4939 = vunpack.c.l.b16 %v3146
        %v4940 = vunpack.c.l.b16 %v3147
        %v4941 = vunpack.c.l.b16 %v3148
        %v4942 = vunpack.c.l.b16 %v3149
        %v4943 = vunpack.c.l.b16 %v3150
        %v4944 = vunpack.c.l.b16 %v3151
        %v4945 = vunpack.c.l.b16 %v3152
        %v4946 = vunpack.c.l.b16 %v3153
        %v4947 = vunpack.c.l.b16 %v3154
        %v4948 = vunpack.c.l.b16 %v3155
        %v4949 = vunpack.c.l.b16 %v3156
        %v4950 = vunpack.c.l.b16 %v3157
        %v4951 = vunpack.c.l.b16 %v3158
        %v4952 = vunpack.c.l.b16 %v3159
        %v4953 = vunpack.c.l.b16 %v3160
        %v4954 = vunpack.c.l.b16 %v3161
        %v4955 = vunpack.c.l.b16 %v3162
        %v4956 = vunpack.c.l.b16 %v3163
        %v4957 = vunpack.c.l.b16 %v3164
        %v4958 = vunpack.c.l.b16 %v3165
        %v4959 = vunpack.c.l.b16 %v3166
        %v4960 = vunpack.c.l.b16 %v3167
        %v4961 = vunpack.c.l.b16 %v3168
        %v4962 = vunpack.c.l.b16 %v3169
        %v4963 = vunpack.c.l.b16 %v3170
        %v4964 = vunpack.c.l.b16 %v3171
        %v4965 = vunpack.c.l.b16 %v3172
        %v4966 = vunpack.c.l.b16 %v3173
        %v4967 = vunpack.c.l.b16 %v3174
        %v4968 = vunpack.c.l.b16 %v3175
        %v4969 = vunpack.c.l.b16 %v3176
        %v4970 = vunpack.c.l.b16 %v3177
        %v4971 = vunpack.c.l.b16 %v3178
        %v4972 = vunpack.c.l.b16 %v3179
        %v4973 = vunpack.c.l.b16 %v3180
        %v4974 = vunpack.c.l.b16 %v3181
        %v4975 = vunpack.c.l.b16 %v3182
        %v4976 = vunpack.c.l.b16 %v3183
        %v4977 = vunpack.c.l.b16 %v3184
        %v4978 = vunpack.c.l.b16 %v3185
        %v4979 = vunpack.c.l.b16 %v3186
        %v4980 = vunpack.c.l.b16 %v3187
        %v4981 = vunpack.c.l.b16 %v3188
        %v4982 = vunpack.c.l.b16 %v3189
        %v4983 = vunpack.c.l.b16 %v3190
        %v4984 = vunpack.c.l.b16 %v3191
        %v4985 = vunpack.c.l.b16 %v3192
        %v4986 = vunpack.c.l.b16 %v3193
        %v4987 = vunpack.c.l.b16 %v3194
        %v4988 = vunpack.c.l.b16 %v3195
        %v4989 = vunpack.c.l.b16 %v3196
        %v4990 = vunpack.c.l.b16 %v3197
        %v4991 = vunpack.c.l.b16 %v3198
        %v4992 = vunpack.c.l.b16 %v3199
        %v4993 = vunpack.c.l.b16 %v3200
        %v4994 = vunpack.c.l.b16 %v3201
        %v4995 = vunpack.c.l.b16 %v3202
        %v4996 = vunpack.c.l.b16 %v3203
        %v4997 = vunpack.c.l.b16 %v3204
        %v4998 = vunpack.c.l.b16 %v3205
        %v4999 = vunpack.c.l.b16 %v3206
        %v5000 = vunpack.c.l.b16 %v3207
        %v5001 = vunpack.c.l.b16 %v3208
        %v5002 = vunpack.c.l.b16 %v3209
        %v5003 = vunpack.c.l.b16 %v3210
        %v5004 = vunpack.c.l.b16 %v3211
        %v5005 = vunpack.c.l.b16 %v3212
        %v5006 = vunpack.c.l.b16 %v3213
        %v5007 = vunpack.c.l.b16 %v3214
        %v5008 = vunpack.c.l.b16 %v3215
        %v5009 = vunpack.c.l.b16 %v3216
        %v5010 = vunpack.c.l.b16 %v3217
        %v5011 = vunpack.c.l.b16 %v3218
        %v5012 = vunpack.c.l.b16 %v3219
        %v5013 = vunpack.c.l.b16 %v3220
        %v5014 = vunpack.c.l.b16 %v3221
        %v5015 = vunpack.c.l.b16 %v3222
        %v5016 = vunpack.c.l.b16 %v3223
        %v5017 = vunpack.c.l.b16 %v3224
        %v5018 = vunpack.c.l.b16 %v3225
        %v5019 = vunpack.c.l.b16 %v3226
        %v5020 = vunpack.c.l.b16 %v3227
        %v5021 = vunpack.c.l.b16 %v3228
        %v5022 = vunpack.c.l.b16 %v3229
        %v5023 = vunpack.c.l.b16 %v3230
        %v5024 = vunpack.c.l.b16 %v3231
        %v5025 = vunpack.c.l.b16 %v3232
        %v5026 = vunpack.c.l.b16 %v3233
        %v5027 = vunpack.c.l.b16 %v3234
        %v5028 = vunpack.c.l.b16 %v3235
        %v5029 = vunpack.c.l.b16 %v3236
        %v5030 = vunpack.c.l.b16 %v3237
        %v5031 = vunpack.c.l.b16 %v3238
        %v5032 = vunpack.c.l.b16 %v3239
        %v5033 = vunpack.c.l.b16 %v3240
        %v5034 = vunpack.c.l.b16 %v3241
        %v5035 = vunpack.c.l.b16 %v3242
        %v5036 = vunpack.c.l.b16 %v3243
        %v5037 = vunpack.c.l.b16 %v3244
        %v5038 = vunpack.c.l.b16 %v3245
        %v5039 = vunpack.c.l.b16 %v3246
        %v5040 = vunpack.c.l.b16 %v3247
        %v5041 = vunpack.c.l.b16 %v3248
        %v5042 = vunpack.c.l.b16 %v3249
        %v5043 = vunpack.c.l.b16 %v3250
        %v5044 = vunpack.c.l.b16 %v3251
        %v5045 = vunpack.c.l.b16 %v3252
        %v5046 = vunpack.c.l.b16 %v3253
        %v5047 = vunpack.c.l.b16 %v3254
        %v5048 = vunpack.c.l.b16 %v3255
        %v5049 = vunpack.c.l.b16 %v3256
        %v5050 = vunpack.c.l.b16 %v3257
        %v5051 = vunpack.c.l.b16 %v3258
        %v5052 = vunpack.c.l.b16 %v3259
        %v5053 = vunpack.c.l.b16 %v3260
        %v5054 = vunpack.c.l.b16 %v3261
        %v5055 = vunpack.c.l.b16 %v3262
        %v5056 = vunpack.c.l.b16 %v3263
        %v5057 = vunpack.c.l.b16 %v3264
        %v5058 = vunpack.c.l.b16 %v3265
        %v5059 = vunpack.c.l.b16 %v3266
        %v5060 = vunpack.c.l.b16 %v3267
        %v5061 = vunpack.c.l.b16 %v3268
        %v5062 = vunpack.c.l.b16 %v3269
        %v5063 = vunpack.c.l.b16 %v3270
        %v5064 = vunpack.c.l.b16 %v3271
        %v5065 = vunpack.c.l.b16 %v3272
        %v5066 = vunpack.c.l.b16 %v3273
        %v5067 = vunpack.c.l.b16 %v3274
        %v5068 = vunpack.c.l.b16 %v3275
        %v5069 = vunpack.c.l.b16 %v3276
        %v5070 = vunpack.c.l.b16 %v3277
        %v5071 = vunpack.c.l.b16 %v3278
        %v5072 = vunpack.c.l.b16 %v3279
        %v5073 = vunpack.c.l.b16 %v3280
        %v5074 = vunpack.c.l.b16 %v3281
        %v5075 = vunpack.c.l.b16 %v3282
        %v5076 = vunpack.c.l.b16 %v3283
        %v5077 = vunpack.c.l.b16 %v3284
        %v5078 = vunpack.c.l.b16 %v3285
        %v5079 = vunpack.c.l.b16 %v3286
        %v5080 = vunpack.c.l.b16 %v3287
        %v5081 = vunpack.c.l.b16 %v3288
        %v5082 = vunpack.c.l.b16 %v3289
        %v5083 = vunpack.c.l.b16 %v3290
        %v5084 = vunpack.c.l.b16 %v3291
        %v5085 = vunpack.c.l.b16 %v3292
        %v5086 = vunpack.c.l.b16 %v3293
        %v5087 = vunpack.c.l.b16 %v3294
        %v5088 = vunpack.c.l.b16 %v3295
        %v5089 = vunpack.c.l.b16 %v3296
        %v5090 = vunpack.c.l.b16 %v3297
        %v5091 = vunpack.c.l.b16 %v3298
        %v5092 = vunpack.c.l.b16 %v3299
        %v5093 = vunpack.c.l.b16 %v3300
        %v5094 = vunpack.c.l.b16 %v3301
        %v5095 = vunpack.c.l.b16 %v3302
        %v5096 = vunpack.c.l.b16 %v3303
        %v5097 = vunpack.c.l.b16 %v3304
        %v5098 = vunpack.c.l.b16 %v3305
        %v5099 = vunpack.c.l.b16 %v3306
        %v5100 = vunpack.c.l.b16 %v3307
        %v5101 = vunpack.c.l.b16 %v3308
        %v5102 = vunpack.c.l.b16 %v3309
        %v5103 = vunpack.c.l.b16 %v3310
        %v5104 = vunpack.c.l.b16 %v3311
        %v5105 = vunpack.c.l.b16 %v3312
        %v5106 = vunpack.c.l.b16 %v3313
        %v5107 = vunpack.c.l.b16 %v3314
        %v5108 = vunpack.c.l.b16 %v3315
        %v5109 = vunpack.c.l.b16 %v3316
        %v5110 = vunpack.c.l.b16 %v3317
        %v5111 = vunpack.c.l.b16 %v3318
        %v5112 = vunpack.c.l.b16 %v3319
        %v5113 = vunpack.c.l.b16 %v3320
        %v5114 = vunpack.c.l.b16 %v3321
        %v5115 = vunpack.c.l.b16 %v3322
        %v5116 = vunpack.c.l.b16 %v3323
        %v5117 = vunpack.c.l.b16 %v3324
        %v5118 = vunpack.c.l.b16 %v3325
        %v5119 = vunpack.c.l.b16 %v3326
        %v5120 = vunpack.c.l.b16 %v3327
        %v5121 = vunpack.c.l.b16 %v3328
        %v5122 = vunpack.c.l.b16 %v3329
        %v5123 = vunpack.c.l.b16 %v3330
        %v5124 = vunpack.c.l.b16 %v3331
        %v5125 = vunpack.c.l.b16 %v3332
        %v5126 = vunpack.c.l.b16 %v3333
        %v5127 = vunpack.c.l.b16 %v3334
        %v5128 = vunpack.c.l.b16 %v3335
        %v5129 = vunpack.c.l.b16 %v3336
        %v5130 = vunpack.c.l.b16 %v3337
        %v5131 = vunpack.c.l.b16 %v3338
        %v5132 = vunpack.c.l.b16 %v3339
        %v5133 = vunpack.c.l.b16 %v3340
        %v5134 = vunpack.c.l.b16 %v3341
        %v5135 = vunpack.c.l.b16 %v3342
        %v5136 = vunpack.c.l.b16 %v3343
        %v5137 = vunpack.c.l.b16 %v3344
        %v5138 = vunpack.c.l.b16 %v3345
        %v5139 = vunpack.c.l.b16 %v3346
        %v5140 = vunpack.c.l.b16 %v3347
        %v5141 = vunpack.c.l.b16 %v3348
        %v5142 = vunpack.c.l.b16 %v3349
        %v5143 = vunpack.c.l.b16 %v3350
        %v5144 = vunpack.c.l.b16 %v3351
        %v5145 = vunpack.c.l.b16 %v3352
        %v5146 = vunpack.c.l.b16 %v3353
        %v5147 = vunpack.c.l.b16 %v3354
        %v5148 = vunpack.c.l.b16 %v3355
        %v5149 = vunpack.c.l.b16 %v3356
        %v5150 = vunpack.c.l.b16 %v3357
        %v5151 = vunpack.c.l.b16 %v3358
        %v5152 = vunpack.c.l.b16 %v3359
        %v5153 = vunpack.c.l.b16 %v3360
        %v5154 = vunpack.c.l.b16 %v3361
        %v5155 = vunpack.c.l.b16 %v3362
        %v5156 = vunpack.c.l.b16 %v3363
        %v5157 = vunpack.c.l.b16 %v3364
        %v5158 = vunpack.c.l.b16 %v3365
        %v5159 = vunpack.c.l.b16 %v3366
        %v5160 = vunpack.c.l.b16 %v3367
        %v5161 = vunpack.c.l.b16 %v3368
        %v5162 = vunpack.c.l.b16 %v3369
        %v5163 = vunpack.c.l.b16 %v3370
        %v5164 = vunpack.c.l.b16 %v3371
        %v5165 = vunpack.c.l.b16 %v3372
        %v5166 = vunpack.c.l.b16 %v3373
        %v5167 = vunpack.c.l.b16 %v3374
        %v5168 = vunpack.c.l.b16 %v3375
        %v5169 = vunpack.c.l.b16 %v3376
        %v5170 = vunpack.c.l.b16 %v3377
        %v5171 = vunpack.c.l.b16 %v3378
        %v5172 = vunpack.c.l.b16 %v3379
        %v5173 = vunpack.c.l.b16 %v3380
        %v5174 = vunpack.c.l.b16 %v3381
        %v5175 = vunpack.c.l.b16 %v3382
        %v5176 = vunpack.c.l.b16 %v3383
        %v5177 = vunpack.c.l.b16 %v3384
        %v5178 = vunpack.c.l.b16 %v3385
        %v5179 = vunpack.c.l.b16 %v3386
        %v5180 = vunpack.c.l.b16 %v3387
        %v5181 = vunpack.c.l.b16 %v3388
        %v5182 = vunpack.c.l.b16 %v3389
        %v5183 = vunpack.c.l.b16 %v3390
        %v5184 = vunpack.c.l.b16 %v3391
        %v5185 = vunpack.c.l.b16 %v3392
        %v5186 = vunpack.c.l.b16 %v3393
        %v5187 = vunpack.c.l.b16 %v3394
        %v5188 = vunpack.c.l.b16 %v3395
        %v5189 = vunpack.c.l.b16 %v3396
        %v5190 = vunpack.c.l.b16 %v3397
        %v5191 = vunpack.c.l.b16 %v3398
        %v5192 = vunpack.c.l.b16 %v3399
        %v5193 = vunpack.c.l.b16 %v3400
        %v5194 = vunpack.c.l.b16 %v3401
        %v5195 = vunpack.c.l.b16 %v3402
        %v5196 = vunpack.c.l.b16 %v3403
        %v5197 = vunpack.c.l.b16 %v3404
        %v5198 = vunpack.c.l.b16 %v3405
        %v5199 = vunpack.c.l.b16 %v3406
        %v5200 = vunpack.c.l.b16 %v3407
        %v5201 = vunpack.c.l.b16 %v3408
        %v5202 = vunpack.c.l.b16 %v3409
        %v5203 = vunpack.c.l.b16 %v3410
        %v5204 = vunpack.c.l.b16 %v3411
        %v5205 = vunpack.c.l.b16 %v3412
        %v5206 = vunpack.c.l.b16 %v3413
        %v5207 = vunpack.c.l.b16 %v3414
        %v5208 = vunpack.c.l.b16 %v3415
        %v5209 = vunpack.c.l.b16 %v3416
        %v5210 = vunpack.c.l.b16 %v3417
        %v5211 = vunpack.c.l.b16 %v3418
        %v5212 = vunpack.c.l.b16 %v3419
        %v5213 = vunpack.c.l.b16 %v3420
        %v5214 = vunpack.c.l.b16 %v3421
        %v5215 = vunpack.c.l.b16 %v3422
        %v5216 = vunpack.c.l.b16 %v3423
        %v5217 = vunpack.c.l.b16 %v3424
        %v5218 = vunpack.c.l.b16 %v3425
        %v5219 = vunpack.c.l.b16 %v3426
        %v5220 = vunpack.c.l.b16 %v3427
        %v5221 = vunpack.c.l.b16 %v3428
        %v5222 = vunpack.c.l.b16 %v3429
        %v5223 = vunpack.c.l.b16 %v3430
        %v5224 = vunpack.c.l.b16 %v3431
        %v5225 = vunpack.c.l.b16 %v3432
        %v5226 = vunpack.c.l.b16 %v3433
        %v5227 = vunpack.c.l.b16 %v3434
        %v5228 = vunpack.c.l.b16 %v3435
        %v5229 = vunpack.c.l.b16 %v3436
        %v5230 = vunpack.c.l.b16 %v3437
        %v5231 = vunpack.c.l.b16 %v3438
        %v5232 = vunpack.c.l.b16 %v3439
        %v5233 = vunpack.c.l.b16 %v3440
        %v5234 = vunpack.c.l.b16 %v3441
        %v5235 = vunpack.c.l.b16 %v3442
        %v5236 = vunpack.c.l.b16 %v3443
        %v5237 = vunpack.c.l.b16 %v3444
        %v5238 = vunpack.c.l.b16 %v3445
        %v5239 = vunpack.c.l.b16 %v3446
        %v5240 = vunpack.c.l.b16 %v3447
        %v5241 = vunpack.c.l.b16 %v3448
        %v5242 = vunpack.c.l.b16 %v3449
        %v5243 = vunpack.c.l.b16 %v3450
        %v5244 = vunpack.c.l.b16 %v3451
        %v5245 = vunpack.c.l.b16 %v3452
        %v5246 = vunpack.c.l.b16 %v3453
        %v5247 = vunpack.c.l.b16 %v3454
        %v5248 = vunpack.c.l.b16 %v3455
        %v5249 = vunpack.c.l.b16 %v3456
        %v5250 = vunpack.c.l.b16 %v3457
        %v5251 = vunpack.c.l.b16 %v3458
        %v5252 = vunpack.c.l.b16 %v3459
        %v5253 = vunpack.c.l.b16 %v3460
        %v5254 = vunpack.c.l.b16 %v3461
        %v5255 = vunpack.c.l.b16 %v3462
        %v5256 = vunpack.c.l.b16 %v3463
        %v5257 = vunpack.c.l.b16 %v3464
        %v5258 = vunpack.c.l.b16 %v3465
        %v5259 = vunpack.c.l.b16 %v3466
        %v5260 = vunpack.c.l.b16 %v3467
        %v5261 = vunpack.c.l.b16 %v3468
        %v5262 = vunpack.c.l.b16 %v3469
        %v5263 = vunpack.c.l.b16 %v3470
        %v5264 = vunpack.c.l.b16 %v3471
        %v5265 = vunpack.c.l.b16 %v3472
        %v5266 = vunpack.c.l.b16 %v3473
        %v5267 = vunpack.c.l.b16 %v3474
        %v5268 = vunpack.c.l.b16 %v3475
        %v5269 = vunpack.c.l.b16 %v3476
        %v5270 = vunpack.c.l.b16 %v3477
        %v5271 = vunpack.c.l.b16 %v3478
        %v5272 = vunpack.c.l.b16 %v3479
        %v5273 = vunpack.c.l.b16 %v3480
        %v5274 = vunpack.c.l.b16 %v3481
        %v5275 = vunpack.c.l.b16 %v3482
        %v5276 = vunpack.c.l.b16 %v3483
        %v5277 = vunpack.c.l.b16 %v3484
        %v5278 = vunpack.c.l.b16 %v3485
        %v5279 = vunpack.c.l.b16 %v3486
        %v5280 = vunpack.c.l.b16 %v3487
        %v5281 = vunpack.c.l.b16 %v3488
        %v5282 = vunpack.c.l.b16 %v3489
        %v5283 = vunpack.c.l.b16 %v3490
        %v5284 = vunpack.c.l.b16 %v3491
        %v5285 = vunpack.c.l.b16 %v3492
        %v5286 = vunpack.c.l.b16 %v3493
        %v5287 = vunpack.c.l.b16 %v3494
        %v5288 = vunpack.c.l.b16 %v3495
        %v5289 = vunpack.c.l.b16 %v3496
        %v5290 = vunpack.c.l.b16 %v3497
        %v5291 = vunpack.c.l.b16 %v3498
        %v5292 = vunpack.c.l.b16 %v3499
        %v5293 = vunpack.c.l.b16 %v3500
        %v5294 = vunpack.c.l.b16 %v3501
        %v5295 = vunpack.c.l.b16 %v3502
        %v5296 = vunpack.c.l.b16 %v3503
        %v5297 = vunpack.c.l.b16 %v3504
        %v5298 = vunpack.c.l.b16 %v3505
        %v5299 = vunpack.c.l.b16 %v3506
        %v5300 = vunpack.c.l.b16 %v3507
        %v5301 = vunpack.c.l.b16 %v3508
        %v5302 = vunpack.c.l.b16 %v3509
        %v5303 = vunpack.c.l.b16 %v3510
        %v5304 = vunpack.c.l.b16 %v3511
        %v5305 = vunpack.c.l.b16 %v3512
        %v5306 = vunpack.c.l.b16 %v3513
        %v5307 = vunpack.c.l.b16 %v3514
        %v5308 = vunpack.c.l.b16 %v3515
        %v5309 = vunpack.c.l.b16 %v3516
        %v5310 = vunpack.c.l.b16 %v3517
        %v5311 = vunpack.c.l.b16 %v3518
        %v5312 = vunpack.c.l.b16 %v3519
        %v5313 = vunpack.c.l.b16 %v3520
        %v5314 = vunpack.c.l.b16 %v3521
        %v5315 = vunpack.c.l.b16 %v3522
        %v5316 = vunpack.c.l.b16 %v3523
        %v5317 = vunpack.c.l.b16 %v3524
        %v5318 = vunpack.c.l.b16 %v3525
        %v5319 = vunpack.c.l.b16 %v3526
        %v5320 = vunpack.c.l.b16 %v3527
        %v5321 = vunpack.c.l.b16 %v3528
        %v5322 = vunpack.c.l.b16 %v3529
        %v5323 = vunpack.c.l.b16 %v3530
        %v5324 = vunpack.c.l.b16 %v3531
        %v5325 = vunpack.c.l.b16 %v3532
        %v5326 = vunpack.c.l.b16 %v3533
        %v5327 = vunpack.c.l.b16 %v3534
        %v5328 = vunpack.c.l.b16 %v3535
        %v5329 = vunpack.c.l.b16 %v3536
        %v5330 = vunpack.c.l.b16 %v3537
        %v5331 = vunpack.c.l.b16 %v3538
        %v5332 = vunpack.c.l.b16 %v3539
        %v5333 = vunpack.c.l.b16 %v3540
        %v5334 = vunpack.c.l.b16 %v3541
        %v5335 = vunpack.c.l.b16 %v3542
        %v5336 = vunpack.c.l.b16 %v3543
        %v5337 = vunpack.c.l.b16 %v3544
        %v5338 = vunpack.c.l.b16 %v3545
        %v5339 = vunpack.c.l.b16 %v3546
        %v5340 = vunpack.c.l.b16 %v3547
        %v5341 = vunpack.c.l.b16 %v3548
        %v5342 = vunpack.c.l.b16 %v3549
        %v5343 = vunpack.c.l.b16 %v3550
        %v5344 = vunpack.c.l.b16 %v3551
        %v5345 = vunpack.c.l.b16 %v3552
        %v5346 = vunpack.c.l.b16 %v3553
        %v5347 = vunpack.c.l.b16 %v3554
        %v5348 = vunpack.c.l.b16 %v3555
        %v5349 = vunpack.c.l.b16 %v3556
        %v5350 = vunpack.c.l.b16 %v3557
        %v5351 = vunpack.c.l.b16 %v3558
        %v5352 = vunpack.c.l.b16 %v3559
        %v5353 = vunpack.c.l.b16 %v3560
        %v5354 = vunpack.c.l.b16 %v3561
        %v5355 = vunpack.c.l.b16 %v3562
        %v5356 = vunpack.c.l.b16 %v3563
        %v5357 = vunpack.c.l.b16 %v3564
        %v5358 = vunpack.c.l.b16 %v3565
        %v5359 = vunpack.c.l.b16 %v3566
        %v5360 = vunpack.c.l.b16 %v3567
        %v5361 = vunpack.c.l.b16 %v3568
        %v5362 = vunpack.c.l.b16 %v3569
        %v5363 = vunpack.c.l.b16 %v3570
        %v5364 = vunpack.c.l.b16 %v3571
        %v5365 = vunpack.c.l.b16 %v3572
        %v5366 = vunpack.c.l.b16 %v3573
        %v5367 = vunpack.c.l.b16 %v3574
        %v5368 = vunpack.c.l.b16 %v3575
        %v5369 = vunpack.c.l.b16 %v3576
        %v5370 = vunpack.c.l.b16 %v3577
        %v5371 = vunpack.c.l.b16 %v3578
        %v5372 = vunpack.c.l.b16 %v3579
        %v5373 = vunpack.c.l.b16 %v3580
        %v5374 = vunpack.c.l.b16 %v3581
        %v5375 = vunpack.c.l.b16 %v3582
        %v5376 = vunpack.c.l.b16 %v3583
        %v5377 = vunpack.c.l.b16 %v3584
        %v5378 = vunpack.c.l.b16 %v3585
        %v5379 = vunpack.c.l.b16 %v3586
        %v5380 = vunpack.c.l.b16 %v3587
        %v5381 = vunpack.c.l.b16 %v3588
        %v5382 = vunpack.c.l.b16 %v3589
        %v5383 = vunpack.c.l.b16 %v3590
        %v5384 = vunpack.c.l.b16 %v3591
        %v5385 = vunpack.c.l.b16 %v3592
        %v5386 = vunpack.c.l.b16 %v3593
        %v5387 = vunpack.c.l.b16 %v3594
        %v5388 = vunpack.c.l.b16 %v3595
        %v5389 = vunpack.c.l.b16 %v3596
        %v5390 = vunpack.c.l.b16 %v3597
        %v5391 = vunpack.c.l.b16 %v3598
        %v5392 = vunpack.c.l.b16 %v3599
        %v5393 = vunpack.c.l.b16 %v3600
        %v5394 = vunpack.c.l.b16 %v3601
        %v5395 = vunpack.c.l.b16 %v3602
        %v5396 = vunpack.c.l.b16 %v3603
        %v5397 = vunpack.c.l.b16 %v3604
        %v5398 = vunpack.c.l.b16 %v3605
        %v5399 = vunpack.c.l.b16 %v3606
        %v5400 = vunpack.c.l.b16 %v3607
        %v5401 = vunpack.c.l.b16 %v3608
        %v5402 = vunpack.c.l.b16 %v3609
        %v5403 = vunpack.c.l.b16 %v3610
        %v5404 = vunpack.c.l.b16 %v3611
        %v5405 = vunpack.c.l.b16 %v3612
        %v5406 = vunpack.c.l.b16 %v3613
        %v5407 = vunpack.c.l.b16 %v3614
        %v5408 = vunpack.c.l.b16 %v3615
        %v5409 = vunpack.c.l.b16 %v3616
        %v5410 = vunpack.c.l.b16 %v3617
        %v5411 = vunpack.c.l.b16 %v3618
        %v5412 = vunpack.c.l.b16 %v3619
        %v5413 = vunpack.c.l.b16 %v3620
        %v5414 = vunpack.c.l.b16 %v3621
        %v5415 = vunpack.c.l.b16 %v3622
        %v5416 = vunpack.c.l.b16 %v3623
        %v5417 = vunpack.c.l.b16 %v3624
        %v5418 = vunpack.c.l.b16 %v3625
        %v5419 = vunpack.c.l.b16 %v3626
        %v5420 = vunpack.c.l.b16 %v3627
        %v5421 = vunpack.c.l.b16 %v3628
        %v5422 = vunpack.c.l.b16 %v3629
        %v5423 = vunpack.c.l.b16 %v3630
        %v5424 = vunpack.c.l.b16 %v3631
        %v5425 = vunpack.c.l.b16 %v3632
        %v5426 = vunpack.c.l.b16 %v3633
        %v5427 = vunpack.c.l.b16 %v3634
        %v5428 = vunpack.c.l.b16 %v3635
        %v5429 = vunpack.c.l.b16 %v3636
        %v5430 = vunpack.c.l.b16 %v3637
        %v5431 = vunpack.c.l.b16 %v3638
        %v5432 = vunpack.c.l.b16 %v3639
        %v5433 = vunpack.c.l.b16 %v3640
        %v5434 = vunpack.c.l.b16 %v3641
        %v5435 = vunpack.c.l.b16 %v3642
        %v5436 = vunpack.c.l.b16 %v3643
        %v5437 = vunpack.c.l.b16 %v3644
        %v5438 = vunpack.c.l.b16 %v3645
        %v5439 = vunpack.c.l.b16 %v3646
        %v5440 = vunpack.c.l.b16 %v3647
        %v5441 = vunpack.c.l.b16 %v3648
        %v5442 = vunpack.c.l.b16 %v3649
        %v5443 = vunpack.c.l.b16 %v3650
        %v5444 = vunpack.c.l.b16 %v3651
        %v5445 = vunpack.c.l.b16 %v3652
        %v5446 = vunpack.c.l.b16 %v3653
        %v5447 = vunpack.c.l.b16 %v3654
        %v5448 = vunpack.c.l.b16 %v3655
        %v5449 = vunpack.c.l.b16 %v3656
        %v5450 = vunpack.c.l.b16 %v3657
        %v5451 = vunpack.c.l.b16 %v3658
        %v5452 = vunpack.c.l.b16 %v3659
        %v5453 = vunpack.c.l.b16 %v3660
        %v5454 = vunpack.c.l.b16 %v3661
        %v5455 = vunpack.c.l.b16 %v3662
        %v5456 = vunpack.c.l.b16 %v3663
        %v5457 = vunpack.c.l.b16 %v3664
        %v5458 = vunpack.c.l.b16 %v3665
        %v5459 = vunpack.c.l.b16 %v3666
        %v5460 = vunpack.c.l.b16 %v3667
        %v5461 = vunpack.c.l.b16 %v3668
        %v5462 = vunpack.c.l.b16 %v3669
        %v5463 = vunpack.c.l.b16 %v3670
        %v5464 = vunpack.c.l.b16 %v3671
        %v5465 = vunpack.c.l.b16 %v3672
        %v5466 = vunpack.c.l.b16 %v3673
        %v5467 = vunpack.c.l.b16 %v3674
        %v5468 = vunpack.c.l.b16 %v3675
        %v5469 = vunpack.c.l.b16 %v3676
        %v5470 = vunpack.c.l.b16 %v3677
        %v5471 = vunpack.c.l.b16 %v3678
        %v5472 = vunpack.c.l.b16 %v3679
        %v5473 = vunpack.c.l.b16 %v3680
        %v5474 = vunpack.c.l.b16 %v3681
        %v5475 = vunpack.c.l.b16 %v3682
        %v5476 = vunpack.c.l.b16 %v3683
        %v5477 = vunpack.c.l.b16 %v3684
        %v5478 = vunpack.c.l.b16 %v3685
        %v5479 = vunpack.c.l.b16 %v3686
        %v5480 = vunpack.c.l.b16 %v3687
        %v5481 = vunpack.c.l.b16 %v3688
        %v5482 = vunpack.c.l.b16 %v3689
        %v5483 = vunpack.c.l.b16 %v3690
        %v5484 = vunpack.c.l.b16 %v3691
        %v5485 = vpack.c.b16 %v4590, %v4589
        %v5486 = vpack.c.b16 %v4592, %v4591
        %v5487 = vpack.c.b16 %v4594, %v4593
        %v5488 = vpack.c.b16 %v4596, %v4595
        %v5489 = vpack.c.b16 %v4598, %v4597
        %v5490 = vpack.c.b16 %v4600, %v4599
        %v5491 = vpack.c.b16 %v4602, %v4601
        %v5492 = vpack.c.b16 %v4604, %v4603
        %v5493 = vpack.c.b16 %v4606, %v4605
        %v5494 = vpack.c.b16 %v4608, %v4607
        %v5495 = vpack.c.b16 %v4610, %v4609
        %v5496 = vpack.c.b16 %v4612, %v4611
        %v5497 = vpack.c.b16 %v4614, %v4613
        %v5498 = vpack.c.b16 %v4616, %v4615
        %v5499 = vpack.c.b16 %v4618, %v4617
        %v5500 = vpack.c.b16 %v4620, %v4619
        %v5501 = vpack.c.b16 %v4622, %v4621
        %v5502 = vpack.c.b16 %v4624, %v4623
        %v5503 = vpack.c.b16 %v4626, %v4625
        %v5504 = vpack.c.b16 %v4628, %v4627
        %v5505 = vpack.c.b16 %v4630, %v4629
        %v5506 = vpack.c.b16 %v4632, %v4631
        %v5507 = vpack.c.b16 %v4634, %v4633
        %v5508 = vpack.c.b16 %v4636, %v4635
        %v5509 = vpack.c.b16 %v4638, %v4637
        %v5510 = vpack.c.b16 %v4640, %v4639
        %v5511 = vpack.c.b16 %v4642, %v4641
        %v5512 = vpack.c.b16 %v4644, %v4643
        %v5513 = vpack.c.b16 %v4646, %v4645
        %v5514 = vpack.c.b16 %v4648, %v4647
        %v5515 = vpack.c.b16 %v4650, %v4649
        %v5516 = vpack.c.b16 %v4652, %v4651
        %v5517 = vpack.c.b16 %v4654, %v4653
        %v5518 = vpack.c.b16 %v4656, %v4655
        %v5519 = vpack.c.b16 %v4658, %v4657
        %v5520 = vpack.c.b16 %v4660, %v4659
        %v5521 = vpack.c.b16 %v4662, %v4661
        %v5522 = vpack.c.b16 %v4664, %v4663
        %v5523 = vpack.c.b16 %v4666, %v4665
        %v5524 = vpack.c.b16 %v4668, %v4667
        %v5525 = vpack.c.b16 %v4670, %v4669
        %v5526 = vpack.c.b16 %v4672, %v4671
        %v5527 = vpack.c.b16 %v4674, %v4673
        %v5528 = vpack.c.b16 %v4676, %v4675
        %v5529 = vpack.c.b16 %v4678, %v4677
        %v5530 = vpack.c.b16 %v4680, %v4679
        %v5531 = vpack.c.b16 %v4682, %v4681
        %v5532 = vpack.c.b16 %v4684, %v4683
        %v5533 = vpack.c.b16 %v4686, %v4685
        %v5534 = vpack.c.b16 %v4688, %v4687
        %v5535 = vpack.c.b16 %v4690, %v4689
        %v5536 = vpack.c.b16 %v4692, %v4691
        %v5537 = vpack.c.b16 %v4694, %v4693
        %v5538 = vpack.c.b16 %v4696, %v4695
        %v5539 = vpack.c.b16 %v4698, %v4697
        %v5540 = vpack.c.b16 %v4700, %v4699
        %v5541 = vpack.c.b16 %v4702, %v4701
        %v5542 = vpack.c.b16 %v4704, %v4703
        %v5543 = vpack.c.b16 %v4706, %v4705
        %v5544 = vpack.c.b16 %v4708, %v4707
        %v5545 = vpack.c.b16 %v4710, %v4709
        %v5546 = vpack.c.b16 %v4712, %v4711
        %v5547 = vpack.c.b16 %v4714, %v4713
        %v5548 = vpack.c.b16 %v4716, %v4715
        %v5549 = vpack.c.b16 %v4718, %v4717
        %v5550 = vpack.c.b16 %v4720, %v4719
        %v5551 = vpack.c.b16 %v4722, %v4721
        %v5552 = vpack.c.b16 %v4724, %v4723
        %v5553 = vpack.c.b16 %v4726, %v4725
        %v5554 = vpack.c.b16 %v4728, %v4727
        %v5555 = vpack.c.b16 %v4730, %v4729
        %v5556 = vpack.c.b16 %v4732, %v4731
        %v5557 = vpack.c.b16 %v4734, %v4733
        %v5558 = vpack.c.b16 %v4736, %v4735
        %v5559 = vpack.c.b16 %v4738, %v4737
        %v5560 = vpack.c.b16 %v4740, %v4739
        %v5561 = vpack.c.b16 %v4742, %v4741
        %v5562 = vpack.c.b16 %v4744, %v4743
        %v5563 = vpack.c.b16 %v4746, %v4745
        %v5564 = vpack.c.b16 %v4748, %v4747
        %v5565 = vpack.c.b16 %v4750, %v4749
        %v5566 = vpack.c.b16 %v4752, %v4751
        %v5567 = vpack.c.b16 %v4754, %v4753
        %v5568 = vpack.c.b16 %v4756, %v4755
        %v5569 = vpack.c.b16 %v4758, %v4757
        %v5570 = vpack.c.b16 %v4760, %v4759
        %v5571 = vpack.c.b16 %v4762, %v4761
        %v5572 = vpack.c.b16 %v4764, %v4763
        %v5573 = vpack.c.b16 %v4766, %v4765
        %v5574 = vpack.c.b16 %v4768, %v4767
        %v5575 = vpack.c.b16 %v4770, %v4769
        %v5576 = vpack.c.b16 %v4772, %v4771
        %v5577 = vpack.c.b16 %v4774, %v4773
        %v5578 = vpack.c.b16 %v4776, %v4775
        %v5579 = vpack.c.b16 %v4778, %v4777
        %v5580 = vpack.c.b16 %v4780, %v4779
        %v5581 = vpack.c.b16 %v4782, %v4781
        %v5582 = vpack.c.b16 %v4784, %v4783
        %v5583 = vpack.c.b16 %v4786, %v4785
        %v5584 = vpack.c.b16 %v4788, %v4787
        %v5585 = vpack.c.b16 %v4790, %v4789
        %v5586 = vpack.c.b16 %v4792, %v4791
        %v5587 = vpack.c.b16 %v4794, %v4793
        %v5588 = vpack.c.b16 %v4796, %v4795
        %v5589 = vpack.c.b16 %v4798, %v4797
        %v5590 = vpack.c.b16 %v4800, %v4799
        %v5591 = vpack.c.b16 %v4802, %v4801
        %v5592 = vpack.c.b16 %v4804, %v4803
        %v5593 = vpack.c.b16 %v4806, %v4805
        %v5594 = vpack.c.b16 %v4808, %v4807
        %v5595 = vpack.c.b16 %v4810, %v4809
        %v5596 = vpack.c.b16 %v4812, %v4811
        %v5597 = vpack.c.b16 %v4814, %v4813
        %v5598 = vpack.c.b16 %v4816, %v4815
        %v5599 = vpack.c.b16 %v4818, %v4817
        %v5600 = vpack.c.b16 %v4820, %v4819
        %v5601 = vpack.c.b16 %v4822, %v4821
        %v5602 = vpack.c.b16 %v4824, %v4823
        %v5603 = vpack.c.b16 %v4826, %v4825
        %v5604 = vpack.c.b16 %v4828, %v4827
        %v5605 = vpack.c.b16 %v4830, %v4829
        %v5606 = vpack.c.b16 %v4832, %v4831
        %v5607 = vpack.c.b16 %v4834, %v4833
        %v5608 = vpack.c.b16 %v4836, %v4835
        %v5609 = vpack.c.b16 %v4838, %v4837
        %v5610 = vpack.c.b16 %v4840, %v4839
        %v5611 = vpack.c.b16 %v4842, %v4841
        %v5612 = vpack.c.b16 %v4844, %v4843
        %v5613 = vpack.c.b16 %v4846, %v4845
        %v5614 = vpack.c.b16 %v4848, %v4847
        %v5615 = vpack.c.b16 %v4850, %v4849
        %v5616 = vpack.c.b16 %v4852, %v4851
        %v5617 = vpack.c.b16 %v4854, %v4853
        %v5618 = vpack.c.b16 %v4856, %v4855
        %v5619 = vpack.c.b16 %v4858, %v4857
        %v5620 = vpack.c.b16 %v4860, %v4859
        %v5621 = vpack.c.b16 %v4862, %v4861
        %v5622 = vpack.c.b16 %v4864, %v4863
        %v5623 = vpack.c.b16 %v4866, %v4865
        %v5624 = vpack.c.b16 %v4868, %v4867
        %v5625 = vpack.c.b16 %v4870, %v4869
        %v5626 = vpack.c.b16 %v4872, %v4871
        %v5627 = vpack.c.b16 %v4874, %v4873
        %v5628 = vpack.c.b16 %v4876, %v4875
        %v5629 = vpack.c.b16 %v4878, %v4877
        %v5630 = vpack.c.b16 %v4880, %v4879
        %v5631 = vpack.c.b16 %v4882, %v4881
        %v5632 = vpack.c.b16 %v4884, %v4883
        %v5633 = vpack.c.b16 %v4886, %v4885
        %v5634 = vpack.c.b16 %v4888, %v4887
        %v5635 = vpack.c.b16 %v4890, %v4889
        %v5636 = vpack.c.b16 %v4892, %v4891
        %v5637 = vpack.c.b16 %v4894, %v4893
        %v5638 = vpack.c.b16 %v4896, %v4895
        %v5639 = vpack.c.b16 %v4898, %v4897
        %v5640 = vpack.c.b16 %v4900, %v4899
        %v5641 = vpack.c.b16 %v4902, %v4901
        %v5642 = vpack.c.b16 %v4904, %v4903
        %v5643 = vpack.c.b16 %v4906, %v4905
        %v5644 = vpack.c.b16 %v4908, %v4907
        %v5645 = vpack.c.b16 %v4910, %v4909
        %v5646 = vpack.c.b16 %v4912, %v4911
        %v5647 = vpack.c.b16 %v4914, %v4913
        %v5648 = vpack.c.b16 %v4916, %v4915
        %v5649 = vpack.c.b16 %v4918, %v4917
        %v5650 = vpack.c.b16 %v4920, %v4919
        %v5651 = vpack.c.b16 %v4922, %v4921
        %v5652 = vpack.c.b16 %v4924, %v4923
        %v5653 = vpack.c.b16 %v4926, %v4925
        %v5654 = vpack.c.b16 %v4928, %v4927
        %v5655 = vpack.c.b16 %v4930, %v4929
        %v5656 = vpack.c.b16 %v4932, %v4931
        %v5657 = vpack.c.b16 %v4934, %v4933
        %v5658 = vpack.c.b16 %v4936, %v4935
        %v5659 = vpack.c.b16 %v4938, %v4937
        %v5660 = vpack.c.b16 %v4940, %v4939
        %v5661 = vpack.c.b16 %v4942, %v4941
        %v5662 = vpack.c.b16 %v4944, %v4943
        %v5663 = vpack.c.b16 %v4946, %v4945
        %v5664 = vpack.c.b16 %v4948, %v4947
        %v5665 = vpack.c.b16 %v4950, %v4949
        %v5666 = vpack.c.b16 %v4952, %v4951
        %v5667 = vpack.c.b16 %v4954, %v4953
        %v5668 = vpack.c.b16 %v4956, %v4955
        %v5669 = vpack.c.b16 %v4958, %v4957
        %v5670 = vpack.c.b16 %v4960, %v4959
        %v5671 = vpack.c.b16 %v4962, %v4961
        %v5672 = vpack.c.b16 %v4964, %v4963
        %v5673 = vpack.c.b16 %v4966, %v4965
        %v5674 = vpack.c.b16 %v4968, %v4967
        %v5675 = vpack.c.b16 %v4970, %v4969
        %v5676 = vpack.c.b16 %v4972, %v4971
        %v5677 = vpack.c.b16 %v4974, %v4973
        %v5678 = vpack.c.b16 %v4976, %v4975
        %v5679 = vpack.c.b16 %v4978, %v4977
        %v5680 = vpack.c.b16 %v4980, %v4979
        %v5681 = vpack.c.b16 %v4982, %v4981
        %v5682 = vpack.c.b16 %v4984, %v4983
        %v5683 = vpack.c.b16 %v4986, %v4985
        %v5684 = vpack.c.b16 %v4988, %v4987
        %v5685 = vpack.c.b16 %v4990, %v4989
        %v5686 = vpack.c.b16 %v4992, %v4991
        %v5687 = vpack.c.b16 %v4994, %v4993
        %v5688 = vpack.c.b16 %v4996, %v4995
        %v5689 = vpack.c.b16 %v4998, %v4997
        %v5690 = vpack.c.b16 %v5000, %v4999
        %v5691 = vpack.c.b16 %v5002, %v5001
        %v5692 = vpack.c.b16 %v5004, %v5003
        %v5693 = vpack.c.b16 %v5006, %v5005
        %v5694 = vpack.c.b16 %v5008, %v5007
        %v5695 = vpack.c.b16 %v5010, %v5009
        %v5696 = vpack.c.b16 %v5012, %v5011
        %v5697 = vpack.c.b16 %v5014, %v5013
        %v5698 = vpack.c.b16 %v5016, %v5015
        %v5699 = vpack.c.b16 %v5018, %v5017
        %v5700 = vpack.c.b16 %v5020, %v5019
        %v5701 = vpack.c.b16 %v5022, %v5021
        %v5702 = vpack.c.b16 %v5024, %v5023
        %v5703 = vpack.c.b16 %v5026, %v5025
        %v5704 = vpack.c.b16 %v5028, %v5027
        %v5705 = vpack.c.b16 %v5030, %v5029
        %v5706 = vpack.c.b16 %v5032, %v5031
        %v5707 = vpack.c.b16 %v5034, %v5033
        %v5708 = vpack.c.b16 %v5036, %v5035
        %v5709 = vpack.c.b16 %v5038, %v5037
        %v5710 = vpack.c.b16 %v5040, %v5039
        %v5711 = vpack.c.b16 %v5042, %v5041
        %v5712 = vpack.c.b16 %v5044, %v5043
        %v5713 = vpack.c.b16 %v5046, %v5045
        %v5714 = vpack.c.b16 %v5048, %v5047
        %v5715 = vpack.c.b16 %v5050, %v5049
        %v5716 = vpack.c.b16 %v5052, %v5051
        %v5717 = vpack.c.b16 %v5054, %v5053
        %v5718 = vpack.c.b16 %v5056, %v5055
        %v5719 = vpack.c.b16 %v5058, %v5057
        %v5720 = vpack.c.b16 %v5060, %v5059
        %v5721 = vpack.c.b16 %v5062, %v5061
        %v5722 = vpack.c.b16 %v5064, %v5063
        %v5723 = vpack.c.b16 %v5066, %v5065
        %v5724 = vpack.c.b16 %v5068, %v5067
        %v5725 = vpack.c.b16 %v5070, %v5069
        %v5726 = vpack.c.b16 %v5072, %v5071
        %v5727 = vpack.c.b16 %v5074, %v5073
        %v5728 = vpack.c.b16 %v5076, %v5075
        %v5729 = vpack.c.b16 %v5078, %v5077
        %v5730 = vpack.c.b16 %v5080, %v5079
        %v5731 = vpack.c.b16 %v5082, %v5081
        %v5732 = vpack.c.b16 %v5084, %v5083
        %v5733 = vpack.c.b16 %v5086, %v5085
        %v5734 = vpack.c.b16 %v5088, %v5087
        %v5735 = vpack.c.b16 %v5090, %v5089
        %v5736 = vpack.c.b16 %v5092, %v5091
        %v5737 = vpack.c.b16 %v5094, %v5093
        %v5738 = vpack.c.b16 %v5096, %v5095
        %v5739 = vpack.c.b16 %v5098, %v5097
        %v5740 = vpack.c.b16 %v5100, %v5099
        %v5741 = vpack.c.b16 %v5102, %v5101
        %v5742 = vpack.c.b16 %v5104, %v5103
        %v5743 = vpack.c.b16 %v5106, %v5105
        %v5744 = vpack.c.b16 %v5108, %v5107
        %v5745 = vpack.c.b16 %v5110, %v5109
        %v5746 = vpack.c.b16 %v5112, %v5111
        %v5747 = vpack.c.b16 %v5114, %v5113
        %v5748 = vpack.c.b16 %v5116, %v5115
        %v5749 = vpack.c.b16 %v5118, %v5117
        %v5750 = vpack.c.b16 %v5120, %v5119
        %v5751 = vpack.c.b16 %v5122, %v5121
        %v5752 = vpack.c.b16 %v5124, %v5123
        %v5753 = vpack.c.b16 %v5126, %v5125
        %v5754 = vpack.c.b16 %v5128, %v5127
        %v5755 = vpack.c.b16 %v5130, %v5129
        %v5756 = vpack.c.b16 %v5132, %v5131
        %v5757 = vpack.c.b16 %v5134, %v5133
        %v5758 = vpack.c.b16 %v5136, %v5135
        %v5759 = vpack.c.b16 %v5138, %v5137
        %v5760 = vpack.c.b16 %v5140, %v5139
        %v5761 = vpack.c.b16 %v5142, %v5141
        %v5762 = vpack.c.b16 %v5144, %v5143
        %v5763 = vpack.c.b16 %v5146, %v5145
        %v5764 = vpack.c.b16 %v5148, %v5147
        %v5765 = vpack.c.b16 %v5150, %v5149
        %v5766 = vpack.c.b16 %v5152, %v5151
        %v5767 = vpack.c.b16 %v5154, %v5153
        %v5768 = vpack.c.b16 %v5156, %v5155
        %v5769 = vpack.c.b16 %v5158, %v5157
        %v5770 = vpack.c.b16 %v5160, %v5159
        %v5771 = vpack.c.b16 %v5162, %v5161
        %v5772 = vpack.c.b16 %v5164, %v5163
        %v5773 = vpack.c.b16 %v5166, %v5165
        %v5774 = vpack.c.b16 %v5168, %v5167
        %v5775 = vpack.c.b16 %v5170, %v5169
        %v5776 = vpack.c.b16 %v5172, %v5171
        %v5777 = vpack.c.b16 %v5174, %v5173
        %v5778 = vpack.c.b16 %v5176, %v5175
        %v5779 = vpack.c.b16 %v5178, %v5177
        %v5780 = vpack.c.b16 %v5180, %v5179
        %v5781 = vpack.c.b16 %v5182, %v5181
        %v5782 = vpack.c.b16 %v5184, %v5183
        %v5783 = vpack.c.b16 %v5186, %v5185
        %v5784 = vpack.c.b16 %v5188, %v5187
        %v5785 = vpack.c.b16 %v5190, %v5189
        %v5786 = vpack.c.b16 %v5192, %v5191
        %v5787 = vpack.c.b16 %v5194, %v5193
        %v5788 = vpack.c.b16 %v5196, %v5195
        %v5789 = vpack.c.b16 %v5198, %v5197
        %v5790 = vpack.c.b16 %v5200, %v5199
        %v5791 = vpack.c.b16 %v5202, %v5201
        %v5792 = vpack.c.b16 %v5204, %v5203
        %v5793 = vpack.c.b16 %v5206, %v5205
        %v5794 = vpack.c.b16 %v5208, %v5207
        %v5795 = vpack.c.b16 %v5210, %v5209
        %v5796 = vpack.c.b16 %v5212, %v5211
        %v5797 = vpack.c.b16 %v5214, %v5213
        %v5798 = vpack.c.b16 %v5216, %v5215
        %v5799 = vpack.c.b16 %v5218, %v5217
        %v5800 = vpack.c.b16 %v5220, %v5219
        %v5801 = vpack.c.b16 %v5222, %v5221
        %v5802 = vpack.c.b16 %v5224, %v5223
        %v5803 = vpack.c.b16 %v5226, %v5225
        %v5804 = vpack.c.b16 %v5228, %v5227
        %v5805 = vpack.c.b16 %v5230, %v5229
        %v5806 = vpack.c.b16 %v5232, %v5231
        %v5807 = vpack.c.b16 %v5234, %v5233
        %v5808 = vpack.c.b16 %v5236, %v5235
        %v5809 = vpack.c.b16 %v5238, %v5237
        %v5810 = vpack.c.b16 %v5240, %v5239
        %v5811 = vpack.c.b16 %v5242, %v5241
        %v5812 = vpack.c.b16 %v5244, %v5243
        %v5813 = vpack.c.b16 %v5246, %v5245
        %v5814 = vpack.c.b16 %v5248, %v5247
        %v5815 = vpack.c.b16 %v5250, %v5249
        %v5816 = vpack.c.b16 %v5252, %v5251
        %v5817 = vpack.c.b16 %v5254, %v5253
        %v5818 = vpack.c.b16 %v5256, %v5255
        %v5819 = vpack.c.b16 %v5258, %v5257
        %v5820 = vpack.c.b16 %v5260, %v5259
        %v5821 = vpack.c.b16 %v5262, %v5261
        %v5822 = vpack.c.b16 %v5264, %v5263
        %v5823 = vpack.c.b16 %v5266, %v5265
        %v5824 = vpack.c.b16 %v5268, %v5267
        %v5825 = vpack.c.b16 %v5270, %v5269
        %v5826 = vpack.c.b16 %v5272, %v5271
        %v5827 = vpack.c.b16 %v5274, %v5273
        %v5828 = vpack.c.b16 %v5276, %v5275
        %v5829 = vpack.c.b16 %v5278, %v5277
        %v5830 = vpack.c.b16 %v5280, %v5279
        %v5831 = vpack.c.b16 %v5282, %v5281
        %v5832 = vpack.c.b16 %v5284, %v5283
        %v5833 = vpack.c.b16 %v5286, %v5285
        %v5834 = vpack.c.b16 %v5288, %v5287
        %v5835 = vpack.c.b16 %v5290, %v5289
        %v5836 = vpack.c.b16 %v5292, %v5291
        %v5837 = vpack.c.b16 %v5294, %v5293
        %v5838 = vpack.c.b16 %v5296, %v5295
        %v5839 = vpack.c.b16 %v5298, %v5297
        %v5840 = vpack.c.b16 %v5300, %v5299
        %v5841 = vpack.c.b16 %v5302, %v5301
        %v5842 = vpack.c.b16 %v5304, %v5303
        %v5843 = vpack.c.b16 %v5306, %v5305
        %v5844 = vpack.c.b16 %v5308, %v5307
        %v5845 = vpack.c.b16 %v5310, %v5309
        %v5846 = vpack.c.b16 %v5312, %v5311
        %v5847 = vpack.c.b16 %v5314, %v5313
        %v5848 = vpack.c.b16 %v5316, %v5315
        %v5849 = vpack.c.b16 %v5318, %v5317
        %v5850 = vpack.c.b16 %v5320, %v5319
        %v5851 = vpack.c.b16 %v5322, %v5321
        %v5852 = vpack.c.b16 %v5324, %v5323
        %v5853 = vpack.c.b16 %v5326, %v5325
        %v5854 = vpack.c.b16 %v5328, %v5327
        %v5855 = vpack.c.b16 %v5330, %v5329
        %v5856 = vpack.c.b16 %v5332, %v5331
        %v5857 = vpack.c.b16 %v5334, %v5333
        %v5858 = vpack.c.b16 %v5336, %v5335
        %v5859 = vpack.c.b16 %v5338, %v5337
        %v5860 = vpack.c.b16 %v5340, %v5339
        %v5861 = vpack.c.b16 %v5342, %v5341
        %v5862 = vpack.c.b16 %v5344, %v5343
        %v5863 = vpack.c.b16 %v5346, %v5345
        %v5864 = vpack.c.b16 %v5348, %v5347
        %v5865 = vpack.c.b16 %v5350, %v5349
        %v5866 = vpack.c.b16 %v5352, %v5351
        %v5867 = vpack.c.b16 %v5354, %v5353
        %v5868 = vpack.c.b16 %v5356, %v5355
        %v5869 = vpack.c.b16 %v5358, %v5357
        %v5870 = vpack.c.b16 %v5360, %v5359
        %v5871 = vpack.c.b16 %v5362, %v5361
        %v5872 = vpack.c.b16 %v5364, %v5363
        %v5873 = vpack.c.b16 %v5366, %v5365
        %v5874 = vpack.c.b16 %v5368, %v5367
        %v5875 = vpack.c.b16 %v5370, %v5369
        %v5876 = vpack.c.b16 %v5372, %v5371
        %v5877 = vpack.c.b16 %v5374, %v5373
        %v5878 = vpack.c.b16 %v5376, %v5375
        %v5879 = vpack.c.b16 %v5378, %v5377
        %v5880 = vpack.c.b16 %v5380, %v5379
        %v5881 = vpack.c.b16 %v5382, %v5381
        %v5882 = vpack.c.b16 %v5384, %v5383
        %v5883 = vpack.c.b16 %v5386, %v5385
        %v5884 = vpack.c.b16 %v5388, %v5387
        %v5885 = vpack.c.b16 %v5390, %v5389
        %v5886 = vpack.c.b16 %v5392, %v5391
        %v5887 = vpack.c.b16 %v5394, %v5393
        %v5888 = vpack.c.b16 %v5396, %v5395
        %v5889 = vpack.c.b16 %v5398, %v5397
        %v5890 = vpack.c.b16 %v5400, %v5399
        %v5891 = vpack.c.b16 %v5402, %v5401
        %v5892 = vpack.c.b16 %v5404, %v5403
        %v5893 = vpack.c.b16 %v5406, %v5405
        %v5894 = vpack.c.b16 %v5408, %v5407
        %v5895 = vpack.c.b16 %v5410, %v5409
        %v5896 = vpack.c.b16 %v5412, %v5411
        %v5897 = vpack.c.b16 %v5414, %v5413
        %v5898 = vpack.c.b16 %v5416, %v5415
        %v5899 = vpack.c.b16 %v5418, %v5417
        %v5900 = vpack.c.b16 %v5420, %v5419
        %v5901 = vpack.c.b16 %v5422, %v5421
        %v5902 = vpack.c.b16 %v5424, %v5423
        %v5903 = vpack.c.b16 %v5426, %v5425
        %v5904 = vpack.c.b16 %v5428, %v5427
        %v5905 = vpack.c.b16 %v5430, %v5429
        %v5906 = vpack.c.b16 %v5432, %v5431
        %v5907 = vpack.c.b16 %v5434, %v5433
        %v5908 = vpack.c.b16 %v5436, %v5435
        %v5909 = vpack.c.b16 %v5438, %v5437
        %v5910 = vpack.c.b16 %v5440, %v5439
        %v5911 = vpack.c.b16 %v5442, %v5441
        %v5912 = vpack.c.b16 %v5444, %v5443
        %v5913 = vpack.c.b16 %v5446, %v5445
        %v5914 = vpack.c.b16 %v5448, %v5447
        %v5915 = vpack.c.b16 %v5450, %v5449
        %v5916 = vpack.c.b16 %v5452, %v5451
        %v5917 = vpack.c.b16 %v5454, %v5453
        %v5918 = vpack.c.b16 %v5456, %v5455
        %v5919 = vpack.c.b16 %v5458, %v5457
        %v5920 = vpack.c.b16 %v5460, %v5459
        %v5921 = vpack.c.b16 %v5462, %v5461
        %v5922 = vpack.c.b16 %v5464, %v5463
        %v5923 = vpack.c.b16 %v5466, %v5465
        %v5924 = vpack.c.b16 %v5468, %v5467
        %v5925 = vpack.c.b16 %v5470, %v5469
        %v5926 = vpack.c.b16 %v5472, %v5471
        %v5927 = vpack.c.b16 %v5474, %v5473
        %v5928 = vpack.c.b16 %v5476, %v5475
        %v5929 = vpack.c.b16 %v5478, %v5477
        %v5930 = vpack.c.b16 %v5480, %v5479
        %v5931 = vpack.c.b16 %v5482, %v5481
        %v5932 = vpack.c.b16 %v5484, %v5483
        %6381 = vmatprep.subr.bf16.mxu0 0
        %6382 = vmatpush1.bf16.msra.mxu0 %v5492
        %6383 = vmatprep.subr.bf16.mxu0 0
        %6384 = vmatpush1.bf16.msra.mxu0 %v5491
        %6385 = vmatprep.subr.bf16.mxu0 0
        %6386 = vmatpush1.bf16.msra.mxu0 %v5490
        %6387 = vmatprep.subr.bf16.mxu0 0
        %6388 = vmatpush1.bf16.msra.mxu0 %v5489
        %6389 = vmatprep.subr.bf16.mxu0 0
        %6390 = vmatpush1.bf16.msra.mxu0 %v5488
        %6391 = vmatprep.subr.bf16.mxu0 0
        %6392 = vmatpush1.bf16.msra.mxu0 %v5487
        %6393 = vmatprep.subr.bf16.mxu0 0
        %6394 = vmatpush1.bf16.msra.mxu0 %v5486
        %6395 = vmatprep.subr.bf16.mxu0 0
        %6396 = vmatpush1.bf16.msra.mxu0 %v5485
        %6397 = vmatprep.subr.bf16.mxu0 0
        %6398 = vmatpush2.bf16.msra.mxu0 %v5500
        %6399 = vmatprep.subr.bf16.mxu0 0
        %6400 = vmatpush2.bf16.msra.mxu0 %v5499
        %6401 = vmatprep.subr.bf16.mxu0 0
        %6402 = vmatpush2.bf16.msra.mxu0 %v5498
        %6403 = vmatprep.subr.bf16.mxu0 0
        %6404 = vmatpush2.bf16.msra.mxu0 %v5497
        %6405 = vmatprep.subr.bf16.mxu0 0
        %6406 = vmatpush2.bf16.msra.mxu0 %v5496
        %6407 = vmatprep.subr.bf16.mxu0 0
        %6408 = vmatpush2.bf16.msra.mxu0 %v5495
        %6409 = vmatprep.subr.bf16.mxu0 0
        %6410 = vmatpush2.bf16.msra.mxu0 %v5494
        %6411 = vmatprep.subr.bf16.mxu0 0
        %6412 = vmatpush2.bf16.msra.mxu0 %v5493
        %6413 = vmatprep.mubr.bf16.mxu0 %v2741
        %6414 = vmatmul.mubr.bf16.gmra.mxu0 %v2740
        %v6415 = vpop.f32.mrf.mxu0
        %v6416 = vadd.f32 %v3692, %v6415
        %v6417 = vpop.f32.mrf.mxu0
        %v6418 = vpop.f32.mrf.mxu0
        %v6419 = vpop.f32.mrf.mxu0
        %6420 = vdwg.mxu0
        %6421 = vmatprep.subr.bf16.mxu0 0
        %6422 = vmatpush1.bf16.msra.mxu0 %v5508
        %6423 = vmatprep.subr.bf16.mxu0 0
        %6424 = vmatpush1.bf16.msra.mxu0 %v5507
        %6425 = vmatprep.subr.bf16.mxu0 0
        %6426 = vmatpush1.bf16.msra.mxu0 %v5506
        %6427 = vmatprep.subr.bf16.mxu0 0
        %6428 = vmatpush1.bf16.msra.mxu0 %v5505
        %6429 = vmatprep.subr.bf16.mxu0 0
        %6430 = vmatpush1.bf16.msra.mxu0 %v5504
        %6431 = vmatprep.subr.bf16.mxu0 0
        %6432 = vmatpush1.bf16.msra.mxu0 %v5503
        %6433 = vmatprep.subr.bf16.mxu0 0
        %6434 = vmatpush1.bf16.msra.mxu0 %v5502
        %6435 = vmatprep.subr.bf16.mxu0 0
        %6436 = vmatpush1.bf16.msra.mxu0 %v5501
        %6437 = vmatprep.subr.bf16.mxu0 0
        %6438 = vmatpush2.bf16.msra.mxu0 %v5516
        %6439 = vmatprep.subr.bf16.mxu0 0
        %6440 = vmatpush2.bf16.msra.mxu0 %v5515
        %6441 = vmatprep.subr.bf16.mxu0 0
        %6442 = vmatpush2.bf16.msra.mxu0 %v5514
        %6443 = vmatprep.subr.bf16.mxu0 0
        %6444 = vmatpush2.bf16.msra.mxu0 %v5513
        %6445 = vmatprep.subr.bf16.mxu0 0
        %6446 = vmatpush2.bf16.msra.mxu0 %v5512
        %6447 = vmatprep.subr.bf16.mxu0 0
        %6448 = vmatpush2.bf16.msra.mxu0 %v5511
        %6449 = vmatprep.subr.bf16.mxu0 0
        %6450 = vmatpush2.bf16.msra.mxu0 %v5510
        %6451 = vmatprep.subr.bf16.mxu0 0
        %6452 = vmatpush2.bf16.msra.mxu0 %v5509
        %6453 = vmatprep.mubr.bf16.mxu0 %v2743
        %6454 = vmatmul.mubr.bf16.gmra.mxu0 %v2742
        %v6455 = vpop.f32.mrf.mxu0
        %v6456 = vadd.f32 %v6416, %v6455
        %v6457 = vpop.f32.mrf.mxu0
        %v6458 = vpop.f32.mrf.mxu0
        %v6459 = vpop.f32.mrf.mxu0
        %6460 = vdwg.mxu0
        %6461 = vmatprep.subr.bf16.mxu0 0
        %6462 = vmatpush1.bf16.msra.mxu0 %v5524
        %6463 = vmatprep.subr.bf16.mxu0 0
        %6464 = vmatpush1.bf16.msra.mxu0 %v5523
        %6465 = vmatprep.subr.bf16.mxu0 0
        %6466 = vmatpush1.bf16.msra.mxu0 %v5522
        %6467 = vmatprep.subr.bf16.mxu0 0
        %6468 = vmatpush1.bf16.msra.mxu0 %v5521
        %6469 = vmatprep.subr.bf16.mxu0 0
        %6470 = vmatpush1.bf16.msra.mxu0 %v5520
        %6471 = vmatprep.subr.bf16.mxu0 0
        %6472 = vmatpush1.bf16.msra.mxu0 %v5519
        %6473 = vmatprep.subr.bf16.mxu0 0
        %6474 = vmatpush1.bf16.msra.mxu0 %v5518
        %6475 = vmatprep.subr.bf16.mxu0 0
        %6476 = vmatpush1.bf16.msra.mxu0 %v5517
        %6477 = vmatprep.subr.bf16.mxu0 0
        %6478 = vmatpush2.bf16.msra.mxu0 %v5532
        %6479 = vmatprep.subr.bf16.mxu0 0
        %6480 = vmatpush2.bf16.msra.mxu0 %v5531
        %6481 = vmatprep.subr.bf16.mxu0 0
        %6482 = vmatpush2.bf16.msra.mxu0 %v5530
        %6483 = vmatprep.subr.bf16.mxu0 0
        %6484 = vmatpush2.bf16.msra.mxu0 %v5529
        %6485 = vmatprep.subr.bf16.mxu0 0
        %6486 = vmatpush2.bf16.msra.mxu0 %v5528
        %6487 = vmatprep.subr.bf16.mxu0 0
        %6488 = vmatpush2.bf16.msra.mxu0 %v5527
        %6489 = vmatprep.subr.bf16.mxu0 0
        %6490 = vmatpush2.bf16.msra.mxu0 %v5526
        %6491 = vmatprep.subr.bf16.mxu0 0
        %6492 = vmatpush2.bf16.msra.mxu0 %v5525
        %6493 = vmatprep.mubr.bf16.mxu0 %v2745
        %6494 = vmatmul.mubr.bf16.gmra.mxu0 %v2744
        %v6495 = vpop.f32.mrf.mxu0
        %v6496 = vadd.f32 %v6456, %v6495
        %v6497 = vpop.f32.mrf.mxu0
        %v6498 = vpop.f32.mrf.mxu0
        %v6499 = vpop.f32.mrf.mxu0
        %6500 = vdwg.mxu0
        %6501 = vmatprep.subr.bf16.mxu0 0
        %6502 = vmatpush1.bf16.msra.mxu0 %v5540
        %6503 = vmatprep.subr.bf16.mxu0 0
        %6504 = vmatpush1.bf16.msra.mxu0 %v5539
        %6505 = vmatprep.subr.bf16.mxu0 0
        %6506 = vmatpush1.bf16.msra.mxu0 %v5538
        %6507 = vmatprep.subr.bf16.mxu0 0
        %6508 = vmatpush1.bf16.msra.mxu0 %v5537
        %6509 = vmatprep.subr.bf16.mxu0 0
        %6510 = vmatpush1.bf16.msra.mxu0 %v5536
        %6511 = vmatprep.subr.bf16.mxu0 0
        %6512 = vmatpush1.bf16.msra.mxu0 %v5535
        %6513 = vmatprep.subr.bf16.mxu0 0
        %6514 = vmatpush1.bf16.msra.mxu0 %v5534
        %6515 = vmatprep.subr.bf16.mxu0 0
        %6516 = vmatpush1.bf16.msra.mxu0 %v5533
        %6517 = vmatprep.subr.bf16.mxu0 0
        %6518 = vmatpush2.bf16.msra.mxu0 %v5548
        %6519 = vmatprep.subr.bf16.mxu0 0
        %6520 = vmatpush2.bf16.msra.mxu0 %v5547
        %6521 = vmatprep.subr.bf16.mxu0 0
        %6522 = vmatpush2.bf16.msra.mxu0 %v5546
        %6523 = vmatprep.subr.bf16.mxu0 0
        %6524 = vmatpush2.bf16.msra.mxu0 %v5545
        %6525 = vmatprep.subr.bf16.mxu0 0
        %6526 = vmatpush2.bf16.msra.mxu0 %v5544
        %6527 = vmatprep.subr.bf16.mxu0 0
        %6528 = vmatpush2.bf16.msra.mxu0 %v5543
        %6529 = vmatprep.subr.bf16.mxu0 0
        %6530 = vmatpush2.bf16.msra.mxu0 %v5542
        %6531 = vmatprep.subr.bf16.mxu0 0
        %6532 = vmatpush2.bf16.msra.mxu0 %v5541
        %6533 = vmatprep.mubr.bf16.mxu0 %v2747
        %6534 = vmatmul.mubr.bf16.gmra.mxu0 %v2746
        %v6535 = vpop.f32.mrf.mxu0
        %v6536 = vadd.f32 %v6496, %v6535
        %v6537 = vpop.f32.mrf.mxu0
        %v6538 = vpop.f32.mrf.mxu0
        %v6539 = vpop.f32.mrf.mxu0
        %6540 = vdwg.mxu0
        %6541 = vmatprep.subr.bf16.mxu0 0
        %6542 = vmatpush1.bf16.msra.mxu0 %v5556
        %6543 = vmatprep.subr.bf16.mxu0 0
        %6544 = vmatpush1.bf16.msra.mxu0 %v5555
        %6545 = vmatprep.subr.bf16.mxu0 0
        %6546 = vmatpush1.bf16.msra.mxu0 %v5554
        %6547 = vmatprep.subr.bf16.mxu0 0
        %6548 = vmatpush1.bf16.msra.mxu0 %v5553
        %6549 = vmatprep.subr.bf16.mxu0 0
        %6550 = vmatpush1.bf16.msra.mxu0 %v5552
        %6551 = vmatprep.subr.bf16.mxu0 0
        %6552 = vmatpush1.bf16.msra.mxu0 %v5551
        %6553 = vmatprep.subr.bf16.mxu0 0
        %6554 = vmatpush1.bf16.msra.mxu0 %v5550
        %6555 = vmatprep.subr.bf16.mxu0 0
        %6556 = vmatpush1.bf16.msra.mxu0 %v5549
        %6557 = vmatprep.subr.bf16.mxu0 0
        %6558 = vmatpush2.bf16.msra.mxu0 %v5564
        %6559 = vmatprep.subr.bf16.mxu0 0
        %6560 = vmatpush2.bf16.msra.mxu0 %v5563
        %6561 = vmatprep.subr.bf16.mxu0 0
        %6562 = vmatpush2.bf16.msra.mxu0 %v5562
        %6563 = vmatprep.subr.bf16.mxu0 0
        %6564 = vmatpush2.bf16.msra.mxu0 %v5561
        %6565 = vmatprep.subr.bf16.mxu0 0
        %6566 = vmatpush2.bf16.msra.mxu0 %v5560
        %6567 = vmatprep.subr.bf16.mxu0 0
        %6568 = vmatpush2.bf16.msra.mxu0 %v5559
        %6569 = vmatprep.subr.bf16.mxu0 0
        %6570 = vmatpush2.bf16.msra.mxu0 %v5558
        %6571 = vmatprep.subr.bf16.mxu0 0
        %6572 = vmatpush2.bf16.msra.mxu0 %v5557
        %6573 = vmatprep.mubr.bf16.mxu0 %v2749
        %6574 = vmatmul.mubr.bf16.gmra.mxu0 %v2748
        %v6575 = vpop.f32.mrf.mxu0
        %v6576 = vadd.f32 %v6536, %v6575
        %v6577 = vpop.f32.mrf.mxu0
        %v6578 = vpop.f32.mrf.mxu0
        %v6579 = vpop.f32.mrf.mxu0
        %6580 = vdwg.mxu0
        %6581 = vmatprep.subr.bf16.mxu0 0
        %6582 = vmatpush1.bf16.msra.mxu0 %v5572
        %6583 = vmatprep.subr.bf16.mxu0 0
        %6584 = vmatpush1.bf16.msra.mxu0 %v5571
        %6585 = vmatprep.subr.bf16.mxu0 0
        %6586 = vmatpush1.bf16.msra.mxu0 %v5570
        %6587 = vmatprep.subr.bf16.mxu0 0
        %6588 = vmatpush1.bf16.msra.mxu0 %v5569
        %6589 = vmatprep.subr.bf16.mxu0 0
        %6590 = vmatpush1.bf16.msra.mxu0 %v5568
        %6591 = vmatprep.subr.bf16.mxu0 0
        %6592 = vmatpush1.bf16.msra.mxu0 %v5567
        %6593 = vmatprep.subr.bf16.mxu0 0
        %6594 = vmatpush1.bf16.msra.mxu0 %v5566
        %6595 = vmatprep.subr.bf16.mxu0 0
        %6596 = vmatpush1.bf16.msra.mxu0 %v5565
        %6597 = vmatprep.subr.bf16.mxu0 0
        %6598 = vmatpush2.bf16.msra.mxu0 %v5580
        %6599 = vmatprep.subr.bf16.mxu0 0
        %6600 = vmatpush2.bf16.msra.mxu0 %v5579
        %6601 = vmatprep.subr.bf16.mxu0 0
        %6602 = vmatpush2.bf16.msra.mxu0 %v5578
        %6603 = vmatprep.subr.bf16.mxu0 0
        %6604 = vmatpush2.bf16.msra.mxu0 %v5577
        %6605 = vmatprep.subr.bf16.mxu0 0
        %6606 = vmatpush2.bf16.msra.mxu0 %v5576
        %6607 = vmatprep.subr.bf16.mxu0 0
        %6608 = vmatpush2.bf16.msra.mxu0 %v5575
        %6609 = vmatprep.subr.bf16.mxu0 0
        %6610 = vmatpush2.bf16.msra.mxu0 %v5574
        %6611 = vmatprep.subr.bf16.mxu0 0
        %6612 = vmatpush2.bf16.msra.mxu0 %v5573
        %6613 = vmatprep.mubr.bf16.mxu0 %v2751
        %6614 = vmatmul.mubr.bf16.gmra.mxu0 %v2750
        %v6615 = vpop.f32.mrf.mxu0
        %v6616 = vadd.f32 %v6576, %v6615
        %v6617 = vpop.f32.mrf.mxu0
        %v6618 = vpop.f32.mrf.mxu0
        %v6619 = vpop.f32.mrf.mxu0
        %6620 = vdwg.mxu0
        %6621 = vmatprep.subr.bf16.mxu0 0
        %6622 = vmatpush1.bf16.msra.mxu0 %v5588
        %6623 = vmatprep.subr.bf16.mxu0 0
        %6624 = vmatpush1.bf16.msra.mxu0 %v5587
        %6625 = vmatprep.subr.bf16.mxu0 0
        %6626 = vmatpush1.bf16.msra.mxu0 %v5586
        %6627 = vmatprep.subr.bf16.mxu0 0
        %6628 = vmatpush1.bf16.msra.mxu0 %v5585
        %6629 = vmatprep.subr.bf16.mxu0 0
        %6630 = vmatpush1.bf16.msra.mxu0 %v5584
        %6631 = vmatprep.subr.bf16.mxu0 0
        %6632 = vmatpush1.bf16.msra.mxu0 %v5583
        %6633 = vmatprep.subr.bf16.mxu0 0
        %6634 = vmatpush1.bf16.msra.mxu0 %v5582
        %6635 = vmatprep.subr.bf16.mxu0 0
        %6636 = vmatpush1.bf16.msra.mxu0 %v5581
        %6637 = vmatprep.subr.bf16.mxu0 0
        %6638 = vmatpush2.bf16.msra.mxu0 %v5596
        %6639 = vmatprep.subr.bf16.mxu0 0
        %6640 = vmatpush2.bf16.msra.mxu0 %v5595
        %6641 = vmatprep.subr.bf16.mxu0 0
        %6642 = vmatpush2.bf16.msra.mxu0 %v5594
        %6643 = vmatprep.subr.bf16.mxu0 0
        %6644 = vmatpush2.bf16.msra.mxu0 %v5593
        %6645 = vmatprep.subr.bf16.mxu0 0
        %6646 = vmatpush2.bf16.msra.mxu0 %v5592
        %6647 = vmatprep.subr.bf16.mxu0 0
        %6648 = vmatpush2.bf16.msra.mxu0 %v5591
        %6649 = vmatprep.subr.bf16.mxu0 0
        %6650 = vmatpush2.bf16.msra.mxu0 %v5590
        %6651 = vmatprep.subr.bf16.mxu0 0
        %6652 = vmatpush2.bf16.msra.mxu0 %v5589
        %6653 = vmatprep.mubr.bf16.mxu0 %v2753
        %6654 = vmatmul.mubr.bf16.gmra.mxu0 %v2752
        %v6655 = vpop.f32.mrf.mxu0
        %v6656 = vadd.f32 %v6616, %v6655
        %v6657 = vpop.f32.mrf.mxu0
        %v6658 = vpop.f32.mrf.mxu0
        %v6659 = vpop.f32.mrf.mxu0
        %6660 = vdwg.mxu0
        %6661 = vmatprep.subr.bf16.mxu0 0
        %6662 = vmatpush1.bf16.msra.mxu0 %v5604
        %6663 = vmatprep.subr.bf16.mxu0 0
        %6664 = vmatpush1.bf16.msra.mxu0 %v5603
        %6665 = vmatprep.subr.bf16.mxu0 0
        %6666 = vmatpush1.bf16.msra.mxu0 %v5602
        %6667 = vmatprep.subr.bf16.mxu0 0
        %6668 = vmatpush1.bf16.msra.mxu0 %v5601
        %6669 = vmatprep.subr.bf16.mxu0 0
        %6670 = vmatpush1.bf16.msra.mxu0 %v5600
        %6671 = vmatprep.subr.bf16.mxu0 0
        %6672 = vmatpush1.bf16.msra.mxu0 %v5599
        %6673 = vmatprep.subr.bf16.mxu0 0
        %6674 = vmatpush1.bf16.msra.mxu0 %v5598
        %6675 = vmatprep.subr.bf16.mxu0 0
        %6676 = vmatpush1.bf16.msra.mxu0 %v5597
        %6677 = vmatprep.subr.bf16.mxu0 0
        %6678 = vmatpush2.bf16.msra.mxu0 %v5612
        %6679 = vmatprep.subr.bf16.mxu0 0
        %6680 = vmatpush2.bf16.msra.mxu0 %v5611
        %6681 = vmatprep.subr.bf16.mxu0 0
        %6682 = vmatpush2.bf16.msra.mxu0 %v5610
        %6683 = vmatprep.subr.bf16.mxu0 0
        %6684 = vmatpush2.bf16.msra.mxu0 %v5609
        %6685 = vmatprep.subr.bf16.mxu0 0
        %6686 = vmatpush2.bf16.msra.mxu0 %v5608
        %6687 = vmatprep.subr.bf16.mxu0 0
        %6688 = vmatpush2.bf16.msra.mxu0 %v5607
        %6689 = vmatprep.subr.bf16.mxu0 0
        %6690 = vmatpush2.bf16.msra.mxu0 %v5606
        %6691 = vmatprep.subr.bf16.mxu0 0
        %6692 = vmatpush2.bf16.msra.mxu0 %v5605
        %6693 = vmatprep.mubr.bf16.mxu0 %v2755
        %6694 = vmatmul.mubr.bf16.gmra.mxu0 %v2754
        %v6695 = vpop.f32.mrf.mxu0
        %v6696 = vadd.f32 %v6656, %v6695
        %v6697 = vpop.f32.mrf.mxu0
        %v6698 = vpop.f32.mrf.mxu0
        %v6699 = vpop.f32.mrf.mxu0
        %6700 = vdwg.mxu0
        %6701 = vmatprep.subr.bf16.mxu0 0
        %6702 = vmatpush1.bf16.msra.mxu0 %v5620
        %6703 = vmatprep.subr.bf16.mxu0 0
        %6704 = vmatpush1.bf16.msra.mxu0 %v5619
        %6705 = vmatprep.subr.bf16.mxu0 0
        %6706 = vmatpush1.bf16.msra.mxu0 %v5618
        %6707 = vmatprep.subr.bf16.mxu0 0
        %6708 = vmatpush1.bf16.msra.mxu0 %v5617
        %6709 = vmatprep.subr.bf16.mxu0 0
        %6710 = vmatpush1.bf16.msra.mxu0 %v5616
        %6711 = vmatprep.subr.bf16.mxu0 0
        %6712 = vmatpush1.bf16.msra.mxu0 %v5615
        %6713 = vmatprep.subr.bf16.mxu0 0
        %6714 = vmatpush1.bf16.msra.mxu0 %v5614
        %6715 = vmatprep.subr.bf16.mxu0 0
        %6716 = vmatpush1.bf16.msra.mxu0 %v5613
        %6717 = vmatprep.subr.bf16.mxu0 0
        %6718 = vmatpush2.bf16.msra.mxu0 %v5628
        %6719 = vmatprep.subr.bf16.mxu0 0
        %6720 = vmatpush2.bf16.msra.mxu0 %v5627
        %6721 = vmatprep.subr.bf16.mxu0 0
        %6722 = vmatpush2.bf16.msra.mxu0 %v5626
        %6723 = vmatprep.subr.bf16.mxu0 0
        %6724 = vmatpush2.bf16.msra.mxu0 %v5625
        %6725 = vmatprep.subr.bf16.mxu0 0
        %6726 = vmatpush2.bf16.msra.mxu0 %v5624
        %6727 = vmatprep.subr.bf16.mxu0 0
        %6728 = vmatpush2.bf16.msra.mxu0 %v5623
        %6729 = vmatprep.subr.bf16.mxu0 0
        %6730 = vmatpush2.bf16.msra.mxu0 %v5622
        %6731 = vmatprep.subr.bf16.mxu0 0
        %6732 = vmatpush2.bf16.msra.mxu0 %v5621
        %6733 = vmatprep.mubr.bf16.mxu0 %v2757
        %6734 = vmatmul.mubr.bf16.gmra.mxu0 %v2756
        %v6735 = vpop.f32.mrf.mxu0
        %v6736 = vadd.f32 %v6696, %v6735
        %v6737 = vpop.f32.mrf.mxu0
        %v6738 = vpop.f32.mrf.mxu0
        %v6739 = vpop.f32.mrf.mxu0
        %6740 = vdwg.mxu0
        %6741 = vmatprep.subr.bf16.mxu0 0
        %6742 = vmatpush1.bf16.msra.mxu0 %v5636
        %6743 = vmatprep.subr.bf16.mxu0 0
        %6744 = vmatpush1.bf16.msra.mxu0 %v5635
        %6745 = vmatprep.subr.bf16.mxu0 0
        %6746 = vmatpush1.bf16.msra.mxu0 %v5634
        %6747 = vmatprep.subr.bf16.mxu0 0
        %6748 = vmatpush1.bf16.msra.mxu0 %v5633
        %6749 = vmatprep.subr.bf16.mxu0 0
        %6750 = vmatpush1.bf16.msra.mxu0 %v5632
        %6751 = vmatprep.subr.bf16.mxu0 0
        %6752 = vmatpush1.bf16.msra.mxu0 %v5631
        %6753 = vmatprep.subr.bf16.mxu0 0
        %6754 = vmatpush1.bf16.msra.mxu0 %v5630
        %6755 = vmatprep.subr.bf16.mxu0 0
        %6756 = vmatpush1.bf16.msra.mxu0 %v5629
        %6757 = vmatprep.subr.bf16.mxu0 0
        %6758 = vmatpush2.bf16.msra.mxu0 %v5644
        %6759 = vmatprep.subr.bf16.mxu0 0
        %6760 = vmatpush2.bf16.msra.mxu0 %v5643
        %6761 = vmatprep.subr.bf16.mxu0 0
        %6762 = vmatpush2.bf16.msra.mxu0 %v5642
        %6763 = vmatprep.subr.bf16.mxu0 0
        %6764 = vmatpush2.bf16.msra.mxu0 %v5641
        %6765 = vmatprep.subr.bf16.mxu0 0
        %6766 = vmatpush2.bf16.msra.mxu0 %v5640
        %6767 = vmatprep.subr.bf16.mxu0 0
        %6768 = vmatpush2.bf16.msra.mxu0 %v5639
        %6769 = vmatprep.subr.bf16.mxu0 0
        %6770 = vmatpush2.bf16.msra.mxu0 %v5638
        %6771 = vmatprep.subr.bf16.mxu0 0
        %6772 = vmatpush2.bf16.msra.mxu0 %v5637
        %6773 = vmatprep.mubr.bf16.mxu0 %v2759
        %6774 = vmatmul.mubr.bf16.gmra.mxu0 %v2758
        %v6775 = vpop.f32.mrf.mxu0
        %v6776 = vadd.f32 %v6736, %v6775
        %v6777 = vpop.f32.mrf.mxu0
        %v6778 = vpop.f32.mrf.mxu0
        %v6779 = vpop.f32.mrf.mxu0
        %6780 = vdwg.mxu0
        %6781 = vmatprep.subr.bf16.mxu0 0
        %6782 = vmatpush1.bf16.msra.mxu0 %v5652
        %6783 = vmatprep.subr.bf16.mxu0 0
        %6784 = vmatpush1.bf16.msra.mxu0 %v5651
        %6785 = vmatprep.subr.bf16.mxu0 0
        %6786 = vmatpush1.bf16.msra.mxu0 %v5650
        %6787 = vmatprep.subr.bf16.mxu0 0
        %6788 = vmatpush1.bf16.msra.mxu0 %v5649
        %6789 = vmatprep.subr.bf16.mxu0 0
        %6790 = vmatpush1.bf16.msra.mxu0 %v5648
        %6791 = vmatprep.subr.bf16.mxu0 0
        %6792 = vmatpush1.bf16.msra.mxu0 %v5647
        %6793 = vmatprep.subr.bf16.mxu0 0
        %6794 = vmatpush1.bf16.msra.mxu0 %v5646
        %6795 = vmatprep.subr.bf16.mxu0 0
        %6796 = vmatpush1.bf16.msra.mxu0 %v5645
        %6797 = vmatprep.subr.bf16.mxu0 0
        %6798 = vmatpush2.bf16.msra.mxu0 %v5660
        %6799 = vmatprep.subr.bf16.mxu0 0
        %6800 = vmatpush2.bf16.msra.mxu0 %v5659
        %6801 = vmatprep.subr.bf16.mxu0 0
        %6802 = vmatpush2.bf16.msra.mxu0 %v5658
        %6803 = vmatprep.subr.bf16.mxu0 0
        %6804 = vmatpush2.bf16.msra.mxu0 %v5657
        %6805 = vmatprep.subr.bf16.mxu0 0
        %6806 = vmatpush2.bf16.msra.mxu0 %v5656
        %6807 = vmatprep.subr.bf16.mxu0 0
        %6808 = vmatpush2.bf16.msra.mxu0 %v5655
        %6809 = vmatprep.subr.bf16.mxu0 0
        %6810 = vmatpush2.bf16.msra.mxu0 %v5654
        %6811 = vmatprep.subr.bf16.mxu0 0
        %6812 = vmatpush2.bf16.msra.mxu0 %v5653
        %6813 = vmatprep.mubr.bf16.mxu0 %v2761
        %6814 = vmatmul.mubr.bf16.gmra.mxu0 %v2760
        %v6815 = vpop.f32.mrf.mxu0
        %v6816 = vadd.f32 %v6776, %v6815
        %v6817 = vpop.f32.mrf.mxu0
        %v6818 = vpop.f32.mrf.mxu0
        %v6819 = vpop.f32.mrf.mxu0
        %6820 = vdwg.mxu0
        %6821 = vmatprep.subr.bf16.mxu0 0
        %6822 = vmatpush1.bf16.msra.mxu0 %v5668
        %6823 = vmatprep.subr.bf16.mxu0 0
        %6824 = vmatpush1.bf16.msra.mxu0 %v5667
        %6825 = vmatprep.subr.bf16.mxu0 0
        %6826 = vmatpush1.bf16.msra.mxu0 %v5666
        %6827 = vmatprep.subr.bf16.mxu0 0
        %6828 = vmatpush1.bf16.msra.mxu0 %v5665
        %6829 = vmatprep.subr.bf16.mxu0 0
        %6830 = vmatpush1.bf16.msra.mxu0 %v5664
        %6831 = vmatprep.subr.bf16.mxu0 0
        %6832 = vmatpush1.bf16.msra.mxu0 %v5663
        %6833 = vmatprep.subr.bf16.mxu0 0
        %6834 = vmatpush1.bf16.msra.mxu0 %v5662
        %6835 = vmatprep.subr.bf16.mxu0 0
        %6836 = vmatpush1.bf16.msra.mxu0 %v5661
        %6837 = vmatprep.subr.bf16.mxu0 0
        %6838 = vmatpush2.bf16.msra.mxu0 %v5676
        %6839 = vmatprep.subr.bf16.mxu0 0
        %6840 = vmatpush2.bf16.msra.mxu0 %v5675
        %6841 = vmatprep.subr.bf16.mxu0 0
        %6842 = vmatpush2.bf16.msra.mxu0 %v5674
        %6843 = vmatprep.subr.bf16.mxu0 0
        %6844 = vmatpush2.bf16.msra.mxu0 %v5673
        %6845 = vmatprep.subr.bf16.mxu0 0
        %6846 = vmatpush2.bf16.msra.mxu0 %v5672
        %6847 = vmatprep.subr.bf16.mxu0 0
        %6848 = vmatpush2.bf16.msra.mxu0 %v5671
        %6849 = vmatprep.subr.bf16.mxu0 0
        %6850 = vmatpush2.bf16.msra.mxu0 %v5670
        %6851 = vmatprep.subr.bf16.mxu0 0
        %6852 = vmatpush2.bf16.msra.mxu0 %v5669
        %6853 = vmatprep.mubr.bf16.mxu0 %v2763
        %6854 = vmatmul.mubr.bf16.gmra.mxu0 %v2762
        %v6855 = vpop.f32.mrf.mxu0
        %v6856 = vadd.f32 %v6816, %v6855
        %v6857 = vpop.f32.mrf.mxu0
        %v6858 = vpop.f32.mrf.mxu0
        %v6859 = vpop.f32.mrf.mxu0
        %6860 = vdwg.mxu0
        %6861 = vmatprep.subr.bf16.mxu0 0
        %6862 = vmatpush1.bf16.msra.mxu0 %v5684
        %6863 = vmatprep.subr.bf16.mxu0 0
        %6864 = vmatpush1.bf16.msra.mxu0 %v5683
        %6865 = vmatprep.subr.bf16.mxu0 0
        %6866 = vmatpush1.bf16.msra.mxu0 %v5682
        %6867 = vmatprep.subr.bf16.mxu0 0
        %6868 = vmatpush1.bf16.msra.mxu0 %v5681
        %6869 = vmatprep.subr.bf16.mxu0 0
        %6870 = vmatpush1.bf16.msra.mxu0 %v5680
        %6871 = vmatprep.subr.bf16.mxu0 0
        %6872 = vmatpush1.bf16.msra.mxu0 %v5679
        %6873 = vmatprep.subr.bf16.mxu0 0
        %6874 = vmatpush1.bf16.msra.mxu0 %v5678
        %6875 = vmatprep.subr.bf16.mxu0 0
        %6876 = vmatpush1.bf16.msra.mxu0 %v5677
        %6877 = vmatprep.subr.bf16.mxu0 0
        %6878 = vmatpush2.bf16.msra.mxu0 %v5692
        %6879 = vmatprep.subr.bf16.mxu0 0
        %6880 = vmatpush2.bf16.msra.mxu0 %v5691
        %6881 = vmatprep.subr.bf16.mxu0 0
        %6882 = vmatpush2.bf16.msra.mxu0 %v5690
        %6883 = vmatprep.subr.bf16.mxu0 0
        %6884 = vmatpush2.bf16.msra.mxu0 %v5689
        %6885 = vmatprep.subr.bf16.mxu0 0
        %6886 = vmatpush2.bf16.msra.mxu0 %v5688
        %6887 = vmatprep.subr.bf16.mxu0 0
        %6888 = vmatpush2.bf16.msra.mxu0 %v5687
        %6889 = vmatprep.subr.bf16.mxu0 0
        %6890 = vmatpush2.bf16.msra.mxu0 %v5686
        %6891 = vmatprep.subr.bf16.mxu0 0
        %6892 = vmatpush2.bf16.msra.mxu0 %v5685
        %6893 = vmatprep.mubr.bf16.mxu0 %v2765
        %6894 = vmatmul.mubr.bf16.gmra.mxu0 %v2764
        %v6895 = vpop.f32.mrf.mxu0
        %v6896 = vadd.f32 %v6856, %v6895
        %v6897 = vpop.f32.mrf.mxu0
        %v6898 = vpop.f32.mrf.mxu0
        %v6899 = vpop.f32.mrf.mxu0
        %6900 = vdwg.mxu0
        %6901 = vmatprep.subr.bf16.mxu0 0
        %6902 = vmatpush1.bf16.msra.mxu0 %v5700
        %6903 = vmatprep.subr.bf16.mxu0 0
        %6904 = vmatpush1.bf16.msra.mxu0 %v5699
        %6905 = vmatprep.subr.bf16.mxu0 0
        %6906 = vmatpush1.bf16.msra.mxu0 %v5698
        %6907 = vmatprep.subr.bf16.mxu0 0
        %6908 = vmatpush1.bf16.msra.mxu0 %v5697
        %6909 = vmatprep.subr.bf16.mxu0 0
        %6910 = vmatpush1.bf16.msra.mxu0 %v5696
        %6911 = vmatprep.subr.bf16.mxu0 0
        %6912 = vmatpush1.bf16.msra.mxu0 %v5695
        %6913 = vmatprep.subr.bf16.mxu0 0
        %6914 = vmatpush1.bf16.msra.mxu0 %v5694
        %6915 = vmatprep.subr.bf16.mxu0 0
        %6916 = vmatpush1.bf16.msra.mxu0 %v5693
        %6917 = vmatprep.subr.bf16.mxu0 0
        %6918 = vmatpush2.bf16.msra.mxu0 %v5708
        %6919 = vmatprep.subr.bf16.mxu0 0
        %6920 = vmatpush2.bf16.msra.mxu0 %v5707
        %6921 = vmatprep.subr.bf16.mxu0 0
        %6922 = vmatpush2.bf16.msra.mxu0 %v5706
        %6923 = vmatprep.subr.bf16.mxu0 0
        %6924 = vmatpush2.bf16.msra.mxu0 %v5705
        %6925 = vmatprep.subr.bf16.mxu0 0
        %6926 = vmatpush2.bf16.msra.mxu0 %v5704
        %6927 = vmatprep.subr.bf16.mxu0 0
        %6928 = vmatpush2.bf16.msra.mxu0 %v5703
        %6929 = vmatprep.subr.bf16.mxu0 0
        %6930 = vmatpush2.bf16.msra.mxu0 %v5702
        %6931 = vmatprep.subr.bf16.mxu0 0
        %6932 = vmatpush2.bf16.msra.mxu0 %v5701
        %6933 = vmatprep.mubr.bf16.mxu0 %v2767
        %6934 = vmatmul.mubr.bf16.gmra.mxu0 %v2766
        %v6935 = vpop.f32.mrf.mxu0
        %v6936 = vadd.f32 %v6896, %v6935
        %v6937 = vpop.f32.mrf.mxu0
        %v6938 = vpop.f32.mrf.mxu0
        %v6939 = vpop.f32.mrf.mxu0
        %6940 = vdwg.mxu0
        %6941 = vmatprep.subr.bf16.mxu0 0
        %6942 = vmatpush1.bf16.msra.mxu0 %v5716
        %6943 = vmatprep.subr.bf16.mxu0 0
        %6944 = vmatpush1.bf16.msra.mxu0 %v5715
        %6945 = vmatprep.subr.bf16.mxu0 0
        %6946 = vmatpush1.bf16.msra.mxu0 %v5714
        %6947 = vmatprep.subr.bf16.mxu0 0
        %6948 = vmatpush1.bf16.msra.mxu0 %v5713
        %6949 = vmatprep.subr.bf16.mxu0 0
        %6950 = vmatpush1.bf16.msra.mxu0 %v5712
        %6951 = vmatprep.subr.bf16.mxu0 0
        %6952 = vmatpush1.bf16.msra.mxu0 %v5711
        %6953 = vmatprep.subr.bf16.mxu0 0
        %6954 = vmatpush1.bf16.msra.mxu0 %v5710
        %6955 = vmatprep.subr.bf16.mxu0 0
        %6956 = vmatpush1.bf16.msra.mxu0 %v5709
        %6957 = vmatprep.subr.bf16.mxu0 0
        %6958 = vmatpush2.bf16.msra.mxu0 %v5724
        %6959 = vmatprep.subr.bf16.mxu0 0
        %6960 = vmatpush2.bf16.msra.mxu0 %v5723
        %6961 = vmatprep.subr.bf16.mxu0 0
        %6962 = vmatpush2.bf16.msra.mxu0 %v5722
        %6963 = vmatprep.subr.bf16.mxu0 0
        %6964 = vmatpush2.bf16.msra.mxu0 %v5721
        %6965 = vmatprep.subr.bf16.mxu0 0
        %6966 = vmatpush2.bf16.msra.mxu0 %v5720
        %6967 = vmatprep.subr.bf16.mxu0 0
        %6968 = vmatpush2.bf16.msra.mxu0 %v5719
        %6969 = vmatprep.subr.bf16.mxu0 0
        %6970 = vmatpush2.bf16.msra.mxu0 %v5718
        %6971 = vmatprep.subr.bf16.mxu0 0
        %6972 = vmatpush2.bf16.msra.mxu0 %v5717
        %6973 = vmatprep.mubr.bf16.mxu0 %v2769
        %6974 = vmatmul.mubr.bf16.gmra.mxu0 %v2768
        %v6975 = vpop.f32.mrf.mxu0
        %v6976 = vadd.f32 %v6936, %v6975
        %v6977 = vpop.f32.mrf.mxu0
        %v6978 = vpop.f32.mrf.mxu0
        %v6979 = vpop.f32.mrf.mxu0
        %6980 = vdwg.mxu0
        %6981 = vmatprep.subr.bf16.mxu0 0
        %6982 = vmatpush1.bf16.msra.mxu0 %v5732
        %6983 = vmatprep.subr.bf16.mxu0 0
        %6984 = vmatpush1.bf16.msra.mxu0 %v5731
        %6985 = vmatprep.subr.bf16.mxu0 0
        %6986 = vmatpush1.bf16.msra.mxu0 %v5730
        %6987 = vmatprep.subr.bf16.mxu0 0
        %6988 = vmatpush1.bf16.msra.mxu0 %v5729
        %6989 = vmatprep.subr.bf16.mxu0 0
        %6990 = vmatpush1.bf16.msra.mxu0 %v5728
        %6991 = vmatprep.subr.bf16.mxu0 0
        %6992 = vmatpush1.bf16.msra.mxu0 %v5727
        %6993 = vmatprep.subr.bf16.mxu0 0
        %6994 = vmatpush1.bf16.msra.mxu0 %v5726
        %6995 = vmatprep.subr.bf16.mxu0 0
        %6996 = vmatpush1.bf16.msra.mxu0 %v5725
        %6997 = vmatprep.subr.bf16.mxu0 0
        %6998 = vmatpush2.bf16.msra.mxu0 %v5740
        %6999 = vmatprep.subr.bf16.mxu0 0
        %7000 = vmatpush2.bf16.msra.mxu0 %v5739
        %7001 = vmatprep.subr.bf16.mxu0 0
        %7002 = vmatpush2.bf16.msra.mxu0 %v5738
        %7003 = vmatprep.subr.bf16.mxu0 0
        %7004 = vmatpush2.bf16.msra.mxu0 %v5737
        %7005 = vmatprep.subr.bf16.mxu0 0
        %7006 = vmatpush2.bf16.msra.mxu0 %v5736
        %7007 = vmatprep.subr.bf16.mxu0 0
        %7008 = vmatpush2.bf16.msra.mxu0 %v5735
        %7009 = vmatprep.subr.bf16.mxu0 0
        %7010 = vmatpush2.bf16.msra.mxu0 %v5734
        %7011 = vmatprep.subr.bf16.mxu0 0
        %7012 = vmatpush2.bf16.msra.mxu0 %v5733
        %7013 = vmatprep.mubr.bf16.mxu0 %v2771
        %7014 = vmatmul.mubr.bf16.gmra.mxu0 %v2770
        %v7015 = vpop.f32.mrf.mxu0
        %v7016 = vadd.f32 %v6976, %v7015
        %v7017 = vpop.f32.mrf.mxu0
        %v7018 = vpop.f32.mrf.mxu0
        %v7019 = vpop.f32.mrf.mxu0
        %7020 = vdwg.mxu0
        %7021 = vmatprep.subr.bf16.mxu0 0
        %7022 = vmatpush1.bf16.msra.mxu0 %v5748
        %7023 = vmatprep.subr.bf16.mxu0 0
        %7024 = vmatpush1.bf16.msra.mxu0 %v5747
        %7025 = vmatprep.subr.bf16.mxu0 0
        %7026 = vmatpush1.bf16.msra.mxu0 %v5746
        %7027 = vmatprep.subr.bf16.mxu0 0
        %7028 = vmatpush1.bf16.msra.mxu0 %v5745
        %7029 = vmatprep.subr.bf16.mxu0 0
        %7030 = vmatpush1.bf16.msra.mxu0 %v5744
        %7031 = vmatprep.subr.bf16.mxu0 0
        %7032 = vmatpush1.bf16.msra.mxu0 %v5743
        %7033 = vmatprep.subr.bf16.mxu0 0
        %7034 = vmatpush1.bf16.msra.mxu0 %v5742
        %7035 = vmatprep.subr.bf16.mxu0 0
        %7036 = vmatpush1.bf16.msra.mxu0 %v5741
        %7037 = vmatprep.subr.bf16.mxu0 0
        %7038 = vmatpush2.bf16.msra.mxu0 %v5756
        %7039 = vmatprep.subr.bf16.mxu0 0
        %7040 = vmatpush2.bf16.msra.mxu0 %v5755
        %7041 = vmatprep.subr.bf16.mxu0 0
        %7042 = vmatpush2.bf16.msra.mxu0 %v5754
        %7043 = vmatprep.subr.bf16.mxu0 0
        %7044 = vmatpush2.bf16.msra.mxu0 %v5753
        %7045 = vmatprep.subr.bf16.mxu0 0
        %7046 = vmatpush2.bf16.msra.mxu0 %v5752
        %7047 = vmatprep.subr.bf16.mxu0 0
        %7048 = vmatpush2.bf16.msra.mxu0 %v5751
        %7049 = vmatprep.subr.bf16.mxu0 0
        %7050 = vmatpush2.bf16.msra.mxu0 %v5750
        %7051 = vmatprep.subr.bf16.mxu0 0
        %7052 = vmatpush2.bf16.msra.mxu0 %v5749
        %7053 = vmatprep.mubr.bf16.mxu0 %v2773
        %7054 = vmatmul.mubr.bf16.gmra.mxu0 %v2772
        %v7055 = vpop.f32.mrf.mxu0
        %v7056 = vadd.f32 %v7016, %v7055
        %v7057 = vpop.f32.mrf.mxu0
        %v7058 = vpop.f32.mrf.mxu0
        %v7059 = vpop.f32.mrf.mxu0
        %7060 = vdwg.mxu0
        %7061 = vmatprep.subr.bf16.mxu0 0
        %7062 = vmatpush1.bf16.msra.mxu0 %v5764
        %7063 = vmatprep.subr.bf16.mxu0 0
        %7064 = vmatpush1.bf16.msra.mxu0 %v5763
        %7065 = vmatprep.subr.bf16.mxu0 0
        %7066 = vmatpush1.bf16.msra.mxu0 %v5762
        %7067 = vmatprep.subr.bf16.mxu0 0
        %7068 = vmatpush1.bf16.msra.mxu0 %v5761
        %7069 = vmatprep.subr.bf16.mxu0 0
        %7070 = vmatpush1.bf16.msra.mxu0 %v5760
        %7071 = vmatprep.subr.bf16.mxu0 0
        %7072 = vmatpush1.bf16.msra.mxu0 %v5759
        %7073 = vmatprep.subr.bf16.mxu0 0
        %7074 = vmatpush1.bf16.msra.mxu0 %v5758
        %7075 = vmatprep.subr.bf16.mxu0 0
        %7076 = vmatpush1.bf16.msra.mxu0 %v5757
        %7077 = vmatprep.subr.bf16.mxu0 0
        %7078 = vmatpush2.bf16.msra.mxu0 %v5772
        %7079 = vmatprep.subr.bf16.mxu0 0
        %7080 = vmatpush2.bf16.msra.mxu0 %v5771
        %7081 = vmatprep.subr.bf16.mxu0 0
        %7082 = vmatpush2.bf16.msra.mxu0 %v5770
        %7083 = vmatprep.subr.bf16.mxu0 0
        %7084 = vmatpush2.bf16.msra.mxu0 %v5769
        %7085 = vmatprep.subr.bf16.mxu0 0
        %7086 = vmatpush2.bf16.msra.mxu0 %v5768
        %7087 = vmatprep.subr.bf16.mxu0 0
        %7088 = vmatpush2.bf16.msra.mxu0 %v5767
        %7089 = vmatprep.subr.bf16.mxu0 0
        %7090 = vmatpush2.bf16.msra.mxu0 %v5766
        %7091 = vmatprep.subr.bf16.mxu0 0
        %7092 = vmatpush2.bf16.msra.mxu0 %v5765
        %7093 = vmatprep.mubr.bf16.mxu0 %v2775
        %7094 = vmatmul.mubr.bf16.gmra.mxu0 %v2774
        %v7095 = vpop.f32.mrf.mxu0
        %v7096 = vadd.f32 %v7056, %v7095
        %v7097 = vpop.f32.mrf.mxu0
        %v7098 = vpop.f32.mrf.mxu0
        %v7099 = vpop.f32.mrf.mxu0
        %7100 = vdwg.mxu0
        %7101 = vmatprep.subr.bf16.mxu0 0
        %7102 = vmatpush1.bf16.msra.mxu0 %v5780
        %7103 = vmatprep.subr.bf16.mxu0 0
        %7104 = vmatpush1.bf16.msra.mxu0 %v5779
        %7105 = vmatprep.subr.bf16.mxu0 0
        %7106 = vmatpush1.bf16.msra.mxu0 %v5778
        %7107 = vmatprep.subr.bf16.mxu0 0
        %7108 = vmatpush1.bf16.msra.mxu0 %v5777
        %7109 = vmatprep.subr.bf16.mxu0 0
        %7110 = vmatpush1.bf16.msra.mxu0 %v5776
        %7111 = vmatprep.subr.bf16.mxu0 0
        %7112 = vmatpush1.bf16.msra.mxu0 %v5775
        %7113 = vmatprep.subr.bf16.mxu0 0
        %7114 = vmatpush1.bf16.msra.mxu0 %v5774
        %7115 = vmatprep.subr.bf16.mxu0 0
        %7116 = vmatpush1.bf16.msra.mxu0 %v5773
        %7117 = vmatprep.subr.bf16.mxu0 0
        %7118 = vmatpush2.bf16.msra.mxu0 %v5788
        %7119 = vmatprep.subr.bf16.mxu0 0
        %7120 = vmatpush2.bf16.msra.mxu0 %v5787
        %7121 = vmatprep.subr.bf16.mxu0 0
        %7122 = vmatpush2.bf16.msra.mxu0 %v5786
        %7123 = vmatprep.subr.bf16.mxu0 0
        %7124 = vmatpush2.bf16.msra.mxu0 %v5785
        %7125 = vmatprep.subr.bf16.mxu0 0
        %7126 = vmatpush2.bf16.msra.mxu0 %v5784
        %7127 = vmatprep.subr.bf16.mxu0 0
        %7128 = vmatpush2.bf16.msra.mxu0 %v5783
        %7129 = vmatprep.subr.bf16.mxu0 0
        %7130 = vmatpush2.bf16.msra.mxu0 %v5782
        %7131 = vmatprep.subr.bf16.mxu0 0
        %7132 = vmatpush2.bf16.msra.mxu0 %v5781
        %7133 = vmatprep.mubr.bf16.mxu0 %v2777
        %7134 = vmatmul.mubr.bf16.gmra.mxu0 %v2776
        %v7135 = vpop.f32.mrf.mxu0
        %v7136 = vadd.f32 %v7096, %v7135
        %v7137 = vpop.f32.mrf.mxu0
        %v7138 = vpop.f32.mrf.mxu0
        %v7139 = vpop.f32.mrf.mxu0
        %7140 = vdwg.mxu0
        %7141 = vmatprep.subr.bf16.mxu0 0
        %7142 = vmatpush1.bf16.msra.mxu0 %v5796
        %7143 = vmatprep.subr.bf16.mxu0 0
        %7144 = vmatpush1.bf16.msra.mxu0 %v5795
        %7145 = vmatprep.subr.bf16.mxu0 0
        %7146 = vmatpush1.bf16.msra.mxu0 %v5794
        %7147 = vmatprep.subr.bf16.mxu0 0
        %7148 = vmatpush1.bf16.msra.mxu0 %v5793
        %7149 = vmatprep.subr.bf16.mxu0 0
        %7150 = vmatpush1.bf16.msra.mxu0 %v5792
        %7151 = vmatprep.subr.bf16.mxu0 0
        %7152 = vmatpush1.bf16.msra.mxu0 %v5791
        %7153 = vmatprep.subr.bf16.mxu0 0
        %7154 = vmatpush1.bf16.msra.mxu0 %v5790
        %7155 = vmatprep.subr.bf16.mxu0 0
        %7156 = vmatpush1.bf16.msra.mxu0 %v5789
        %7157 = vmatprep.subr.bf16.mxu0 0
        %7158 = vmatpush2.bf16.msra.mxu0 %v5804
        %7159 = vmatprep.subr.bf16.mxu0 0
        %7160 = vmatpush2.bf16.msra.mxu0 %v5803
        %7161 = vmatprep.subr.bf16.mxu0 0
        %7162 = vmatpush2.bf16.msra.mxu0 %v5802
        %7163 = vmatprep.subr.bf16.mxu0 0
        %7164 = vmatpush2.bf16.msra.mxu0 %v5801
        %7165 = vmatprep.subr.bf16.mxu0 0
        %7166 = vmatpush2.bf16.msra.mxu0 %v5800
        %7167 = vmatprep.subr.bf16.mxu0 0
        %7168 = vmatpush2.bf16.msra.mxu0 %v5799
        %7169 = vmatprep.subr.bf16.mxu0 0
        %7170 = vmatpush2.bf16.msra.mxu0 %v5798
        %7171 = vmatprep.subr.bf16.mxu0 0
        %7172 = vmatpush2.bf16.msra.mxu0 %v5797
        %7173 = vmatprep.mubr.bf16.mxu0 %v2779
        %7174 = vmatmul.mubr.bf16.gmra.mxu0 %v2778
        %v7175 = vpop.f32.mrf.mxu0
        %v7176 = vadd.f32 %v7136, %v7175
        %v7177 = vpop.f32.mrf.mxu0
        %v7178 = vpop.f32.mrf.mxu0
        %v7179 = vpop.f32.mrf.mxu0
        %7180 = vdwg.mxu0
        %7181 = vmatprep.subr.bf16.mxu0 0
        %7182 = vmatpush1.bf16.msra.mxu0 %v5812
        %7183 = vmatprep.subr.bf16.mxu0 0
        %7184 = vmatpush1.bf16.msra.mxu0 %v5811
        %7185 = vmatprep.subr.bf16.mxu0 0
        %7186 = vmatpush1.bf16.msra.mxu0 %v5810
        %7187 = vmatprep.subr.bf16.mxu0 0
        %7188 = vmatpush1.bf16.msra.mxu0 %v5809
        %7189 = vmatprep.subr.bf16.mxu0 0
        %7190 = vmatpush1.bf16.msra.mxu0 %v5808
        %7191 = vmatprep.subr.bf16.mxu0 0
        %7192 = vmatpush1.bf16.msra.mxu0 %v5807
        %7193 = vmatprep.subr.bf16.mxu0 0
        %7194 = vmatpush1.bf16.msra.mxu0 %v5806
        %7195 = vmatprep.subr.bf16.mxu0 0
        %7196 = vmatpush1.bf16.msra.mxu0 %v5805
        %7197 = vmatprep.subr.bf16.mxu0 0
        %7198 = vmatpush2.bf16.msra.mxu0 %v5820
        %7199 = vmatprep.subr.bf16.mxu0 0
        %7200 = vmatpush2.bf16.msra.mxu0 %v5819
        %7201 = vmatprep.subr.bf16.mxu0 0
        %7202 = vmatpush2.bf16.msra.mxu0 %v5818
        %7203 = vmatprep.subr.bf16.mxu0 0
        %7204 = vmatpush2.bf16.msra.mxu0 %v5817
        %7205 = vmatprep.subr.bf16.mxu0 0
        %7206 = vmatpush2.bf16.msra.mxu0 %v5816
        %7207 = vmatprep.subr.bf16.mxu0 0
        %7208 = vmatpush2.bf16.msra.mxu0 %v5815
        %7209 = vmatprep.subr.bf16.mxu0 0
        %7210 = vmatpush2.bf16.msra.mxu0 %v5814
        %7211 = vmatprep.subr.bf16.mxu0 0
        %7212 = vmatpush2.bf16.msra.mxu0 %v5813
        %7213 = vmatprep.mubr.bf16.mxu0 %v2781
        %7214 = vmatmul.mubr.bf16.gmra.mxu0 %v2780
        %v7215 = vpop.f32.mrf.mxu0
        %v7216 = vadd.f32 %v7176, %v7215
        %v7217 = vpop.f32.mrf.mxu0
        %v7218 = vpop.f32.mrf.mxu0
        %v7219 = vpop.f32.mrf.mxu0
        %7220 = vdwg.mxu0
        %7221 = vmatprep.subr.bf16.mxu0 0
        %7222 = vmatpush1.bf16.msra.mxu0 %v5828
        %7223 = vmatprep.subr.bf16.mxu0 0
        %7224 = vmatpush1.bf16.msra.mxu0 %v5827
        %7225 = vmatprep.subr.bf16.mxu0 0
        %7226 = vmatpush1.bf16.msra.mxu0 %v5826
        %7227 = vmatprep.subr.bf16.mxu0 0
        %7228 = vmatpush1.bf16.msra.mxu0 %v5825
        %7229 = vmatprep.subr.bf16.mxu0 0
        %7230 = vmatpush1.bf16.msra.mxu0 %v5824
        %7231 = vmatprep.subr.bf16.mxu0 0
        %7232 = vmatpush1.bf16.msra.mxu0 %v5823
        %7233 = vmatprep.subr.bf16.mxu0 0
        %7234 = vmatpush1.bf16.msra.mxu0 %v5822
        %7235 = vmatprep.subr.bf16.mxu0 0
        %7236 = vmatpush1.bf16.msra.mxu0 %v5821
        %7237 = vmatprep.subr.bf16.mxu0 0
        %7238 = vmatpush2.bf16.msra.mxu0 %v5836
        %7239 = vmatprep.subr.bf16.mxu0 0
        %7240 = vmatpush2.bf16.msra.mxu0 %v5835
        %7241 = vmatprep.subr.bf16.mxu0 0
        %7242 = vmatpush2.bf16.msra.mxu0 %v5834
        %7243 = vmatprep.subr.bf16.mxu0 0
        %7244 = vmatpush2.bf16.msra.mxu0 %v5833
        %7245 = vmatprep.subr.bf16.mxu0 0
        %7246 = vmatpush2.bf16.msra.mxu0 %v5832
        %7247 = vmatprep.subr.bf16.mxu0 0
        %7248 = vmatpush2.bf16.msra.mxu0 %v5831
        %7249 = vmatprep.subr.bf16.mxu0 0
        %7250 = vmatpush2.bf16.msra.mxu0 %v5830
        %7251 = vmatprep.subr.bf16.mxu0 0
        %7252 = vmatpush2.bf16.msra.mxu0 %v5829
        %7253 = vmatprep.mubr.bf16.mxu0 %v2783
        %7254 = vmatmul.mubr.bf16.gmra.mxu0 %v2782
        %v7255 = vpop.f32.mrf.mxu0
        %v7256 = vadd.f32 %v7216, %v7255
        %v7257 = vpop.f32.mrf.mxu0
        %v7258 = vpop.f32.mrf.mxu0
        %v7259 = vpop.f32.mrf.mxu0
        %7260 = vdwg.mxu0
        %7261 = vmatprep.subr.bf16.mxu0 0
        %7262 = vmatpush1.bf16.msra.mxu0 %v5844
        %7263 = vmatprep.subr.bf16.mxu0 0
        %7264 = vmatpush1.bf16.msra.mxu0 %v5843
        %7265 = vmatprep.subr.bf16.mxu0 0
        %7266 = vmatpush1.bf16.msra.mxu0 %v5842
        %7267 = vmatprep.subr.bf16.mxu0 0
        %7268 = vmatpush1.bf16.msra.mxu0 %v5841
        %7269 = vmatprep.subr.bf16.mxu0 0
        %7270 = vmatpush1.bf16.msra.mxu0 %v5840
        %7271 = vmatprep.subr.bf16.mxu0 0
        %7272 = vmatpush1.bf16.msra.mxu0 %v5839
        %7273 = vmatprep.subr.bf16.mxu0 0
        %7274 = vmatpush1.bf16.msra.mxu0 %v5838
        %7275 = vmatprep.subr.bf16.mxu0 0
        %7276 = vmatpush1.bf16.msra.mxu0 %v5837
        %7277 = vmatprep.subr.bf16.mxu0 0
        %7278 = vmatpush2.bf16.msra.mxu0 %v5852
        %7279 = vmatprep.subr.bf16.mxu0 0
        %7280 = vmatpush2.bf16.msra.mxu0 %v5851
        %7281 = vmatprep.subr.bf16.mxu0 0
        %7282 = vmatpush2.bf16.msra.mxu0 %v5850
        %7283 = vmatprep.subr.bf16.mxu0 0
        %7284 = vmatpush2.bf16.msra.mxu0 %v5849
        %7285 = vmatprep.subr.bf16.mxu0 0
        %7286 = vmatpush2.bf16.msra.mxu0 %v5848
        %7287 = vmatprep.subr.bf16.mxu0 0
        %7288 = vmatpush2.bf16.msra.mxu0 %v5847
        %7289 = vmatprep.subr.bf16.mxu0 0
        %7290 = vmatpush2.bf16.msra.mxu0 %v5846
        %7291 = vmatprep.subr.bf16.mxu0 0
        %7292 = vmatpush2.bf16.msra.mxu0 %v5845
        %7293 = vmatprep.mubr.bf16.mxu0 %v2785
        %7294 = vmatmul.mubr.bf16.gmra.mxu0 %v2784
        %v7295 = vpop.f32.mrf.mxu0
        %v7296 = vadd.f32 %v7256, %v7295
        %v7297 = vpop.f32.mrf.mxu0
        %v7298 = vpop.f32.mrf.mxu0
        %v7299 = vpop.f32.mrf.mxu0
        %7300 = vdwg.mxu0
        %7301 = vmatprep.subr.bf16.mxu0 0
        %7302 = vmatpush1.bf16.msra.mxu0 %v5860
        %7303 = vmatprep.subr.bf16.mxu0 0
        %7304 = vmatpush1.bf16.msra.mxu0 %v5859
        %7305 = vmatprep.subr.bf16.mxu0 0
        %7306 = vmatpush1.bf16.msra.mxu0 %v5858
        %7307 = vmatprep.subr.bf16.mxu0 0
        %7308 = vmatpush1.bf16.msra.mxu0 %v5857
        %7309 = vmatprep.subr.bf16.mxu0 0
        %7310 = vmatpush1.bf16.msra.mxu0 %v5856
        %7311 = vmatprep.subr.bf16.mxu0 0
        %7312 = vmatpush1.bf16.msra.mxu0 %v5855
        %7313 = vmatprep.subr.bf16.mxu0 0
        %7314 = vmatpush1.bf16.msra.mxu0 %v5854
        %7315 = vmatprep.subr.bf16.mxu0 0
        %7316 = vmatpush1.bf16.msra.mxu0 %v5853
        %7317 = vmatprep.subr.bf16.mxu0 0
        %7318 = vmatpush2.bf16.msra.mxu0 %v5868
        %7319 = vmatprep.subr.bf16.mxu0 0
        %7320 = vmatpush2.bf16.msra.mxu0 %v5867
        %7321 = vmatprep.subr.bf16.mxu0 0
        %7322 = vmatpush2.bf16.msra.mxu0 %v5866
        %7323 = vmatprep.subr.bf16.mxu0 0
        %7324 = vmatpush2.bf16.msra.mxu0 %v5865
        %7325 = vmatprep.subr.bf16.mxu0 0
        %7326 = vmatpush2.bf16.msra.mxu0 %v5864
        %7327 = vmatprep.subr.bf16.mxu0 0
        %7328 = vmatpush2.bf16.msra.mxu0 %v5863
        %7329 = vmatprep.subr.bf16.mxu0 0
        %7330 = vmatpush2.bf16.msra.mxu0 %v5862
        %7331 = vmatprep.subr.bf16.mxu0 0
        %7332 = vmatpush2.bf16.msra.mxu0 %v5861
        %7333 = vmatprep.mubr.bf16.mxu0 %v2787
        %7334 = vmatmul.mubr.bf16.gmra.mxu0 %v2786
        %v7335 = vpop.f32.mrf.mxu0
        %v7336 = vadd.f32 %v7296, %v7335
        %v7337 = vpop.f32.mrf.mxu0
        %v7338 = vpop.f32.mrf.mxu0
        %v7339 = vpop.f32.mrf.mxu0
        %7340 = vdwg.mxu0
        %7341 = vmatprep.subr.bf16.mxu0 0
        %7342 = vmatpush1.bf16.msra.mxu0 %v5876
        %7343 = vmatprep.subr.bf16.mxu0 0
        %7344 = vmatpush1.bf16.msra.mxu0 %v5875
        %7345 = vmatprep.subr.bf16.mxu0 0
        %7346 = vmatpush1.bf16.msra.mxu0 %v5874
        %7347 = vmatprep.subr.bf16.mxu0 0
        %7348 = vmatpush1.bf16.msra.mxu0 %v5873
        %7349 = vmatprep.subr.bf16.mxu0 0
        %7350 = vmatpush1.bf16.msra.mxu0 %v5872
        %7351 = vmatprep.subr.bf16.mxu0 0
        %7352 = vmatpush1.bf16.msra.mxu0 %v5871
        %7353 = vmatprep.subr.bf16.mxu0 0
        %7354 = vmatpush1.bf16.msra.mxu0 %v5870
        %7355 = vmatprep.subr.bf16.mxu0 0
        %7356 = vmatpush1.bf16.msra.mxu0 %v5869
        %7357 = vmatprep.subr.bf16.mxu0 0
        %7358 = vmatpush2.bf16.msra.mxu0 %v5884
        %7359 = vmatprep.subr.bf16.mxu0 0
        %7360 = vmatpush2.bf16.msra.mxu0 %v5883
        %7361 = vmatprep.subr.bf16.mxu0 0
        %7362 = vmatpush2.bf16.msra.mxu0 %v5882
        %7363 = vmatprep.subr.bf16.mxu0 0
        %7364 = vmatpush2.bf16.msra.mxu0 %v5881
        %7365 = vmatprep.subr.bf16.mxu0 0
        %7366 = vmatpush2.bf16.msra.mxu0 %v5880
        %7367 = vmatprep.subr.bf16.mxu0 0
        %7368 = vmatpush2.bf16.msra.mxu0 %v5879
        %7369 = vmatprep.subr.bf16.mxu0 0
        %7370 = vmatpush2.bf16.msra.mxu0 %v5878
        %7371 = vmatprep.subr.bf16.mxu0 0
        %7372 = vmatpush2.bf16.msra.mxu0 %v5877
        %7373 = vmatprep.mubr.bf16.mxu0 %v2789
        %7374 = vmatmul.mubr.bf16.gmra.mxu0 %v2788
        %v7375 = vpop.f32.mrf.mxu0
        %v7376 = vadd.f32 %v7336, %v7375
        %v7377 = vpop.f32.mrf.mxu0
        %v7378 = vpop.f32.mrf.mxu0
        %v7379 = vpop.f32.mrf.mxu0
        %7380 = vdwg.mxu0
        %7381 = vmatprep.subr.bf16.mxu0 0
        %7382 = vmatpush1.bf16.msra.mxu0 %v5892
        %7383 = vmatprep.subr.bf16.mxu0 0
        %7384 = vmatpush1.bf16.msra.mxu0 %v5891
        %7385 = vmatprep.subr.bf16.mxu0 0
        %7386 = vmatpush1.bf16.msra.mxu0 %v5890
        %7387 = vmatprep.subr.bf16.mxu0 0
        %7388 = vmatpush1.bf16.msra.mxu0 %v5889
        %7389 = vmatprep.subr.bf16.mxu0 0
        %7390 = vmatpush1.bf16.msra.mxu0 %v5888
        %7391 = vmatprep.subr.bf16.mxu0 0
        %7392 = vmatpush1.bf16.msra.mxu0 %v5887
        %7393 = vmatprep.subr.bf16.mxu0 0
        %7394 = vmatpush1.bf16.msra.mxu0 %v5886
        %7395 = vmatprep.subr.bf16.mxu0 0
        %7396 = vmatpush1.bf16.msra.mxu0 %v5885
        %7397 = vmatprep.subr.bf16.mxu0 0
        %7398 = vmatpush2.bf16.msra.mxu0 %v5900
        %7399 = vmatprep.subr.bf16.mxu0 0
        %7400 = vmatpush2.bf16.msra.mxu0 %v5899
        %7401 = vmatprep.subr.bf16.mxu0 0
        %7402 = vmatpush2.bf16.msra.mxu0 %v5898
        %7403 = vmatprep.subr.bf16.mxu0 0
        %7404 = vmatpush2.bf16.msra.mxu0 %v5897
        %7405 = vmatprep.subr.bf16.mxu0 0
        %7406 = vmatpush2.bf16.msra.mxu0 %v5896
        %7407 = vmatprep.subr.bf16.mxu0 0
        %7408 = vmatpush2.bf16.msra.mxu0 %v5895
        %7409 = vmatprep.subr.bf16.mxu0 0
        %7410 = vmatpush2.bf16.msra.mxu0 %v5894
        %7411 = vmatprep.subr.bf16.mxu0 0
        %7412 = vmatpush2.bf16.msra.mxu0 %v5893
        %7413 = vmatprep.mubr.bf16.mxu0 %v2791
        %7414 = vmatmul.mubr.bf16.gmra.mxu0 %v2790
        %v7415 = vpop.f32.mrf.mxu0
        %v7416 = vadd.f32 %v7376, %v7415
        %v7417 = vpop.f32.mrf.mxu0
        %v7418 = vpop.f32.mrf.mxu0
        %v7419 = vpop.f32.mrf.mxu0
        %7420 = vdwg.mxu0
        %7421 = vmatprep.subr.bf16.mxu0 0
        %7422 = vmatpush1.bf16.msra.mxu0 %v5908
        %7423 = vmatprep.subr.bf16.mxu0 0
        %7424 = vmatpush1.bf16.msra.mxu0 %v5907
        %7425 = vmatprep.subr.bf16.mxu0 0
        %7426 = vmatpush1.bf16.msra.mxu0 %v5906
        %7427 = vmatprep.subr.bf16.mxu0 0
        %7428 = vmatpush1.bf16.msra.mxu0 %v5905
        %7429 = vmatprep.subr.bf16.mxu0 0
        %7430 = vmatpush1.bf16.msra.mxu0 %v5904
        %7431 = vmatprep.subr.bf16.mxu0 0
        %7432 = vmatpush1.bf16.msra.mxu0 %v5903
        %7433 = vmatprep.subr.bf16.mxu0 0
        %7434 = vmatpush1.bf16.msra.mxu0 %v5902
        %7435 = vmatprep.subr.bf16.mxu0 0
        %7436 = vmatpush1.bf16.msra.mxu0 %v5901
        %7437 = vmatprep.subr.bf16.mxu0 0
        %7438 = vmatpush2.bf16.msra.mxu0 %v5916
        %7439 = vmatprep.subr.bf16.mxu0 0
        %7440 = vmatpush2.bf16.msra.mxu0 %v5915
        %7441 = vmatprep.subr.bf16.mxu0 0
        %7442 = vmatpush2.bf16.msra.mxu0 %v5914
        %7443 = vmatprep.subr.bf16.mxu0 0
        %7444 = vmatpush2.bf16.msra.mxu0 %v5913
        %7445 = vmatprep.subr.bf16.mxu0 0
        %7446 = vmatpush2.bf16.msra.mxu0 %v5912
        %7447 = vmatprep.subr.bf16.mxu0 0
        %7448 = vmatpush2.bf16.msra.mxu0 %v5911
        %7449 = vmatprep.subr.bf16.mxu0 0
        %7450 = vmatpush2.bf16.msra.mxu0 %v5910
        %7451 = vmatprep.subr.bf16.mxu0 0
        %7452 = vmatpush2.bf16.msra.mxu0 %v5909
        %7453 = vmatprep.mubr.bf16.mxu0 %v2793
        %7454 = vmatmul.mubr.bf16.gmra.mxu0 %v2792
        %v7455 = vpop.f32.mrf.mxu0
        %v7456 = vadd.f32 %v7416, %v7455
        %v7457 = vpop.f32.mrf.mxu0
        %v7458 = vpop.f32.mrf.mxu0
        %v7459 = vpop.f32.mrf.mxu0
        %7460 = vdwg.mxu0
        %7461 = vmatprep.subr.bf16.mxu0 0
        %7462 = vmatpush1.bf16.msra.mxu0 %v5924
        %7463 = vmatprep.subr.bf16.mxu0 0
        %7464 = vmatpush1.bf16.msra.mxu0 %v5923
        %7465 = vmatprep.subr.bf16.mxu0 0
        %7466 = vmatpush1.bf16.msra.mxu0 %v5922
        %7467 = vmatprep.subr.bf16.mxu0 0
        %7468 = vmatpush1.bf16.msra.mxu0 %v5921
        %7469 = vmatprep.subr.bf16.mxu0 0
        %7470 = vmatpush1.bf16.msra.mxu0 %v5920
        %7471 = vmatprep.subr.bf16.mxu0 0
        %7472 = vmatpush1.bf16.msra.mxu0 %v5919
        %7473 = vmatprep.subr.bf16.mxu0 0
        %7474 = vmatpush1.bf16.msra.mxu0 %v5918
        %7475 = vmatprep.subr.bf16.mxu0 0
        %7476 = vmatpush1.bf16.msra.mxu0 %v5917
        %7477 = vmatprep.subr.bf16.mxu0 0
        %7478 = vmatpush2.bf16.msra.mxu0 %v5932
        %7479 = vmatprep.subr.bf16.mxu0 0
        %7480 = vmatpush2.bf16.msra.mxu0 %v5931
        %7481 = vmatprep.subr.bf16.mxu0 0
        %7482 = vmatpush2.bf16.msra.mxu0 %v5930
        %7483 = vmatprep.subr.bf16.mxu0 0
        %7484 = vmatpush2.bf16.msra.mxu0 %v5929
        %7485 = vmatprep.subr.bf16.mxu0 0
        %7486 = vmatpush2.bf16.msra.mxu0 %v5928
        %7487 = vmatprep.subr.bf16.mxu0 0
        %7488 = vmatpush2.bf16.msra.mxu0 %v5927
        %7489 = vmatprep.subr.bf16.mxu0 0
        %7490 = vmatpush2.bf16.msra.mxu0 %v5926
        %7491 = vmatprep.subr.bf16.mxu0 0
        %7492 = vmatpush2.bf16.msra.mxu0 %v5925
        %7493 = vmatprep.mubr.bf16.mxu0 %v2795
        %7494 = vmatmul.mubr.bf16.gmra.mxu0 %v2794
        %v7495 = vpop.f32.mrf.mxu0
        %v7496 = vadd.f32 %v7456, %v7495
        %v7497 = vpop.f32.mrf.mxu0
        %v7498 = vpop.f32.mrf.mxu0
        %v7499 = vpop.f32.mrf.mxu0
        %7500 = vdwg.mxu0
        %vm7501 = vcmask 73728
        %7502 = vst.msk [vmem:[%s432] sm:$0x1] %vm7501, %v7496
        %s7503 = sand.u32 %s313, 1
        %s7504 = scalar_lea.sflag [#allocation3], %s7503
        %s7505 = sand.u32 %s313, 1
        %s7506 = scalar_lea.vmem [#allocation2], %s7505
        // Predicated region
        $region73: #{mnist_forward_pallas.1} parent=71 // pred_check
          %p7507 = pneg %p323
        $region74: #{mnist_forward_pallas.1} parent=71 // pred_check_branch
          %7509 = sbr.rel (%p7507) target = $region76
        $region75: #{mnist_forward_pallas.1} parent=71 // pred_region
          %s7511 = ssub.s32 16, 16
          %7512 = vsyncadd %s7504, %s7511
          %s7513 = smul.addr %s27, 16
          %s7514 = scalar_lea.hbm %s13, %s7513
          %s7516 = sshll.u32 %s7506, 4
          %s7517 = int_to_ptr.vmem [resolvable:$true] %s7516
          %7519 = dma.vmem_to_hbm [thread:$0]  %s7517, 16, %s7514, %s7504
        $region76: #{mnist_forward_pallas.1} parent=71 // pred_fallthru
          _
      $region72: #{mnist_forward_pallas.1} parent=5 // pred_fallthru
        _
      %p7520 = scmp.le.s32.totalorder 2, %s22
      // Predicated region
      $region77: #{mnist_forward_pallas.1} parent=5 // pred_check
        %p7521 = pneg %p7520
      $region78: #{mnist_forward_pallas.1} parent=5 // pred_check_branch
        %7523 = sbr.rel (%p7521) target = $region80
      $region79: #{mnist_forward_pallas.1} parent=5 // pred_region
        %s7524 = ssub.s32 %s22, 2
        // Predicated region
        $region81: #{mnist_forward_pallas.1} parent=79 // pred_check
          %p7525 = pneg %p329
        $region82: #{mnist_forward_pallas.1} parent=79 // pred_check_branch
          %7527 = sbr.rel (%p7525) target = $region84
        $region83: #{mnist_forward_pallas.1} parent=79 // pred_region
          %s7528 = sand.u32 %s314, 1
          %s7529 = scalar_lea.sflag [#allocation3], %s7528
          %s7530 = sand.u32 %s314, 1
          %s7531 = scalar_lea.vmem [#allocation2], %s7530
          %7532 = dma.done %s7529, 16
        $region84: #{mnist_forward_pallas.1} parent=79 // pred_fallthru
          _
      $region80: #{mnist_forward_pallas.1} parent=5 // pred_fallthru
        _
    $region6: #{mnist_forward_pallas.1} parent=1 // loop_footer
      %s26 = sadd.s32 1, %s22
    $region7: #{mnist_forward_pallas.1} parent=1 // loop_footer_branch
      %21 = sbr.rel target = $region3
    $region8: #{mnist_forward_pallas.1} parent=1 // loop_exit
      _
    %7533 = vsyncpa [#allocation3], 1
    %s7534 = scalar_lea.sflag [#allocation3], 1
    %7535 = vsyncpa %s7534, 1

</llo_original>
